<compile_context>
chip_gen: v5e
topology: v5e:2x2
jax: 0.10.0
libtpu: 0.0.40
codegen_flags: <defaults>
</compile_context>

<pallas_src>
import jax
import jax.numpy as jnp
from jax import lax
from jax.experimental import pallas as pl
from jax.experimental.pallas import tpu as pltpu


# MXU operand dtype: bf16 is the native high-throughput MXU path on v5e/v6e/v7x.
# Set to jnp.float32 for a bit-tighter (but slower) matmul path.
MXU_DTYPE = jnp.bfloat16


def _conv3x3_im2col(pad_ref, col_ref, w_ref, bias, H, W, C):
    """3x3 'same' cross-correlation of the image held in pad_ref's interior.

    pad_ref: (H+2, W+2, C) f32 scratch; interior = conv input, border = 0.
    col_ref: (H*W, 9*C) MXU_DTYPE scratch for the im2col patches.
    w_ref:   (9*C, C) MXU_DTYPE weights, row index = k*C + ci with
             k = (dy+1)*3 + (dx+1), dy, dx in {-1, 0, 1}   (== w9.reshape(9C, C)).
    bias:    (1, C) f32.
    Returns the conv output as an (H, W, C) f32 value.
    """
    for dy in range(3):
        for dx in range(3):
            k = dy * 3 + dx
            tap = pad_ref[dy:dy + H, dx:dx + W, :]            # (H, W, C) f32, static slice
            col_ref[:, k * C:(k + 1) * C] = (
                tap.reshape(H * W, C).astype(col_ref.dtype))
    # One deep matmul on the MXU: (H*W, 9C) x (9C, C), f32 accumulation.
    acc = jnp.dot(col_ref[...], w_ref[...], preferred_element_type=jnp.float32)
    return (acc + bias).reshape(H, W, C)


def _dilran_kernel(x_ref, w_ref, b_ref, o_ref, pad_ref, col_ref):
    # x_ref: (1, H, W, C) f32   w_ref: (9C, C) bf16   b_ref: (1, C) f32
    # o_ref: (1, H, W, C) f32   pad_ref: (H+2, W+2, C) f32   col_ref: (H*W, 9C) bf16
    _, H, W, C = x_ref.shape
    bias = b_ref[...]                                          # (1, C) f32

    # Zero the halo scratch every step (megacore-safe; interior is overwritten below).
    pad_ref[...] = jnp.zeros_like(pad_ref)

    # ---- conv_path = c1 + c2 + c3 (shared conv), running-sum accumulation ----
    pad_ref[1:H + 1, 1:W + 1, :] = x_ref[0]
    c = _conv3x3_im2col(pad_ref, col_ref, w_ref, bias, H, W, C)   # c1
    s = c
    pad_ref[1:H + 1, 1:W + 1, :] = c
    c = _conv3x3_im2col(pad_ref, col_ref, w_ref, bias, H, W, C)   # c2
    s = s + c
    pad_ref[1:H + 1, 1:W + 1, :] = c
    c = _conv3x3_im2col(pad_ref, col_ref, w_ref, bias, H, W, C)   # c3
    s = s + c

    # ---- pur = relu(up2x(avgpool2x2(x))) ------------------------------------
    # Each output pixel is the mean of its 2x2 block; the partner pixels are
    # picked by row/col parity from static slices of the (re-)padded input.
    # Parity never selects a border zero (H, W even).
    pad_ref[1:H + 1, 1:W + 1, :] = x_ref[0]
    row = lax.broadcasted_iota(jnp.int32, (H, W, 1), 0)
    col = lax.broadcasted_iota(jnp.int32, (H, W, 1), 1)
    even_r = (row % 2) == 0
    even_c = (col % 2) == 0
    xc = pad_ref[1:H + 1, 1:W + 1, :]                              # x itself
    nh = jnp.where(even_r, pad_ref[2:H + 2, 1:W + 1, :], pad_ref[0:H, 1:W + 1, :])
    nw = jnp.where(even_c, pad_ref[1:H + 1, 2:W + 2, :], pad_ref[1:H + 1, 0:W, :])
    nd = jnp.where(
        even_r,
        jnp.where(even_c, pad_ref[2:H + 2, 2:W + 2, :], pad_ref[2:H + 2, 0:W, :]),
        jnp.where(even_c, pad_ref[0:H, 2:W + 2, :], pad_ref[0:H, 0:W, :]))
    pur = jnp.maximum(0.25 * (xc + nh + nw + nd), 0.0)

    # ---- residual combine ----------------------------------------------------
    o_ref[0] = (x_ref[0] + pur * s).astype(o_ref.dtype)


def dilran_v1_forward(x_nchw, w9, bias):
    """x_nchw: (B, C, H, W) f32; w9: (9, C, C) [tap, in, out]; bias: (C,). Returns NCHW."""
    B, C, H, W = x_nchw.shape
    assert H % 2 == 0 and W % 2 == 0        # avgpool(2,2) + nearest 2x upsample
    assert W % 8 == 0                        # sublane alignment for free in-kernel reshapes
    assert w9.shape == (9, C, C) and bias.shape == (C,)

    x = jnp.transpose(x_nchw, (0, 2, 3, 1))                        # NHWC
    w_flat = w9.reshape(9 * C, C).astype(MXU_DTYPE)                # (9C, C), row = k*C + ci
    b2d = bias.reshape(1, C).astype(jnp.float32)

    out = pl.pallas_call(
        _dilran_kernel,
        out_shape=jax.ShapeDtypeStruct((B, H, W, C), x.dtype),
        grid_spec=pltpu.PrefetchScalarGridSpec(
            num_scalar_prefetch=0,
            grid=(B,),
            in_specs=[
                pl.BlockSpec((1, H, W, C), lambda b: (b, 0, 0, 0)),
                # TODO(synk): pipeline_mode=pl.Buffered(1) would skip double-buffering
                # these constant-index operands; left at default for lowering safety.
                pl.BlockSpec((9 * C, C), lambda b: (0, 0)),
                pl.BlockSpec((1, C), lambda b: (0, 0)),
            ],
            out_specs=pl.BlockSpec((1, H, W, C), lambda b: (b, 0, 0, 0)),
            scratch_shapes=[
                pltpu.VMEM((H + 2, W + 2, C), jnp.float32),        # padded halo scratch
                pltpu.VMEM((H * W, 9 * C), MXU_DTYPE),             # im2col patches
            ],
        ),
        compiler_params=pltpu.CompilerParams(
            dimension_semantics=("parallel",),
            vmem_limit_bytes=32 * 1024 * 1024,
        ),
    )(x, w_flat, b2d)
    return jnp.transpose(out, (0, 3, 1, 2))                        # back to NCHW


def _reference(x_nchw, w9, bias, mxu_dtype):
    """Pure-JAX reference mirroring the PyTorch forward, with the same MXU-operand
    dtype as the kernel so the comparison isolates kernel correctness."""
    B, C, H, W = x_nchw.shape
    x = jnp.transpose(x_nchw, (0, 2, 3, 1))
    w_hwio = w9.reshape(3, 3, C, C).astype(mxu_dtype)

    def conv(v):
        y = lax.conv_general_dilated(
            v.astype(mxu_dtype), w_hwio, (1, 1), "SAME",
            dimension_numbers=("NHWC", "HWIO", "NHWC"),
            preferred_element_type=jnp.float32)
        return y + bias.reshape(1, 1, 1, C)

    c1 = conv(x)
    c2 = conv(c1)
    c3 = conv(c2)
    pooled = x.reshape(B, H // 2, 2, W // 2, 2, C).mean(axis=(2, 4))
    up = jnp.repeat(jnp.repeat(pooled, 2, axis=1), 2, axis=2)
    pur = jnp.maximum(up, 0.0)
    out = x + pur * (c1 + c2 + c3)
    return jnp.transpose(out, (0, 3, 1, 2))


if __name__ == "__main__":
    B, C, H, W = 2, 64, 16, 16   # conv_d is fixed at 64 in/out channels in the module
    key = jax.random.PRNGKey(0)
    kx, kw, kb = jax.random.split(key, 3)
    x = jax.random.normal(kx, (B, C, H, W), jnp.float32)
    # Deterministic synthetic conv_d parameters (Conv2d(64, 64, 3, padding='same')),
    # in the kernel's [tap, in, out] layout (PyTorch (Cout,Cin,3,3) weights would
    # need transposing to this layout).
    w9 = jax.random.normal(kw, (9, C, C), jnp.float32) * 0.05
    bias = jax.random.normal(kb, (C,), jnp.float32) * 0.1

    out = jax.block_until_ready(dilran_v1_forward(x, w9, bias))
    ref = _reference(x, w9, bias, MXU_DTYPE)

    assert out.shape == (B, C, H, W)
    max_err = float(jnp.max(jnp.abs(out - ref)))
    # bf16 MXU operands: the reference applies the same bf16 casts, but three chained
    # convs can still diverge by a few bf16 ulps (accumulation-order-induced rounding
    # flips cascading through the chain), hence the looser bf16 tolerance.
    tol = 1e-3 if MXU_DTYPE == jnp.float32 else 2e-2
    assert max_err < tol, f"max abs err {max_err} (tol {tol})"
    print("KERNEL_OK")
</pallas_src>

<mosaic_0001>
module attributes {stable_mosaic.version = 11 : i64} {
  func.func @_dilran_kernel(%arg0: i32, %arg1: memref<1x16x16x64xf32, #tpu.memory_space<vmem>>, %arg2: memref<576x64xbf16, #tpu.memory_space<vmem>>, %arg3: memref<1x64xf32, #tpu.memory_space<vmem>>, %arg4: memref<1x16x16x64xf32, #tpu.memory_space<vmem>>, %arg5: memref<18x18x64xf32, #tpu.memory_space<vmem>>, %arg6: memref<256x576xbf16, #tpu.memory_space<vmem>>) attributes {dimension_semantics = [#tpu.dimension_semantics<parallel>], iteration_bounds = array<i64: 2>, scalar_prefetch = 0 : i64, scratch_operands = 2 : i64, tpu.core_type = #tpu.core_type<tc>, window_params = [{transform_indices = @transform_0, window_bounds = array<i64: 1, 16, 16, 64>}, {pipeline_mode = #tpu.pipeline_mode<synchronous>, transform_indices = @transform_1, window_bounds = array<i64: 576, 64>}, {pipeline_mode = #tpu.pipeline_mode<synchronous>, transform_indices = @transform_2, window_bounds = array<i64: 1, 64>}, {transform_indices = @transform_3, window_bounds = array<i64: 1, 16, 16, 64>}]} {
    %c0 = arith.constant 0 : index
    %c0_0 = arith.constant 0 : index
    %0 = vector.load %arg3[%c0, %c0_0] : memref<1x64xf32, #tpu.memory_space<vmem>>, vector<1x64xf32>
    %cst = arith.constant 0.000000e+00 : f32
    %1 = vector.broadcast %cst : f32 to vector<18x18x64xf32>
    %c0_1 = arith.constant 0 : index
    %c0_2 = arith.constant 0 : index
    %c0_3 = arith.constant 0 : index
    %2 = vector.load %arg5[%c0_1, %c0_2, %c0_3] : memref<18x18x64xf32, #tpu.memory_space<vmem>>, vector<18x18x64xf32>
    tpu.vector_store %arg5[%c0_1, %c0_2, %c0_3], %1 {strides = array<i32>} : memref<18x18x64xf32, #tpu.memory_space<vmem>>, vector<18x18x64xf32>,
    %c0_4 = arith.constant 0 : index
    %c0_5 = arith.constant 0 : index
    %c0_6 = arith.constant 0 : index
    %c0_7 = arith.constant 0 : index
    %3 = vector.load %arg1[%c0_4, %c0_5, %c0_6, %c0_7] : memref<1x16x16x64xf32, #tpu.memory_space<vmem>>, vector<1x16x16x64xf32>
    %4 = vector.shape_cast %3 : vector<1x16x16x64xf32> to vector<16x16x64xf32>
    %c1 = arith.constant 1 : index
    %c1_8 = arith.constant 1 : index
    %c0_9 = arith.constant 0 : index
    %5 = vector.load %arg5[%c1, %c1_8, %c0_9] : memref<18x18x64xf32, #tpu.memory_space<vmem>>, vector<16x16x64xf32>
    tpu.vector_store %arg5[%c1, %c1_8, %c0_9], %4 {strides = array<i32>} : memref<18x18x64xf32, #tpu.memory_space<vmem>>, vector<16x16x64xf32>,
    %c0_10 = arith.constant 0 : index
    %c0_11 = arith.constant 0 : index
    %c0_12 = arith.constant 0 : index
    %6 = vector.load %arg5[%c0_10, %c0_11, %c0_12] : memref<18x18x64xf32, #tpu.memory_space<vmem>>, vector<16x16x64xf32>
    %7 = vector.shape_cast %6 : vector<16x16x64xf32> to vector<256x64xf32>
    %8 = arith.truncf %7 : vector<256x64xf32> to vector<256x64xbf16>
    %c0_13 = arith.constant 0 : index
    %c0_14 = arith.constant 0 : index
    %9 = vector.load %arg6[%c0_13, %c0_14] : memref<256x576xbf16, #tpu.memory_space<vmem>>, vector<256x64xbf16>
    tpu.vector_store %arg6[%c0_13, %c0_14], %8 {strides = array<i32>} : memref<256x576xbf16, #tpu.memory_space<vmem>>, vector<256x64xbf16>,
    %c0_15 = arith.constant 0 : index
    %c1_16 = arith.constant 1 : index
    %c0_17 = arith.constant 0 : index
    %10 = vector.load %arg5[%c0_15, %c1_16, %c0_17] : memref<18x18x64xf32, #tpu.memory_space<vmem>>, vector<16x16x64xf32>
    %11 = vector.shape_cast %10 : vector<16x16x64xf32> to vector<256x64xf32>
    %12 = arith.truncf %11 : vector<256x64xf32> to vector<256x64xbf16>
    %c0_18 = arith.constant 0 : index
    %c64 = arith.constant 64 : index
    %13 = vector.load %arg6[%c0_18, %c64] : memref<256x576xbf16, #tpu.memory_space<vmem>>, vector<256x64xbf16>
    tpu.vector_store %arg6[%c0_18, %c64], %12 {strides = array<i32>} : memref<256x576xbf16, #tpu.memory_space<vmem>>, vector<256x64xbf16>,
    %c0_19 = arith.constant 0 : index
    %c2 = arith.constant 2 : index
    %c0_20 = arith.constant 0 : index
    %14 = vector.load %arg5[%c0_19, %c2, %c0_20] : memref<18x18x64xf32, #tpu.memory_space<vmem>>, vector<16x16x64xf32>
    %15 = vector.shape_cast %14 : vector<16x16x64xf32> to vector<256x64xf32>
    %16 = arith.truncf %15 : vector<256x64xf32> to vector<256x64xbf16>
    %c0_21 = arith.constant 0 : index
    %c128 = arith.constant 128 : index
    %17 = vector.load %arg6[%c0_21, %c128] : memref<256x576xbf16, #tpu.memory_space<vmem>>, vector<256x64xbf16>
    tpu.vector_store %arg6[%c0_21, %c128], %16 {strides = array<i32>} : memref<256x576xbf16, #tpu.memory_space<vmem>>, vector<256x64xbf16>,
    %c1_22 = arith.constant 1 : index
    %c0_23 = arith.constant 0 : index
    %c0_24 = arith.constant 0 : index
    %18 = vector.load %arg5[%c1_22, %c0_23, %c0_24] : memref<18x18x64xf32, #tpu.memory_space<vmem>>, vector<16x16x64xf32>
    %19 = vector.shape_cast %18 : vector<16x16x64xf32> to vector<256x64xf32>
    %20 = arith.truncf %19 : vector<256x64xf32> to vector<256x64xbf16>
    %c0_25 = arith.constant 0 : index
    %c192 = arith.constant 192 : index
    %21 = vector.load %arg6[%c0_25, %c192] : memref<256x576xbf16, #tpu.memory_space<vmem>>, vector<256x64xbf16>
    tpu.vector_store %arg6[%c0_25, %c192], %20 {strides = array<i32>} : memref<256x576xbf16, #tpu.memory_space<vmem>>, vector<256x64xbf16>,
    %c1_26 = arith.constant 1 : index
    %c1_27 = arith.constant 1 : index
    %c0_28 = arith.constant 0 : index
    %22 = vector.load %arg5[%c1_26, %c1_27, %c0_28] : memref<18x18x64xf32, #tpu.memory_space<vmem>>, vector<16x16x64xf32>
    %23 = vector.shape_cast %22 : vector<16x16x64xf32> to vector<256x64xf32>
    %24 = arith.truncf %23 : vector<256x64xf32> to vector<256x64xbf16>
    %c0_29 = arith.constant 0 : index
    %c256 = arith.constant 256 : index
    %25 = vector.load %arg6[%c0_29, %c256] : memref<256x576xbf16, #tpu.memory_space<vmem>>, vector<256x64xbf16>
    tpu.vector_store %arg6[%c0_29, %c256], %24 {strides = array<i32>} : memref<256x576xbf16, #tpu.memory_space<vmem>>, vector<256x64xbf16>,
    %c1_30 = arith.constant 1 : index
    %c2_31 = arith.constant 2 : index
    %c0_32 = arith.constant 0 : index
    %26 = vector.load %arg5[%c1_30, %c2_31, %c0_32] : memref<18x18x64xf32, #tpu.memory_space<vmem>>, vector<16x16x64xf32>
    %27 = vector.shape_cast %26 : vector<16x16x64xf32> to vector<256x64xf32>
    %28 = arith.truncf %27 : vector<256x64xf32> to vector<256x64xbf16>
    %c0_33 = arith.constant 0 : index
    %c320 = arith.constant 320 : index
    %29 = vector.load %arg6[%c0_33, %c320] : memref<256x576xbf16, #tpu.memory_space<vmem>>, vector<256x64xbf16>
    tpu.vector_store %arg6[%c0_33, %c320], %28 {strides = array<i32>} : memref<256x576xbf16, #tpu.memory_space<vmem>>, vector<256x64xbf16>,
    %c2_34 = arith.constant 2 : index
    %c0_35 = arith.constant 0 : index
    %c0_36 = arith.constant 0 : index
    %30 = vector.load %arg5[%c2_34, %c0_35, %c0_36] : memref<18x18x64xf32, #tpu.memory_space<vmem>>, vector<16x16x64xf32>
    %31 = vector.shape_cast %30 : vector<16x16x64xf32> to vector<256x64xf32>
    %32 = arith.truncf %31 : vector<256x64xf32> to vector<256x64xbf16>
    %c0_37 = arith.constant 0 : index
    %c384 = arith.constant 384 : index
    %33 = vector.load %arg6[%c0_37, %c384] : memref<256x576xbf16, #tpu.memory_space<vmem>>, vector<256x64xbf16>
    tpu.vector_store %arg6[%c0_37, %c384], %32 {strides = array<i32>} : memref<256x576xbf16, #tpu.memory_space<vmem>>, vector<256x64xbf16>,
    %c2_38 = arith.constant 2 : index
    %c1_39 = arith.constant 1 : index
    %c0_40 = arith.constant 0 : index
    %34 = vector.load %arg5[%c2_38, %c1_39, %c0_40] : memref<18x18x64xf32, #tpu.memory_space<vmem>>, vector<16x16x64xf32>
    %35 = vector.shape_cast %34 : vector<16x16x64xf32> to vector<256x64xf32>
    %36 = arith.truncf %35 : vector<256x64xf32> to vector<256x64xbf16>
    %c0_41 = arith.constant 0 : index
    %c448 = arith.constant 448 : index
    %37 = vector.load %arg6[%c0_41, %c448] : memref<256x576xbf16, #tpu.memory_space<vmem>>, vector<256x64xbf16>
    tpu.vector_store %arg6[%c0_41, %c448], %36 {strides = array<i32>} : memref<256x576xbf16, #tpu.memory_space<vmem>>, vector<256x64xbf16>,
    %c2_42 = arith.constant 2 : index
    %c2_43 = arith.constant 2 : index
    %c0_44 = arith.constant 0 : index
    %38 = vector.load %arg5[%c2_42, %c2_43, %c0_44] : memref<18x18x64xf32, #tpu.memory_space<vmem>>, vector<16x16x64xf32>
    %39 = vector.shape_cast %38 : vector<16x16x64xf32> to vector<256x64xf32>
    %40 = arith.truncf %39 : vector<256x64xf32> to vector<256x64xbf16>
    %c0_45 = arith.constant 0 : index
    %c512 = arith.constant 512 : index
    %41 = vector.load %arg6[%c0_45, %c512] : memref<256x576xbf16, #tpu.memory_space<vmem>>, vector<256x64xbf16>
    tpu.vector_store %arg6[%c0_45, %c512], %40 {strides = array<i32>} : memref<256x576xbf16, #tpu.memory_space<vmem>>, vector<256x64xbf16>,
    %c0_46 = arith.constant 0 : index
    %c0_47 = arith.constant 0 : index
    %42 = vector.load %arg6[%c0_46, %c0_47] : memref<256x576xbf16, #tpu.memory_space<vmem>>, vector<256x576xbf16>
    %c0_48 = arith.constant 0 : index
    %c0_49 = arith.constant 0 : index
    %43 = vector.load %arg2[%c0_48, %c0_49] : memref<576x64xbf16, #tpu.memory_space<vmem>>, vector<576x64xbf16>
    %cst_50 = arith.constant dense<0.000000e+00> : vector<256x64xf32>
    %44 = tpu.matmul %42, %43, %cst_50 {dimension_numbers = #tpu.dot_dimension_numbers<[1], [0], [0], [1], [0, 0, 1, 1], [], []>} : vector<256x576xbf16>, vector<576x64xbf16>, vector<256x64xf32> -> vector<256x64xf32>
    %45 = vector.broadcast %0 : vector<1x64xf32> to vector<256x64xf32>
    %46 = arith.addf %44, %45 : vector<256x64xf32>
    %47 = vector.shape_cast %46 : vector<256x64xf32> to vector<16x16x64xf32>
    %c1_51 = arith.constant 1 : index
    %c1_52 = arith.constant 1 : index
    %c0_53 = arith.constant 0 : index
    %48 = vector.load %arg5[%c1_51, %c1_52, %c0_53] : memref<18x18x64xf32, #tpu.memory_space<vmem>>, vector<16x16x64xf32>
    tpu.vector_store %arg5[%c1_51, %c1_52, %c0_53], %47 {strides = array<i32>} : memref<18x18x64xf32, #tpu.memory_space<vmem>>, vector<16x16x64xf32>,
    %c0_54 = arith.constant 0 : index
    %c0_55 = arith.constant 0 : index
    %c0_56 = arith.constant 0 : index
    %49 = vector.load %arg5[%c0_54, %c0_55, %c0_56] : memref<18x18x64xf32, #tpu.memory_space<vmem>>, vector<16x16x64xf32>
    %50 = vector.shape_cast %49 : vector<16x16x64xf32> to vector<256x64xf32>
    %51 = arith.truncf %50 : vector<256x64xf32> to vector<256x64xbf16>
    %c0_57 = arith.constant 0 : index
    %c0_58 = arith.constant 0 : index
    %52 = vector.load %arg6[%c0_57, %c0_58] : memref<256x576xbf16, #tpu.memory_space<vmem>>, vector<256x64xbf16>
    tpu.vector_store %arg6[%c0_57, %c0_58], %51 {strides = array<i32>} : memref<256x576xbf16, #tpu.memory_space<vmem>>, vector<256x64xbf16>,
    %c0_59 = arith.constant 0 : index
    %c1_60 = arith.constant 1 : index
    %c0_61 = arith.constant 0 : index
    %53 = vector.load %arg5[%c0_59, %c1_60, %c0_61] : memref<18x18x64xf32, #tpu.memory_space<vmem>>, vector<16x16x64xf32>
    %54 = vector.shape_cast %53 : vector<16x16x64xf32> to vector<256x64xf32>
    %55 = arith.truncf %54 : vector<256x64xf32> to vector<256x64xbf16>
    %c0_62 = arith.constant 0 : index
    %c64_63 = arith.constant 64 : index
    %56 = vector.load %arg6[%c0_62, %c64_63] : memref<256x576xbf16, #tpu.memory_space<vmem>>, vector<256x64xbf16>
    tpu.vector_store %arg6[%c0_62, %c64_63], %55 {strides = array<i32>} : memref<256x576xbf16, #tpu.memory_space<vmem>>, vector<256x64xbf16>,
    %c0_64 = arith.constant 0 : index
    %c2_65 = arith.constant 2 : index
    %c0_66 = arith.constant 0 : index
    %57 = vector.load %arg5[%c0_64, %c2_65, %c0_66] : memref<18x18x64xf32, #tpu.memory_space<vmem>>, vector<16x16x64xf32>
    %58 = vector.shape_cast %57 : vector<16x16x64xf32> to vector<256x64xf32>
    %59 = arith.truncf %58 : vector<256x64xf32> to vector<256x64xbf16>
    %c0_67 = arith.constant 0 : index
    %c128_68 = arith.constant 128 : index
    %60 = vector.load %arg6[%c0_67, %c128_68] : memref<256x576xbf16, #tpu.memory_space<vmem>>, vector<256x64xbf16>
    tpu.vector_store %arg6[%c0_67, %c128_68], %59 {strides = array<i32>} : memref<256x576xbf16, #tpu.memory_space<vmem>>, vector<256x64xbf16>,
    %c1_69 = arith.constant 1 : index
    %c0_70 = arith.constant 0 : index
    %c0_71 = arith.constant 0 : index
    %61 = vector.load %arg5[%c1_69, %c0_70, %c0_71] : memref<18x18x64xf32, #tpu.memory_space<vmem>>, vector<16x16x64xf32>
    %62 = vector.shape_cast %61 : vector<16x16x64xf32> to vector<256x64xf32>
    %63 = arith.truncf %62 : vector<256x64xf32> to vector<256x64xbf16>
    %c0_72 = arith.constant 0 : index
    %c192_73 = arith.constant 192 : index
    %64 = vector.load %arg6[%c0_72, %c192_73] : memref<256x576xbf16, #tpu.memory_space<vmem>>, vector<256x64xbf16>
    tpu.vector_store %arg6[%c0_72, %c192_73], %63 {strides = array<i32>} : memref<256x576xbf16, #tpu.memory_space<vmem>>, vector<256x64xbf16>,
    %c1_74 = arith.constant 1 : index
    %c1_75 = arith.constant 1 : index
    %c0_76 = arith.constant 0 : index
    %65 = vector.load %arg5[%c1_74, %c1_75, %c0_76] : memref<18x18x64xf32, #tpu.memory_space<vmem>>, vector<16x16x64xf32>
    %66 = vector.shape_cast %65 : vector<16x16x64xf32> to vector<256x64xf32>
    %67 = arith.truncf %66 : vector<256x64xf32> to vector<256x64xbf16>
    %c0_77 = arith.constant 0 : index
    %c256_78 = arith.constant 256 : index
    %68 = vector.load %arg6[%c0_77, %c256_78] : memref<256x576xbf16, #tpu.memory_space<vmem>>, vector<256x64xbf16>
    tpu.vector_store %arg6[%c0_77, %c256_78], %67 {strides = array<i32>} : memref<256x576xbf16, #tpu.memory_space<vmem>>, vector<256x64xbf16>,
    %c1_79 = arith.constant 1 : index
    %c2_80 = arith.constant 2 : index
    %c0_81 = arith.constant 0 : index
    %69 = vector.load %arg5[%c1_79, %c2_80, %c0_81] : memref<18x18x64xf32, #tpu.memory_space<vmem>>, vector<16x16x64xf32>
    %70 = vector.shape_cast %69 : vector<16x16x64xf32> to vector<256x64xf32>
    %71 = arith.truncf %70 : vector<256x64xf32> to vector<256x64xbf16>
    %c0_82 = arith.constant 0 : index
    %c320_83 = arith.constant 320 : index
    %72 = vector.load %arg6[%c0_82, %c320_83] : memref<256x576xbf16, #tpu.memory_space<vmem>>, vector<256x64xbf16>
    tpu.vector_store %arg6[%c0_82, %c320_83], %71 {strides = array<i32>} : memref<256x576xbf16, #tpu.memory_space<vmem>>, vector<256x64xbf16>,
    %c2_84 = arith.constant 2 : index
    %c0_85 = arith.constant 0 : index
    %c0_86 = arith.constant 0 : index
    %73 = vector.load %arg5[%c2_84, %c0_85, %c0_86] : memref<18x18x64xf32, #tpu.memory_space<vmem>>, vector<16x16x64xf32>
    %74 = vector.shape_cast %73 : vector<16x16x64xf32> to vector<256x64xf32>
    %75 = arith.truncf %74 : vector<256x64xf32> to vector<256x64xbf16>
    %c0_87 = arith.constant 0 : index
    %c384_88 = arith.constant 384 : index
    %76 = vector.load %arg6[%c0_87, %c384_88] : memref<256x576xbf16, #tpu.memory_space<vmem>>, vector<256x64xbf16>
    tpu.vector_store %arg6[%c0_87, %c384_88], %75 {strides = array<i32>} : memref<256x576xbf16, #tpu.memory_space<vmem>>, vector<256x64xbf16>,
    %c2_89 = arith.constant 2 : index
    %c1_90 = arith.constant 1 : index
    %c0_91 = arith.constant 0 : index
    %77 = vector.load %arg5[%c2_89, %c1_90, %c0_91] : memref<18x18x64xf32, #tpu.memory_space<vmem>>, vector<16x16x64xf32>
    %78 = vector.shape_cast %77 : vector<16x16x64xf32> to vector<256x64xf32>
    %79 = arith.truncf %78 : vector<256x64xf32> to vector<256x64xbf16>
    %c0_92 = arith.constant 0 : index
    %c448_93 = arith.constant 448 : index
    %80 = vector.load %arg6[%c0_92, %c448_93] : memref<256x576xbf16, #tpu.memory_space<vmem>>, vector<256x64xbf16>
    tpu.vector_store %arg6[%c0_92, %c448_93], %79 {strides = array<i32>} : memref<256x576xbf16, #tpu.memory_space<vmem>>, vector<256x64xbf16>,
    %c2_94 = arith.constant 2 : index
    %c2_95 = arith.constant 2 : index
    %c0_96 = arith.constant 0 : index
    %81 = vector.load %arg5[%c2_94, %c2_95, %c0_96] : memref<18x18x64xf32, #tpu.memory_space<vmem>>, vector<16x16x64xf32>
    %82 = vector.shape_cast %81 : vector<16x16x64xf32> to vector<256x64xf32>
    %83 = arith.truncf %82 : vector<256x64xf32> to vector<256x64xbf16>
    %c0_97 = arith.constant 0 : index
    %c512_98 = arith.constant 512 : index
    %84 = vector.load %arg6[%c0_97, %c512_98] : memref<256x576xbf16, #tpu.memory_space<vmem>>, vector<256x64xbf16>
    tpu.vector_store %arg6[%c0_97, %c512_98], %83 {strides = array<i32>} : memref<256x576xbf16, #tpu.memory_space<vmem>>, vector<256x64xbf16>,
    %c0_99 = arith.constant 0 : index
    %c0_100 = arith.constant 0 : index
    %85 = vector.load %arg6[%c0_99, %c0_100] : memref<256x576xbf16, #tpu.memory_space<vmem>>, vector<256x576xbf16>
    %c0_101 = arith.constant 0 : index
    %c0_102 = arith.constant 0 : index
    %86 = vector.load %arg2[%c0_101, %c0_102] : memref<576x64xbf16, #tpu.memory_space<vmem>>, vector<576x64xbf16>
    %cst_103 = arith.constant dense<0.000000e+00> : vector<256x64xf32>
    %87 = tpu.matmul %85, %86, %cst_103 {dimension_numbers = #tpu.dot_dimension_numbers<[1], [0], [0], [1], [0, 0, 1, 1], [], []>} : vector<256x576xbf16>, vector<576x64xbf16>, vector<256x64xf32> -> vector<256x64xf32>
    %88 = vector.broadcast %0 : vector<1x64xf32> to vector<256x64xf32>
    %89 = arith.addf %87, %88 : vector<256x64xf32>
    %90 = vector.shape_cast %89 : vector<256x64xf32> to vector<16x16x64xf32>
    %91 = arith.addf %47, %90 : vector<16x16x64xf32>
    %c1_104 = arith.constant 1 : index
    %c1_105 = arith.constant 1 : index
    %c0_106 = arith.constant 0 : index
    %92 = vector.load %arg5[%c1_104, %c1_105, %c0_106] : memref<18x18x64xf32, #tpu.memory_space<vmem>>, vector<16x16x64xf32>
    tpu.vector_store %arg5[%c1_104, %c1_105, %c0_106], %90 {strides = array<i32>} : memref<18x18x64xf32, #tpu.memory_space<vmem>>, vector<16x16x64xf32>,
    %c0_107 = arith.constant 0 : index
    %c0_108 = arith.constant 0 : index
    %c0_109 = arith.constant 0 : index
    %93 = vector.load %arg5[%c0_107, %c0_108, %c0_109] : memref<18x18x64xf32, #tpu.memory_space<vmem>>, vector<16x16x64xf32>
    %94 = vector.shape_cast %93 : vector<16x16x64xf32> to vector<256x64xf32>
    %95 = arith.truncf %94 : vector<256x64xf32> to vector<256x64xbf16>
    %c0_110 = arith.constant 0 : index
    %c0_111 = arith.constant 0 : index
    %96 = vector.load %arg6[%c0_110, %c0_111] : memref<256x576xbf16, #tpu.memory_space<vmem>>, vector<256x64xbf16>
    tpu.vector_store %arg6[%c0_110, %c0_111], %95 {strides = array<i32>} : memref<256x576xbf16, #tpu.memory_space<vmem>>, vector<256x64xbf16>,
    %c0_112 = arith.constant 0 : index
    %c1_113 = arith.constant 1 : index
    %c0_114 = arith.constant 0 : index
    %97 = vector.load %arg5[%c0_112, %c1_113, %c0_114] : memref<18x18x64xf32, #tpu.memory_space<vmem>>, vector<16x16x64xf32>
    %98 = vector.shape_cast %97 : vector<16x16x64xf32> to vector<256x64xf32>
    %99 = arith.truncf %98 : vector<256x64xf32> to vector<256x64xbf16>
    %c0_115 = arith.constant 0 : index
    %c64_116 = arith.constant 64 : index
    %100 = vector.load %arg6[%c0_115, %c64_116] : memref<256x576xbf16, #tpu.memory_space<vmem>>, vector<256x64xbf16>
    tpu.vector_store %arg6[%c0_115, %c64_116], %99 {strides = array<i32>} : memref<256x576xbf16, #tpu.memory_space<vmem>>, vector<256x64xbf16>,
    %c0_117 = arith.constant 0 : index
    %c2_118 = arith.constant 2 : index
    %c0_119 = arith.constant 0 : index
    %101 = vector.load %arg5[%c0_117, %c2_118, %c0_119] : memref<18x18x64xf32, #tpu.memory_space<vmem>>, vector<16x16x64xf32>
    %102 = vector.shape_cast %101 : vector<16x16x64xf32> to vector<256x64xf32>
    %103 = arith.truncf %102 : vector<256x64xf32> to vector<256x64xbf16>
    %c0_120 = arith.constant 0 : index
    %c128_121 = arith.constant 128 : index
    %104 = vector.load %arg6[%c0_120, %c128_121] : memref<256x576xbf16, #tpu.memory_space<vmem>>, vector<256x64xbf16>
    tpu.vector_store %arg6[%c0_120, %c128_121], %103 {strides = array<i32>} : memref<256x576xbf16, #tpu.memory_space<vmem>>, vector<256x64xbf16>,
    %c1_122 = arith.constant 1 : index
    %c0_123 = arith.constant 0 : index
    %c0_124 = arith.constant 0 : index
    %105 = vector.load %arg5[%c1_122, %c0_123, %c0_124] : memref<18x18x64xf32, #tpu.memory_space<vmem>>, vector<16x16x64xf32>
    %106 = vector.shape_cast %105 : vector<16x16x64xf32> to vector<256x64xf32>
    %107 = arith.truncf %106 : vector<256x64xf32> to vector<256x64xbf16>
    %c0_125 = arith.constant 0 : index
    %c192_126 = arith.constant 192 : index
    %108 = vector.load %arg6[%c0_125, %c192_126] : memref<256x576xbf16, #tpu.memory_space<vmem>>, vector<256x64xbf16>
    tpu.vector_store %arg6[%c0_125, %c192_126], %107 {strides = array<i32>} : memref<256x576xbf16, #tpu.memory_space<vmem>>, vector<256x64xbf16>,
    %c1_127 = arith.constant 1 : index
    %c1_128 = arith.constant 1 : index
    %c0_129 = arith.constant 0 : index
    %109 = vector.load %arg5[%c1_127, %c1_128, %c0_129] : memref<18x18x64xf32, #tpu.memory_space<vmem>>, vector<16x16x64xf32>
    %110 = vector.shape_cast %109 : vector<16x16x64xf32> to vector<256x64xf32>
    %111 = arith.truncf %110 : vector<256x64xf32> to vector<256x64xbf16>
    %c0_130 = arith.constant 0 : index
    %c256_131 = arith.constant 256 : index
    %112 = vector.load %arg6[%c0_130, %c256_131] : memref<256x576xbf16, #tpu.memory_space<vmem>>, vector<256x64xbf16>
    tpu.vector_store %arg6[%c0_130, %c256_131], %111 {strides = array<i32>} : memref<256x576xbf16, #tpu.memory_space<vmem>>, vector<256x64xbf16>,
    %c1_132 = arith.constant 1 : index
    %c2_133 = arith.constant 2 : index
    %c0_134 = arith.constant 0 : index
    %113 = vector.load %arg5[%c1_132, %c2_133, %c0_134] : memref<18x18x64xf32, #tpu.memory_space<vmem>>, vector<16x16x64xf32>
    %114 = vector.shape_cast %113 : vector<16x16x64xf32> to vector<256x64xf32>
    %115 = arith.truncf %114 : vector<256x64xf32> to vector<256x64xbf16>
    %c0_135 = arith.constant 0 : index
    %c320_136 = arith.constant 320 : index
    %116 = vector.load %arg6[%c0_135, %c320_136] : memref<256x576xbf16, #tpu.memory_space<vmem>>, vector<256x64xbf16>
    tpu.vector_store %arg6[%c0_135, %c320_136], %115 {strides = array<i32>} : memref<256x576xbf16, #tpu.memory_space<vmem>>, vector<256x64xbf16>,
    %c2_137 = arith.constant 2 : index
    %c0_138 = arith.constant 0 : index
    %c0_139 = arith.constant 0 : index
    %117 = vector.load %arg5[%c2_137, %c0_138, %c0_139] : memref<18x18x64xf32, #tpu.memory_space<vmem>>, vector<16x16x64xf32>
    %118 = vector.shape_cast %117 : vector<16x16x64xf32> to vector<256x64xf32>
    %119 = arith.truncf %118 : vector<256x64xf32> to vector<256x64xbf16>
    %c0_140 = arith.constant 0 : index
    %c384_141 = arith.constant 384 : index
    %120 = vector.load %arg6[%c0_140, %c384_141] : memref<256x576xbf16, #tpu.memory_space<vmem>>, vector<256x64xbf16>
    tpu.vector_store %arg6[%c0_140, %c384_141], %119 {strides = array<i32>} : memref<256x576xbf16, #tpu.memory_space<vmem>>, vector<256x64xbf16>,
    %c2_142 = arith.constant 2 : index
    %c1_143 = arith.constant 1 : index
    %c0_144 = arith.constant 0 : index
    %121 = vector.load %arg5[%c2_142, %c1_143, %c0_144] : memref<18x18x64xf32, #tpu.memory_space<vmem>>, vector<16x16x64xf32>
    %122 = vector.shape_cast %121 : vector<16x16x64xf32> to vector<256x64xf32>
    %123 = arith.truncf %122 : vector<256x64xf32> to vector<256x64xbf16>
    %c0_145 = arith.constant 0 : index
    %c448_146 = arith.constant 448 : index
    %124 = vector.load %arg6[%c0_145, %c448_146] : memref<256x576xbf16, #tpu.memory_space<vmem>>, vector<256x64xbf16>
    tpu.vector_store %arg6[%c0_145, %c448_146], %123 {strides = array<i32>} : memref<256x576xbf16, #tpu.memory_space<vmem>>, vector<256x64xbf16>,
    %c2_147 = arith.constant 2 : index
    %c2_148 = arith.constant 2 : index
    %c0_149 = arith.constant 0 : index
    %125 = vector.load %arg5[%c2_147, %c2_148, %c0_149] : memref<18x18x64xf32, #tpu.memory_space<vmem>>, vector<16x16x64xf32>
    %126 = vector.shape_cast %125 : vector<16x16x64xf32> to vector<256x64xf32>
    %127 = arith.truncf %126 : vector<256x64xf32> to vector<256x64xbf16>
    %c0_150 = arith.constant 0 : index
    %c512_151 = arith.constant 512 : index
    %128 = vector.load %arg6[%c0_150, %c512_151] : memref<256x576xbf16, #tpu.memory_space<vmem>>, vector<256x64xbf16>
    tpu.vector_store %arg6[%c0_150, %c512_151], %127 {strides = array<i32>} : memref<256x576xbf16, #tpu.memory_space<vmem>>, vector<256x64xbf16>,
    %c0_152 = arith.constant 0 : index
    %c0_153 = arith.constant 0 : index
    %129 = vector.load %arg6[%c0_152, %c0_153] : memref<256x576xbf16, #tpu.memory_space<vmem>>, vector<256x576xbf16>
    %c0_154 = arith.constant 0 : index
    %c0_155 = arith.constant 0 : index
    %130 = vector.load %arg2[%c0_154, %c0_155] : memref<576x64xbf16, #tpu.memory_space<vmem>>, vector<576x64xbf16>
    %cst_156 = arith.constant dense<0.000000e+00> : vector<256x64xf32>
    %131 = tpu.matmul %129, %130, %cst_156 {dimension_numbers = #tpu.dot_dimension_numbers<[1], [0], [0], [1], [0, 0, 1, 1], [], []>} : vector<256x576xbf16>, vector<576x64xbf16>, vector<256x64xf32> -> vector<256x64xf32>
    %132 = vector.broadcast %0 : vector<1x64xf32> to vector<256x64xf32>
    %133 = arith.addf %131, %132 : vector<256x64xf32>
    %134 = vector.shape_cast %133 : vector<256x64xf32> to vector<16x16x64xf32>
    %135 = arith.addf %91, %134 : vector<16x16x64xf32>
    %c0_157 = arith.constant 0 : index
    %c0_158 = arith.constant 0 : index
    %c0_159 = arith.constant 0 : index
    %c0_160 = arith.constant 0 : index
    %136 = vector.load %arg1[%c0_157, %c0_158, %c0_159, %c0_160] : memref<1x16x16x64xf32, #tpu.memory_space<vmem>>, vector<1x16x16x64xf32>
    %137 = vector.shape_cast %136 : vector<1x16x16x64xf32> to vector<16x16x64xf32>
    %c1_161 = arith.constant 1 : index
    %c1_162 = arith.constant 1 : index
    %c0_163 = arith.constant 0 : index
    %138 = vector.load %arg5[%c1_161, %c1_162, %c0_163] : memref<18x18x64xf32, #tpu.memory_space<vmem>>, vector<16x16x64xf32>
    tpu.vector_store %arg5[%c1_161, %c1_162, %c0_163], %137 {strides = array<i32>} : memref<18x18x64xf32, #tpu.memory_space<vmem>>, vector<16x16x64xf32>,
    %139 = tpu.iota {dimensions = array<i32: 0>} : vector<16x16x1xi32>
    %140 = tpu.iota {dimensions = array<i32: 1>} : vector<16x16x1xi32>
    %c2_i32 = arith.constant 2 : i32
    %c0_i32 = arith.constant 0 : i32
    %141 = arith.cmpi eq, %c2_i32, %c0_i32 : i32
    %c1_i32 = arith.constant 1 : i32
    %142 = arith.select %141, %c1_i32, %c2_i32 : i32
    %143 = vector.broadcast %142 : i32 to vector<16x16x1xi32>
    %144 = arith.remsi %139, %143 : vector<16x16x1xi32>
    %c0_i32_164 = arith.constant 0 : i32
    %145 = vector.broadcast %c0_i32_164 : i32 to vector<16x16x1xi32>
    %146 = arith.cmpi ne, %144, %145 : vector<16x16x1xi32>
    %c0_i32_165 = arith.constant 0 : i32
    %147 = vector.broadcast %c0_i32_165 : i32 to vector<16x16x1xi32>
    %148 = arith.cmpi slt, %144, %147 : vector<16x16x1xi32>
    %c0_i32_166 = arith.constant 0 : i32
    %149 = arith.cmpi slt, %142, %c0_i32_166 : i32
    %150 = vector.broadcast %149 : i1 to vector<16x16x1xi1>
    %151 = vector.broadcast %150 : vector<16x16x1xi1> to vector<16x16x1xi1>
    %152 = arith.xori %148, %151 : vector<16x16x1xi1>
    %153 = arith.andi %152, %146 : vector<16x16x1xi1>
    %154 = vector.broadcast %142 : i32 to vector<16x16x1xi32>
    %155 = arith.addi %144, %154 : vector<16x16x1xi32>
    %156 = arith.select %153, %155, %144 : vector<16x16x1xi1>, vector<16x16x1xi32>
    %c0_i32_167 = arith.constant 0 : i32
    %157 = vector.broadcast %c0_i32_167 : i32 to vector<16x16x1xi32>
    %158 = arith.cmpi eq, %156, %157 : vector<16x16x1xi32>
    %c2_i32_168 = arith.constant 2 : i32
    %c0_i32_169 = arith.constant 0 : i32
    %159 = arith.cmpi eq, %c2_i32_168, %c0_i32_169 : i32
    %c1_i32_170 = arith.constant 1 : i32
    %160 = arith.select %159, %c1_i32_170, %c2_i32_168 : i32
    %161 = vector.broadcast %160 : i32 to vector<16x16x1xi32>
    %162 = arith.remsi %140, %161 : vector<16x16x1xi32>
    %c0_i32_171 = arith.constant 0 : i32
    %163 = vector.broadcast %c0_i32_171 : i32 to vector<16x16x1xi32>
    %164 = arith.cmpi ne, %162, %163 : vector<16x16x1xi32>
    %c0_i32_172 = arith.constant 0 : i32
    %165 = vector.broadcast %c0_i32_172 : i32 to vector<16x16x1xi32>
    %166 = arith.cmpi slt, %162, %165 : vector<16x16x1xi32>
    %c0_i32_173 = arith.constant 0 : i32
    %167 = arith.cmpi slt, %160, %c0_i32_173 : i32
    %168 = vector.broadcast %167 : i1 to vector<16x16x1xi1>
    %169 = vector.broadcast %168 : vector<16x16x1xi1> to vector<16x16x1xi1>
    %170 = arith.xori %166, %169 : vector<16x16x1xi1>
    %171 = arith.andi %170, %164 : vector<16x16x1xi1>
    %172 = vector.broadcast %160 : i32 to vector<16x16x1xi32>
    %173 = arith.addi %162, %172 : vector<16x16x1xi32>
    %174 = arith.select %171, %173, %162 : vector<16x16x1xi1>, vector<16x16x1xi32>
    %c0_i32_174 = arith.constant 0 : i32
    %175 = vector.broadcast %c0_i32_174 : i32 to vector<16x16x1xi32>
    %176 = arith.cmpi eq, %174, %175 : vector<16x16x1xi32>
    %c1_175 = arith.constant 1 : index
    %c1_176 = arith.constant 1 : index
    %c0_177 = arith.constant 0 : index
    %177 = vector.load %arg5[%c1_175, %c1_176, %c0_177] : memref<18x18x64xf32, #tpu.memory_space<vmem>>, vector<16x16x64xf32>
    %c2_178 = arith.constant 2 : index
    %c1_179 = arith.constant 1 : index
    %c0_180 = arith.constant 0 : index
    %178 = vector.load %arg5[%c2_178, %c1_179, %c0_180] : memref<18x18x64xf32, #tpu.memory_space<vmem>>, vector<16x16x64xf32>
    %c0_181 = arith.constant 0 : index
    %c1_182 = arith.constant 1 : index
    %c0_183 = arith.constant 0 : index
    %179 = vector.load %arg5[%c0_181, %c1_182, %c0_183] : memref<18x18x64xf32, #tpu.memory_space<vmem>>, vector<16x16x64xf32>
    %180 = vector.shape_cast %158 : vector<16x16x1xi1> to vector<16x16x1xi1>
    %181 = vector.broadcast %180 : vector<16x16x1xi1> to vector<16x16x64xi1>
    %182 = arith.select %181, %178, %179 : vector<16x16x64xi1>, vector<16x16x64xf32>
    %c1_184 = arith.constant 1 : index
    %c2_185 = arith.constant 2 : index
    %c0_186 = arith.constant 0 : index
    %183 = vector.load %arg5[%c1_184, %c2_185, %c0_186] : memref<18x18x64xf32, #tpu.memory_space<vmem>>, vector<16x16x64xf32>
    %c1_187 = arith.constant 1 : index
    %c0_188 = arith.constant 0 : index
    %c0_189 = arith.constant 0 : index
    %184 = vector.load %arg5[%c1_187, %c0_188, %c0_189] : memref<18x18x64xf32, #tpu.memory_space<vmem>>, vector<16x16x64xf32>
    %185 = vector.shape_cast %176 : vector<16x16x1xi1> to vector<16x16x1xi1>
    %186 = vector.broadcast %185 : vector<16x16x1xi1> to vector<16x16x64xi1>
    %187 = arith.select %186, %183, %184 : vector<16x16x64xi1>, vector<16x16x64xf32>
    %c2_190 = arith.constant 2 : index
    %c2_191 = arith.constant 2 : index
    %c0_192 = arith.constant 0 : index
    %188 = vector.load %arg5[%c2_190, %c2_191, %c0_192] : memref<18x18x64xf32, #tpu.memory_space<vmem>>, vector<16x16x64xf32>
    %c2_193 = arith.constant 2 : index
    %c0_194 = arith.constant 0 : index
    %c0_195 = arith.constant 0 : index
    %189 = vector.load %arg5[%c2_193, %c0_194, %c0_195] : memref<18x18x64xf32, #tpu.memory_space<vmem>>, vector<16x16x64xf32>
    %190 = vector.shape_cast %176 : vector<16x16x1xi1> to vector<16x16x1xi1>
    %191 = vector.broadcast %190 : vector<16x16x1xi1> to vector<16x16x64xi1>
    %192 = arith.select %191, %188, %189 : vector<16x16x64xi1>, vector<16x16x64xf32>
    %c0_196 = arith.constant 0 : index
    %c2_197 = arith.constant 2 : index
    %c0_198 = arith.constant 0 : index
    %193 = vector.load %arg5[%c0_196, %c2_197, %c0_198] : memref<18x18x64xf32, #tpu.memory_space<vmem>>, vector<16x16x64xf32>
    %c0_199 = arith.constant 0 : index
    %c0_200 = arith.constant 0 : index
    %c0_201 = arith.constant 0 : index
    %194 = vector.load %arg5[%c0_199, %c0_200, %c0_201] : memref<18x18x64xf32, #tpu.memory_space<vmem>>, vector<16x16x64xf32>
    %195 = vector.shape_cast %176 : vector<16x16x1xi1> to vector<16x16x1xi1>
    %196 = vector.broadcast %195 : vector<16x16x1xi1> to vector<16x16x64xi1>
    %197 = arith.select %196, %193, %194 : vector<16x16x64xi1>, vector<16x16x64xf32>
    %198 = vector.shape_cast %158 : vector<16x16x1xi1> to vector<16x16x1xi1>
    %199 = vector.broadcast %198 : vector<16x16x1xi1> to vector<16x16x64xi1>
    %200 = arith.select %199, %192, %197 : vector<16x16x64xi1>, vector<16x16x64xf32>
    %201 = arith.addf %177, %182 : vector<16x16x64xf32>
    %202 = arith.addf %201, %187 : vector<16x16x64xf32>
    %203 = arith.addf %202, %200 : vector<16x16x64xf32>
    %cst_202 = arith.constant 2.500000e-01 : f32
    %204 = vector.broadcast %cst_202 : f32 to vector<16x16x64xf32>
    %205 = arith.mulf %204, %203 : vector<16x16x64xf32>
    %cst_203 = arith.constant 0.000000e+00 : f32
    %206 = vector.broadcast %cst_203 : f32 to vector<16x16x64xf32>
    %207 = arith.maximumf %205, %206 : vector<16x16x64xf32>
    %c0_204 = arith.constant 0 : index
    %c0_205 = arith.constant 0 : index
    %c0_206 = arith.constant 0 : index
    %c0_207 = arith.constant 0 : index
    %208 = vector.load %arg1[%c0_204, %c0_205, %c0_206, %c0_207] : memref<1x16x16x64xf32, #tpu.memory_space<vmem>>, vector<1x16x16x64xf32>
    %209 = vector.shape_cast %208 : vector<1x16x16x64xf32> to vector<16x16x64xf32>
    %210 = arith.mulf %207, %135 : vector<16x16x64xf32>
    %211 = arith.addf %209, %210 : vector<16x16x64xf32>
    %c0_208 = arith.constant 0 : index
    %c0_209 = arith.constant 0 : index
    %c0_210 = arith.constant 0 : index
    %c0_211 = arith.constant 0 : index
    %212 = vector.load %arg4[%c0_208, %c0_209, %c0_210, %c0_211] : memref<1x16x16x64xf32, #tpu.memory_space<vmem>>, vector<1x16x16x64xf32>
    %213 = vector.shape_cast %212 : vector<1x16x16x64xf32> to vector<16x16x64xf32>
    %214 = vector.shape_cast %211 : vector<16x16x64xf32> to vector<1x16x16x64xf32>
    tpu.vector_store %arg4[%c0_208, %c0_209, %c0_210, %c0_211], %214 {strides = array<i32>} : memref<1x16x16x64xf32, #tpu.memory_space<vmem>>, vector<1x16x16x64xf32>,
    return
  }
  func.func @transform_0(%arg0: i32) -> (i32, i32, i32, i32) {
    %c0_i32 = arith.constant 0 : i32
    %c0_i32_0 = arith.constant 0 : i32
    %c0_i32_1 = arith.constant 0 : i32
    %c0_i32_2 = arith.constant 0 : i32
    return %arg0, %c0_i32, %c0_i32_0, %c0_i32_1 : i32, i32, i32, i32
  }
  func.func @transform_1(%arg0: i32) -> (i32, i32) {
    %c0_i32 = arith.constant 0 : i32
    %c0_i32_0 = arith.constant 0 : i32
    %c0_i32_1 = arith.constant 0 : i32
    return %c0_i32, %c0_i32_0 : i32, i32
  }
  func.func @transform_2(%arg0: i32) -> (i32, i32) {
    %c0_i32 = arith.constant 0 : i32
    %c0_i32_0 = arith.constant 0 : i32
    %c0_i32_1 = arith.constant 0 : i32
    return %c0_i32, %c0_i32_0 : i32, i32
  }
  func.func @transform_3(%arg0: i32) -> (i32, i32, i32, i32) {
    %c0_i32 = arith.constant 0 : i32
    %c0_i32_0 = arith.constant 0 : i32
    %c0_i32_1 = arith.constant 0 : i32
    %c0_i32_2 = arith.constant 0 : i32
    return %arg0, %c0_i32, %c0_i32_0, %c0_i32_1 : i32, i32, i32, i32
  }
}

</mosaic_0001>

<llo_original>
// kernel: tpu_custom_call.1
$region0: #{tpu_custom_call.1}
  #allocation0 [shape = 'u32[]', space=smem, size = 0x4, offset = 0x4, fixed_abs, tag = 'smem constant byte address 0x4 - core index']
  #allocation1 [shape = 'u32[72,128]{1,0:T(1,128)}', space=vmem, size = 0x9000, scoped, tag = 'internal scratch']
  #allocation2 [shape = 'f32[18,18,64]{2,1,0:T(8,128)}', space=vmem, size = 0x36000, scoped, tag = 'scratch operand']
  #allocation3 [shape = 'bf16[256,576]{1,0:T(8,128)(2,1)}', space=vmem, size = 0x50000, scoped, tag = 'scratch operand']
  %s0 = inlined_call_operand.hbm [shape: f32[2,16,16,64], index: 0, kind: input, shape index: {}]
  %s1 = inlined_call_operand.vmem [shape: bf16[576,64], index: 1, kind: input, shape index: {}]
  %s2 = inlined_call_operand.vmem [shape: f32[1,64], index: 2, kind: input, shape index: {}]
  %s3 = inlined_call_operand.hbm [shape: f32[2,16,16,64], index: 3, kind: output, shape index: {}]
  %s4 = sld [smem:[#allocation0]]
  $region49: #{tpu_custom_call.1} parent=0
    _
  %s6 = ssub.s32 1, %s4
  %s7 = scalar_select 0, %s6, %s4
  $region1: #{tpu_custom_call.1} parent=0
    #allocation4 [shape = 'u8[262144]{0}', space=vmem, size = 0x40000, scoped, tag = 'input window, operand 0']
    #allocation5 [shape = 's32[2]{0}', space=sflag, size = 0x8, scoped, tag = 'scoped memory for tpu_custom_call.1']
    #allocation6 [shape = 's32[2]{0}', space=sflag, size = 0x8, scoped, tag = 'scoped memory for tpu_custom_call.1']
    #allocation7 [shape = 'u8[262144]{0}', space=vmem, size = 0x40000, scoped, tag = 'output window, operand 0']
    %8 = vsyncpa [#allocation5], 0
    %s9 = scalar_lea.sflag [#allocation5], 1
    %10 = vsyncpa %s9, 0
    %11 = vsyncpa [#allocation6], 0
    %s12 = scalar_lea.sflag [#allocation6], 1
    %13 = vsyncpa %s12, 0
    loop: start=0, step=1, limit=4
    $region2: #{tpu_custom_call.1} parent=1 // loop_pre_header
      _
    $region3: #{tpu_custom_call.1} parent=1 // loop_header
      %s15 = sphi 0, %s19
      %p16 = scmp.ge.s32.totalorder %s15, 4
      %s25 = sphi 0, %s27
      %s28 = sphi 0, %s25
      %s29 = sphi 0, %s28
      %s45 = sphi 0, %s29
      %s49 = sphi 0, %s49
      %s51 = sphi 0, %s49
      %s52 = sphi 0, %s51
      %s66 = sphi 0, %s52
      %s70 = sphi 0, %s70
      %s72 = sphi 0, %s70
      %s73 = sphi 0, %s72
      %s87 = sphi 0, %s73
      %s93 = sphi 0, %s95
      %s96 = sphi 0, %s93
      %s97 = sphi 0, %s96
      %s113 = sphi 0, %s97
    $region4: #{tpu_custom_call.1} parent=1 // loop_header_branch
      %18 = sbr.rel (%p16) target = $region8
    $region5: #{tpu_custom_call.1} parent=1 // loop_body
      %s20 = ssub.s32 %s15, 1
      %s21 = ssub.s32 %s15, 2
      %s22 = sadd.s32 %s15, 1
      %s23 = ssub.s32 %s15, %s22
      %p24 = scmp.eq.s32.totalorder %s23, 0
      %s26 = sadd.s32 %s25, 1
      %s27 = scalar_select %p24, %s25, %s26
      %p30 = pneg %p24
      %p31 = scmp.eq.s32.totalorder %s15, 1
      %p32 = por %p30, %p31
      %p33 = scmp.ne.s32.totalorder %s25, %s28
      %p34 = scmp.eq.s32.totalorder %s15, 0
      %p35 = por %p33, %p34
      %p36 = scmp.ne.s32.totalorder %s25, %s28
      %p37 = scmp.eq.s32.totalorder %s20, 1
      %p38 = por %p36, %p37
      %p39 = scmp.ne.s32.totalorder %s28, %s29
      %p40 = scmp.eq.s32.totalorder %s20, 0
      %p41 = por %p39, %p40
      %p42 = scmp.ne.s32.totalorder %s28, %s29
      %p43 = scmp.eq.s32.totalorder %s21, 1
      %p44 = por %p42, %p43
      %p46 = scmp.ne.s32.totalorder %s29, %s45
      %p47 = scmp.eq.s32.totalorder %s21, 0
      %p48 = por %p46, %p47
      %s50 = sadd.s32 %s49, 1
      %p53 = scmp.eq.s32.totalorder %s15, 1
      %p54 = scmp.ne.s32.totalorder %s49, %s51
      %p55 = scmp.eq.s32.totalorder %s15, 0
      %p56 = por %p54, %p55
      %p57 = scmp.ne.s32.totalorder %s49, %s51
      %p58 = scmp.eq.s32.totalorder %s20, 1
      %p59 = por %p57, %p58
      %p60 = scmp.ne.s32.totalorder %s51, %s52
      %p61 = scmp.eq.s32.totalorder %s20, 0
      %p62 = por %p60, %p61
      %p63 = scmp.ne.s32.totalorder %s51, %s52
      %p64 = scmp.eq.s32.totalorder %s21, 1
      %p65 = por %p63, %p64
      %p67 = scmp.ne.s32.totalorder %s52, %s66
      %p68 = scmp.eq.s32.totalorder %s21, 0
      %p69 = por %p67, %p68
      %s71 = sadd.s32 %s70, 1
      %p74 = scmp.eq.s32.totalorder %s15, 1
      %p75 = scmp.ne.s32.totalorder %s70, %s72
      %p76 = scmp.eq.s32.totalorder %s15, 0
      %p77 = por %p75, %p76
      %p78 = scmp.ne.s32.totalorder %s70, %s72
      %p79 = scmp.eq.s32.totalorder %s20, 1
      %p80 = por %p78, %p79
      %p81 = scmp.ne.s32.totalorder %s72, %s73
      %p82 = scmp.eq.s32.totalorder %s20, 0
      %p83 = por %p81, %p82
      %p84 = scmp.ne.s32.totalorder %s72, %s73
      %p85 = scmp.eq.s32.totalorder %s21, 1
      %p86 = por %p84, %p85
      %p88 = scmp.ne.s32.totalorder %s73, %s87
      %p89 = scmp.eq.s32.totalorder %s21, 0
      %p90 = por %p88, %p89
      %s91 = ssub.s32 %s15, %s22
      %p92 = scmp.eq.s32.totalorder %s91, 0
      %s94 = sadd.s32 %s93, 1
      %s95 = scalar_select %p92, %s93, %s94
      %p98 = pneg %p92
      %p99 = scmp.eq.s32.totalorder %s15, 1
      %p100 = por %p98, %p99
      %p101 = scmp.ne.s32.totalorder %s93, %s96
      %p102 = scmp.eq.s32.totalorder %s15, 0
      %p103 = por %p101, %p102
      %p104 = scmp.ne.s32.totalorder %s93, %s96
      %p105 = scmp.eq.s32.totalorder %s20, 1
      %p106 = por %p104, %p105
      %p107 = scmp.ne.s32.totalorder %s96, %s97
      %p108 = scmp.eq.s32.totalorder %s20, 0
      %p109 = por %p107, %p108
      %p110 = scmp.ne.s32.totalorder %s96, %s97
      %p111 = scmp.eq.s32.totalorder %s21, 1
      %p112 = por %p110, %p111
      %p114 = scmp.ne.s32.totalorder %s97, %s113
      %p115 = scmp.eq.s32.totalorder %s21, 0
      %p116 = por %p114, %p115
      %p117 = scmp.le.s32.totalorder 1, %s15
      %p118 = scmp.lt.s32.totalorder %s15, 3
      %p119 = pnand %p117, %p118
      %p120 = pneg %p119
      // Predicated region
      $region9: #{tpu_custom_call.1} parent=5 // pred_check
        _
      $region10: #{tpu_custom_call.1} parent=5 // pred_check_branch
        %122 = sbr.rel (%p119) target = $region12
      $region11: #{tpu_custom_call.1} parent=5 // pred_region
        %s123 = ssub.s32 %s15, 1
        // Predicated region
        $region13: #{tpu_custom_call.1} parent=11 // pred_check
          %p124 = pneg %p62
        $region14: #{tpu_custom_call.1} parent=11 // pred_check_branch
          %126 = sbr.rel (%p124) target = $region16
        $region15: #{tpu_custom_call.1} parent=11 // pred_region
          _
        $region16: #{tpu_custom_call.1} parent=11 // pred_fallthru
          _
        // Predicated region
        $region17: #{tpu_custom_call.1} parent=11 // pred_check
          %p127 = pneg %p83
        $region18: #{tpu_custom_call.1} parent=11 // pred_check_branch
          %129 = sbr.rel (%p127) target = $region20
        $region19: #{tpu_custom_call.1} parent=11 // pred_region
          _
        $region20: #{tpu_custom_call.1} parent=11 // pred_fallthru
          _
      $region12: #{tpu_custom_call.1} parent=5 // pred_fallthru
        _
      %p130 = scmp.lt.s32.totalorder %s15, 2
      // Predicated region
      $region21: #{tpu_custom_call.1} parent=5 // pred_check
        %p131 = pneg %p130
      $region22: #{tpu_custom_call.1} parent=5 // pred_check_branch
        %133 = sbr.rel (%p131) target = $region24
      $region23: #{tpu_custom_call.1} parent=5 // pred_region
        // Predicated region
        $region25: #{tpu_custom_call.1} parent=23 // pred_check
          %p134 = pneg %p35
        $region26: #{tpu_custom_call.1} parent=23 // pred_check_branch
          %136 = sbr.rel (%p134) target = $region28
        $region27: #{tpu_custom_call.1} parent=23 // pred_region
          %s137 = sand.u32 %s25, 1
          %s138 = scalar_lea.sflag [#allocation5], %s137
          %s139 = sand.u32 %s25, 1
          %s140 = smul.addr %s139, 256
          %s141 = scalar_lea.vmem [#allocation4], %s140
          %143 = vsyncadd %s138, 0
          %s144 = smul.addr %s15, 32
          %s145 = smul.addr %s144, 8
          %s146 = scalar_lea.hbm %s0, %s145
          %s147 = sshll.u32 %s146, 4
          %s148 = int_to_ptr.hbm [resolvable:$true] %s147
          %s149 = sshll.u32 %s141, 4
          %s150 = int_to_ptr.vmem [resolvable:$true] %s149
          %155 = dma.hbm_to_vmem [thread:$0]  %s148, 4096, %s150, %s138, 128, 128, 8
        $region28: #{tpu_custom_call.1} parent=23 // pred_fallthru
          _
      $region24: #{tpu_custom_call.1} parent=5 // pred_fallthru
        _
      %p156 = scmp.le.s32.totalorder 1, %s15
      %p157 = scmp.lt.s32.totalorder %s15, 3
      %p158 = pnand %p156, %p157
      %p159 = pneg %p158
      // Predicated region
      $region29: #{tpu_custom_call.1} parent=5 // pred_check
        _
      $region30: #{tpu_custom_call.1} parent=5 // pred_check_branch
        %161 = sbr.rel (%p158) target = $region32
      $region31: #{tpu_custom_call.1} parent=5 // pred_region
        %s162 = ssub.s32 %s15, 1
        %s163 = sand.u32 %s28, 1
        %s164 = scalar_lea.sflag [#allocation5], %s163
        %s165 = sand.u32 %s28, 1
        %s166 = smul.addr %s165, 256
        %s167 = scalar_lea.vmem [#allocation4], %s166
        // Predicated region
        $region33: #{tpu_custom_call.1} parent=31 // pred_check
          %p168 = pneg %p41
        $region34: #{tpu_custom_call.1} parent=31 // pred_check_branch
          %170 = sbr.rel (%p168) target = $region36
        $region35: #{tpu_custom_call.1} parent=31 // pred_region
          %172 = dma.done %s164, 4096
        $region36: #{tpu_custom_call.1} parent=31 // pred_fallthru
          _
        %s173 = sand.u32 %s28, 1
        %s174 = scalar_lea.sflag [#allocation5], %s173
        %s175 = sand.u32 %s28, 1
        %s176 = smul.addr %s175, 256
        %s177 = scalar_lea.vmem [#allocation4], %s176
        %p178 = pneg %p41
        %p179 = pneg %p38
        %p180 = pneg %p62
        %p181 = pneg %p59
        %p182 = pneg %p83
        %p183 = pneg %p80
        %p184 = pneg %p109
        %p185 = pneg %p106
        %s186 = sand.u32 %s96, 1
        %s187 = scalar_lea.sflag [#allocation6], %s186
        %s188 = sand.u32 %s96, 1
        %s189 = smul.addr %s188, 256
        %s190 = scalar_lea.vmem [#allocation7], %s189
        %v192 = vld [vmem:[%s2] sm:$0x1]
        %vm193 = vcmask 523264
        %194 = vst.msk [vmem:[#allocation2] sm:$0xff] %vm193, 0.0
        %195 = vst.msk [vmem:[#allocation2 + $0x8] sm:$0xff] %vm193, 0.0
        %vm196 = vcmask 517120
        %197 = vst.msk [vmem:[#allocation2 + $0x10] sm:$0x3] %vm196, 0.0
        %198 = vst.msk [vmem:[#allocation2 + $0x18] sm:$0xff] %vm193, 0.0
        %199 = vst.msk [vmem:[#allocation2 + $0x20] sm:$0xff] %vm193, 0.0
        %200 = vst.msk [vmem:[#allocation2 + $0x28] sm:$0x3] %vm196, 0.0
        %201 = vst.msk [vmem:[#allocation2 + $0x30] sm:$0xff] %vm193, 0.0
        %202 = vst.msk [vmem:[#allocation2 + $0x38] sm:$0xff] %vm193, 0.0
        %203 = vst.msk [vmem:[#allocation2 + $0x40] sm:$0x3] %vm196, 0.0
        %204 = vst.msk [vmem:[#allocation2 + $0x48] sm:$0xff] %vm193, 0.0
        %205 = vst.msk [vmem:[#allocation2 + $0x50] sm:$0xff] %vm193, 0.0
        %206 = vst.msk [vmem:[#allocation2 + $0x58] sm:$0x3] %vm196, 0.0
        %207 = vst.msk [vmem:[#allocation2 + $0x60] sm:$0xff] %vm193, 0.0
        %208 = vst.msk [vmem:[#allocation2 + $0x68] sm:$0xff] %vm193, 0.0
        %209 = vst.msk [vmem:[#allocation2 + $0x70] sm:$0x3] %vm196, 0.0
        %210 = vst.msk [vmem:[#allocation2 + $0x78] sm:$0xff] %vm193, 0.0
        %211 = vst.msk [vmem:[#allocation2 + $0x80] sm:$0xff] %vm193, 0.0
        %212 = vst.msk [vmem:[#allocation2 + $0x88] sm:$0x3] %vm196, 0.0
        %213 = vst.msk [vmem:[#allocation2 + $0x90] sm:$0xff] %vm193, 0.0
        %214 = vst.msk [vmem:[#allocation2 + $0x98] sm:$0xff] %vm193, 0.0
        %215 = vst.msk [vmem:[#allocation2 + $0xa0] sm:$0x3] %vm196, 0.0
        %216 = vst.msk [vmem:[#allocation2 + $0xa8] sm:$0xff] %vm193, 0.0
        %217 = vst.msk [vmem:[#allocation2 + $0xb0] sm:$0xff] %vm193, 0.0
        %218 = vst.msk [vmem:[#allocation2 + $0xb8] sm:$0x3] %vm196, 0.0
        %219 = vst.msk [vmem:[#allocation2 + $0xc0] sm:$0xff] %vm193, 0.0
        %220 = vst.msk [vmem:[#allocation2 + $0xc8] sm:$0xff] %vm193, 0.0
        %221 = vst.msk [vmem:[#allocation2 + $0xd0] sm:$0x3] %vm196, 0.0
        %222 = vst.msk [vmem:[#allocation2 + $0xd8] sm:$0xff] %vm193, 0.0
        %223 = vst.msk [vmem:[#allocation2 + $0xe0] sm:$0xff] %vm193, 0.0
        %224 = vst.msk [vmem:[#allocation2 + $0xe8] sm:$0x3] %vm196, 0.0
        %225 = vst.msk [vmem:[#allocation2 + $0xf0] sm:$0xff] %vm193, 0.0
        %226 = vst.msk [vmem:[#allocation2 + $0xf8] sm:$0xff] %vm193, 0.0
        %227 = vst.msk [vmem:[#allocation2 + $0x100] sm:$0x3] %vm196, 0.0
        %228 = vst.msk [vmem:[#allocation2 + $0x108] sm:$0xff] %vm193, 0.0
        %229 = vst.msk [vmem:[#allocation2 + $0x110] sm:$0xff] %vm193, 0.0
        %230 = vst.msk [vmem:[#allocation2 + $0x118] sm:$0x3] %vm196, 0.0
        %231 = vst.msk [vmem:[#allocation2 + $0x120] sm:$0xff] %vm193, 0.0
        %232 = vst.msk [vmem:[#allocation2 + $0x128] sm:$0xff] %vm193, 0.0
        %233 = vst.msk [vmem:[#allocation2 + $0x130] sm:$0x3] %vm196, 0.0
        %234 = vst.msk [vmem:[#allocation2 + $0x138] sm:$0xff] %vm193, 0.0
        %235 = vst.msk [vmem:[#allocation2 + $0x140] sm:$0xff] %vm193, 0.0
        %236 = vst.msk [vmem:[#allocation2 + $0x148] sm:$0x3] %vm196, 0.0
        %237 = vst.msk [vmem:[#allocation2 + $0x150] sm:$0xff] %vm193, 0.0
        %238 = vst.msk [vmem:[#allocation2 + $0x158] sm:$0xff] %vm193, 0.0
        %239 = vst.msk [vmem:[#allocation2 + $0x160] sm:$0x3] %vm196, 0.0
        %240 = vst.msk [vmem:[#allocation2 + $0x168] sm:$0xff] %vm193, 0.0
        %241 = vst.msk [vmem:[#allocation2 + $0x170] sm:$0xff] %vm193, 0.0
        %242 = vst.msk [vmem:[#allocation2 + $0x178] sm:$0x3] %vm196, 0.0
        %243 = vst.msk [vmem:[#allocation2 + $0x180] sm:$0xff] %vm193, 0.0
        %244 = vst.msk [vmem:[#allocation2 + $0x188] sm:$0xff] %vm193, 0.0
        %245 = vst.msk [vmem:[#allocation2 + $0x190] sm:$0x3] %vm196, 0.0
        %246 = vst.msk [vmem:[#allocation2 + $0x198] sm:$0xff] %vm193, 0.0
        %247 = vst.msk [vmem:[#allocation2 + $0x1a0] sm:$0xff] %vm193, 0.0
        %248 = vst.msk [vmem:[#allocation2 + $0x1a8] sm:$0x3] %vm196, 0.0
        %v249 = vld [vmem:[%s167] sm:$0xff]
        %v250 = vld [vmem:[%s167 + $0x8] sm:$0xff]
        %v251 = vld [vmem:[%s167 + $0x10] sm:$0xff]
        %v252 = vld [vmem:[%s167 + $0x18] sm:$0xff]
        %v253 = vld [vmem:[%s167 + $0x20] sm:$0xff]
        %v254 = vld [vmem:[%s167 + $0x28] sm:$0xff]
        %v255 = vld [vmem:[%s167 + $0x30] sm:$0xff]
        %v256 = vld [vmem:[%s167 + $0x38] sm:$0xff]
        %v257 = vld [vmem:[%s167 + $0x40] sm:$0xff]
        %v258 = vld [vmem:[%s167 + $0x48] sm:$0xff]
        %v259 = vld [vmem:[%s167 + $0x50] sm:$0xff]
        %v260 = vld [vmem:[%s167 + $0x58] sm:$0xff]
        %v261 = vld [vmem:[%s167 + $0x60] sm:$0xff]
        %v262 = vld [vmem:[%s167 + $0x68] sm:$0xff]
        %v263 = vld [vmem:[%s167 + $0x70] sm:$0xff]
        %v264 = vld [vmem:[%s167 + $0x78] sm:$0xff]
        %v265 = vld [vmem:[%s167 + $0x80] sm:$0xff]
        %v266 = vld [vmem:[%s167 + $0x88] sm:$0xff]
        %v267 = vld [vmem:[%s167 + $0x90] sm:$0xff]
        %v268 = vld [vmem:[%s167 + $0x98] sm:$0xff]
        %v269 = vld [vmem:[%s167 + $0xa0] sm:$0xff]
        %v270 = vld [vmem:[%s167 + $0xa8] sm:$0xff]
        %v271 = vld [vmem:[%s167 + $0xb0] sm:$0xff]
        %v272 = vld [vmem:[%s167 + $0xb8] sm:$0xff]
        %v273 = vld [vmem:[%s167 + $0xc0] sm:$0xff]
        %v274 = vld [vmem:[%s167 + $0xc8] sm:$0xff]
        %v275 = vld [vmem:[%s167 + $0xd0] sm:$0xff]
        %v276 = vld [vmem:[%s167 + $0xd8] sm:$0xff]
        %v277 = vld [vmem:[%s167 + $0xe0] sm:$0xff]
        %v278 = vld [vmem:[%s167 + $0xe8] sm:$0xff]
        %v279 = vld [vmem:[%s167 + $0xf0] sm:$0xff]
        %v280 = vld [vmem:[%s167 + $0xf8] sm:$0xff]
        %s281 = scalar_lea.vmem [#allocation2], 24
        %282 = vst.msk [vmem:[%s281 + $0x1] sm:$0xff] %vm193, %v249
        %283 = vst.msk [vmem:[%s281 + $0x9] sm:$0xff] %vm193, %v250
        %284 = vst.msk [vmem:[%s281 + $0x19] sm:$0xff] %vm193, %v251
        %285 = vst.msk [vmem:[%s281 + $0x21] sm:$0xff] %vm193, %v252
        %286 = vst.msk [vmem:[%s281 + $0x31] sm:$0xff] %vm193, %v253
        %287 = vst.msk [vmem:[%s281 + $0x39] sm:$0xff] %vm193, %v254
        %288 = vst.msk [vmem:[%s281 + $0x49] sm:$0xff] %vm193, %v255
        %289 = vst.msk [vmem:[%s281 + $0x51] sm:$0xff] %vm193, %v256
        %290 = vst.msk [vmem:[%s281 + $0x61] sm:$0xff] %vm193, %v257
        %291 = vst.msk [vmem:[%s281 + $0x69] sm:$0xff] %vm193, %v258
        %292 = vst.msk [vmem:[%s281 + $0x79] sm:$0xff] %vm193, %v259
        %293 = vst.msk [vmem:[%s281 + $0x81] sm:$0xff] %vm193, %v260
        %294 = vst.msk [vmem:[%s281 + $0x91] sm:$0xff] %vm193, %v261
        %295 = vst.msk [vmem:[%s281 + $0x99] sm:$0xff] %vm193, %v262
        %296 = vst.msk [vmem:[%s281 + $0xa9] sm:$0xff] %vm193, %v263
        %297 = vst.msk [vmem:[%s281 + $0xb1] sm:$0xff] %vm193, %v264
        %298 = vst.msk [vmem:[%s281 + $0xc1] sm:$0xff] %vm193, %v265
        %299 = vst.msk [vmem:[%s281 + $0xc9] sm:$0xff] %vm193, %v266
        %300 = vst.msk [vmem:[%s281 + $0xd9] sm:$0xff] %vm193, %v267
        %301 = vst.msk [vmem:[%s281 + $0xe1] sm:$0xff] %vm193, %v268
        %302 = vst.msk [vmem:[%s281 + $0xf1] sm:$0xff] %vm193, %v269
        %303 = vst.msk [vmem:[%s281 + $0xf9] sm:$0xff] %vm193, %v270
        %304 = vst.msk [vmem:[%s281 + $0x109] sm:$0xff] %vm193, %v271
        %305 = vst.msk [vmem:[%s281 + $0x111] sm:$0xff] %vm193, %v272
        %306 = vst.msk [vmem:[%s281 + $0x121] sm:$0xff] %vm193, %v273
        %307 = vst.msk [vmem:[%s281 + $0x129] sm:$0xff] %vm193, %v274
        %308 = vst.msk [vmem:[%s281 + $0x139] sm:$0xff] %vm193, %v275
        %309 = vst.msk [vmem:[%s281 + $0x141] sm:$0xff] %vm193, %v276
        %310 = vst.msk [vmem:[%s281 + $0x151] sm:$0xff] %vm193, %v277
        %311 = vst.msk [vmem:[%s281 + $0x159] sm:$0xff] %vm193, %v278
        %312 = vst.msk [vmem:[%s281 + $0x169] sm:$0xff] %vm193, %v279
        %313 = vst.msk [vmem:[%s281 + $0x171] sm:$0xff] %vm193, %v280
        %v314 = vld [vmem:[#allocation2] sm:$0xff]
        %v315 = vld [vmem:[#allocation2 + $0x8] sm:$0xff]
        %v316 = vld [vmem:[#allocation2 + $0x18] sm:$0xff]
        %v317 = vld [vmem:[#allocation2 + $0x20] sm:$0xff]
        %v318 = vld [vmem:[#allocation2 + $0x30] sm:$0xff]
        %v319 = vld [vmem:[#allocation2 + $0x38] sm:$0xff]
        %v320 = vld [vmem:[#allocation2 + $0x48] sm:$0xff]
        %v321 = vld [vmem:[#allocation2 + $0x50] sm:$0xff]
        %v322 = vld [vmem:[#allocation2 + $0x60] sm:$0xff]
        %v323 = vld [vmem:[#allocation2 + $0x68] sm:$0xff]
        %v324 = vld [vmem:[#allocation2 + $0x78] sm:$0xff]
        %v325 = vld [vmem:[#allocation2 + $0x80] sm:$0xff]
        %v326 = vld [vmem:[#allocation2 + $0x90] sm:$0xff]
        %v327 = vld [vmem:[#allocation2 + $0x98] sm:$0xff]
        %v328 = vld [vmem:[#allocation2 + $0xa8] sm:$0xff]
        %v329 = vld [vmem:[#allocation2 + $0xb0] sm:$0xff]
        %v330 = vld [vmem:[#allocation2 + $0xc0] sm:$0xff]
        %v331 = vld [vmem:[#allocation2 + $0xc8] sm:$0xff]
        %v332 = vld [vmem:[#allocation2 + $0xd8] sm:$0xff]
        %v333 = vld [vmem:[#allocation2 + $0xe0] sm:$0xff]
        %v334 = vld [vmem:[#allocation2 + $0xf0] sm:$0xff]
        %v335 = vld [vmem:[#allocation2 + $0xf8] sm:$0xff]
        %v336 = vld [vmem:[#allocation2 + $0x108] sm:$0xff]
        %v337 = vld [vmem:[#allocation2 + $0x110] sm:$0xff]
        %v338 = vld [vmem:[#allocation2 + $0x120] sm:$0xff]
        %v339 = vld [vmem:[#allocation2 + $0x128] sm:$0xff]
        %v340 = vld [vmem:[#allocation2 + $0x138] sm:$0xff]
        %v341 = vld [vmem:[#allocation2 + $0x140] sm:$0xff]
        %v342 = vld [vmem:[#allocation2 + $0x150] sm:$0xff]
        %v343 = vld [vmem:[#allocation2 + $0x158] sm:$0xff]
        %v344 = vld [vmem:[#allocation2 + $0x168] sm:$0xff]
        %v345 = vld [vmem:[#allocation2 + $0x170] sm:$0xff]
        %v346 = vpack.c.bf16 %v314, %v314
        %v347 = vpack.c.bf16 %v315, %v315
        %v348 = vpack.c.bf16 %v316, %v316
        %v349 = vpack.c.bf16 %v317, %v317
        %v350 = vpack.c.bf16 %v318, %v318
        %v351 = vpack.c.bf16 %v319, %v319
        %v352 = vpack.c.bf16 %v320, %v320
        %v353 = vpack.c.bf16 %v321, %v321
        %v354 = vpack.c.bf16 %v322, %v322
        %v355 = vpack.c.bf16 %v323, %v323
        %v356 = vpack.c.bf16 %v324, %v324
        %v357 = vpack.c.bf16 %v325, %v325
        %v358 = vpack.c.bf16 %v326, %v326
        %v359 = vpack.c.bf16 %v327, %v327
        %v360 = vpack.c.bf16 %v328, %v328
        %v361 = vpack.c.bf16 %v329, %v329
        %v362 = vpack.c.bf16 %v330, %v330
        %v363 = vpack.c.bf16 %v331, %v331
        %v364 = vpack.c.bf16 %v332, %v332
        %v365 = vpack.c.bf16 %v333, %v333
        %v366 = vpack.c.bf16 %v334, %v334
        %v367 = vpack.c.bf16 %v335, %v335
        %v368 = vpack.c.bf16 %v336, %v336
        %v369 = vpack.c.bf16 %v337, %v337
        %v370 = vpack.c.bf16 %v338, %v338
        %v371 = vpack.c.bf16 %v339, %v339
        %v372 = vpack.c.bf16 %v340, %v340
        %v373 = vpack.c.bf16 %v341, %v341
        %v374 = vpack.c.bf16 %v342, %v342
        %v375 = vpack.c.bf16 %v343, %v343
        %v376 = vpack.c.bf16 %v344, %v344
        %v377 = vpack.c.bf16 %v345, %v345
        %vm378 = vcmask 519168
        %379 = vst.msk [vmem:[#allocation3] sm:$0xf] %vm378, %v346
        %380 = vst.msk [vmem:[#allocation3 + $0x14] sm:$0xf] %vm378, %v347
        %381 = vst.msk [vmem:[#allocation3 + $0x28] sm:$0xf] %vm378, %v348
        %382 = vst.msk [vmem:[#allocation3 + $0x3c] sm:$0xf] %vm378, %v349
        %383 = vst.msk [vmem:[#allocation3 + $0x50] sm:$0xf] %vm378, %v350
        %384 = vst.msk [vmem:[#allocation3 + $0x64] sm:$0xf] %vm378, %v351
        %385 = vst.msk [vmem:[#allocation3 + $0x78] sm:$0xf] %vm378, %v352
        %386 = vst.msk [vmem:[#allocation3 + $0x8c] sm:$0xf] %vm378, %v353
        %387 = vst.msk [vmem:[#allocation3 + $0xa0] sm:$0xf] %vm378, %v354
        %388 = vst.msk [vmem:[#allocation3 + $0xb4] sm:$0xf] %vm378, %v355
        %389 = vst.msk [vmem:[#allocation3 + $0xc8] sm:$0xf] %vm378, %v356
        %390 = vst.msk [vmem:[#allocation3 + $0xdc] sm:$0xf] %vm378, %v357
        %391 = vst.msk [vmem:[#allocation3 + $0xf0] sm:$0xf] %vm378, %v358
        %392 = vst.msk [vmem:[#allocation3 + $0x104] sm:$0xf] %vm378, %v359
        %393 = vst.msk [vmem:[#allocation3 + $0x118] sm:$0xf] %vm378, %v360
        %394 = vst.msk [vmem:[#allocation3 + $0x12c] sm:$0xf] %vm378, %v361
        %395 = vst.msk [vmem:[#allocation3 + $0x140] sm:$0xf] %vm378, %v362
        %396 = vst.msk [vmem:[#allocation3 + $0x154] sm:$0xf] %vm378, %v363
        %397 = vst.msk [vmem:[#allocation3 + $0x168] sm:$0xf] %vm378, %v364
        %398 = vst.msk [vmem:[#allocation3 + $0x17c] sm:$0xf] %vm378, %v365
        %399 = vst.msk [vmem:[#allocation3 + $0x190] sm:$0xf] %vm378, %v366
        %400 = vst.msk [vmem:[#allocation3 + $0x1a4] sm:$0xf] %vm378, %v367
        %401 = vst.msk [vmem:[#allocation3 + $0x1b8] sm:$0xf] %vm378, %v368
        %402 = vst.msk [vmem:[#allocation3 + $0x1cc] sm:$0xf] %vm378, %v369
        %403 = vst.msk [vmem:[#allocation3 + $0x1e0] sm:$0xf] %vm378, %v370
        %404 = vst.msk [vmem:[#allocation3 + $0x1f4] sm:$0xf] %vm378, %v371
        %405 = vst.msk [vmem:[#allocation3 + $0x208] sm:$0xf] %vm378, %v372
        %406 = vst.msk [vmem:[#allocation3 + $0x21c] sm:$0xf] %vm378, %v373
        %407 = vst.msk [vmem:[#allocation3 + $0x230] sm:$0xf] %vm378, %v374
        %408 = vst.msk [vmem:[#allocation3 + $0x244] sm:$0xf] %vm378, %v375
        %409 = vst.msk [vmem:[#allocation3 + $0x258] sm:$0xf] %vm378, %v376
        %410 = vst.msk [vmem:[#allocation3 + $0x26c] sm:$0xf] %vm378, %v377
        %v411 = vld [vmem:[#allocation2 + $0x1] sm:$0xff]
        %v412 = vld [vmem:[#allocation2 + $0x9] sm:$0xff]
        %v413 = vld [vmem:[#allocation2 + $0x19] sm:$0xff]
        %v414 = vld [vmem:[#allocation2 + $0x21] sm:$0xff]
        %v415 = vld [vmem:[#allocation2 + $0x31] sm:$0xff]
        %v416 = vld [vmem:[#allocation2 + $0x39] sm:$0xff]
        %v417 = vld [vmem:[#allocation2 + $0x49] sm:$0xff]
        %v418 = vld [vmem:[#allocation2 + $0x51] sm:$0xff]
        %v419 = vld [vmem:[#allocation2 + $0x61] sm:$0xff]
        %v420 = vld [vmem:[#allocation2 + $0x69] sm:$0xff]
        %v421 = vld [vmem:[#allocation2 + $0x79] sm:$0xff]
        %v422 = vld [vmem:[#allocation2 + $0x81] sm:$0xff]
        %v423 = vld [vmem:[#allocation2 + $0x91] sm:$0xff]
        %v424 = vld [vmem:[#allocation2 + $0x99] sm:$0xff]
        %v425 = vld [vmem:[#allocation2 + $0xa9] sm:$0xff]
        %v426 = vld [vmem:[#allocation2 + $0xb1] sm:$0xff]
        %v427 = vld [vmem:[#allocation2 + $0xc1] sm:$0xff]
        %v428 = vld [vmem:[#allocation2 + $0xc9] sm:$0xff]
        %v429 = vld [vmem:[#allocation2 + $0xd9] sm:$0xff]
        %v430 = vld [vmem:[#allocation2 + $0xe1] sm:$0xff]
        %v431 = vld [vmem:[#allocation2 + $0xf1] sm:$0xff]
        %v432 = vld [vmem:[#allocation2 + $0xf9] sm:$0xff]
        %v433 = vld [vmem:[#allocation2 + $0x109] sm:$0xff]
        %v434 = vld [vmem:[#allocation2 + $0x111] sm:$0xff]
        %v435 = vld [vmem:[#allocation2 + $0x121] sm:$0xff]
        %v436 = vld [vmem:[#allocation2 + $0x129] sm:$0xff]
        %v437 = vld [vmem:[#allocation2 + $0x139] sm:$0xff]
        %v438 = vld [vmem:[#allocation2 + $0x141] sm:$0xff]
        %v439 = vld [vmem:[#allocation2 + $0x151] sm:$0xff]
        %v440 = vld [vmem:[#allocation2 + $0x159] sm:$0xff]
        %v441 = vld [vmem:[#allocation2 + $0x169] sm:$0xff]
        %v442 = vld [vmem:[#allocation2 + $0x171] sm:$0xff]
        %v443 = vpack.c.bf16 %v411, %v411
        %v444 = vpack.c.bf16 %v412, %v412
        %v445 = vpack.c.bf16 %v413, %v413
        %v446 = vpack.c.bf16 %v414, %v414
        %v447 = vpack.c.bf16 %v415, %v415
        %v448 = vpack.c.bf16 %v416, %v416
        %v449 = vpack.c.bf16 %v417, %v417
        %v450 = vpack.c.bf16 %v418, %v418
        %v451 = vpack.c.bf16 %v419, %v419
        %v452 = vpack.c.bf16 %v420, %v420
        %v453 = vpack.c.bf16 %v421, %v421
        %v454 = vpack.c.bf16 %v422, %v422
        %v455 = vpack.c.bf16 %v423, %v423
        %v456 = vpack.c.bf16 %v424, %v424
        %v457 = vpack.c.bf16 %v425, %v425
        %v458 = vpack.c.bf16 %v426, %v426
        %v459 = vpack.c.bf16 %v427, %v427
        %v460 = vpack.c.bf16 %v428, %v428
        %v461 = vpack.c.bf16 %v429, %v429
        %v462 = vpack.c.bf16 %v430, %v430
        %v463 = vpack.c.bf16 %v431, %v431
        %v464 = vpack.c.bf16 %v432, %v432
        %v465 = vpack.c.bf16 %v433, %v433
        %v466 = vpack.c.bf16 %v434, %v434
        %v467 = vpack.c.bf16 %v435, %v435
        %v468 = vpack.c.bf16 %v436, %v436
        %v469 = vpack.c.bf16 %v437, %v437
        %v470 = vpack.c.bf16 %v438, %v438
        %v471 = vpack.c.bf16 %v439, %v439
        %v472 = vpack.c.bf16 %v440, %v440
        %v473 = vpack.c.bf16 %v441, %v441
        %v474 = vpack.c.bf16 %v442, %v442
        %507 = vrot.lane.b32.xlu0 %v443, 64
        %v508 = vpop.permute.xlu0 %507
        %509 = vrot.lane.b32.xlu0 %v444, 64
        %v510 = vpop.permute.xlu0 %509
        %511 = vrot.lane.b32.xlu0 %v445, 64
        %v512 = vpop.permute.xlu0 %511
        %513 = vrot.lane.b32.xlu0 %v446, 64
        %v514 = vpop.permute.xlu0 %513
        %515 = vrot.lane.b32.xlu0 %v447, 64
        %v516 = vpop.permute.xlu0 %515
        %517 = vrot.lane.b32.xlu0 %v448, 64
        %v518 = vpop.permute.xlu0 %517
        %519 = vrot.lane.b32.xlu0 %v449, 64
        %v520 = vpop.permute.xlu0 %519
        %521 = vrot.lane.b32.xlu0 %v450, 64
        %v522 = vpop.permute.xlu0 %521
        %523 = vrot.lane.b32.xlu0 %v451, 64
        %v524 = vpop.permute.xlu0 %523
        %525 = vrot.lane.b32.xlu0 %v452, 64
        %v526 = vpop.permute.xlu0 %525
        %527 = vrot.lane.b32.xlu0 %v453, 64
        %v528 = vpop.permute.xlu0 %527
        %529 = vrot.lane.b32.xlu0 %v454, 64
        %v530 = vpop.permute.xlu0 %529
        %531 = vrot.lane.b32.xlu0 %v455, 64
        %v532 = vpop.permute.xlu0 %531
        %533 = vrot.lane.b32.xlu0 %v456, 64
        %v534 = vpop.permute.xlu0 %533
        %535 = vrot.lane.b32.xlu0 %v457, 64
        %v536 = vpop.permute.xlu0 %535
        %537 = vrot.lane.b32.xlu0 %v458, 64
        %v538 = vpop.permute.xlu0 %537
        %539 = vrot.lane.b32.xlu0 %v459, 64
        %v540 = vpop.permute.xlu0 %539
        %541 = vrot.lane.b32.xlu0 %v460, 64
        %v542 = vpop.permute.xlu0 %541
        %543 = vrot.lane.b32.xlu0 %v461, 64
        %v544 = vpop.permute.xlu0 %543
        %545 = vrot.lane.b32.xlu0 %v462, 64
        %v546 = vpop.permute.xlu0 %545
        %547 = vrot.lane.b32.xlu0 %v463, 64
        %v548 = vpop.permute.xlu0 %547
        %549 = vrot.lane.b32.xlu0 %v464, 64
        %v550 = vpop.permute.xlu0 %549
        %551 = vrot.lane.b32.xlu0 %v465, 64
        %v552 = vpop.permute.xlu0 %551
        %553 = vrot.lane.b32.xlu0 %v466, 64
        %v554 = vpop.permute.xlu0 %553
        %555 = vrot.lane.b32.xlu0 %v467, 64
        %v556 = vpop.permute.xlu0 %555
        %557 = vrot.lane.b32.xlu0 %v468, 64
        %v558 = vpop.permute.xlu0 %557
        %559 = vrot.lane.b32.xlu0 %v469, 64
        %v560 = vpop.permute.xlu0 %559
        %561 = vrot.lane.b32.xlu0 %v470, 64
        %v562 = vpop.permute.xlu0 %561
        %563 = vrot.lane.b32.xlu0 %v471, 64
        %v564 = vpop.permute.xlu0 %563
        %565 = vrot.lane.b32.xlu0 %v472, 64
        %v566 = vpop.permute.xlu0 %565
        %567 = vrot.lane.b32.xlu0 %v473, 64
        %v568 = vpop.permute.xlu0 %567
        %569 = vrot.lane.b32.xlu0 %v474, 64
        %v570 = vpop.permute.xlu0 %569
        %vm603 = vcmask 1043968
        %604 = vst.msk [vmem:[#allocation3] sm:$0xf] %vm603, %v508
        %605 = vst.msk [vmem:[#allocation3 + $0x14] sm:$0xf] %vm603, %v510
        %606 = vst.msk [vmem:[#allocation3 + $0x28] sm:$0xf] %vm603, %v512
        %607 = vst.msk [vmem:[#allocation3 + $0x3c] sm:$0xf] %vm603, %v514
        %608 = vst.msk [vmem:[#allocation3 + $0x50] sm:$0xf] %vm603, %v516
        %609 = vst.msk [vmem:[#allocation3 + $0x64] sm:$0xf] %vm603, %v518
        %610 = vst.msk [vmem:[#allocation3 + $0x78] sm:$0xf] %vm603, %v520
        %611 = vst.msk [vmem:[#allocation3 + $0x8c] sm:$0xf] %vm603, %v522
        %612 = vst.msk [vmem:[#allocation3 + $0xa0] sm:$0xf] %vm603, %v524
        %613 = vst.msk [vmem:[#allocation3 + $0xb4] sm:$0xf] %vm603, %v526
        %614 = vst.msk [vmem:[#allocation3 + $0xc8] sm:$0xf] %vm603, %v528
        %615 = vst.msk [vmem:[#allocation3 + $0xdc] sm:$0xf] %vm603, %v530
        %616 = vst.msk [vmem:[#allocation3 + $0xf0] sm:$0xf] %vm603, %v532
        %617 = vst.msk [vmem:[#allocation3 + $0x104] sm:$0xf] %vm603, %v534
        %618 = vst.msk [vmem:[#allocation3 + $0x118] sm:$0xf] %vm603, %v536
        %619 = vst.msk [vmem:[#allocation3 + $0x12c] sm:$0xf] %vm603, %v538
        %620 = vst.msk [vmem:[#allocation3 + $0x140] sm:$0xf] %vm603, %v540
        %621 = vst.msk [vmem:[#allocation3 + $0x154] sm:$0xf] %vm603, %v542
        %622 = vst.msk [vmem:[#allocation3 + $0x168] sm:$0xf] %vm603, %v544
        %623 = vst.msk [vmem:[#allocation3 + $0x17c] sm:$0xf] %vm603, %v546
        %624 = vst.msk [vmem:[#allocation3 + $0x190] sm:$0xf] %vm603, %v548
        %625 = vst.msk [vmem:[#allocation3 + $0x1a4] sm:$0xf] %vm603, %v550
        %626 = vst.msk [vmem:[#allocation3 + $0x1b8] sm:$0xf] %vm603, %v552
        %627 = vst.msk [vmem:[#allocation3 + $0x1cc] sm:$0xf] %vm603, %v554
        %628 = vst.msk [vmem:[#allocation3 + $0x1e0] sm:$0xf] %vm603, %v556
        %629 = vst.msk [vmem:[#allocation3 + $0x1f4] sm:$0xf] %vm603, %v558
        %630 = vst.msk [vmem:[#allocation3 + $0x208] sm:$0xf] %vm603, %v560
        %631 = vst.msk [vmem:[#allocation3 + $0x21c] sm:$0xf] %vm603, %v562
        %632 = vst.msk [vmem:[#allocation3 + $0x230] sm:$0xf] %vm603, %v564
        %633 = vst.msk [vmem:[#allocation3 + $0x244] sm:$0xf] %vm603, %v566
        %634 = vst.msk [vmem:[#allocation3 + $0x258] sm:$0xf] %vm603, %v568
        %635 = vst.msk [vmem:[#allocation3 + $0x26c] sm:$0xf] %vm603, %v570
        %v636 = vld [vmem:[#allocation2 + $0x2] sm:$0xff]
        %v637 = vld [vmem:[#allocation2 + $0xa] sm:$0xff]
        %v638 = vld [vmem:[#allocation2 + $0x1a] sm:$0xff]
        %v639 = vld [vmem:[#allocation2 + $0x22] sm:$0xff]
        %v640 = vld [vmem:[#allocation2 + $0x32] sm:$0xff]
        %v641 = vld [vmem:[#allocation2 + $0x3a] sm:$0xff]
        %v642 = vld [vmem:[#allocation2 + $0x4a] sm:$0xff]
        %v643 = vld [vmem:[#allocation2 + $0x52] sm:$0xff]
        %v644 = vld [vmem:[#allocation2 + $0x62] sm:$0xff]
        %v645 = vld [vmem:[#allocation2 + $0x6a] sm:$0xff]
        %v646 = vld [vmem:[#allocation2 + $0x7a] sm:$0xff]
        %v647 = vld [vmem:[#allocation2 + $0x82] sm:$0xff]
        %v648 = vld [vmem:[#allocation2 + $0x92] sm:$0xff]
        %v649 = vld [vmem:[#allocation2 + $0x9a] sm:$0xff]
        %v650 = vld [vmem:[#allocation2 + $0xaa] sm:$0xff]
        %v651 = vld [vmem:[#allocation2 + $0xb2] sm:$0xff]
        %v652 = vld [vmem:[#allocation2 + $0xc2] sm:$0xff]
        %v653 = vld [vmem:[#allocation2 + $0xca] sm:$0xff]
        %v654 = vld [vmem:[#allocation2 + $0xda] sm:$0xff]
        %v655 = vld [vmem:[#allocation2 + $0xe2] sm:$0xff]
        %v656 = vld [vmem:[#allocation2 + $0xf2] sm:$0xff]
        %v657 = vld [vmem:[#allocation2 + $0xfa] sm:$0xff]
        %v658 = vld [vmem:[#allocation2 + $0x10a] sm:$0xff]
        %v659 = vld [vmem:[#allocation2 + $0x112] sm:$0xff]
        %v660 = vld [vmem:[#allocation2 + $0x122] sm:$0xff]
        %v661 = vld [vmem:[#allocation2 + $0x12a] sm:$0xff]
        %v662 = vld [vmem:[#allocation2 + $0x13a] sm:$0xff]
        %v663 = vld [vmem:[#allocation2 + $0x142] sm:$0xff]
        %v664 = vld [vmem:[#allocation2 + $0x152] sm:$0xff]
        %v665 = vld [vmem:[#allocation2 + $0x15a] sm:$0xff]
        %v666 = vld [vmem:[#allocation2 + $0x16a] sm:$0xff]
        %v667 = vld [vmem:[#allocation2 + $0x172] sm:$0xff]
        %v668 = vpack.c.bf16 %v636, %v636
        %v669 = vpack.c.bf16 %v637, %v637
        %v670 = vpack.c.bf16 %v638, %v638
        %v671 = vpack.c.bf16 %v639, %v639
        %v672 = vpack.c.bf16 %v640, %v640
        %v673 = vpack.c.bf16 %v641, %v641
        %v674 = vpack.c.bf16 %v642, %v642
        %v675 = vpack.c.bf16 %v643, %v643
        %v676 = vpack.c.bf16 %v644, %v644
        %v677 = vpack.c.bf16 %v645, %v645
        %v678 = vpack.c.bf16 %v646, %v646
        %v679 = vpack.c.bf16 %v647, %v647
        %v680 = vpack.c.bf16 %v648, %v648
        %v681 = vpack.c.bf16 %v649, %v649
        %v682 = vpack.c.bf16 %v650, %v650
        %v683 = vpack.c.bf16 %v651, %v651
        %v684 = vpack.c.bf16 %v652, %v652
        %v685 = vpack.c.bf16 %v653, %v653
        %v686 = vpack.c.bf16 %v654, %v654
        %v687 = vpack.c.bf16 %v655, %v655
        %v688 = vpack.c.bf16 %v656, %v656
        %v689 = vpack.c.bf16 %v657, %v657
        %v690 = vpack.c.bf16 %v658, %v658
        %v691 = vpack.c.bf16 %v659, %v659
        %v692 = vpack.c.bf16 %v660, %v660
        %v693 = vpack.c.bf16 %v661, %v661
        %v694 = vpack.c.bf16 %v662, %v662
        %v695 = vpack.c.bf16 %v663, %v663
        %v696 = vpack.c.bf16 %v664, %v664
        %v697 = vpack.c.bf16 %v665, %v665
        %v698 = vpack.c.bf16 %v666, %v666
        %v699 = vpack.c.bf16 %v667, %v667
        %700 = vst.msk [vmem:[#allocation3 + $0x4] sm:$0xf] %vm378, %v668
        %701 = vst.msk [vmem:[#allocation3 + $0x18] sm:$0xf] %vm378, %v669
        %702 = vst.msk [vmem:[#allocation3 + $0x2c] sm:$0xf] %vm378, %v670
        %703 = vst.msk [vmem:[#allocation3 + $0x40] sm:$0xf] %vm378, %v671
        %704 = vst.msk [vmem:[#allocation3 + $0x54] sm:$0xf] %vm378, %v672
        %705 = vst.msk [vmem:[#allocation3 + $0x68] sm:$0xf] %vm378, %v673
        %706 = vst.msk [vmem:[#allocation3 + $0x7c] sm:$0xf] %vm378, %v674
        %707 = vst.msk [vmem:[#allocation3 + $0x90] sm:$0xf] %vm378, %v675
        %708 = vst.msk [vmem:[#allocation3 + $0xa4] sm:$0xf] %vm378, %v676
        %709 = vst.msk [vmem:[#allocation3 + $0xb8] sm:$0xf] %vm378, %v677
        %710 = vst.msk [vmem:[#allocation3 + $0xcc] sm:$0xf] %vm378, %v678
        %711 = vst.msk [vmem:[#allocation3 + $0xe0] sm:$0xf] %vm378, %v679
        %712 = vst.msk [vmem:[#allocation3 + $0xf4] sm:$0xf] %vm378, %v680
        %713 = vst.msk [vmem:[#allocation3 + $0x108] sm:$0xf] %vm378, %v681
        %714 = vst.msk [vmem:[#allocation3 + $0x11c] sm:$0xf] %vm378, %v682
        %715 = vst.msk [vmem:[#allocation3 + $0x130] sm:$0xf] %vm378, %v683
        %716 = vst.msk [vmem:[#allocation3 + $0x144] sm:$0xf] %vm378, %v684
        %717 = vst.msk [vmem:[#allocation3 + $0x158] sm:$0xf] %vm378, %v685
        %718 = vst.msk [vmem:[#allocation3 + $0x16c] sm:$0xf] %vm378, %v686
        %719 = vst.msk [vmem:[#allocation3 + $0x180] sm:$0xf] %vm378, %v687
        %720 = vst.msk [vmem:[#allocation3 + $0x194] sm:$0xf] %vm378, %v688
        %721 = vst.msk [vmem:[#allocation3 + $0x1a8] sm:$0xf] %vm378, %v689
        %722 = vst.msk [vmem:[#allocation3 + $0x1bc] sm:$0xf] %vm378, %v690
        %723 = vst.msk [vmem:[#allocation3 + $0x1d0] sm:$0xf] %vm378, %v691
        %724 = vst.msk [vmem:[#allocation3 + $0x1e4] sm:$0xf] %vm378, %v692
        %725 = vst.msk [vmem:[#allocation3 + $0x1f8] sm:$0xf] %vm378, %v693
        %726 = vst.msk [vmem:[#allocation3 + $0x20c] sm:$0xf] %vm378, %v694
        %727 = vst.msk [vmem:[#allocation3 + $0x220] sm:$0xf] %vm378, %v695
        %728 = vst.msk [vmem:[#allocation3 + $0x234] sm:$0xf] %vm378, %v696
        %729 = vst.msk [vmem:[#allocation3 + $0x248] sm:$0xf] %vm378, %v697
        %730 = vst.msk [vmem:[#allocation3 + $0x25c] sm:$0xf] %vm378, %v698
        %731 = vst.msk [vmem:[#allocation3 + $0x270] sm:$0xf] %vm378, %v699
        %v732 = vld [vmem:[%s281] sm:$0xff]
        %v733 = vld [vmem:[%s281 + $0x8] sm:$0xff]
        %v734 = vld [vmem:[%s281 + $0x18] sm:$0xff]
        %v735 = vld [vmem:[%s281 + $0x20] sm:$0xff]
        %v736 = vld [vmem:[%s281 + $0x30] sm:$0xff]
        %v737 = vld [vmem:[%s281 + $0x38] sm:$0xff]
        %v738 = vld [vmem:[%s281 + $0x48] sm:$0xff]
        %v739 = vld [vmem:[%s281 + $0x50] sm:$0xff]
        %v740 = vld [vmem:[%s281 + $0x60] sm:$0xff]
        %v741 = vld [vmem:[%s281 + $0x68] sm:$0xff]
        %v742 = vld [vmem:[%s281 + $0x78] sm:$0xff]
        %v743 = vld [vmem:[%s281 + $0x80] sm:$0xff]
        %v744 = vld [vmem:[%s281 + $0x90] sm:$0xff]
        %v745 = vld [vmem:[%s281 + $0x98] sm:$0xff]
        %v746 = vld [vmem:[%s281 + $0xa8] sm:$0xff]
        %v747 = vld [vmem:[%s281 + $0xb0] sm:$0xff]
        %v748 = vld [vmem:[%s281 + $0xc0] sm:$0xff]
        %v749 = vld [vmem:[%s281 + $0xc8] sm:$0xff]
        %v750 = vld [vmem:[%s281 + $0xd8] sm:$0xff]
        %v751 = vld [vmem:[%s281 + $0xe0] sm:$0xff]
        %v752 = vld [vmem:[%s281 + $0xf0] sm:$0xff]
        %v753 = vld [vmem:[%s281 + $0xf8] sm:$0xff]
        %v754 = vld [vmem:[%s281 + $0x108] sm:$0xff]
        %v755 = vld [vmem:[%s281 + $0x110] sm:$0xff]
        %v756 = vld [vmem:[%s281 + $0x120] sm:$0xff]
        %v757 = vld [vmem:[%s281 + $0x128] sm:$0xff]
        %v758 = vld [vmem:[%s281 + $0x138] sm:$0xff]
        %v759 = vld [vmem:[%s281 + $0x140] sm:$0xff]
        %v760 = vld [vmem:[%s281 + $0x150] sm:$0xff]
        %v761 = vld [vmem:[%s281 + $0x158] sm:$0xff]
        %v762 = vld [vmem:[%s281 + $0x168] sm:$0xff]
        %v763 = vld [vmem:[%s281 + $0x170] sm:$0xff]
        %v764 = vpack.c.bf16 %v732, %v732
        %v765 = vpack.c.bf16 %v733, %v733
        %v766 = vpack.c.bf16 %v734, %v734
        %v767 = vpack.c.bf16 %v735, %v735
        %v768 = vpack.c.bf16 %v736, %v736
        %v769 = vpack.c.bf16 %v737, %v737
        %v770 = vpack.c.bf16 %v738, %v738
        %v771 = vpack.c.bf16 %v739, %v739
        %v772 = vpack.c.bf16 %v740, %v740
        %v773 = vpack.c.bf16 %v741, %v741
        %v774 = vpack.c.bf16 %v742, %v742
        %v775 = vpack.c.bf16 %v743, %v743
        %v776 = vpack.c.bf16 %v744, %v744
        %v777 = vpack.c.bf16 %v745, %v745
        %v778 = vpack.c.bf16 %v746, %v746
        %v779 = vpack.c.bf16 %v747, %v747
        %v780 = vpack.c.bf16 %v748, %v748
        %v781 = vpack.c.bf16 %v749, %v749
        %v782 = vpack.c.bf16 %v750, %v750
        %v783 = vpack.c.bf16 %v751, %v751
        %v784 = vpack.c.bf16 %v752, %v752
        %v785 = vpack.c.bf16 %v753, %v753
        %v786 = vpack.c.bf16 %v754, %v754
        %v787 = vpack.c.bf16 %v755, %v755
        %v788 = vpack.c.bf16 %v756, %v756
        %v789 = vpack.c.bf16 %v757, %v757
        %v790 = vpack.c.bf16 %v758, %v758
        %v791 = vpack.c.bf16 %v759, %v759
        %v792 = vpack.c.bf16 %v760, %v760
        %v793 = vpack.c.bf16 %v761, %v761
        %v794 = vpack.c.bf16 %v762, %v762
        %v795 = vpack.c.bf16 %v763, %v763
        %828 = vrot.lane.b32.xlu0 %v764, 64
        %v829 = vpop.permute.xlu0 %828
        %830 = vrot.lane.b32.xlu0 %v765, 64
        %v831 = vpop.permute.xlu0 %830
        %832 = vrot.lane.b32.xlu0 %v766, 64
        %v833 = vpop.permute.xlu0 %832
        %834 = vrot.lane.b32.xlu0 %v767, 64
        %v835 = vpop.permute.xlu0 %834
        %836 = vrot.lane.b32.xlu0 %v768, 64
        %v837 = vpop.permute.xlu0 %836
        %838 = vrot.lane.b32.xlu0 %v769, 64
        %v839 = vpop.permute.xlu0 %838
        %840 = vrot.lane.b32.xlu0 %v770, 64
        %v841 = vpop.permute.xlu0 %840
        %842 = vrot.lane.b32.xlu0 %v771, 64
        %v843 = vpop.permute.xlu0 %842
        %844 = vrot.lane.b32.xlu0 %v772, 64
        %v845 = vpop.permute.xlu0 %844
        %846 = vrot.lane.b32.xlu0 %v773, 64
        %v847 = vpop.permute.xlu0 %846
        %848 = vrot.lane.b32.xlu0 %v774, 64
        %v849 = vpop.permute.xlu0 %848
        %850 = vrot.lane.b32.xlu0 %v775, 64
        %v851 = vpop.permute.xlu0 %850
        %852 = vrot.lane.b32.xlu0 %v776, 64
        %v853 = vpop.permute.xlu0 %852
        %854 = vrot.lane.b32.xlu0 %v777, 64
        %v855 = vpop.permute.xlu0 %854
        %856 = vrot.lane.b32.xlu0 %v778, 64
        %v857 = vpop.permute.xlu0 %856
        %858 = vrot.lane.b32.xlu0 %v779, 64
        %v859 = vpop.permute.xlu0 %858
        %860 = vrot.lane.b32.xlu0 %v780, 64
        %v861 = vpop.permute.xlu0 %860
        %862 = vrot.lane.b32.xlu0 %v781, 64
        %v863 = vpop.permute.xlu0 %862
        %864 = vrot.lane.b32.xlu0 %v782, 64
        %v865 = vpop.permute.xlu0 %864
        %866 = vrot.lane.b32.xlu0 %v783, 64
        %v867 = vpop.permute.xlu0 %866
        %868 = vrot.lane.b32.xlu0 %v784, 64
        %v869 = vpop.permute.xlu0 %868
        %870 = vrot.lane.b32.xlu0 %v785, 64
        %v871 = vpop.permute.xlu0 %870
        %872 = vrot.lane.b32.xlu0 %v786, 64
        %v873 = vpop.permute.xlu0 %872
        %874 = vrot.lane.b32.xlu0 %v787, 64
        %v875 = vpop.permute.xlu0 %874
        %876 = vrot.lane.b32.xlu0 %v788, 64
        %v877 = vpop.permute.xlu0 %876
        %878 = vrot.lane.b32.xlu0 %v789, 64
        %v879 = vpop.permute.xlu0 %878
        %880 = vrot.lane.b32.xlu0 %v790, 64
        %v881 = vpop.permute.xlu0 %880
        %882 = vrot.lane.b32.xlu0 %v791, 64
        %v883 = vpop.permute.xlu0 %882
        %884 = vrot.lane.b32.xlu0 %v792, 64
        %v885 = vpop.permute.xlu0 %884
        %886 = vrot.lane.b32.xlu0 %v793, 64
        %v887 = vpop.permute.xlu0 %886
        %888 = vrot.lane.b32.xlu0 %v794, 64
        %v889 = vpop.permute.xlu0 %888
        %890 = vrot.lane.b32.xlu0 %v795, 64
        %v891 = vpop.permute.xlu0 %890
        %924 = vst.msk [vmem:[#allocation3 + $0x4] sm:$0xf] %vm603, %v829
        %925 = vst.msk [vmem:[#allocation3 + $0x18] sm:$0xf] %vm603, %v831
        %926 = vst.msk [vmem:[#allocation3 + $0x2c] sm:$0xf] %vm603, %v833
        %927 = vst.msk [vmem:[#allocation3 + $0x40] sm:$0xf] %vm603, %v835
        %928 = vst.msk [vmem:[#allocation3 + $0x54] sm:$0xf] %vm603, %v837
        %929 = vst.msk [vmem:[#allocation3 + $0x68] sm:$0xf] %vm603, %v839
        %930 = vst.msk [vmem:[#allocation3 + $0x7c] sm:$0xf] %vm603, %v841
        %931 = vst.msk [vmem:[#allocation3 + $0x90] sm:$0xf] %vm603, %v843
        %932 = vst.msk [vmem:[#allocation3 + $0xa4] sm:$0xf] %vm603, %v845
        %933 = vst.msk [vmem:[#allocation3 + $0xb8] sm:$0xf] %vm603, %v847
        %934 = vst.msk [vmem:[#allocation3 + $0xcc] sm:$0xf] %vm603, %v849
        %935 = vst.msk [vmem:[#allocation3 + $0xe0] sm:$0xf] %vm603, %v851
        %936 = vst.msk [vmem:[#allocation3 + $0xf4] sm:$0xf] %vm603, %v853
        %937 = vst.msk [vmem:[#allocation3 + $0x108] sm:$0xf] %vm603, %v855
        %938 = vst.msk [vmem:[#allocation3 + $0x11c] sm:$0xf] %vm603, %v857
        %939 = vst.msk [vmem:[#allocation3 + $0x130] sm:$0xf] %vm603, %v859
        %940 = vst.msk [vmem:[#allocation3 + $0x144] sm:$0xf] %vm603, %v861
        %941 = vst.msk [vmem:[#allocation3 + $0x158] sm:$0xf] %vm603, %v863
        %942 = vst.msk [vmem:[#allocation3 + $0x16c] sm:$0xf] %vm603, %v865
        %943 = vst.msk [vmem:[#allocation3 + $0x180] sm:$0xf] %vm603, %v867
        %944 = vst.msk [vmem:[#allocation3 + $0x194] sm:$0xf] %vm603, %v869
        %945 = vst.msk [vmem:[#allocation3 + $0x1a8] sm:$0xf] %vm603, %v871
        %946 = vst.msk [vmem:[#allocation3 + $0x1bc] sm:$0xf] %vm603, %v873
        %947 = vst.msk [vmem:[#allocation3 + $0x1d0] sm:$0xf] %vm603, %v875
        %948 = vst.msk [vmem:[#allocation3 + $0x1e4] sm:$0xf] %vm603, %v877
        %949 = vst.msk [vmem:[#allocation3 + $0x1f8] sm:$0xf] %vm603, %v879
        %950 = vst.msk [vmem:[#allocation3 + $0x20c] sm:$0xf] %vm603, %v881
        %951 = vst.msk [vmem:[#allocation3 + $0x220] sm:$0xf] %vm603, %v883
        %952 = vst.msk [vmem:[#allocation3 + $0x234] sm:$0xf] %vm603, %v885
        %953 = vst.msk [vmem:[#allocation3 + $0x248] sm:$0xf] %vm603, %v887
        %954 = vst.msk [vmem:[#allocation3 + $0x25c] sm:$0xf] %vm603, %v889
        %955 = vst.msk [vmem:[#allocation3 + $0x270] sm:$0xf] %vm603, %v891
        %v956 = vld [vmem:[%s281 + $0x1] sm:$0xff]
        %v957 = vld [vmem:[%s281 + $0x9] sm:$0xff]
        %v958 = vld [vmem:[%s281 + $0x19] sm:$0xff]
        %v959 = vld [vmem:[%s281 + $0x21] sm:$0xff]
        %v960 = vld [vmem:[%s281 + $0x31] sm:$0xff]
        %v961 = vld [vmem:[%s281 + $0x39] sm:$0xff]
        %v962 = vld [vmem:[%s281 + $0x49] sm:$0xff]
        %v963 = vld [vmem:[%s281 + $0x51] sm:$0xff]
        %v964 = vld [vmem:[%s281 + $0x61] sm:$0xff]
        %v965 = vld [vmem:[%s281 + $0x69] sm:$0xff]
        %v966 = vld [vmem:[%s281 + $0x79] sm:$0xff]
        %v967 = vld [vmem:[%s281 + $0x81] sm:$0xff]
        %v968 = vld [vmem:[%s281 + $0x91] sm:$0xff]
        %v969 = vld [vmem:[%s281 + $0x99] sm:$0xff]
        %v970 = vld [vmem:[%s281 + $0xa9] sm:$0xff]
        %v971 = vld [vmem:[%s281 + $0xb1] sm:$0xff]
        %v972 = vld [vmem:[%s281 + $0xc1] sm:$0xff]
        %v973 = vld [vmem:[%s281 + $0xc9] sm:$0xff]
        %v974 = vld [vmem:[%s281 + $0xd9] sm:$0xff]
        %v975 = vld [vmem:[%s281 + $0xe1] sm:$0xff]
        %v976 = vld [vmem:[%s281 + $0xf1] sm:$0xff]
        %v977 = vld [vmem:[%s281 + $0xf9] sm:$0xff]
        %v978 = vld [vmem:[%s281 + $0x109] sm:$0xff]
        %v979 = vld [vmem:[%s281 + $0x111] sm:$0xff]
        %v980 = vld [vmem:[%s281 + $0x121] sm:$0xff]
        %v981 = vld [vmem:[%s281 + $0x129] sm:$0xff]
        %v982 = vld [vmem:[%s281 + $0x139] sm:$0xff]
        %v983 = vld [vmem:[%s281 + $0x141] sm:$0xff]
        %v984 = vld [vmem:[%s281 + $0x151] sm:$0xff]
        %v985 = vld [vmem:[%s281 + $0x159] sm:$0xff]
        %v986 = vld [vmem:[%s281 + $0x169] sm:$0xff]
        %v987 = vld [vmem:[%s281 + $0x171] sm:$0xff]
        %v988 = vpack.c.bf16 %v956, %v956
        %v989 = vpack.c.bf16 %v957, %v957
        %v990 = vpack.c.bf16 %v958, %v958
        %v991 = vpack.c.bf16 %v959, %v959
        %v992 = vpack.c.bf16 %v960, %v960
        %v993 = vpack.c.bf16 %v961, %v961
        %v994 = vpack.c.bf16 %v962, %v962
        %v995 = vpack.c.bf16 %v963, %v963
        %v996 = vpack.c.bf16 %v964, %v964
        %v997 = vpack.c.bf16 %v965, %v965
        %v998 = vpack.c.bf16 %v966, %v966
        %v999 = vpack.c.bf16 %v967, %v967
        %v1000 = vpack.c.bf16 %v968, %v968
        %v1001 = vpack.c.bf16 %v969, %v969
        %v1002 = vpack.c.bf16 %v970, %v970
        %v1003 = vpack.c.bf16 %v971, %v971
        %v1004 = vpack.c.bf16 %v972, %v972
        %v1005 = vpack.c.bf16 %v973, %v973
        %v1006 = vpack.c.bf16 %v974, %v974
        %v1007 = vpack.c.bf16 %v975, %v975
        %v1008 = vpack.c.bf16 %v976, %v976
        %v1009 = vpack.c.bf16 %v977, %v977
        %v1010 = vpack.c.bf16 %v978, %v978
        %v1011 = vpack.c.bf16 %v979, %v979
        %v1012 = vpack.c.bf16 %v980, %v980
        %v1013 = vpack.c.bf16 %v981, %v981
        %v1014 = vpack.c.bf16 %v982, %v982
        %v1015 = vpack.c.bf16 %v983, %v983
        %v1016 = vpack.c.bf16 %v984, %v984
        %v1017 = vpack.c.bf16 %v985, %v985
        %v1018 = vpack.c.bf16 %v986, %v986
        %v1019 = vpack.c.bf16 %v987, %v987
        %1020 = vst.msk [vmem:[#allocation3 + $0x8] sm:$0xf] %vm378, %v988
        %1021 = vst.msk [vmem:[#allocation3 + $0x1c] sm:$0xf] %vm378, %v989
        %1022 = vst.msk [vmem:[#allocation3 + $0x30] sm:$0xf] %vm378, %v990
        %1023 = vst.msk [vmem:[#allocation3 + $0x44] sm:$0xf] %vm378, %v991
        %1024 = vst.msk [vmem:[#allocation3 + $0x58] sm:$0xf] %vm378, %v992
        %1025 = vst.msk [vmem:[#allocation3 + $0x6c] sm:$0xf] %vm378, %v993
        %1026 = vst.msk [vmem:[#allocation3 + $0x80] sm:$0xf] %vm378, %v994
        %1027 = vst.msk [vmem:[#allocation3 + $0x94] sm:$0xf] %vm378, %v995
        %1028 = vst.msk [vmem:[#allocation3 + $0xa8] sm:$0xf] %vm378, %v996
        %1029 = vst.msk [vmem:[#allocation3 + $0xbc] sm:$0xf] %vm378, %v997
        %1030 = vst.msk [vmem:[#allocation3 + $0xd0] sm:$0xf] %vm378, %v998
        %1031 = vst.msk [vmem:[#allocation3 + $0xe4] sm:$0xf] %vm378, %v999
        %1032 = vst.msk [vmem:[#allocation3 + $0xf8] sm:$0xf] %vm378, %v1000
        %1033 = vst.msk [vmem:[#allocation3 + $0x10c] sm:$0xf] %vm378, %v1001
        %1034 = vst.msk [vmem:[#allocation3 + $0x120] sm:$0xf] %vm378, %v1002
        %1035 = vst.msk [vmem:[#allocation3 + $0x134] sm:$0xf] %vm378, %v1003
        %1036 = vst.msk [vmem:[#allocation3 + $0x148] sm:$0xf] %vm378, %v1004
        %1037 = vst.msk [vmem:[#allocation3 + $0x15c] sm:$0xf] %vm378, %v1005
        %1038 = vst.msk [vmem:[#allocation3 + $0x170] sm:$0xf] %vm378, %v1006
        %1039 = vst.msk [vmem:[#allocation3 + $0x184] sm:$0xf] %vm378, %v1007
        %1040 = vst.msk [vmem:[#allocation3 + $0x198] sm:$0xf] %vm378, %v1008
        %1041 = vst.msk [vmem:[#allocation3 + $0x1ac] sm:$0xf] %vm378, %v1009
        %1042 = vst.msk [vmem:[#allocation3 + $0x1c0] sm:$0xf] %vm378, %v1010
        %1043 = vst.msk [vmem:[#allocation3 + $0x1d4] sm:$0xf] %vm378, %v1011
        %1044 = vst.msk [vmem:[#allocation3 + $0x1e8] sm:$0xf] %vm378, %v1012
        %1045 = vst.msk [vmem:[#allocation3 + $0x1fc] sm:$0xf] %vm378, %v1013
        %1046 = vst.msk [vmem:[#allocation3 + $0x210] sm:$0xf] %vm378, %v1014
        %1047 = vst.msk [vmem:[#allocation3 + $0x224] sm:$0xf] %vm378, %v1015
        %1048 = vst.msk [vmem:[#allocation3 + $0x238] sm:$0xf] %vm378, %v1016
        %1049 = vst.msk [vmem:[#allocation3 + $0x24c] sm:$0xf] %vm378, %v1017
        %1050 = vst.msk [vmem:[#allocation3 + $0x260] sm:$0xf] %vm378, %v1018
        %1051 = vst.msk [vmem:[#allocation3 + $0x274] sm:$0xf] %vm378, %v1019
        %v1052 = vld [vmem:[%s281 + $0x2] sm:$0xff]
        %v1053 = vld [vmem:[%s281 + $0xa] sm:$0xff]
        %v1054 = vld [vmem:[%s281 + $0x1a] sm:$0xff]
        %v1055 = vld [vmem:[%s281 + $0x22] sm:$0xff]
        %v1056 = vld [vmem:[%s281 + $0x32] sm:$0xff]
        %v1057 = vld [vmem:[%s281 + $0x3a] sm:$0xff]
        %v1058 = vld [vmem:[%s281 + $0x4a] sm:$0xff]
        %v1059 = vld [vmem:[%s281 + $0x52] sm:$0xff]
        %v1060 = vld [vmem:[%s281 + $0x62] sm:$0xff]
        %v1061 = vld [vmem:[%s281 + $0x6a] sm:$0xff]
        %v1062 = vld [vmem:[%s281 + $0x7a] sm:$0xff]
        %v1063 = vld [vmem:[%s281 + $0x82] sm:$0xff]
        %v1064 = vld [vmem:[%s281 + $0x92] sm:$0xff]
        %v1065 = vld [vmem:[%s281 + $0x9a] sm:$0xff]
        %v1066 = vld [vmem:[%s281 + $0xaa] sm:$0xff]
        %v1067 = vld [vmem:[%s281 + $0xb2] sm:$0xff]
        %v1068 = vld [vmem:[%s281 + $0xc2] sm:$0xff]
        %v1069 = vld [vmem:[%s281 + $0xca] sm:$0xff]
        %v1070 = vld [vmem:[%s281 + $0xda] sm:$0xff]
        %v1071 = vld [vmem:[%s281 + $0xe2] sm:$0xff]
        %v1072 = vld [vmem:[%s281 + $0xf2] sm:$0xff]
        %v1073 = vld [vmem:[%s281 + $0xfa] sm:$0xff]
        %v1074 = vld [vmem:[%s281 + $0x10a] sm:$0xff]
        %v1075 = vld [vmem:[%s281 + $0x112] sm:$0xff]
        %v1076 = vld [vmem:[%s281 + $0x122] sm:$0xff]
        %v1077 = vld [vmem:[%s281 + $0x12a] sm:$0xff]
        %v1078 = vld [vmem:[%s281 + $0x13a] sm:$0xff]
        %v1079 = vld [vmem:[%s281 + $0x142] sm:$0xff]
        %v1080 = vld [vmem:[%s281 + $0x152] sm:$0xff]
        %v1081 = vld [vmem:[%s281 + $0x15a] sm:$0xff]
        %v1082 = vld [vmem:[%s281 + $0x16a] sm:$0xff]
        %v1083 = vld [vmem:[%s281 + $0x172] sm:$0xff]
        %v1084 = vpack.c.bf16 %v1052, %v1052
        %v1085 = vpack.c.bf16 %v1053, %v1053
        %v1086 = vpack.c.bf16 %v1054, %v1054
        %v1087 = vpack.c.bf16 %v1055, %v1055
        %v1088 = vpack.c.bf16 %v1056, %v1056
        %v1089 = vpack.c.bf16 %v1057, %v1057
        %v1090 = vpack.c.bf16 %v1058, %v1058
        %v1091 = vpack.c.bf16 %v1059, %v1059
        %v1092 = vpack.c.bf16 %v1060, %v1060
        %v1093 = vpack.c.bf16 %v1061, %v1061
        %v1094 = vpack.c.bf16 %v1062, %v1062
        %v1095 = vpack.c.bf16 %v1063, %v1063
        %v1096 = vpack.c.bf16 %v1064, %v1064
        %v1097 = vpack.c.bf16 %v1065, %v1065
        %v1098 = vpack.c.bf16 %v1066, %v1066
        %v1099 = vpack.c.bf16 %v1067, %v1067
        %v1100 = vpack.c.bf16 %v1068, %v1068
        %v1101 = vpack.c.bf16 %v1069, %v1069
        %v1102 = vpack.c.bf16 %v1070, %v1070
        %v1103 = vpack.c.bf16 %v1071, %v1071
        %v1104 = vpack.c.bf16 %v1072, %v1072
        %v1105 = vpack.c.bf16 %v1073, %v1073
        %v1106 = vpack.c.bf16 %v1074, %v1074
        %v1107 = vpack.c.bf16 %v1075, %v1075
        %v1108 = vpack.c.bf16 %v1076, %v1076
        %v1109 = vpack.c.bf16 %v1077, %v1077
        %v1110 = vpack.c.bf16 %v1078, %v1078
        %v1111 = vpack.c.bf16 %v1079, %v1079
        %v1112 = vpack.c.bf16 %v1080, %v1080
        %v1113 = vpack.c.bf16 %v1081, %v1081
        %v1114 = vpack.c.bf16 %v1082, %v1082
        %v1115 = vpack.c.bf16 %v1083, %v1083
        %1148 = vrot.lane.b32.xlu0 %v1084, 64
        %v1149 = vpop.permute.xlu0 %1148
        %1150 = vrot.lane.b32.xlu0 %v1085, 64
        %v1151 = vpop.permute.xlu0 %1150
        %1152 = vrot.lane.b32.xlu0 %v1086, 64
        %v1153 = vpop.permute.xlu0 %1152
        %1154 = vrot.lane.b32.xlu0 %v1087, 64
        %v1155 = vpop.permute.xlu0 %1154
        %1156 = vrot.lane.b32.xlu0 %v1088, 64
        %v1157 = vpop.permute.xlu0 %1156
        %1158 = vrot.lane.b32.xlu0 %v1089, 64
        %v1159 = vpop.permute.xlu0 %1158
        %1160 = vrot.lane.b32.xlu0 %v1090, 64
        %v1161 = vpop.permute.xlu0 %1160
        %1162 = vrot.lane.b32.xlu0 %v1091, 64
        %v1163 = vpop.permute.xlu0 %1162
        %1164 = vrot.lane.b32.xlu0 %v1092, 64
        %v1165 = vpop.permute.xlu0 %1164
        %1166 = vrot.lane.b32.xlu0 %v1093, 64
        %v1167 = vpop.permute.xlu0 %1166
        %1168 = vrot.lane.b32.xlu0 %v1094, 64
        %v1169 = vpop.permute.xlu0 %1168
        %1170 = vrot.lane.b32.xlu0 %v1095, 64
        %v1171 = vpop.permute.xlu0 %1170
        %1172 = vrot.lane.b32.xlu0 %v1096, 64
        %v1173 = vpop.permute.xlu0 %1172
        %1174 = vrot.lane.b32.xlu0 %v1097, 64
        %v1175 = vpop.permute.xlu0 %1174
        %1176 = vrot.lane.b32.xlu0 %v1098, 64
        %v1177 = vpop.permute.xlu0 %1176
        %1178 = vrot.lane.b32.xlu0 %v1099, 64
        %v1179 = vpop.permute.xlu0 %1178
        %1180 = vrot.lane.b32.xlu0 %v1100, 64
        %v1181 = vpop.permute.xlu0 %1180
        %1182 = vrot.lane.b32.xlu0 %v1101, 64
        %v1183 = vpop.permute.xlu0 %1182
        %1184 = vrot.lane.b32.xlu0 %v1102, 64
        %v1185 = vpop.permute.xlu0 %1184
        %1186 = vrot.lane.b32.xlu0 %v1103, 64
        %v1187 = vpop.permute.xlu0 %1186
        %1188 = vrot.lane.b32.xlu0 %v1104, 64
        %v1189 = vpop.permute.xlu0 %1188
        %1190 = vrot.lane.b32.xlu0 %v1105, 64
        %v1191 = vpop.permute.xlu0 %1190
        %1192 = vrot.lane.b32.xlu0 %v1106, 64
        %v1193 = vpop.permute.xlu0 %1192
        %1194 = vrot.lane.b32.xlu0 %v1107, 64
        %v1195 = vpop.permute.xlu0 %1194
        %1196 = vrot.lane.b32.xlu0 %v1108, 64
        %v1197 = vpop.permute.xlu0 %1196
        %1198 = vrot.lane.b32.xlu0 %v1109, 64
        %v1199 = vpop.permute.xlu0 %1198
        %1200 = vrot.lane.b32.xlu0 %v1110, 64
        %v1201 = vpop.permute.xlu0 %1200
        %1202 = vrot.lane.b32.xlu0 %v1111, 64
        %v1203 = vpop.permute.xlu0 %1202
        %1204 = vrot.lane.b32.xlu0 %v1112, 64
        %v1205 = vpop.permute.xlu0 %1204
        %1206 = vrot.lane.b32.xlu0 %v1113, 64
        %v1207 = vpop.permute.xlu0 %1206
        %1208 = vrot.lane.b32.xlu0 %v1114, 64
        %v1209 = vpop.permute.xlu0 %1208
        %1210 = vrot.lane.b32.xlu0 %v1115, 64
        %v1211 = vpop.permute.xlu0 %1210
        %1244 = vst.msk [vmem:[#allocation3 + $0x8] sm:$0xf] %vm603, %v1149
        %1245 = vst.msk [vmem:[#allocation3 + $0x1c] sm:$0xf] %vm603, %v1151
        %1246 = vst.msk [vmem:[#allocation3 + $0x30] sm:$0xf] %vm603, %v1153
        %1247 = vst.msk [vmem:[#allocation3 + $0x44] sm:$0xf] %vm603, %v1155
        %1248 = vst.msk [vmem:[#allocation3 + $0x58] sm:$0xf] %vm603, %v1157
        %1249 = vst.msk [vmem:[#allocation3 + $0x6c] sm:$0xf] %vm603, %v1159
        %1250 = vst.msk [vmem:[#allocation3 + $0x80] sm:$0xf] %vm603, %v1161
        %1251 = vst.msk [vmem:[#allocation3 + $0x94] sm:$0xf] %vm603, %v1163
        %1252 = vst.msk [vmem:[#allocation3 + $0xa8] sm:$0xf] %vm603, %v1165
        %1253 = vst.msk [vmem:[#allocation3 + $0xbc] sm:$0xf] %vm603, %v1167
        %1254 = vst.msk [vmem:[#allocation3 + $0xd0] sm:$0xf] %vm603, %v1169
        %1255 = vst.msk [vmem:[#allocation3 + $0xe4] sm:$0xf] %vm603, %v1171
        %1256 = vst.msk [vmem:[#allocation3 + $0xf8] sm:$0xf] %vm603, %v1173
        %1257 = vst.msk [vmem:[#allocation3 + $0x10c] sm:$0xf] %vm603, %v1175
        %1258 = vst.msk [vmem:[#allocation3 + $0x120] sm:$0xf] %vm603, %v1177
        %1259 = vst.msk [vmem:[#allocation3 + $0x134] sm:$0xf] %vm603, %v1179
        %1260 = vst.msk [vmem:[#allocation3 + $0x148] sm:$0xf] %vm603, %v1181
        %1261 = vst.msk [vmem:[#allocation3 + $0x15c] sm:$0xf] %vm603, %v1183
        %1262 = vst.msk [vmem:[#allocation3 + $0x170] sm:$0xf] %vm603, %v1185
        %1263 = vst.msk [vmem:[#allocation3 + $0x184] sm:$0xf] %vm603, %v1187
        %1264 = vst.msk [vmem:[#allocation3 + $0x198] sm:$0xf] %vm603, %v1189
        %1265 = vst.msk [vmem:[#allocation3 + $0x1ac] sm:$0xf] %vm603, %v1191
        %1266 = vst.msk [vmem:[#allocation3 + $0x1c0] sm:$0xf] %vm603, %v1193
        %1267 = vst.msk [vmem:[#allocation3 + $0x1d4] sm:$0xf] %vm603, %v1195
        %1268 = vst.msk [vmem:[#allocation3 + $0x1e8] sm:$0xf] %vm603, %v1197
        %1269 = vst.msk [vmem:[#allocation3 + $0x1fc] sm:$0xf] %vm603, %v1199
        %1270 = vst.msk [vmem:[#allocation3 + $0x210] sm:$0xf] %vm603, %v1201
        %1271 = vst.msk [vmem:[#allocation3 + $0x224] sm:$0xf] %vm603, %v1203
        %1272 = vst.msk [vmem:[#allocation3 + $0x238] sm:$0xf] %vm603, %v1205
        %1273 = vst.msk [vmem:[#allocation3 + $0x24c] sm:$0xf] %vm603, %v1207
        %1274 = vst.msk [vmem:[#allocation3 + $0x260] sm:$0xf] %vm603, %v1209
        %1275 = vst.msk [vmem:[#allocation3 + $0x274] sm:$0xf] %vm603, %v1211
        %s1276 = scalar_lea.vmem [#allocation2], 48
        %v1277 = vld [vmem:[%s1276] sm:$0xff]
        %v1278 = vld [vmem:[%s1276 + $0x8] sm:$0xff]
        %v1279 = vld [vmem:[%s1276 + $0x18] sm:$0xff]
        %v1280 = vld [vmem:[%s1276 + $0x20] sm:$0xff]
        %v1281 = vld [vmem:[%s1276 + $0x30] sm:$0xff]
        %v1282 = vld [vmem:[%s1276 + $0x38] sm:$0xff]
        %v1283 = vld [vmem:[%s1276 + $0x48] sm:$0xff]
        %v1284 = vld [vmem:[%s1276 + $0x50] sm:$0xff]
        %v1285 = vld [vmem:[%s1276 + $0x60] sm:$0xff]
        %v1286 = vld [vmem:[%s1276 + $0x68] sm:$0xff]
        %v1287 = vld [vmem:[%s1276 + $0x78] sm:$0xff]
        %v1288 = vld [vmem:[%s1276 + $0x80] sm:$0xff]
        %v1289 = vld [vmem:[%s1276 + $0x90] sm:$0xff]
        %v1290 = vld [vmem:[%s1276 + $0x98] sm:$0xff]
        %v1291 = vld [vmem:[%s1276 + $0xa8] sm:$0xff]
        %v1292 = vld [vmem:[%s1276 + $0xb0] sm:$0xff]
        %v1293 = vld [vmem:[%s1276 + $0xc0] sm:$0xff]
        %v1294 = vld [vmem:[%s1276 + $0xc8] sm:$0xff]
        %v1295 = vld [vmem:[%s1276 + $0xd8] sm:$0xff]
        %v1296 = vld [vmem:[%s1276 + $0xe0] sm:$0xff]
        %v1297 = vld [vmem:[%s1276 + $0xf0] sm:$0xff]
        %v1298 = vld [vmem:[%s1276 + $0xf8] sm:$0xff]
        %v1299 = vld [vmem:[%s1276 + $0x108] sm:$0xff]
        %v1300 = vld [vmem:[%s1276 + $0x110] sm:$0xff]
        %v1301 = vld [vmem:[%s1276 + $0x120] sm:$0xff]
        %v1302 = vld [vmem:[%s1276 + $0x128] sm:$0xff]
        %v1303 = vld [vmem:[%s1276 + $0x138] sm:$0xff]
        %v1304 = vld [vmem:[%s1276 + $0x140] sm:$0xff]
        %v1305 = vld [vmem:[%s1276 + $0x150] sm:$0xff]
        %v1306 = vld [vmem:[%s1276 + $0x158] sm:$0xff]
        %v1307 = vld [vmem:[%s1276 + $0x168] sm:$0xff]
        %v1308 = vld [vmem:[%s1276 + $0x170] sm:$0xff]
        %v1309 = vpack.c.bf16 %v1277, %v1277
        %v1310 = vpack.c.bf16 %v1278, %v1278
        %v1311 = vpack.c.bf16 %v1279, %v1279
        %v1312 = vpack.c.bf16 %v1280, %v1280
        %v1313 = vpack.c.bf16 %v1281, %v1281
        %v1314 = vpack.c.bf16 %v1282, %v1282
        %v1315 = vpack.c.bf16 %v1283, %v1283
        %v1316 = vpack.c.bf16 %v1284, %v1284
        %v1317 = vpack.c.bf16 %v1285, %v1285
        %v1318 = vpack.c.bf16 %v1286, %v1286
        %v1319 = vpack.c.bf16 %v1287, %v1287
        %v1320 = vpack.c.bf16 %v1288, %v1288
        %v1321 = vpack.c.bf16 %v1289, %v1289
        %v1322 = vpack.c.bf16 %v1290, %v1290
        %v1323 = vpack.c.bf16 %v1291, %v1291
        %v1324 = vpack.c.bf16 %v1292, %v1292
        %v1325 = vpack.c.bf16 %v1293, %v1293
        %v1326 = vpack.c.bf16 %v1294, %v1294
        %v1327 = vpack.c.bf16 %v1295, %v1295
        %v1328 = vpack.c.bf16 %v1296, %v1296
        %v1329 = vpack.c.bf16 %v1297, %v1297
        %v1330 = vpack.c.bf16 %v1298, %v1298
        %v1331 = vpack.c.bf16 %v1299, %v1299
        %v1332 = vpack.c.bf16 %v1300, %v1300
        %v1333 = vpack.c.bf16 %v1301, %v1301
        %v1334 = vpack.c.bf16 %v1302, %v1302
        %v1335 = vpack.c.bf16 %v1303, %v1303
        %v1336 = vpack.c.bf16 %v1304, %v1304
        %v1337 = vpack.c.bf16 %v1305, %v1305
        %v1338 = vpack.c.bf16 %v1306, %v1306
        %v1339 = vpack.c.bf16 %v1307, %v1307
        %v1340 = vpack.c.bf16 %v1308, %v1308
        %1341 = vst.msk [vmem:[#allocation3 + $0xc] sm:$0xf] %vm378, %v1309
        %1342 = vst.msk [vmem:[#allocation3 + $0x20] sm:$0xf] %vm378, %v1310
        %1343 = vst.msk [vmem:[#allocation3 + $0x34] sm:$0xf] %vm378, %v1311
        %1344 = vst.msk [vmem:[#allocation3 + $0x48] sm:$0xf] %vm378, %v1312
        %1345 = vst.msk [vmem:[#allocation3 + $0x5c] sm:$0xf] %vm378, %v1313
        %1346 = vst.msk [vmem:[#allocation3 + $0x70] sm:$0xf] %vm378, %v1314
        %1347 = vst.msk [vmem:[#allocation3 + $0x84] sm:$0xf] %vm378, %v1315
        %1348 = vst.msk [vmem:[#allocation3 + $0x98] sm:$0xf] %vm378, %v1316
        %1349 = vst.msk [vmem:[#allocation3 + $0xac] sm:$0xf] %vm378, %v1317
        %1350 = vst.msk [vmem:[#allocation3 + $0xc0] sm:$0xf] %vm378, %v1318
        %1351 = vst.msk [vmem:[#allocation3 + $0xd4] sm:$0xf] %vm378, %v1319
        %1352 = vst.msk [vmem:[#allocation3 + $0xe8] sm:$0xf] %vm378, %v1320
        %1353 = vst.msk [vmem:[#allocation3 + $0xfc] sm:$0xf] %vm378, %v1321
        %1354 = vst.msk [vmem:[#allocation3 + $0x110] sm:$0xf] %vm378, %v1322
        %1355 = vst.msk [vmem:[#allocation3 + $0x124] sm:$0xf] %vm378, %v1323
        %1356 = vst.msk [vmem:[#allocation3 + $0x138] sm:$0xf] %vm378, %v1324
        %1357 = vst.msk [vmem:[#allocation3 + $0x14c] sm:$0xf] %vm378, %v1325
        %1358 = vst.msk [vmem:[#allocation3 + $0x160] sm:$0xf] %vm378, %v1326
        %1359 = vst.msk [vmem:[#allocation3 + $0x174] sm:$0xf] %vm378, %v1327
        %1360 = vst.msk [vmem:[#allocation3 + $0x188] sm:$0xf] %vm378, %v1328
        %1361 = vst.msk [vmem:[#allocation3 + $0x19c] sm:$0xf] %vm378, %v1329
        %1362 = vst.msk [vmem:[#allocation3 + $0x1b0] sm:$0xf] %vm378, %v1330
        %1363 = vst.msk [vmem:[#allocation3 + $0x1c4] sm:$0xf] %vm378, %v1331
        %1364 = vst.msk [vmem:[#allocation3 + $0x1d8] sm:$0xf] %vm378, %v1332
        %1365 = vst.msk [vmem:[#allocation3 + $0x1ec] sm:$0xf] %vm378, %v1333
        %1366 = vst.msk [vmem:[#allocation3 + $0x200] sm:$0xf] %vm378, %v1334
        %1367 = vst.msk [vmem:[#allocation3 + $0x214] sm:$0xf] %vm378, %v1335
        %1368 = vst.msk [vmem:[#allocation3 + $0x228] sm:$0xf] %vm378, %v1336
        %1369 = vst.msk [vmem:[#allocation3 + $0x23c] sm:$0xf] %vm378, %v1337
        %1370 = vst.msk [vmem:[#allocation3 + $0x250] sm:$0xf] %vm378, %v1338
        %1371 = vst.msk [vmem:[#allocation3 + $0x264] sm:$0xf] %vm378, %v1339
        %1372 = vst.msk [vmem:[#allocation3 + $0x278] sm:$0xf] %vm378, %v1340
        %v1373 = vld [vmem:[%s1276 + $0x1] sm:$0xff]
        %v1374 = vld [vmem:[%s1276 + $0x9] sm:$0xff]
        %v1375 = vld [vmem:[%s1276 + $0x19] sm:$0xff]
        %v1376 = vld [vmem:[%s1276 + $0x21] sm:$0xff]
        %v1377 = vld [vmem:[%s1276 + $0x31] sm:$0xff]
        %v1378 = vld [vmem:[%s1276 + $0x39] sm:$0xff]
        %v1379 = vld [vmem:[%s1276 + $0x49] sm:$0xff]
        %v1380 = vld [vmem:[%s1276 + $0x51] sm:$0xff]
        %v1381 = vld [vmem:[%s1276 + $0x61] sm:$0xff]
        %v1382 = vld [vmem:[%s1276 + $0x69] sm:$0xff]
        %v1383 = vld [vmem:[%s1276 + $0x79] sm:$0xff]
        %v1384 = vld [vmem:[%s1276 + $0x81] sm:$0xff]
        %v1385 = vld [vmem:[%s1276 + $0x91] sm:$0xff]
        %v1386 = vld [vmem:[%s1276 + $0x99] sm:$0xff]
        %v1387 = vld [vmem:[%s1276 + $0xa9] sm:$0xff]
        %v1388 = vld [vmem:[%s1276 + $0xb1] sm:$0xff]
        %v1389 = vld [vmem:[%s1276 + $0xc1] sm:$0xff]
        %v1390 = vld [vmem:[%s1276 + $0xc9] sm:$0xff]
        %v1391 = vld [vmem:[%s1276 + $0xd9] sm:$0xff]
        %v1392 = vld [vmem:[%s1276 + $0xe1] sm:$0xff]
        %v1393 = vld [vmem:[%s1276 + $0xf1] sm:$0xff]
        %v1394 = vld [vmem:[%s1276 + $0xf9] sm:$0xff]
        %v1395 = vld [vmem:[%s1276 + $0x109] sm:$0xff]
        %v1396 = vld [vmem:[%s1276 + $0x111] sm:$0xff]
        %v1397 = vld [vmem:[%s1276 + $0x121] sm:$0xff]
        %v1398 = vld [vmem:[%s1276 + $0x129] sm:$0xff]
        %v1399 = vld [vmem:[%s1276 + $0x139] sm:$0xff]
        %v1400 = vld [vmem:[%s1276 + $0x141] sm:$0xff]
        %v1401 = vld [vmem:[%s1276 + $0x151] sm:$0xff]
        %v1402 = vld [vmem:[%s1276 + $0x159] sm:$0xff]
        %v1403 = vld [vmem:[%s1276 + $0x169] sm:$0xff]
        %v1404 = vld [vmem:[%s1276 + $0x171] sm:$0xff]
        %v1405 = vpack.c.bf16 %v1373, %v1373
        %v1406 = vpack.c.bf16 %v1374, %v1374
        %v1407 = vpack.c.bf16 %v1375, %v1375
        %v1408 = vpack.c.bf16 %v1376, %v1376
        %v1409 = vpack.c.bf16 %v1377, %v1377
        %v1410 = vpack.c.bf16 %v1378, %v1378
        %v1411 = vpack.c.bf16 %v1379, %v1379
        %v1412 = vpack.c.bf16 %v1380, %v1380
        %v1413 = vpack.c.bf16 %v1381, %v1381
        %v1414 = vpack.c.bf16 %v1382, %v1382
        %v1415 = vpack.c.bf16 %v1383, %v1383
        %v1416 = vpack.c.bf16 %v1384, %v1384
        %v1417 = vpack.c.bf16 %v1385, %v1385
        %v1418 = vpack.c.bf16 %v1386, %v1386
        %v1419 = vpack.c.bf16 %v1387, %v1387
        %v1420 = vpack.c.bf16 %v1388, %v1388
        %v1421 = vpack.c.bf16 %v1389, %v1389
        %v1422 = vpack.c.bf16 %v1390, %v1390
        %v1423 = vpack.c.bf16 %v1391, %v1391
        %v1424 = vpack.c.bf16 %v1392, %v1392
        %v1425 = vpack.c.bf16 %v1393, %v1393
        %v1426 = vpack.c.bf16 %v1394, %v1394
        %v1427 = vpack.c.bf16 %v1395, %v1395
        %v1428 = vpack.c.bf16 %v1396, %v1396
        %v1429 = vpack.c.bf16 %v1397, %v1397
        %v1430 = vpack.c.bf16 %v1398, %v1398
        %v1431 = vpack.c.bf16 %v1399, %v1399
        %v1432 = vpack.c.bf16 %v1400, %v1400
        %v1433 = vpack.c.bf16 %v1401, %v1401
        %v1434 = vpack.c.bf16 %v1402, %v1402
        %v1435 = vpack.c.bf16 %v1403, %v1403
        %v1436 = vpack.c.bf16 %v1404, %v1404
        %1469 = vrot.lane.b32.xlu0 %v1405, 64
        %v1470 = vpop.permute.xlu0 %1469
        %1471 = vrot.lane.b32.xlu0 %v1406, 64
        %v1472 = vpop.permute.xlu0 %1471
        %1473 = vrot.lane.b32.xlu0 %v1407, 64
        %v1474 = vpop.permute.xlu0 %1473
        %1475 = vrot.lane.b32.xlu0 %v1408, 64
        %v1476 = vpop.permute.xlu0 %1475
        %1477 = vrot.lane.b32.xlu0 %v1409, 64
        %v1478 = vpop.permute.xlu0 %1477
        %1479 = vrot.lane.b32.xlu0 %v1410, 64
        %v1480 = vpop.permute.xlu0 %1479
        %1481 = vrot.lane.b32.xlu0 %v1411, 64
        %v1482 = vpop.permute.xlu0 %1481
        %1483 = vrot.lane.b32.xlu0 %v1412, 64
        %v1484 = vpop.permute.xlu0 %1483
        %1485 = vrot.lane.b32.xlu0 %v1413, 64
        %v1486 = vpop.permute.xlu0 %1485
        %1487 = vrot.lane.b32.xlu0 %v1414, 64
        %v1488 = vpop.permute.xlu0 %1487
        %1489 = vrot.lane.b32.xlu0 %v1415, 64
        %v1490 = vpop.permute.xlu0 %1489
        %1491 = vrot.lane.b32.xlu0 %v1416, 64
        %v1492 = vpop.permute.xlu0 %1491
        %1493 = vrot.lane.b32.xlu0 %v1417, 64
        %v1494 = vpop.permute.xlu0 %1493
        %1495 = vrot.lane.b32.xlu0 %v1418, 64
        %v1496 = vpop.permute.xlu0 %1495
        %1497 = vrot.lane.b32.xlu0 %v1419, 64
        %v1498 = vpop.permute.xlu0 %1497
        %1499 = vrot.lane.b32.xlu0 %v1420, 64
        %v1500 = vpop.permute.xlu0 %1499
        %1501 = vrot.lane.b32.xlu0 %v1421, 64
        %v1502 = vpop.permute.xlu0 %1501
        %1503 = vrot.lane.b32.xlu0 %v1422, 64
        %v1504 = vpop.permute.xlu0 %1503
        %1505 = vrot.lane.b32.xlu0 %v1423, 64
        %v1506 = vpop.permute.xlu0 %1505
        %1507 = vrot.lane.b32.xlu0 %v1424, 64
        %v1508 = vpop.permute.xlu0 %1507
        %1509 = vrot.lane.b32.xlu0 %v1425, 64
        %v1510 = vpop.permute.xlu0 %1509
        %1511 = vrot.lane.b32.xlu0 %v1426, 64
        %v1512 = vpop.permute.xlu0 %1511
        %1513 = vrot.lane.b32.xlu0 %v1427, 64
        %v1514 = vpop.permute.xlu0 %1513
        %1515 = vrot.lane.b32.xlu0 %v1428, 64
        %v1516 = vpop.permute.xlu0 %1515
        %1517 = vrot.lane.b32.xlu0 %v1429, 64
        %v1518 = vpop.permute.xlu0 %1517
        %1519 = vrot.lane.b32.xlu0 %v1430, 64
        %v1520 = vpop.permute.xlu0 %1519
        %1521 = vrot.lane.b32.xlu0 %v1431, 64
        %v1522 = vpop.permute.xlu0 %1521
        %1523 = vrot.lane.b32.xlu0 %v1432, 64
        %v1524 = vpop.permute.xlu0 %1523
        %1525 = vrot.lane.b32.xlu0 %v1433, 64
        %v1526 = vpop.permute.xlu0 %1525
        %1527 = vrot.lane.b32.xlu0 %v1434, 64
        %v1528 = vpop.permute.xlu0 %1527
        %1529 = vrot.lane.b32.xlu0 %v1435, 64
        %v1530 = vpop.permute.xlu0 %1529
        %1531 = vrot.lane.b32.xlu0 %v1436, 64
        %v1532 = vpop.permute.xlu0 %1531
        %1565 = vst.msk [vmem:[#allocation3 + $0xc] sm:$0xf] %vm603, %v1470
        %1566 = vst.msk [vmem:[#allocation3 + $0x20] sm:$0xf] %vm603, %v1472
        %1567 = vst.msk [vmem:[#allocation3 + $0x34] sm:$0xf] %vm603, %v1474
        %1568 = vst.msk [vmem:[#allocation3 + $0x48] sm:$0xf] %vm603, %v1476
        %1569 = vst.msk [vmem:[#allocation3 + $0x5c] sm:$0xf] %vm603, %v1478
        %1570 = vst.msk [vmem:[#allocation3 + $0x70] sm:$0xf] %vm603, %v1480
        %1571 = vst.msk [vmem:[#allocation3 + $0x84] sm:$0xf] %vm603, %v1482
        %1572 = vst.msk [vmem:[#allocation3 + $0x98] sm:$0xf] %vm603, %v1484
        %1573 = vst.msk [vmem:[#allocation3 + $0xac] sm:$0xf] %vm603, %v1486
        %1574 = vst.msk [vmem:[#allocation3 + $0xc0] sm:$0xf] %vm603, %v1488
        %1575 = vst.msk [vmem:[#allocation3 + $0xd4] sm:$0xf] %vm603, %v1490
        %1576 = vst.msk [vmem:[#allocation3 + $0xe8] sm:$0xf] %vm603, %v1492
        %1577 = vst.msk [vmem:[#allocation3 + $0xfc] sm:$0xf] %vm603, %v1494
        %1578 = vst.msk [vmem:[#allocation3 + $0x110] sm:$0xf] %vm603, %v1496
        %1579 = vst.msk [vmem:[#allocation3 + $0x124] sm:$0xf] %vm603, %v1498
        %1580 = vst.msk [vmem:[#allocation3 + $0x138] sm:$0xf] %vm603, %v1500
        %1581 = vst.msk [vmem:[#allocation3 + $0x14c] sm:$0xf] %vm603, %v1502
        %1582 = vst.msk [vmem:[#allocation3 + $0x160] sm:$0xf] %vm603, %v1504
        %1583 = vst.msk [vmem:[#allocation3 + $0x174] sm:$0xf] %vm603, %v1506
        %1584 = vst.msk [vmem:[#allocation3 + $0x188] sm:$0xf] %vm603, %v1508
        %1585 = vst.msk [vmem:[#allocation3 + $0x19c] sm:$0xf] %vm603, %v1510
        %1586 = vst.msk [vmem:[#allocation3 + $0x1b0] sm:$0xf] %vm603, %v1512
        %1587 = vst.msk [vmem:[#allocation3 + $0x1c4] sm:$0xf] %vm603, %v1514
        %1588 = vst.msk [vmem:[#allocation3 + $0x1d8] sm:$0xf] %vm603, %v1516
        %1589 = vst.msk [vmem:[#allocation3 + $0x1ec] sm:$0xf] %vm603, %v1518
        %1590 = vst.msk [vmem:[#allocation3 + $0x200] sm:$0xf] %vm603, %v1520
        %1591 = vst.msk [vmem:[#allocation3 + $0x214] sm:$0xf] %vm603, %v1522
        %1592 = vst.msk [vmem:[#allocation3 + $0x228] sm:$0xf] %vm603, %v1524
        %1593 = vst.msk [vmem:[#allocation3 + $0x23c] sm:$0xf] %vm603, %v1526
        %1594 = vst.msk [vmem:[#allocation3 + $0x250] sm:$0xf] %vm603, %v1528
        %1595 = vst.msk [vmem:[#allocation3 + $0x264] sm:$0xf] %vm603, %v1530
        %1596 = vst.msk [vmem:[#allocation3 + $0x278] sm:$0xf] %vm603, %v1532
        %v1597 = vld [vmem:[%s1276 + $0x2] sm:$0xff]
        %v1598 = vld [vmem:[%s1276 + $0xa] sm:$0xff]
        %v1599 = vld [vmem:[%s1276 + $0x1a] sm:$0xff]
        %v1600 = vld [vmem:[%s1276 + $0x22] sm:$0xff]
        %v1601 = vld [vmem:[%s1276 + $0x32] sm:$0xff]
        %v1602 = vld [vmem:[%s1276 + $0x3a] sm:$0xff]
        %v1603 = vld [vmem:[%s1276 + $0x4a] sm:$0xff]
        %v1604 = vld [vmem:[%s1276 + $0x52] sm:$0xff]
        %v1605 = vld [vmem:[%s1276 + $0x62] sm:$0xff]
        %v1606 = vld [vmem:[%s1276 + $0x6a] sm:$0xff]
        %v1607 = vld [vmem:[%s1276 + $0x7a] sm:$0xff]
        %v1608 = vld [vmem:[%s1276 + $0x82] sm:$0xff]
        %v1609 = vld [vmem:[%s1276 + $0x92] sm:$0xff]
        %v1610 = vld [vmem:[%s1276 + $0x9a] sm:$0xff]
        %v1611 = vld [vmem:[%s1276 + $0xaa] sm:$0xff]
        %v1612 = vld [vmem:[%s1276 + $0xb2] sm:$0xff]
        %v1613 = vld [vmem:[%s1276 + $0xc2] sm:$0xff]
        %v1614 = vld [vmem:[%s1276 + $0xca] sm:$0xff]
        %v1615 = vld [vmem:[%s1276 + $0xda] sm:$0xff]
        %v1616 = vld [vmem:[%s1276 + $0xe2] sm:$0xff]
        %v1617 = vld [vmem:[%s1276 + $0xf2] sm:$0xff]
        %v1618 = vld [vmem:[%s1276 + $0xfa] sm:$0xff]
        %v1619 = vld [vmem:[%s1276 + $0x10a] sm:$0xff]
        %v1620 = vld [vmem:[%s1276 + $0x112] sm:$0xff]
        %v1621 = vld [vmem:[%s1276 + $0x122] sm:$0xff]
        %v1622 = vld [vmem:[%s1276 + $0x12a] sm:$0xff]
        %v1623 = vld [vmem:[%s1276 + $0x13a] sm:$0xff]
        %v1624 = vld [vmem:[%s1276 + $0x142] sm:$0xff]
        %v1625 = vld [vmem:[%s1276 + $0x152] sm:$0xff]
        %v1626 = vld [vmem:[%s1276 + $0x15a] sm:$0xff]
        %v1627 = vld [vmem:[%s1276 + $0x16a] sm:$0xff]
        %v1628 = vld [vmem:[%s1276 + $0x172] sm:$0xff]
        %v1629 = vpack.c.bf16 %v1597, %v1597
        %v1630 = vpack.c.bf16 %v1598, %v1598
        %v1631 = vpack.c.bf16 %v1599, %v1599
        %v1632 = vpack.c.bf16 %v1600, %v1600
        %v1633 = vpack.c.bf16 %v1601, %v1601
        %v1634 = vpack.c.bf16 %v1602, %v1602
        %v1635 = vpack.c.bf16 %v1603, %v1603
        %v1636 = vpack.c.bf16 %v1604, %v1604
        %v1637 = vpack.c.bf16 %v1605, %v1605
        %v1638 = vpack.c.bf16 %v1606, %v1606
        %v1639 = vpack.c.bf16 %v1607, %v1607
        %v1640 = vpack.c.bf16 %v1608, %v1608
        %v1641 = vpack.c.bf16 %v1609, %v1609
        %v1642 = vpack.c.bf16 %v1610, %v1610
        %v1643 = vpack.c.bf16 %v1611, %v1611
        %v1644 = vpack.c.bf16 %v1612, %v1612
        %v1645 = vpack.c.bf16 %v1613, %v1613
        %v1646 = vpack.c.bf16 %v1614, %v1614
        %v1647 = vpack.c.bf16 %v1615, %v1615
        %v1648 = vpack.c.bf16 %v1616, %v1616
        %v1649 = vpack.c.bf16 %v1617, %v1617
        %v1650 = vpack.c.bf16 %v1618, %v1618
        %v1651 = vpack.c.bf16 %v1619, %v1619
        %v1652 = vpack.c.bf16 %v1620, %v1620
        %v1653 = vpack.c.bf16 %v1621, %v1621
        %v1654 = vpack.c.bf16 %v1622, %v1622
        %v1655 = vpack.c.bf16 %v1623, %v1623
        %v1656 = vpack.c.bf16 %v1624, %v1624
        %v1657 = vpack.c.bf16 %v1625, %v1625
        %v1658 = vpack.c.bf16 %v1626, %v1626
        %v1659 = vpack.c.bf16 %v1627, %v1627
        %v1660 = vpack.c.bf16 %v1628, %v1628
        %1661 = vst.msk [vmem:[#allocation3 + $0x10] sm:$0xf] %vm378, %v1629
        %1662 = vst.msk [vmem:[#allocation3 + $0x24] sm:$0xf] %vm378, %v1630
        %1663 = vst.msk [vmem:[#allocation3 + $0x38] sm:$0xf] %vm378, %v1631
        %1664 = vst.msk [vmem:[#allocation3 + $0x4c] sm:$0xf] %vm378, %v1632
        %1665 = vst.msk [vmem:[#allocation3 + $0x60] sm:$0xf] %vm378, %v1633
        %1666 = vst.msk [vmem:[#allocation3 + $0x74] sm:$0xf] %vm378, %v1634
        %1667 = vst.msk [vmem:[#allocation3 + $0x88] sm:$0xf] %vm378, %v1635
        %1668 = vst.msk [vmem:[#allocation3 + $0x9c] sm:$0xf] %vm378, %v1636
        %1669 = vst.msk [vmem:[#allocation3 + $0xb0] sm:$0xf] %vm378, %v1637
        %1670 = vst.msk [vmem:[#allocation3 + $0xc4] sm:$0xf] %vm378, %v1638
        %1671 = vst.msk [vmem:[#allocation3 + $0xd8] sm:$0xf] %vm378, %v1639
        %1672 = vst.msk [vmem:[#allocation3 + $0xec] sm:$0xf] %vm378, %v1640
        %1673 = vst.msk [vmem:[#allocation3 + $0x100] sm:$0xf] %vm378, %v1641
        %1674 = vst.msk [vmem:[#allocation3 + $0x114] sm:$0xf] %vm378, %v1642
        %1675 = vst.msk [vmem:[#allocation3 + $0x128] sm:$0xf] %vm378, %v1643
        %1676 = vst.msk [vmem:[#allocation3 + $0x13c] sm:$0xf] %vm378, %v1644
        %1677 = vst.msk [vmem:[#allocation3 + $0x150] sm:$0xf] %vm378, %v1645
        %1678 = vst.msk [vmem:[#allocation3 + $0x164] sm:$0xf] %vm378, %v1646
        %1679 = vst.msk [vmem:[#allocation3 + $0x178] sm:$0xf] %vm378, %v1647
        %1680 = vst.msk [vmem:[#allocation3 + $0x18c] sm:$0xf] %vm378, %v1648
        %1681 = vst.msk [vmem:[#allocation3 + $0x1a0] sm:$0xf] %vm378, %v1649
        %1682 = vst.msk [vmem:[#allocation3 + $0x1b4] sm:$0xf] %vm378, %v1650
        %1683 = vst.msk [vmem:[#allocation3 + $0x1c8] sm:$0xf] %vm378, %v1651
        %1684 = vst.msk [vmem:[#allocation3 + $0x1dc] sm:$0xf] %vm378, %v1652
        %1685 = vst.msk [vmem:[#allocation3 + $0x1f0] sm:$0xf] %vm378, %v1653
        %1686 = vst.msk [vmem:[#allocation3 + $0x204] sm:$0xf] %vm378, %v1654
        %1687 = vst.msk [vmem:[#allocation3 + $0x218] sm:$0xf] %vm378, %v1655
        %1688 = vst.msk [vmem:[#allocation3 + $0x22c] sm:$0xf] %vm378, %v1656
        %1689 = vst.msk [vmem:[#allocation3 + $0x240] sm:$0xf] %vm378, %v1657
        %1690 = vst.msk [vmem:[#allocation3 + $0x254] sm:$0xf] %vm378, %v1658
        %1691 = vst.msk [vmem:[#allocation3 + $0x268] sm:$0xf] %vm378, %v1659
        %1692 = vst.msk [vmem:[#allocation3 + $0x27c] sm:$0xf] %vm378, %v1660
        %v1693 = vld [vmem:[#allocation3] sm:$0xff]
        %v1694 = vld [vmem:[#allocation3 + $0x8] sm:$0xff]
        %v1695 = vld [vmem:[#allocation3 + $0x10] sm:$0xf]
        %v1696 = vld [vmem:[#allocation3 + $0x14] sm:$0xff]
        %v1697 = vld [vmem:[#allocation3 + $0x1c] sm:$0xff]
        %v1698 = vld [vmem:[#allocation3 + $0x24] sm:$0xf]
        %v1699 = vld [vmem:[#allocation3 + $0x28] sm:$0xff]
        %v1700 = vld [vmem:[#allocation3 + $0x30] sm:$0xff]
        %v1701 = vld [vmem:[#allocation3 + $0x38] sm:$0xf]
        %v1702 = vld [vmem:[#allocation3 + $0x3c] sm:$0xff]
        %v1703 = vld [vmem:[#allocation3 + $0x44] sm:$0xff]
        %v1704 = vld [vmem:[#allocation3 + $0x4c] sm:$0xf]
        %v1705 = vld [vmem:[#allocation3 + $0x50] sm:$0xff]
        %v1706 = vld [vmem:[#allocation3 + $0x58] sm:$0xff]
        %v1707 = vld [vmem:[#allocation3 + $0x60] sm:$0xf]
        %v1708 = vld [vmem:[#allocation3 + $0x64] sm:$0xff]
        %v1709 = vld [vmem:[#allocation3 + $0x6c] sm:$0xff]
        %v1710 = vld [vmem:[#allocation3 + $0x74] sm:$0xf]
        %v1711 = vld [vmem:[#allocation3 + $0x78] sm:$0xff]
        %v1712 = vld [vmem:[#allocation3 + $0x80] sm:$0xff]
        %v1713 = vld [vmem:[#allocation3 + $0x88] sm:$0xf]
        %v1714 = vld [vmem:[#allocation3 + $0x8c] sm:$0xff]
        %v1715 = vld [vmem:[#allocation3 + $0x94] sm:$0xff]
        %v1716 = vld [vmem:[#allocation3 + $0x9c] sm:$0xf]
        %v1717 = vld [vmem:[#allocation3 + $0xa0] sm:$0xff]
        %v1718 = vld [vmem:[#allocation3 + $0xa8] sm:$0xff]
        %v1719 = vld [vmem:[#allocation3 + $0xb0] sm:$0xf]
        %v1720 = vld [vmem:[#allocation3 + $0xb4] sm:$0xff]
        %v1721 = vld [vmem:[#allocation3 + $0xbc] sm:$0xff]
        %v1722 = vld [vmem:[#allocation3 + $0xc4] sm:$0xf]
        %v1723 = vld [vmem:[#allocation3 + $0xc8] sm:$0xff]
        %v1724 = vld [vmem:[#allocation3 + $0xd0] sm:$0xff]
        %v1725 = vld [vmem:[#allocation3 + $0xd8] sm:$0xf]
        %v1726 = vld [vmem:[#allocation3 + $0xdc] sm:$0xff]
        %v1727 = vld [vmem:[#allocation3 + $0xe4] sm:$0xff]
        %v1728 = vld [vmem:[#allocation3 + $0xec] sm:$0xf]
        %v1729 = vld [vmem:[#allocation3 + $0xf0] sm:$0xff]
        %v1730 = vld [vmem:[#allocation3 + $0xf8] sm:$0xff]
        %v1731 = vld [vmem:[#allocation3 + $0x100] sm:$0xf]
        %v1732 = vld [vmem:[#allocation3 + $0x104] sm:$0xff]
        %v1733 = vld [vmem:[#allocation3 + $0x10c] sm:$0xff]
        %v1734 = vld [vmem:[#allocation3 + $0x114] sm:$0xf]
        %v1735 = vld [vmem:[#allocation3 + $0x118] sm:$0xff]
        %v1736 = vld [vmem:[#allocation3 + $0x120] sm:$0xff]
        %v1737 = vld [vmem:[#allocation3 + $0x128] sm:$0xf]
        %v1738 = vld [vmem:[#allocation3 + $0x12c] sm:$0xff]
        %v1739 = vld [vmem:[#allocation3 + $0x134] sm:$0xff]
        %v1740 = vld [vmem:[#allocation3 + $0x13c] sm:$0xf]
        %v1741 = vld [vmem:[#allocation3 + $0x140] sm:$0xff]
        %v1742 = vld [vmem:[#allocation3 + $0x148] sm:$0xff]
        %v1743 = vld [vmem:[#allocation3 + $0x150] sm:$0xf]
        %v1744 = vld [vmem:[#allocation3 + $0x154] sm:$0xff]
        %v1745 = vld [vmem:[#allocation3 + $0x15c] sm:$0xff]
        %v1746 = vld [vmem:[#allocation3 + $0x164] sm:$0xf]
        %v1747 = vld [vmem:[#allocation3 + $0x168] sm:$0xff]
        %v1748 = vld [vmem:[#allocation3 + $0x170] sm:$0xff]
        %v1749 = vld [vmem:[#allocation3 + $0x178] sm:$0xf]
        %v1750 = vld [vmem:[#allocation3 + $0x17c] sm:$0xff]
        %v1751 = vld [vmem:[#allocation3 + $0x184] sm:$0xff]
        %v1752 = vld [vmem:[#allocation3 + $0x18c] sm:$0xf]
        %v1753 = vld [vmem:[#allocation3 + $0x190] sm:$0xff]
        %v1754 = vld [vmem:[#allocation3 + $0x198] sm:$0xff]
        %v1755 = vld [vmem:[#allocation3 + $0x1a0] sm:$0xf]
        %v1756 = vld [vmem:[#allocation3 + $0x1a4] sm:$0xff]
        %v1757 = vld [vmem:[#allocation3 + $0x1ac] sm:$0xff]
        %v1758 = vld [vmem:[#allocation3 + $0x1b4] sm:$0xf]
        %v1759 = vld [vmem:[#allocation3 + $0x1b8] sm:$0xff]
        %v1760 = vld [vmem:[#allocation3 + $0x1c0] sm:$0xff]
        %v1761 = vld [vmem:[#allocation3 + $0x1c8] sm:$0xf]
        %v1762 = vld [vmem:[#allocation3 + $0x1cc] sm:$0xff]
        %v1763 = vld [vmem:[#allocation3 + $0x1d4] sm:$0xff]
        %v1764 = vld [vmem:[#allocation3 + $0x1dc] sm:$0xf]
        %v1765 = vld [vmem:[#allocation3 + $0x1e0] sm:$0xff]
        %v1766 = vld [vmem:[#allocation3 + $0x1e8] sm:$0xff]
        %v1767 = vld [vmem:[#allocation3 + $0x1f0] sm:$0xf]
        %v1768 = vld [vmem:[#allocation3 + $0x1f4] sm:$0xff]
        %v1769 = vld [vmem:[#allocation3 + $0x1fc] sm:$0xff]
        %v1770 = vld [vmem:[#allocation3 + $0x204] sm:$0xf]
        %v1771 = vld [vmem:[#allocation3 + $0x208] sm:$0xff]
        %v1772 = vld [vmem:[#allocation3 + $0x210] sm:$0xff]
        %v1773 = vld [vmem:[#allocation3 + $0x218] sm:$0xf]
        %v1774 = vld [vmem:[#allocation3 + $0x21c] sm:$0xff]
        %v1775 = vld [vmem:[#allocation3 + $0x224] sm:$0xff]
        %v1776 = vld [vmem:[#allocation3 + $0x22c] sm:$0xf]
        %v1777 = vld [vmem:[#allocation3 + $0x230] sm:$0xff]
        %v1778 = vld [vmem:[#allocation3 + $0x238] sm:$0xff]
        %v1779 = vld [vmem:[#allocation3 + $0x240] sm:$0xf]
        %v1780 = vld [vmem:[#allocation3 + $0x244] sm:$0xff]
        %v1781 = vld [vmem:[#allocation3 + $0x24c] sm:$0xff]
        %v1782 = vld [vmem:[#allocation3 + $0x254] sm:$0xf]
        %v1783 = vld [vmem:[#allocation3 + $0x258] sm:$0xff]
        %v1784 = vld [vmem:[#allocation3 + $0x260] sm:$0xff]
        %v1785 = vld [vmem:[#allocation3 + $0x268] sm:$0xf]
        %v1786 = vld [vmem:[#allocation3 + $0x26c] sm:$0xff]
        %v1787 = vld [vmem:[#allocation3 + $0x274] sm:$0xff]
        %v1788 = vld [vmem:[#allocation3 + $0x27c] sm:$0xf]
        %v1789 = vld [vmem:[%s1] sm:$0xf]
        %v1790 = vld [vmem:[%s1 + $0x4] sm:$0xf]
        %v1791 = vld [vmem:[%s1 + $0x8] sm:$0xf]
        %v1792 = vld [vmem:[%s1 + $0xc] sm:$0xf]
        %v1793 = vld [vmem:[%s1 + $0x10] sm:$0xf]
        %v1794 = vld [vmem:[%s1 + $0x14] sm:$0xf]
        %v1795 = vld [vmem:[%s1 + $0x18] sm:$0xf]
        %v1796 = vld [vmem:[%s1 + $0x1c] sm:$0xf]
        %v1797 = vld [vmem:[%s1 + $0x20] sm:$0xf]
        %v1798 = vld [vmem:[%s1 + $0x24] sm:$0xf]
        %v1799 = vld [vmem:[%s1 + $0x28] sm:$0xf]
        %v1800 = vld [vmem:[%s1 + $0x2c] sm:$0xf]
        %v1801 = vld [vmem:[%s1 + $0x30] sm:$0xf]
        %v1802 = vld [vmem:[%s1 + $0x34] sm:$0xf]
        %v1803 = vld [vmem:[%s1 + $0x38] sm:$0xf]
        %v1804 = vld [vmem:[%s1 + $0x3c] sm:$0xf]
        %v1805 = vld [vmem:[%s1 + $0x40] sm:$0xf]
        %v1806 = vld [vmem:[%s1 + $0x44] sm:$0xf]
        %v1807 = vld [vmem:[%s1 + $0x48] sm:$0xf]
        %v1808 = vld [vmem:[%s1 + $0x4c] sm:$0xf]
        %v1809 = vld [vmem:[%s1 + $0x50] sm:$0xf]
        %v1810 = vld [vmem:[%s1 + $0x54] sm:$0xf]
        %v1811 = vld [vmem:[%s1 + $0x58] sm:$0xf]
        %v1812 = vld [vmem:[%s1 + $0x5c] sm:$0xf]
        %v1813 = vld [vmem:[%s1 + $0x60] sm:$0xf]
        %v1814 = vld [vmem:[%s1 + $0x64] sm:$0xf]
        %v1815 = vld [vmem:[%s1 + $0x68] sm:$0xf]
        %v1816 = vld [vmem:[%s1 + $0x6c] sm:$0xf]
        %v1817 = vld [vmem:[%s1 + $0x70] sm:$0xf]
        %v1818 = vld [vmem:[%s1 + $0x74] sm:$0xf]
        %v1819 = vld [vmem:[%s1 + $0x78] sm:$0xf]
        %v1820 = vld [vmem:[%s1 + $0x7c] sm:$0xf]
        %v1821 = vld [vmem:[%s1 + $0x80] sm:$0xf]
        %v1822 = vld [vmem:[%s1 + $0x84] sm:$0xf]
        %v1823 = vld [vmem:[%s1 + $0x88] sm:$0xf]
        %v1824 = vld [vmem:[%s1 + $0x8c] sm:$0xf]
        %v1825 = vld [vmem:[%s1 + $0x90] sm:$0xf]
        %v1826 = vld [vmem:[%s1 + $0x94] sm:$0xf]
        %v1827 = vld [vmem:[%s1 + $0x98] sm:$0xf]
        %v1828 = vld [vmem:[%s1 + $0x9c] sm:$0xf]
        %v1829 = vld [vmem:[%s1 + $0xa0] sm:$0xf]
        %v1830 = vld [vmem:[%s1 + $0xa4] sm:$0xf]
        %v1831 = vld [vmem:[%s1 + $0xa8] sm:$0xf]
        %v1832 = vld [vmem:[%s1 + $0xac] sm:$0xf]
        %v1833 = vld [vmem:[%s1 + $0xb0] sm:$0xf]
        %v1834 = vld [vmem:[%s1 + $0xb4] sm:$0xf]
        %v1835 = vld [vmem:[%s1 + $0xb8] sm:$0xf]
        %v1836 = vld [vmem:[%s1 + $0xbc] sm:$0xf]
        %v1837 = vld [vmem:[%s1 + $0xc0] sm:$0xf]
        %v1838 = vld [vmem:[%s1 + $0xc4] sm:$0xf]
        %v1839 = vld [vmem:[%s1 + $0xc8] sm:$0xf]
        %v1840 = vld [vmem:[%s1 + $0xcc] sm:$0xf]
        %v1841 = vld [vmem:[%s1 + $0xd0] sm:$0xf]
        %v1842 = vld [vmem:[%s1 + $0xd4] sm:$0xf]
        %v1843 = vld [vmem:[%s1 + $0xd8] sm:$0xf]
        %v1844 = vld [vmem:[%s1 + $0xdc] sm:$0xf]
        %v1845 = vld [vmem:[%s1 + $0xe0] sm:$0xf]
        %v1846 = vld [vmem:[%s1 + $0xe4] sm:$0xf]
        %v1847 = vld [vmem:[%s1 + $0xe8] sm:$0xf]
        %v1848 = vld [vmem:[%s1 + $0xec] sm:$0xf]
        %v1849 = vld [vmem:[%s1 + $0xf0] sm:$0xf]
        %v1850 = vld [vmem:[%s1 + $0xf4] sm:$0xf]
        %v1851 = vld [vmem:[%s1 + $0xf8] sm:$0xf]
        %v1852 = vld [vmem:[%s1 + $0xfc] sm:$0xf]
        %v1853 = vld [vmem:[%s1 + $0x100] sm:$0xf]
        %v1854 = vld [vmem:[%s1 + $0x104] sm:$0xf]
        %v1855 = vld [vmem:[%s1 + $0x108] sm:$0xf]
        %v1856 = vld [vmem:[%s1 + $0x10c] sm:$0xf]
        %v1857 = vld [vmem:[%s1 + $0x110] sm:$0xf]
        %v1858 = vld [vmem:[%s1 + $0x114] sm:$0xf]
        %v1859 = vld [vmem:[%s1 + $0x118] sm:$0xf]
        %v1860 = vld [vmem:[%s1 + $0x11c] sm:$0xf]
        %v1862 = vperm.slane %v192, 0
        %v1960 = vunpack.c.l.b16 %v1693
        %v1961 = vunpack.c.h.b16 %v1693
        %v1962 = vunpack.c.l.b16 %v1694
        %v1963 = vunpack.c.h.b16 %v1694
        %v1964 = vunpack.c.l.b16 %v1695
        %v1965 = vunpack.c.l.b16 %v1696
        %v1966 = vunpack.c.h.b16 %v1696
        %v1967 = vunpack.c.l.b16 %v1697
        %v1968 = vunpack.c.h.b16 %v1697
        %v1969 = vunpack.c.l.b16 %v1698
        %v1970 = vunpack.c.l.b16 %v1699
        %v1971 = vunpack.c.h.b16 %v1699
        %v1972 = vunpack.c.l.b16 %v1700
        %v1973 = vunpack.c.h.b16 %v1700
        %v1974 = vunpack.c.l.b16 %v1701
        %v1975 = vunpack.c.l.b16 %v1702
        %v1976 = vunpack.c.h.b16 %v1702
        %v1977 = vunpack.c.l.b16 %v1703
        %v1978 = vunpack.c.h.b16 %v1703
        %v1979 = vunpack.c.l.b16 %v1704
        %v1980 = vunpack.c.l.b16 %v1705
        %v1981 = vunpack.c.h.b16 %v1705
        %v1982 = vunpack.c.l.b16 %v1706
        %v1983 = vunpack.c.h.b16 %v1706
        %v1984 = vunpack.c.l.b16 %v1707
        %v1985 = vunpack.c.l.b16 %v1708
        %v1986 = vunpack.c.h.b16 %v1708
        %v1987 = vunpack.c.l.b16 %v1709
        %v1988 = vunpack.c.h.b16 %v1709
        %v1989 = vunpack.c.l.b16 %v1710
        %v1990 = vunpack.c.l.b16 %v1711
        %v1991 = vunpack.c.h.b16 %v1711
        %v1992 = vunpack.c.l.b16 %v1712
        %v1993 = vunpack.c.h.b16 %v1712
        %v1994 = vunpack.c.l.b16 %v1713
        %v1995 = vunpack.c.l.b16 %v1714
        %v1996 = vunpack.c.h.b16 %v1714
        %v1997 = vunpack.c.l.b16 %v1715
        %v1998 = vunpack.c.h.b16 %v1715
        %v1999 = vunpack.c.l.b16 %v1716
        %v2000 = vunpack.c.l.b16 %v1717
        %v2001 = vunpack.c.h.b16 %v1717
        %v2002 = vunpack.c.l.b16 %v1718
        %v2003 = vunpack.c.h.b16 %v1718
        %v2004 = vunpack.c.l.b16 %v1719
        %v2005 = vunpack.c.l.b16 %v1720
        %v2006 = vunpack.c.h.b16 %v1720
        %v2007 = vunpack.c.l.b16 %v1721
        %v2008 = vunpack.c.h.b16 %v1721
        %v2009 = vunpack.c.l.b16 %v1722
        %v2010 = vunpack.c.l.b16 %v1723
        %v2011 = vunpack.c.h.b16 %v1723
        %v2012 = vunpack.c.l.b16 %v1724
        %v2013 = vunpack.c.h.b16 %v1724
        %v2014 = vunpack.c.l.b16 %v1725
        %v2015 = vunpack.c.l.b16 %v1726
        %v2016 = vunpack.c.h.b16 %v1726
        %v2017 = vunpack.c.l.b16 %v1727
        %v2018 = vunpack.c.h.b16 %v1727
        %v2019 = vunpack.c.l.b16 %v1728
        %v2020 = vunpack.c.l.b16 %v1729
        %v2021 = vunpack.c.h.b16 %v1729
        %v2022 = vunpack.c.l.b16 %v1730
        %v2023 = vunpack.c.h.b16 %v1730
        %v2024 = vunpack.c.l.b16 %v1731
        %v2025 = vunpack.c.l.b16 %v1732
        %v2026 = vunpack.c.h.b16 %v1732
        %v2027 = vunpack.c.l.b16 %v1733
        %v2028 = vunpack.c.h.b16 %v1733
        %v2029 = vunpack.c.l.b16 %v1734
        %v2030 = vunpack.c.l.b16 %v1735
        %v2031 = vunpack.c.h.b16 %v1735
        %v2032 = vunpack.c.l.b16 %v1736
        %v2033 = vunpack.c.h.b16 %v1736
        %v2034 = vunpack.c.l.b16 %v1737
        %v2035 = vunpack.c.l.b16 %v1738
        %v2036 = vunpack.c.h.b16 %v1738
        %v2037 = vunpack.c.l.b16 %v1739
        %v2038 = vunpack.c.h.b16 %v1739
        %v2039 = vunpack.c.l.b16 %v1740
        %v2040 = vunpack.c.l.b16 %v1741
        %v2041 = vunpack.c.h.b16 %v1741
        %v2042 = vunpack.c.l.b16 %v1742
        %v2043 = vunpack.c.h.b16 %v1742
        %v2044 = vunpack.c.l.b16 %v1743
        %v2045 = vunpack.c.l.b16 %v1744
        %v2046 = vunpack.c.h.b16 %v1744
        %v2047 = vunpack.c.l.b16 %v1745
        %v2048 = vunpack.c.h.b16 %v1745
        %v2049 = vunpack.c.l.b16 %v1746
        %v2050 = vunpack.c.l.b16 %v1747
        %v2051 = vunpack.c.h.b16 %v1747
        %v2052 = vunpack.c.l.b16 %v1748
        %v2053 = vunpack.c.h.b16 %v1748
        %v2054 = vunpack.c.l.b16 %v1749
        %v2055 = vunpack.c.l.b16 %v1750
        %v2056 = vunpack.c.h.b16 %v1750
        %v2057 = vunpack.c.l.b16 %v1751
        %v2058 = vunpack.c.h.b16 %v1751
        %v2059 = vunpack.c.l.b16 %v1752
        %v2060 = vunpack.c.l.b16 %v1753
        %v2061 = vunpack.c.h.b16 %v1753
        %v2062 = vunpack.c.l.b16 %v1754
        %v2063 = vunpack.c.h.b16 %v1754
        %v2064 = vunpack.c.l.b16 %v1755
        %v2065 = vunpack.c.l.b16 %v1756
        %v2066 = vunpack.c.h.b16 %v1756
        %v2067 = vunpack.c.l.b16 %v1757
        %v2068 = vunpack.c.h.b16 %v1757
        %v2069 = vunpack.c.l.b16 %v1758
        %v2070 = vunpack.c.l.b16 %v1759
        %v2071 = vunpack.c.h.b16 %v1759
        %v2072 = vunpack.c.l.b16 %v1760
        %v2073 = vunpack.c.h.b16 %v1760
        %v2074 = vunpack.c.l.b16 %v1761
        %v2075 = vunpack.c.l.b16 %v1762
        %v2076 = vunpack.c.h.b16 %v1762
        %v2077 = vunpack.c.l.b16 %v1763
        %v2078 = vunpack.c.h.b16 %v1763
        %v2079 = vunpack.c.l.b16 %v1764
        %v2080 = vunpack.c.l.b16 %v1765
        %v2081 = vunpack.c.h.b16 %v1765
        %v2082 = vunpack.c.l.b16 %v1766
        %v2083 = vunpack.c.h.b16 %v1766
        %v2084 = vunpack.c.l.b16 %v1767
        %v2085 = vunpack.c.l.b16 %v1768
        %v2086 = vunpack.c.h.b16 %v1768
        %v2087 = vunpack.c.l.b16 %v1769
        %v2088 = vunpack.c.h.b16 %v1769
        %v2089 = vunpack.c.l.b16 %v1770
        %v2090 = vunpack.c.l.b16 %v1771
        %v2091 = vunpack.c.h.b16 %v1771
        %v2092 = vunpack.c.l.b16 %v1772
        %v2093 = vunpack.c.h.b16 %v1772
        %v2094 = vunpack.c.l.b16 %v1773
        %v2095 = vunpack.c.l.b16 %v1774
        %v2096 = vunpack.c.h.b16 %v1774
        %v2097 = vunpack.c.l.b16 %v1775
        %v2098 = vunpack.c.h.b16 %v1775
        %v2099 = vunpack.c.l.b16 %v1776
        %v2100 = vunpack.c.l.b16 %v1777
        %v2101 = vunpack.c.h.b16 %v1777
        %v2102 = vunpack.c.l.b16 %v1778
        %v2103 = vunpack.c.h.b16 %v1778
        %v2104 = vunpack.c.l.b16 %v1779
        %v2105 = vunpack.c.l.b16 %v1780
        %v2106 = vunpack.c.h.b16 %v1780
        %v2107 = vunpack.c.l.b16 %v1781
        %v2108 = vunpack.c.h.b16 %v1781
        %v2109 = vunpack.c.l.b16 %v1782
        %v2110 = vunpack.c.l.b16 %v1783
        %v2111 = vunpack.c.h.b16 %v1783
        %v2112 = vunpack.c.l.b16 %v1784
        %v2113 = vunpack.c.h.b16 %v1784
        %v2114 = vunpack.c.l.b16 %v1785
        %v2115 = vunpack.c.l.b16 %v1786
        %v2116 = vunpack.c.h.b16 %v1786
        %v2117 = vunpack.c.l.b16 %v1787
        %v2118 = vunpack.c.h.b16 %v1787
        %v2119 = vunpack.c.l.b16 %v1788
        %v2120 = vpack.c.b16 %v1965, %v1960
        %v2121 = vpack.c.b16 %v1966, %v1961
        %v2122 = vpack.c.b16 %v1967, %v1962
        %v2123 = vpack.c.b16 %v1968, %v1963
        %v2124 = vpack.c.b16 %v1969, %v1964
        %v2125 = vpack.c.b16 %v1975, %v1970
        %v2126 = vpack.c.b16 %v1976, %v1971
        %v2127 = vpack.c.b16 %v1977, %v1972
        %v2128 = vpack.c.b16 %v1978, %v1973
        %v2129 = vpack.c.b16 %v1979, %v1974
        %v2130 = vpack.c.b16 %v1985, %v1980
        %v2131 = vpack.c.b16 %v1986, %v1981
        %v2132 = vpack.c.b16 %v1987, %v1982
        %v2133 = vpack.c.b16 %v1988, %v1983
        %v2134 = vpack.c.b16 %v1989, %v1984
        %v2135 = vpack.c.b16 %v1995, %v1990
        %v2136 = vpack.c.b16 %v1996, %v1991
        %v2137 = vpack.c.b16 %v1997, %v1992
        %v2138 = vpack.c.b16 %v1998, %v1993
        %v2139 = vpack.c.b16 %v1999, %v1994
        %v2140 = vpack.c.b16 %v2005, %v2000
        %v2141 = vpack.c.b16 %v2006, %v2001
        %v2142 = vpack.c.b16 %v2007, %v2002
        %v2143 = vpack.c.b16 %v2008, %v2003
        %v2144 = vpack.c.b16 %v2009, %v2004
        %v2145 = vpack.c.b16 %v2015, %v2010
        %v2146 = vpack.c.b16 %v2016, %v2011
        %v2147 = vpack.c.b16 %v2017, %v2012
        %v2148 = vpack.c.b16 %v2018, %v2013
        %v2149 = vpack.c.b16 %v2019, %v2014
        %v2150 = vpack.c.b16 %v2025, %v2020
        %v2151 = vpack.c.b16 %v2026, %v2021
        %v2152 = vpack.c.b16 %v2027, %v2022
        %v2153 = vpack.c.b16 %v2028, %v2023
        %v2154 = vpack.c.b16 %v2029, %v2024
        %v2155 = vpack.c.b16 %v2035, %v2030
        %v2156 = vpack.c.b16 %v2036, %v2031
        %v2157 = vpack.c.b16 %v2037, %v2032
        %v2158 = vpack.c.b16 %v2038, %v2033
        %v2159 = vpack.c.b16 %v2039, %v2034
        %v2160 = vpack.c.b16 %v2045, %v2040
        %v2161 = vpack.c.b16 %v2046, %v2041
        %v2162 = vpack.c.b16 %v2047, %v2042
        %v2163 = vpack.c.b16 %v2048, %v2043
        %v2164 = vpack.c.b16 %v2049, %v2044
        %v2165 = vpack.c.b16 %v2055, %v2050
        %v2166 = vpack.c.b16 %v2056, %v2051
        %v2167 = vpack.c.b16 %v2057, %v2052
        %v2168 = vpack.c.b16 %v2058, %v2053
        %v2169 = vpack.c.b16 %v2059, %v2054
        %v2170 = vpack.c.b16 %v2065, %v2060
        %v2171 = vpack.c.b16 %v2066, %v2061
        %v2172 = vpack.c.b16 %v2067, %v2062
        %v2173 = vpack.c.b16 %v2068, %v2063
        %v2174 = vpack.c.b16 %v2069, %v2064
        %v2175 = vpack.c.b16 %v2075, %v2070
        %v2176 = vpack.c.b16 %v2076, %v2071
        %v2177 = vpack.c.b16 %v2077, %v2072
        %v2178 = vpack.c.b16 %v2078, %v2073
        %v2179 = vpack.c.b16 %v2079, %v2074
        %v2180 = vpack.c.b16 %v2085, %v2080
        %v2181 = vpack.c.b16 %v2086, %v2081
        %v2182 = vpack.c.b16 %v2087, %v2082
        %v2183 = vpack.c.b16 %v2088, %v2083
        %v2184 = vpack.c.b16 %v2089, %v2084
        %v2185 = vpack.c.b16 %v2095, %v2090
        %v2186 = vpack.c.b16 %v2096, %v2091
        %v2187 = vpack.c.b16 %v2097, %v2092
        %v2188 = vpack.c.b16 %v2098, %v2093
        %v2189 = vpack.c.b16 %v2099, %v2094
        %v2190 = vpack.c.b16 %v2105, %v2100
        %v2191 = vpack.c.b16 %v2106, %v2101
        %v2192 = vpack.c.b16 %v2107, %v2102
        %v2193 = vpack.c.b16 %v2108, %v2103
        %v2194 = vpack.c.b16 %v2109, %v2104
        %v2195 = vpack.c.b16 %v2115, %v2110
        %v2196 = vpack.c.b16 %v2116, %v2111
        %v2197 = vpack.c.b16 %v2117, %v2112
        %v2198 = vpack.c.b16 %v2118, %v2113
        %v2199 = vpack.c.b16 %v2119, %v2114
        %v2336 = vunpack.c.l.b16 %v1789
        %v2337 = vunpack.c.l.b16 %v1790
        %v2338 = vunpack.c.l.b16 %v1791
        %v2339 = vunpack.c.l.b16 %v1792
        %v2340 = vunpack.c.l.b16 %v1793
        %v2341 = vunpack.c.l.b16 %v1794
        %v2342 = vunpack.c.l.b16 %v1795
        %v2343 = vunpack.c.l.b16 %v1796
        %v2344 = vunpack.c.l.b16 %v1797
        %v2345 = vunpack.c.l.b16 %v1798
        %v2346 = vunpack.c.l.b16 %v1799
        %v2347 = vunpack.c.l.b16 %v1800
        %v2348 = vunpack.c.l.b16 %v1801
        %v2349 = vunpack.c.l.b16 %v1802
        %v2350 = vunpack.c.l.b16 %v1803
        %v2351 = vunpack.c.l.b16 %v1804
        %v2352 = vunpack.c.l.b16 %v1805
        %v2353 = vunpack.c.l.b16 %v1806
        %v2354 = vunpack.c.l.b16 %v1807
        %v2355 = vunpack.c.l.b16 %v1808
        %v2356 = vunpack.c.l.b16 %v1809
        %v2357 = vunpack.c.l.b16 %v1810
        %v2358 = vunpack.c.l.b16 %v1811
        %v2359 = vunpack.c.l.b16 %v1812
        %v2360 = vunpack.c.l.b16 %v1813
        %v2361 = vunpack.c.l.b16 %v1814
        %v2362 = vunpack.c.l.b16 %v1815
        %v2363 = vunpack.c.l.b16 %v1816
        %v2364 = vunpack.c.l.b16 %v1817
        %v2365 = vunpack.c.l.b16 %v1818
        %v2366 = vunpack.c.l.b16 %v1819
        %v2367 = vunpack.c.l.b16 %v1820
        %v2368 = vunpack.c.l.b16 %v1821
        %v2369 = vunpack.c.l.b16 %v1822
        %v2370 = vunpack.c.l.b16 %v1823
        %v2371 = vunpack.c.l.b16 %v1824
        %v2372 = vunpack.c.l.b16 %v1825
        %v2373 = vunpack.c.l.b16 %v1826
        %v2374 = vunpack.c.l.b16 %v1827
        %v2375 = vunpack.c.l.b16 %v1828
        %v2376 = vunpack.c.l.b16 %v1829
        %v2377 = vunpack.c.l.b16 %v1830
        %v2378 = vunpack.c.l.b16 %v1831
        %v2379 = vunpack.c.l.b16 %v1832
        %v2380 = vunpack.c.l.b16 %v1833
        %v2381 = vunpack.c.l.b16 %v1834
        %v2382 = vunpack.c.l.b16 %v1835
        %v2383 = vunpack.c.l.b16 %v1836
        %v2384 = vunpack.c.l.b16 %v1837
        %v2385 = vunpack.c.l.b16 %v1838
        %v2386 = vunpack.c.l.b16 %v1839
        %v2387 = vunpack.c.l.b16 %v1840
        %v2388 = vunpack.c.l.b16 %v1841
        %v2389 = vunpack.c.l.b16 %v1842
        %v2390 = vunpack.c.l.b16 %v1843
        %v2391 = vunpack.c.l.b16 %v1844
        %v2392 = vunpack.c.l.b16 %v1845
        %v2393 = vunpack.c.l.b16 %v1846
        %v2394 = vunpack.c.l.b16 %v1847
        %v2395 = vunpack.c.l.b16 %v1848
        %v2396 = vunpack.c.l.b16 %v1849
        %v2397 = vunpack.c.l.b16 %v1850
        %v2398 = vunpack.c.l.b16 %v1851
        %v2399 = vunpack.c.l.b16 %v1852
        %v2400 = vunpack.c.l.b16 %v1853
        %v2401 = vunpack.c.l.b16 %v1854
        %v2402 = vunpack.c.l.b16 %v1855
        %v2403 = vunpack.c.l.b16 %v1856
        %v2404 = vunpack.c.l.b16 %v1857
        %v2405 = vunpack.c.l.b16 %v1858
        %v2406 = vunpack.c.l.b16 %v1859
        %v2407 = vunpack.c.l.b16 %v1860
        %v2408 = vpack.c.b16 %v2337, %v2336
        %v2409 = vpack.c.b16 %v2339, %v2338
        %v2410 = vpack.c.b16 %v2341, %v2340
        %v2411 = vpack.c.b16 %v2343, %v2342
        %v2412 = vpack.c.b16 %v2345, %v2344
        %v2413 = vpack.c.b16 %v2347, %v2346
        %v2414 = vpack.c.b16 %v2349, %v2348
        %v2415 = vpack.c.b16 %v2351, %v2350
        %v2416 = vpack.c.b16 %v2353, %v2352
        %v2417 = vpack.c.b16 %v2355, %v2354
        %v2418 = vpack.c.b16 %v2357, %v2356
        %v2419 = vpack.c.b16 %v2359, %v2358
        %v2420 = vpack.c.b16 %v2361, %v2360
        %v2421 = vpack.c.b16 %v2363, %v2362
        %v2422 = vpack.c.b16 %v2365, %v2364
        %v2423 = vpack.c.b16 %v2367, %v2366
        %v2424 = vpack.c.b16 %v2369, %v2368
        %v2425 = vpack.c.b16 %v2371, %v2370
        %v2426 = vpack.c.b16 %v2373, %v2372
        %v2427 = vpack.c.b16 %v2375, %v2374
        %v2428 = vpack.c.b16 %v2377, %v2376
        %v2429 = vpack.c.b16 %v2379, %v2378
        %v2430 = vpack.c.b16 %v2381, %v2380
        %v2431 = vpack.c.b16 %v2383, %v2382
        %v2432 = vpack.c.b16 %v2385, %v2384
        %v2433 = vpack.c.b16 %v2387, %v2386
        %v2434 = vpack.c.b16 %v2389, %v2388
        %v2435 = vpack.c.b16 %v2391, %v2390
        %v2436 = vpack.c.b16 %v2393, %v2392
        %v2437 = vpack.c.b16 %v2395, %v2394
        %v2438 = vpack.c.b16 %v2397, %v2396
        %v2439 = vpack.c.b16 %v2399, %v2398
        %v2440 = vpack.c.b16 %v2401, %v2400
        %v2441 = vpack.c.b16 %v2403, %v2402
        %v2442 = vpack.c.b16 %v2405, %v2404
        %v2443 = vpack.c.b16 %v2407, %v2406
        %v2481 = vsel %vm193, %v2124, 0
        %v2484 = vsel %vm193, %v2129, 0
        %v2487 = vsel %vm193, %v2134, 0
        %v2490 = vsel %vm193, %v2139, 0
        %v2493 = vsel %vm193, %v2144, 0
        %v2496 = vsel %vm193, %v2149, 0
        %v2499 = vsel %vm193, %v2154, 0
        %v2502 = vsel %vm193, %v2159, 0
        %v2505 = vsel %vm193, %v2164, 0
        %v2508 = vsel %vm193, %v2169, 0
        %v2511 = vsel %vm193, %v2174, 0
        %v2514 = vsel %vm193, %v2179, 0
        %v2517 = vsel %vm193, %v2184, 0
        %v2520 = vsel %vm193, %v2189, 0
        %v2523 = vsel %vm193, %v2194, 0
        %v2526 = vsel %vm193, %v2199, 0
        %2528 = vmatpush.bf16.msra.mxu0 %v2415
        %2529 = vmatpush.bf16.msra.mxu0 %v2414
        %2530 = vmatpush.bf16.msra.mxu0 %v2413
        %2531 = vmatpush.bf16.msra.mxu0 %v2412
        %2532 = vmatpush.bf16.msra.mxu0 %v2411
        %2533 = vmatpush.bf16.msra.mxu0 %v2410
        %2534 = vmatpush.bf16.msra.mxu0 %v2409
        %2535 = vmatpush.bf16.msra.mxu0 %v2408
        %2536 = vmatmul.bf16.gmra.mxu0 %v2120
        %v2537 = vpop.f32.mrf.mxu0
        %v2538 = vadd.f32 %v1862, %v2537
        %v2539 = vpop.f32.mrf.mxu0
        %v2540 = vadd.f32 %v1862, %v2539
        %2541 = vmatmul.bf16.gmra.mxu0 %v2125
        %v2542 = vpop.f32.mrf.mxu0
        %v2543 = vadd.f32 %v1862, %v2542
        %v2544 = vpop.f32.mrf.mxu0
        %v2545 = vadd.f32 %v1862, %v2544
        %2546 = vmatmul.bf16.gmra.mxu0 %v2130
        %v2547 = vpop.f32.mrf.mxu0
        %v2548 = vadd.f32 %v1862, %v2547
        %v2549 = vpop.f32.mrf.mxu0
        %v2550 = vadd.f32 %v1862, %v2549
        %2551 = vmatmul.bf16.gmra.mxu0 %v2135
        %v2552 = vpop.f32.mrf.mxu0
        %v2553 = vadd.f32 %v1862, %v2552
        %v2554 = vpop.f32.mrf.mxu0
        %v2555 = vadd.f32 %v1862, %v2554
        %2556 = vmatmul.bf16.gmra.mxu0 %v2140
        %v2557 = vpop.f32.mrf.mxu0
        %v2558 = vadd.f32 %v1862, %v2557
        %v2559 = vpop.f32.mrf.mxu0
        %v2560 = vadd.f32 %v1862, %v2559
        %2561 = vmatmul.bf16.gmra.mxu0 %v2145
        %v2562 = vpop.f32.mrf.mxu0
        %v2563 = vadd.f32 %v1862, %v2562
        %v2564 = vpop.f32.mrf.mxu0
        %v2565 = vadd.f32 %v1862, %v2564
        %2566 = vmatmul.bf16.gmra.mxu0 %v2150
        %v2567 = vpop.f32.mrf.mxu0
        %v2568 = vadd.f32 %v1862, %v2567
        %v2569 = vpop.f32.mrf.mxu0
        %v2570 = vadd.f32 %v1862, %v2569
        %2571 = vmatmul.bf16.gmra.mxu0 %v2155
        %v2572 = vpop.f32.mrf.mxu0
        %v2573 = vadd.f32 %v1862, %v2572
        %v2574 = vpop.f32.mrf.mxu0
        %v2575 = vadd.f32 %v1862, %v2574
        %2576 = vmatmul.bf16.gmra.mxu0 %v2160
        %v2577 = vpop.f32.mrf.mxu0
        %v2578 = vadd.f32 %v1862, %v2577
        %v2579 = vpop.f32.mrf.mxu0
        %v2580 = vadd.f32 %v1862, %v2579
        %2581 = vmatmul.bf16.gmra.mxu0 %v2165
        %v2582 = vpop.f32.mrf.mxu0
        %v2583 = vadd.f32 %v1862, %v2582
        %v2584 = vpop.f32.mrf.mxu0
        %v2585 = vadd.f32 %v1862, %v2584
        %2586 = vmatmul.bf16.gmra.mxu0 %v2170
        %v2587 = vpop.f32.mrf.mxu0
        %v2588 = vadd.f32 %v1862, %v2587
        %v2589 = vpop.f32.mrf.mxu0
        %v2590 = vadd.f32 %v1862, %v2589
        %2591 = vmatmul.bf16.gmra.mxu0 %v2175
        %v2592 = vpop.f32.mrf.mxu0
        %v2593 = vadd.f32 %v1862, %v2592
        %v2594 = vpop.f32.mrf.mxu0
        %v2595 = vadd.f32 %v1862, %v2594
        %2596 = vmatmul.bf16.gmra.mxu0 %v2180
        %v2597 = vpop.f32.mrf.mxu0
        %v2598 = vadd.f32 %v1862, %v2597
        %v2599 = vpop.f32.mrf.mxu0
        %v2600 = vadd.f32 %v1862, %v2599
        %2601 = vmatmul.bf16.gmra.mxu0 %v2185
        %v2602 = vpop.f32.mrf.mxu0
        %v2603 = vadd.f32 %v1862, %v2602
        %v2604 = vpop.f32.mrf.mxu0
        %v2605 = vadd.f32 %v1862, %v2604
        %2606 = vmatmul.bf16.gmra.mxu0 %v2190
        %v2607 = vpop.f32.mrf.mxu0
        %v2608 = vadd.f32 %v1862, %v2607
        %v2609 = vpop.f32.mrf.mxu0
        %v2610 = vadd.f32 %v1862, %v2609
        %2611 = vmatmul.bf16.gmra.mxu0 %v2195
        %v2612 = vpop.f32.mrf.mxu0
        %v2613 = vadd.f32 %v1862, %v2612
        %v2614 = vpop.f32.mrf.mxu0
        %v2615 = vadd.f32 %v1862, %v2614
        %2616 = vdwg.mxu0
        %2617 = vmatpush.bf16.msra.mxu0 %v2423
        %2618 = vmatpush.bf16.msra.mxu0 %v2422
        %2619 = vmatpush.bf16.msra.mxu0 %v2421
        %2620 = vmatpush.bf16.msra.mxu0 %v2420
        %2621 = vmatpush.bf16.msra.mxu0 %v2419
        %2622 = vmatpush.bf16.msra.mxu0 %v2418
        %2623 = vmatpush.bf16.msra.mxu0 %v2417
        %2624 = vmatpush.bf16.msra.mxu0 %v2416
        %2625 = vmatmul.bf16.gmra.mxu0 %v2121
        %v2626 = vpop.f32.mrf.mxu0
        %v2627 = vadd.f32 %v2538, %v2626
        %v2628 = vpop.f32.mrf.mxu0
        %v2629 = vadd.f32 %v2540, %v2628
        %2630 = vmatmul.bf16.gmra.mxu0 %v2126
        %v2631 = vpop.f32.mrf.mxu0
        %v2632 = vadd.f32 %v2543, %v2631
        %v2633 = vpop.f32.mrf.mxu0
        %v2634 = vadd.f32 %v2545, %v2633
        %2635 = vmatmul.bf16.gmra.mxu0 %v2131
        %v2636 = vpop.f32.mrf.mxu0
        %v2637 = vadd.f32 %v2548, %v2636
        %v2638 = vpop.f32.mrf.mxu0
        %v2639 = vadd.f32 %v2550, %v2638
        %2640 = vmatmul.bf16.gmra.mxu0 %v2136
        %v2641 = vpop.f32.mrf.mxu0
        %v2642 = vadd.f32 %v2553, %v2641
        %v2643 = vpop.f32.mrf.mxu0
        %v2644 = vadd.f32 %v2555, %v2643
        %2645 = vmatmul.bf16.gmra.mxu0 %v2141
        %v2646 = vpop.f32.mrf.mxu0
        %v2647 = vadd.f32 %v2558, %v2646
        %v2648 = vpop.f32.mrf.mxu0
        %v2649 = vadd.f32 %v2560, %v2648
        %2650 = vmatmul.bf16.gmra.mxu0 %v2146
        %v2651 = vpop.f32.mrf.mxu0
        %v2652 = vadd.f32 %v2563, %v2651
        %v2653 = vpop.f32.mrf.mxu0
        %v2654 = vadd.f32 %v2565, %v2653
        %2655 = vmatmul.bf16.gmra.mxu0 %v2151
        %v2656 = vpop.f32.mrf.mxu0
        %v2657 = vadd.f32 %v2568, %v2656
        %v2658 = vpop.f32.mrf.mxu0
        %v2659 = vadd.f32 %v2570, %v2658
        %2660 = vmatmul.bf16.gmra.mxu0 %v2156
        %v2661 = vpop.f32.mrf.mxu0
        %v2662 = vadd.f32 %v2573, %v2661
        %v2663 = vpop.f32.mrf.mxu0
        %v2664 = vadd.f32 %v2575, %v2663
        %2665 = vmatmul.bf16.gmra.mxu0 %v2161
        %v2666 = vpop.f32.mrf.mxu0
        %v2667 = vadd.f32 %v2578, %v2666
        %v2668 = vpop.f32.mrf.mxu0
        %v2669 = vadd.f32 %v2580, %v2668
        %2670 = vmatmul.bf16.gmra.mxu0 %v2166
        %v2671 = vpop.f32.mrf.mxu0
        %v2672 = vadd.f32 %v2583, %v2671
        %v2673 = vpop.f32.mrf.mxu0
        %v2674 = vadd.f32 %v2585, %v2673
        %2675 = vmatmul.bf16.gmra.mxu0 %v2171
        %v2676 = vpop.f32.mrf.mxu0
        %v2677 = vadd.f32 %v2588, %v2676
        %v2678 = vpop.f32.mrf.mxu0
        %v2679 = vadd.f32 %v2590, %v2678
        %2680 = vmatmul.bf16.gmra.mxu0 %v2176
        %v2681 = vpop.f32.mrf.mxu0
        %v2682 = vadd.f32 %v2593, %v2681
        %v2683 = vpop.f32.mrf.mxu0
        %v2684 = vadd.f32 %v2595, %v2683
        %2685 = vmatmul.bf16.gmra.mxu0 %v2181
        %v2686 = vpop.f32.mrf.mxu0
        %v2687 = vadd.f32 %v2598, %v2686
        %v2688 = vpop.f32.mrf.mxu0
        %v2689 = vadd.f32 %v2600, %v2688
        %2690 = vmatmul.bf16.gmra.mxu0 %v2186
        %v2691 = vpop.f32.mrf.mxu0
        %v2692 = vadd.f32 %v2603, %v2691
        %v2693 = vpop.f32.mrf.mxu0
        %v2694 = vadd.f32 %v2605, %v2693
        %2695 = vmatmul.bf16.gmra.mxu0 %v2191
        %v2696 = vpop.f32.mrf.mxu0
        %v2697 = vadd.f32 %v2608, %v2696
        %v2698 = vpop.f32.mrf.mxu0
        %v2699 = vadd.f32 %v2610, %v2698
        %2700 = vmatmul.bf16.gmra.mxu0 %v2196
        %v2701 = vpop.f32.mrf.mxu0
        %v2702 = vadd.f32 %v2613, %v2701
        %v2703 = vpop.f32.mrf.mxu0
        %v2704 = vadd.f32 %v2615, %v2703
        %2705 = vdwg.mxu0
        %2706 = vmatpush.bf16.msra.mxu0 %v2431
        %2707 = vmatpush.bf16.msra.mxu0 %v2430
        %2708 = vmatpush.bf16.msra.mxu0 %v2429
        %2709 = vmatpush.bf16.msra.mxu0 %v2428
        %2710 = vmatpush.bf16.msra.mxu0 %v2427
        %2711 = vmatpush.bf16.msra.mxu0 %v2426
        %2712 = vmatpush.bf16.msra.mxu0 %v2425
        %2713 = vmatpush.bf16.msra.mxu0 %v2424
        %2714 = vmatmul.bf16.gmra.mxu0 %v2122
        %v2715 = vpop.f32.mrf.mxu0
        %v2716 = vadd.f32 %v2627, %v2715
        %v2717 = vpop.f32.mrf.mxu0
        %v2718 = vadd.f32 %v2629, %v2717
        %2719 = vmatmul.bf16.gmra.mxu0 %v2127
        %v2720 = vpop.f32.mrf.mxu0
        %v2721 = vadd.f32 %v2632, %v2720
        %v2722 = vpop.f32.mrf.mxu0
        %v2723 = vadd.f32 %v2634, %v2722
        %2724 = vmatmul.bf16.gmra.mxu0 %v2132
        %v2725 = vpop.f32.mrf.mxu0
        %v2726 = vadd.f32 %v2637, %v2725
        %v2727 = vpop.f32.mrf.mxu0
        %v2728 = vadd.f32 %v2639, %v2727
        %2729 = vmatmul.bf16.gmra.mxu0 %v2137
        %v2730 = vpop.f32.mrf.mxu0
        %v2731 = vadd.f32 %v2642, %v2730
        %v2732 = vpop.f32.mrf.mxu0
        %v2733 = vadd.f32 %v2644, %v2732
        %2734 = vmatmul.bf16.gmra.mxu0 %v2142
        %v2735 = vpop.f32.mrf.mxu0
        %v2736 = vadd.f32 %v2647, %v2735
        %v2737 = vpop.f32.mrf.mxu0
        %v2738 = vadd.f32 %v2649, %v2737
        %2739 = vmatmul.bf16.gmra.mxu0 %v2147
        %v2740 = vpop.f32.mrf.mxu0
        %v2741 = vadd.f32 %v2652, %v2740
        %v2742 = vpop.f32.mrf.mxu0
        %v2743 = vadd.f32 %v2654, %v2742
        %2744 = vmatmul.bf16.gmra.mxu0 %v2152
        %v2745 = vpop.f32.mrf.mxu0
        %v2746 = vadd.f32 %v2657, %v2745
        %v2747 = vpop.f32.mrf.mxu0
        %v2748 = vadd.f32 %v2659, %v2747
        %2749 = vmatmul.bf16.gmra.mxu0 %v2157
        %v2750 = vpop.f32.mrf.mxu0
        %v2751 = vadd.f32 %v2662, %v2750
        %v2752 = vpop.f32.mrf.mxu0
        %v2753 = vadd.f32 %v2664, %v2752
        %2754 = vmatmul.bf16.gmra.mxu0 %v2162
        %v2755 = vpop.f32.mrf.mxu0
        %v2756 = vadd.f32 %v2667, %v2755
        %v2757 = vpop.f32.mrf.mxu0
        %v2758 = vadd.f32 %v2669, %v2757
        %2759 = vmatmul.bf16.gmra.mxu0 %v2167
        %v2760 = vpop.f32.mrf.mxu0
        %v2761 = vadd.f32 %v2672, %v2760
        %v2762 = vpop.f32.mrf.mxu0
        %v2763 = vadd.f32 %v2674, %v2762
        %2764 = vmatmul.bf16.gmra.mxu0 %v2172
        %v2765 = vpop.f32.mrf.mxu0
        %v2766 = vadd.f32 %v2677, %v2765
        %v2767 = vpop.f32.mrf.mxu0
        %v2768 = vadd.f32 %v2679, %v2767
        %2769 = vmatmul.bf16.gmra.mxu0 %v2177
        %v2770 = vpop.f32.mrf.mxu0
        %v2771 = vadd.f32 %v2682, %v2770
        %v2772 = vpop.f32.mrf.mxu0
        %v2773 = vadd.f32 %v2684, %v2772
        %2774 = vmatmul.bf16.gmra.mxu0 %v2182
        %v2775 = vpop.f32.mrf.mxu0
        %v2776 = vadd.f32 %v2687, %v2775
        %v2777 = vpop.f32.mrf.mxu0
        %v2778 = vadd.f32 %v2689, %v2777
        %2779 = vmatmul.bf16.gmra.mxu0 %v2187
        %v2780 = vpop.f32.mrf.mxu0
        %v2781 = vadd.f32 %v2692, %v2780
        %v2782 = vpop.f32.mrf.mxu0
        %v2783 = vadd.f32 %v2694, %v2782
        %2784 = vmatmul.bf16.gmra.mxu0 %v2192
        %v2785 = vpop.f32.mrf.mxu0
        %v2786 = vadd.f32 %v2697, %v2785
        %v2787 = vpop.f32.mrf.mxu0
        %v2788 = vadd.f32 %v2699, %v2787
        %2789 = vmatmul.bf16.gmra.mxu0 %v2197
        %v2790 = vpop.f32.mrf.mxu0
        %v2791 = vadd.f32 %v2702, %v2790
        %v2792 = vpop.f32.mrf.mxu0
        %v2793 = vadd.f32 %v2704, %v2792
        %2794 = vdwg.mxu0
        %2795 = vmatpush.bf16.msra.mxu0 %v2439
        %2796 = vmatpush.bf16.msra.mxu0 %v2438
        %2797 = vmatpush.bf16.msra.mxu0 %v2437
        %2798 = vmatpush.bf16.msra.mxu0 %v2436
        %2799 = vmatpush.bf16.msra.mxu0 %v2435
        %2800 = vmatpush.bf16.msra.mxu0 %v2434
        %2801 = vmatpush.bf16.msra.mxu0 %v2433
        %2802 = vmatpush.bf16.msra.mxu0 %v2432
        %2803 = vmatmul.bf16.gmra.mxu0 %v2123
        %v2804 = vpop.f32.mrf.mxu0
        %v2805 = vadd.f32 %v2716, %v2804
        %v2806 = vpop.f32.mrf.mxu0
        %v2807 = vadd.f32 %v2718, %v2806
        %2808 = vmatmul.bf16.gmra.mxu0 %v2128
        %v2809 = vpop.f32.mrf.mxu0
        %v2810 = vadd.f32 %v2721, %v2809
        %v2811 = vpop.f32.mrf.mxu0
        %v2812 = vadd.f32 %v2723, %v2811
        %2813 = vmatmul.bf16.gmra.mxu0 %v2133
        %v2814 = vpop.f32.mrf.mxu0
        %v2815 = vadd.f32 %v2726, %v2814
        %v2816 = vpop.f32.mrf.mxu0
        %v2817 = vadd.f32 %v2728, %v2816
        %2818 = vmatmul.bf16.gmra.mxu0 %v2138
        %v2819 = vpop.f32.mrf.mxu0
        %v2820 = vadd.f32 %v2731, %v2819
        %v2821 = vpop.f32.mrf.mxu0
        %v2822 = vadd.f32 %v2733, %v2821
        %2823 = vmatmul.bf16.gmra.mxu0 %v2143
        %v2824 = vpop.f32.mrf.mxu0
        %v2825 = vadd.f32 %v2736, %v2824
        %v2826 = vpop.f32.mrf.mxu0
        %v2827 = vadd.f32 %v2738, %v2826
        %2828 = vmatmul.bf16.gmra.mxu0 %v2148
        %v2829 = vpop.f32.mrf.mxu0
        %v2830 = vadd.f32 %v2741, %v2829
        %v2831 = vpop.f32.mrf.mxu0
        %v2832 = vadd.f32 %v2743, %v2831
        %2833 = vmatmul.bf16.gmra.mxu0 %v2153
        %v2834 = vpop.f32.mrf.mxu0
        %v2835 = vadd.f32 %v2746, %v2834
        %v2836 = vpop.f32.mrf.mxu0
        %v2837 = vadd.f32 %v2748, %v2836
        %2838 = vmatmul.bf16.gmra.mxu0 %v2158
        %v2839 = vpop.f32.mrf.mxu0
        %v2840 = vadd.f32 %v2751, %v2839
        %v2841 = vpop.f32.mrf.mxu0
        %v2842 = vadd.f32 %v2753, %v2841
        %2843 = vmatmul.bf16.gmra.mxu0 %v2163
        %v2844 = vpop.f32.mrf.mxu0
        %v2845 = vadd.f32 %v2756, %v2844
        %v2846 = vpop.f32.mrf.mxu0
        %v2847 = vadd.f32 %v2758, %v2846
        %2848 = vmatmul.bf16.gmra.mxu0 %v2168
        %v2849 = vpop.f32.mrf.mxu0
        %v2850 = vadd.f32 %v2761, %v2849
        %v2851 = vpop.f32.mrf.mxu0
        %v2852 = vadd.f32 %v2763, %v2851
        %2853 = vmatmul.bf16.gmra.mxu0 %v2173
        %v2854 = vpop.f32.mrf.mxu0
        %v2855 = vadd.f32 %v2766, %v2854
        %v2856 = vpop.f32.mrf.mxu0
        %v2857 = vadd.f32 %v2768, %v2856
        %2858 = vmatmul.bf16.gmra.mxu0 %v2178
        %v2859 = vpop.f32.mrf.mxu0
        %v2860 = vadd.f32 %v2771, %v2859
        %v2861 = vpop.f32.mrf.mxu0
        %v2862 = vadd.f32 %v2773, %v2861
        %2863 = vmatmul.bf16.gmra.mxu0 %v2183
        %v2864 = vpop.f32.mrf.mxu0
        %v2865 = vadd.f32 %v2776, %v2864
        %v2866 = vpop.f32.mrf.mxu0
        %v2867 = vadd.f32 %v2778, %v2866
        %2868 = vmatmul.bf16.gmra.mxu0 %v2188
        %v2869 = vpop.f32.mrf.mxu0
        %v2870 = vadd.f32 %v2781, %v2869
        %v2871 = vpop.f32.mrf.mxu0
        %v2872 = vadd.f32 %v2783, %v2871
        %2873 = vmatmul.bf16.gmra.mxu0 %v2193
        %v2874 = vpop.f32.mrf.mxu0
        %v2875 = vadd.f32 %v2786, %v2874
        %v2876 = vpop.f32.mrf.mxu0
        %v2877 = vadd.f32 %v2788, %v2876
        %2878 = vmatmul.bf16.gmra.mxu0 %v2198
        %v2879 = vpop.f32.mrf.mxu0
        %v2880 = vadd.f32 %v2791, %v2879
        %v2881 = vpop.f32.mrf.mxu0
        %v2882 = vadd.f32 %v2793, %v2881
        %2883 = vdwg.mxu0
        %2884 = vmatpush.bf16.msra.mxu0 0
        %2885 = vmatpush.bf16.msra.mxu0 0
        %2886 = vmatpush.bf16.msra.mxu0 0
        %2887 = vmatpush.bf16.msra.mxu0 0
        %2888 = vmatpush.bf16.msra.mxu0 %v2443
        %2889 = vmatpush.bf16.msra.mxu0 %v2442
        %2890 = vmatpush.bf16.msra.mxu0 %v2441
        %2891 = vmatpush.bf16.msra.mxu0 %v2440
        %2892 = vmatmul.bf16.gmra.mxu0 %v2481
        %v2893 = vpop.f32.mrf.mxu0
        %v2894 = vadd.f32 %v2805, %v2893
        %v2895 = vpop.f32.mrf.mxu0
        %v2896 = vadd.f32 %v2807, %v2895
        %2897 = vmatmul.bf16.gmra.mxu0 %v2484
        %v2898 = vpop.f32.mrf.mxu0
        %v2899 = vadd.f32 %v2810, %v2898
        %v2900 = vpop.f32.mrf.mxu0
        %v2901 = vadd.f32 %v2812, %v2900
        %2902 = vmatmul.bf16.gmra.mxu0 %v2487
        %v2903 = vpop.f32.mrf.mxu0
        %v2904 = vadd.f32 %v2815, %v2903
        %v2905 = vpop.f32.mrf.mxu0
        %v2906 = vadd.f32 %v2817, %v2905
        %2907 = vmatmul.bf16.gmra.mxu0 %v2490
        %v2908 = vpop.f32.mrf.mxu0
        %v2909 = vadd.f32 %v2820, %v2908
        %v2910 = vpop.f32.mrf.mxu0
        %v2911 = vadd.f32 %v2822, %v2910
        %2912 = vmatmul.bf16.gmra.mxu0 %v2493
        %v2913 = vpop.f32.mrf.mxu0
        %v2914 = vadd.f32 %v2825, %v2913
        %v2915 = vpop.f32.mrf.mxu0
        %v2916 = vadd.f32 %v2827, %v2915
        %2917 = vmatmul.bf16.gmra.mxu0 %v2496
        %v2918 = vpop.f32.mrf.mxu0
        %v2919 = vadd.f32 %v2830, %v2918
        %v2920 = vpop.f32.mrf.mxu0
        %v2921 = vadd.f32 %v2832, %v2920
        %2922 = vmatmul.bf16.gmra.mxu0 %v2499
        %v2923 = vpop.f32.mrf.mxu0
        %v2924 = vadd.f32 %v2835, %v2923
        %v2925 = vpop.f32.mrf.mxu0
        %v2926 = vadd.f32 %v2837, %v2925
        %2927 = vmatmul.bf16.gmra.mxu0 %v2502
        %v2928 = vpop.f32.mrf.mxu0
        %v2929 = vadd.f32 %v2840, %v2928
        %v2930 = vpop.f32.mrf.mxu0
        %v2931 = vadd.f32 %v2842, %v2930
        %2932 = vmatmul.bf16.gmra.mxu0 %v2505
        %v2933 = vpop.f32.mrf.mxu0
        %v2934 = vadd.f32 %v2845, %v2933
        %v2935 = vpop.f32.mrf.mxu0
        %v2936 = vadd.f32 %v2847, %v2935
        %2937 = vmatmul.bf16.gmra.mxu0 %v2508
        %v2938 = vpop.f32.mrf.mxu0
        %v2939 = vadd.f32 %v2850, %v2938
        %v2940 = vpop.f32.mrf.mxu0
        %v2941 = vadd.f32 %v2852, %v2940
        %2942 = vmatmul.bf16.gmra.mxu0 %v2511
        %v2943 = vpop.f32.mrf.mxu0
        %v2944 = vadd.f32 %v2855, %v2943
        %v2945 = vpop.f32.mrf.mxu0
        %v2946 = vadd.f32 %v2857, %v2945
        %2947 = vmatmul.bf16.gmra.mxu0 %v2514
        %v2948 = vpop.f32.mrf.mxu0
        %v2949 = vadd.f32 %v2860, %v2948
        %v2950 = vpop.f32.mrf.mxu0
        %v2951 = vadd.f32 %v2862, %v2950
        %2952 = vmatmul.bf16.gmra.mxu0 %v2517
        %v2953 = vpop.f32.mrf.mxu0
        %v2954 = vadd.f32 %v2865, %v2953
        %v2955 = vpop.f32.mrf.mxu0
        %v2956 = vadd.f32 %v2867, %v2955
        %2957 = vmatmul.bf16.gmra.mxu0 %v2520
        %v2958 = vpop.f32.mrf.mxu0
        %v2959 = vadd.f32 %v2870, %v2958
        %v2960 = vpop.f32.mrf.mxu0
        %v2961 = vadd.f32 %v2872, %v2960
        %2962 = vmatmul.bf16.gmra.mxu0 %v2523
        %v2963 = vpop.f32.mrf.mxu0
        %v2964 = vadd.f32 %v2875, %v2963
        %v2965 = vpop.f32.mrf.mxu0
        %v2966 = vadd.f32 %v2877, %v2965
        %2967 = vmatmul.bf16.gmra.mxu0 %v2526
        %v2968 = vpop.f32.mrf.mxu0
        %v2969 = vadd.f32 %v2880, %v2968
        %v2970 = vpop.f32.mrf.mxu0
        %v2971 = vadd.f32 %v2882, %v2970
        %2972 = vdwg.mxu0
        %2973 = vst.msk [vmem:[%s281 + $0x1] sm:$0xff] %vm193, %v2894
        %2974 = vst.msk [vmem:[%s281 + $0x9] sm:$0xff] %vm193, %v2896
        %2975 = vst.msk [vmem:[%s281 + $0x19] sm:$0xff] %vm193, %v2899
        %2976 = vst.msk [vmem:[%s281 + $0x21] sm:$0xff] %vm193, %v2901
        %2977 = vst.msk [vmem:[%s281 + $0x31] sm:$0xff] %vm193, %v2904
        %2978 = vst.msk [vmem:[%s281 + $0x39] sm:$0xff] %vm193, %v2906
        %2979 = vst.msk [vmem:[%s281 + $0x49] sm:$0xff] %vm193, %v2909
        %2980 = vst.msk [vmem:[%s281 + $0x51] sm:$0xff] %vm193, %v2911
        %2981 = vst.msk [vmem:[%s281 + $0x61] sm:$0xff] %vm193, %v2914
        %2982 = vst.msk [vmem:[%s281 + $0x69] sm:$0xff] %vm193, %v2916
        %2983 = vst.msk [vmem:[%s281 + $0x79] sm:$0xff] %vm193, %v2919
        %2984 = vst.msk [vmem:[%s281 + $0x81] sm:$0xff] %vm193, %v2921
        %2985 = vst.msk [vmem:[%s281 + $0x91] sm:$0xff] %vm193, %v2924
        %2986 = vst.msk [vmem:[%s281 + $0x99] sm:$0xff] %vm193, %v2926
        %2987 = vst.msk [vmem:[%s281 + $0xa9] sm:$0xff] %vm193, %v2929
        %2988 = vst.msk [vmem:[%s281 + $0xb1] sm:$0xff] %vm193, %v2931
        %2989 = vst.msk [vmem:[%s281 + $0xc1] sm:$0xff] %vm193, %v2934
        %2990 = vst.msk [vmem:[%s281 + $0xc9] sm:$0xff] %vm193, %v2936
        %2991 = vst.msk [vmem:[%s281 + $0xd9] sm:$0xff] %vm193, %v2939
        %2992 = vst.msk [vmem:[%s281 + $0xe1] sm:$0xff] %vm193, %v2941
        %2993 = vst.msk [vmem:[%s281 + $0xf1] sm:$0xff] %vm193, %v2944
        %2994 = vst.msk [vmem:[%s281 + $0xf9] sm:$0xff] %vm193, %v2946
        %2995 = vst.msk [vmem:[%s281 + $0x109] sm:$0xff] %vm193, %v2949
        %2996 = vst.msk [vmem:[%s281 + $0x111] sm:$0xff] %vm193, %v2951
        %2997 = vst.msk [vmem:[%s281 + $0x121] sm:$0xff] %vm193, %v2954
        %2998 = vst.msk [vmem:[%s281 + $0x129] sm:$0xff] %vm193, %v2956
        %2999 = vst.msk [vmem:[%s281 + $0x139] sm:$0xff] %vm193, %v2959
        %3000 = vst.msk [vmem:[%s281 + $0x141] sm:$0xff] %vm193, %v2961
        %3001 = vst.msk [vmem:[%s281 + $0x151] sm:$0xff] %vm193, %v2964
        %3002 = vst.msk [vmem:[%s281 + $0x159] sm:$0xff] %vm193, %v2966
        %3003 = vst.msk [vmem:[%s281 + $0x169] sm:$0xff] %vm193, %v2969
        %3004 = vst.msk [vmem:[%s281 + $0x171] sm:$0xff] %vm193, %v2971
        %v3005 = vld [vmem:[#allocation2] sm:$0xff]
        %v3006 = vld [vmem:[#allocation2 + $0x8] sm:$0xff]
        %v3007 = vld [vmem:[#allocation2 + $0x18] sm:$0xff]
        %v3008 = vld [vmem:[#allocation2 + $0x20] sm:$0xff]
        %v3009 = vld [vmem:[#allocation2 + $0x30] sm:$0xff]
        %v3010 = vld [vmem:[#allocation2 + $0x38] sm:$0xff]
        %v3011 = vld [vmem:[#allocation2 + $0x48] sm:$0xff]
        %v3012 = vld [vmem:[#allocation2 + $0x50] sm:$0xff]
        %v3013 = vld [vmem:[#allocation2 + $0x60] sm:$0xff]
        %v3014 = vld [vmem:[#allocation2 + $0x68] sm:$0xff]
        %v3015 = vld [vmem:[#allocation2 + $0x78] sm:$0xff]
        %v3016 = vld [vmem:[#allocation2 + $0x80] sm:$0xff]
        %v3017 = vld [vmem:[#allocation2 + $0x90] sm:$0xff]
        %v3018 = vld [vmem:[#allocation2 + $0x98] sm:$0xff]
        %v3019 = vld [vmem:[#allocation2 + $0xa8] sm:$0xff]
        %v3020 = vld [vmem:[#allocation2 + $0xb0] sm:$0xff]
        %v3021 = vld [vmem:[#allocation2 + $0xc0] sm:$0xff]
        %v3022 = vld [vmem:[#allocation2 + $0xc8] sm:$0xff]
        %v3023 = vld [vmem:[#allocation2 + $0xd8] sm:$0xff]
        %v3024 = vld [vmem:[#allocation2 + $0xe0] sm:$0xff]
        %v3025 = vld [vmem:[#allocation2 + $0xf0] sm:$0xff]
        %v3026 = vld [vmem:[#allocation2 + $0xf8] sm:$0xff]
        %v3027 = vld [vmem:[#allocation2 + $0x108] sm:$0xff]
        %v3028 = vld [vmem:[#allocation2 + $0x110] sm:$0xff]
        %v3029 = vld [vmem:[#allocation2 + $0x120] sm:$0xff]
        %v3030 = vld [vmem:[#allocation2 + $0x128] sm:$0xff]
        %v3031 = vld [vmem:[#allocation2 + $0x138] sm:$0xff]
        %v3032 = vld [vmem:[#allocation2 + $0x140] sm:$0xff]
        %v3033 = vld [vmem:[#allocation2 + $0x150] sm:$0xff]
        %v3034 = vld [vmem:[#allocation2 + $0x158] sm:$0xff]
        %v3035 = vld [vmem:[#allocation2 + $0x168] sm:$0xff]
        %v3036 = vld [vmem:[#allocation2 + $0x170] sm:$0xff]
        %v3037 = vpack.c.bf16 %v3005, %v3005
        %v3038 = vpack.c.bf16 %v3006, %v3006
        %v3039 = vpack.c.bf16 %v3007, %v3007
        %v3040 = vpack.c.bf16 %v3008, %v3008
        %v3041 = vpack.c.bf16 %v3009, %v3009
        %v3042 = vpack.c.bf16 %v3010, %v3010
        %v3043 = vpack.c.bf16 %v3011, %v3011
        %v3044 = vpack.c.bf16 %v3012, %v3012
        %v3045 = vpack.c.bf16 %v3013, %v3013
        %v3046 = vpack.c.bf16 %v3014, %v3014
        %v3047 = vpack.c.bf16 %v3015, %v3015
        %v3048 = vpack.c.bf16 %v3016, %v3016
        %v3049 = vpack.c.bf16 %v3017, %v3017
        %v3050 = vpack.c.bf16 %v3018, %v3018
        %v3051 = vpack.c.bf16 %v3019, %v3019
        %v3052 = vpack.c.bf16 %v3020, %v3020
        %v3053 = vpack.c.bf16 %v3021, %v3021
        %v3054 = vpack.c.bf16 %v3022, %v3022
        %v3055 = vpack.c.bf16 %v3023, %v3023
        %v3056 = vpack.c.bf16 %v3024, %v3024
        %v3057 = vpack.c.bf16 %v3025, %v3025
        %v3058 = vpack.c.bf16 %v3026, %v3026
        %v3059 = vpack.c.bf16 %v3027, %v3027
        %v3060 = vpack.c.bf16 %v3028, %v3028
        %v3061 = vpack.c.bf16 %v3029, %v3029
        %v3062 = vpack.c.bf16 %v3030, %v3030
        %v3063 = vpack.c.bf16 %v3031, %v3031
        %v3064 = vpack.c.bf16 %v3032, %v3032
        %v3065 = vpack.c.bf16 %v3033, %v3033
        %v3066 = vpack.c.bf16 %v3034, %v3034
        %v3067 = vpack.c.bf16 %v3035, %v3035
        %v3068 = vpack.c.bf16 %v3036, %v3036
        %3069 = vst.msk [vmem:[#allocation3] sm:$0xf] %vm378, %v3037
        %3070 = vst.msk [vmem:[#allocation3 + $0x14] sm:$0xf] %vm378, %v3038
        %3071 = vst.msk [vmem:[#allocation3 + $0x28] sm:$0xf] %vm378, %v3039
        %3072 = vst.msk [vmem:[#allocation3 + $0x3c] sm:$0xf] %vm378, %v3040
        %3073 = vst.msk [vmem:[#allocation3 + $0x50] sm:$0xf] %vm378, %v3041
        %3074 = vst.msk [vmem:[#allocation3 + $0x64] sm:$0xf] %vm378, %v3042
        %3075 = vst.msk [vmem:[#allocation3 + $0x78] sm:$0xf] %vm378, %v3043
        %3076 = vst.msk [vmem:[#allocation3 + $0x8c] sm:$0xf] %vm378, %v3044
        %3077 = vst.msk [vmem:[#allocation3 + $0xa0] sm:$0xf] %vm378, %v3045
        %3078 = vst.msk [vmem:[#allocation3 + $0xb4] sm:$0xf] %vm378, %v3046
        %3079 = vst.msk [vmem:[#allocation3 + $0xc8] sm:$0xf] %vm378, %v3047
        %3080 = vst.msk [vmem:[#allocation3 + $0xdc] sm:$0xf] %vm378, %v3048
        %3081 = vst.msk [vmem:[#allocation3 + $0xf0] sm:$0xf] %vm378, %v3049
        %3082 = vst.msk [vmem:[#allocation3 + $0x104] sm:$0xf] %vm378, %v3050
        %3083 = vst.msk [vmem:[#allocation3 + $0x118] sm:$0xf] %vm378, %v3051
        %3084 = vst.msk [vmem:[#allocation3 + $0x12c] sm:$0xf] %vm378, %v3052
        %3085 = vst.msk [vmem:[#allocation3 + $0x140] sm:$0xf] %vm378, %v3053
        %3086 = vst.msk [vmem:[#allocation3 + $0x154] sm:$0xf] %vm378, %v3054
        %3087 = vst.msk [vmem:[#allocation3 + $0x168] sm:$0xf] %vm378, %v3055
        %3088 = vst.msk [vmem:[#allocation3 + $0x17c] sm:$0xf] %vm378, %v3056
        %3089 = vst.msk [vmem:[#allocation3 + $0x190] sm:$0xf] %vm378, %v3057
        %3090 = vst.msk [vmem:[#allocation3 + $0x1a4] sm:$0xf] %vm378, %v3058
        %3091 = vst.msk [vmem:[#allocation3 + $0x1b8] sm:$0xf] %vm378, %v3059
        %3092 = vst.msk [vmem:[#allocation3 + $0x1cc] sm:$0xf] %vm378, %v3060
        %3093 = vst.msk [vmem:[#allocation3 + $0x1e0] sm:$0xf] %vm378, %v3061
        %3094 = vst.msk [vmem:[#allocation3 + $0x1f4] sm:$0xf] %vm378, %v3062
        %3095 = vst.msk [vmem:[#allocation3 + $0x208] sm:$0xf] %vm378, %v3063
        %3096 = vst.msk [vmem:[#allocation3 + $0x21c] sm:$0xf] %vm378, %v3064
        %3097 = vst.msk [vmem:[#allocation3 + $0x230] sm:$0xf] %vm378, %v3065
        %3098 = vst.msk [vmem:[#allocation3 + $0x244] sm:$0xf] %vm378, %v3066
        %3099 = vst.msk [vmem:[#allocation3 + $0x258] sm:$0xf] %vm378, %v3067
        %3100 = vst.msk [vmem:[#allocation3 + $0x26c] sm:$0xf] %vm378, %v3068
        %v3101 = vld [vmem:[#allocation2 + $0x1] sm:$0xff]
        %v3102 = vld [vmem:[#allocation2 + $0x9] sm:$0xff]
        %v3103 = vld [vmem:[#allocation2 + $0x19] sm:$0xff]
        %v3104 = vld [vmem:[#allocation2 + $0x21] sm:$0xff]
        %v3105 = vld [vmem:[#allocation2 + $0x31] sm:$0xff]
        %v3106 = vld [vmem:[#allocation2 + $0x39] sm:$0xff]
        %v3107 = vld [vmem:[#allocation2 + $0x49] sm:$0xff]
        %v3108 = vld [vmem:[#allocation2 + $0x51] sm:$0xff]
        %v3109 = vld [vmem:[#allocation2 + $0x61] sm:$0xff]
        %v3110 = vld [vmem:[#allocation2 + $0x69] sm:$0xff]
        %v3111 = vld [vmem:[#allocation2 + $0x79] sm:$0xff]
        %v3112 = vld [vmem:[#allocation2 + $0x81] sm:$0xff]
        %v3113 = vld [vmem:[#allocation2 + $0x91] sm:$0xff]
        %v3114 = vld [vmem:[#allocation2 + $0x99] sm:$0xff]
        %v3115 = vld [vmem:[#allocation2 + $0xa9] sm:$0xff]
        %v3116 = vld [vmem:[#allocation2 + $0xb1] sm:$0xff]
        %v3117 = vld [vmem:[#allocation2 + $0xc1] sm:$0xff]
        %v3118 = vld [vmem:[#allocation2 + $0xc9] sm:$0xff]
        %v3119 = vld [vmem:[#allocation2 + $0xd9] sm:$0xff]
        %v3120 = vld [vmem:[#allocation2 + $0xe1] sm:$0xff]
        %v3121 = vld [vmem:[#allocation2 + $0xf1] sm:$0xff]
        %v3122 = vld [vmem:[#allocation2 + $0xf9] sm:$0xff]
        %v3123 = vld [vmem:[#allocation2 + $0x109] sm:$0xff]
        %v3124 = vld [vmem:[#allocation2 + $0x111] sm:$0xff]
        %v3125 = vld [vmem:[#allocation2 + $0x121] sm:$0xff]
        %v3126 = vld [vmem:[#allocation2 + $0x129] sm:$0xff]
        %v3127 = vld [vmem:[#allocation2 + $0x139] sm:$0xff]
        %v3128 = vld [vmem:[#allocation2 + $0x141] sm:$0xff]
        %v3129 = vld [vmem:[#allocation2 + $0x151] sm:$0xff]
        %v3130 = vld [vmem:[#allocation2 + $0x159] sm:$0xff]
        %v3131 = vld [vmem:[#allocation2 + $0x169] sm:$0xff]
        %v3132 = vld [vmem:[#allocation2 + $0x171] sm:$0xff]
        %v3133 = vpack.c.bf16 %v3101, %v3101
        %v3134 = vpack.c.bf16 %v3102, %v3102
        %v3135 = vpack.c.bf16 %v3103, %v3103
        %v3136 = vpack.c.bf16 %v3104, %v3104
        %v3137 = vpack.c.bf16 %v3105, %v3105
        %v3138 = vpack.c.bf16 %v3106, %v3106
        %v3139 = vpack.c.bf16 %v3107, %v3107
        %v3140 = vpack.c.bf16 %v3108, %v3108
        %v3141 = vpack.c.bf16 %v3109, %v3109
        %v3142 = vpack.c.bf16 %v3110, %v3110
        %v3143 = vpack.c.bf16 %v3111, %v3111
        %v3144 = vpack.c.bf16 %v3112, %v3112
        %v3145 = vpack.c.bf16 %v3113, %v3113
        %v3146 = vpack.c.bf16 %v3114, %v3114
        %v3147 = vpack.c.bf16 %v3115, %v3115
        %v3148 = vpack.c.bf16 %v3116, %v3116
        %v3149 = vpack.c.bf16 %v3117, %v3117
        %v3150 = vpack.c.bf16 %v3118, %v3118
        %v3151 = vpack.c.bf16 %v3119, %v3119
        %v3152 = vpack.c.bf16 %v3120, %v3120
        %v3153 = vpack.c.bf16 %v3121, %v3121
        %v3154 = vpack.c.bf16 %v3122, %v3122
        %v3155 = vpack.c.bf16 %v3123, %v3123
        %v3156 = vpack.c.bf16 %v3124, %v3124
        %v3157 = vpack.c.bf16 %v3125, %v3125
        %v3158 = vpack.c.bf16 %v3126, %v3126
        %v3159 = vpack.c.bf16 %v3127, %v3127
        %v3160 = vpack.c.bf16 %v3128, %v3128
        %v3161 = vpack.c.bf16 %v3129, %v3129
        %v3162 = vpack.c.bf16 %v3130, %v3130
        %v3163 = vpack.c.bf16 %v3131, %v3131
        %v3164 = vpack.c.bf16 %v3132, %v3132
        %3197 = vrot.lane.b32.xlu0 %v3133, 64
        %v3198 = vpop.permute.xlu0 %3197
        %3199 = vrot.lane.b32.xlu0 %v3134, 64
        %v3200 = vpop.permute.xlu0 %3199
        %3201 = vrot.lane.b32.xlu0 %v3135, 64
        %v3202 = vpop.permute.xlu0 %3201
        %3203 = vrot.lane.b32.xlu0 %v3136, 64
        %v3204 = vpop.permute.xlu0 %3203
        %3205 = vrot.lane.b32.xlu0 %v3137, 64
        %v3206 = vpop.permute.xlu0 %3205
        %3207 = vrot.lane.b32.xlu0 %v3138, 64
        %v3208 = vpop.permute.xlu0 %3207
        %3209 = vrot.lane.b32.xlu0 %v3139, 64
        %v3210 = vpop.permute.xlu0 %3209
        %3211 = vrot.lane.b32.xlu0 %v3140, 64
        %v3212 = vpop.permute.xlu0 %3211
        %3213 = vrot.lane.b32.xlu0 %v3141, 64
        %v3214 = vpop.permute.xlu0 %3213
        %3215 = vrot.lane.b32.xlu0 %v3142, 64
        %v3216 = vpop.permute.xlu0 %3215
        %3217 = vrot.lane.b32.xlu0 %v3143, 64
        %v3218 = vpop.permute.xlu0 %3217
        %3219 = vrot.lane.b32.xlu0 %v3144, 64
        %v3220 = vpop.permute.xlu0 %3219
        %3221 = vrot.lane.b32.xlu0 %v3145, 64
        %v3222 = vpop.permute.xlu0 %3221
        %3223 = vrot.lane.b32.xlu0 %v3146, 64
        %v3224 = vpop.permute.xlu0 %3223
        %3225 = vrot.lane.b32.xlu0 %v3147, 64
        %v3226 = vpop.permute.xlu0 %3225
        %3227 = vrot.lane.b32.xlu0 %v3148, 64
        %v3228 = vpop.permute.xlu0 %3227
        %3229 = vrot.lane.b32.xlu0 %v3149, 64
        %v3230 = vpop.permute.xlu0 %3229
        %3231 = vrot.lane.b32.xlu0 %v3150, 64
        %v3232 = vpop.permute.xlu0 %3231
        %3233 = vrot.lane.b32.xlu0 %v3151, 64
        %v3234 = vpop.permute.xlu0 %3233
        %3235 = vrot.lane.b32.xlu0 %v3152, 64
        %v3236 = vpop.permute.xlu0 %3235
        %3237 = vrot.lane.b32.xlu0 %v3153, 64
        %v3238 = vpop.permute.xlu0 %3237
        %3239 = vrot.lane.b32.xlu0 %v3154, 64
        %v3240 = vpop.permute.xlu0 %3239
        %3241 = vrot.lane.b32.xlu0 %v3155, 64
        %v3242 = vpop.permute.xlu0 %3241
        %3243 = vrot.lane.b32.xlu0 %v3156, 64
        %v3244 = vpop.permute.xlu0 %3243
        %3245 = vrot.lane.b32.xlu0 %v3157, 64
        %v3246 = vpop.permute.xlu0 %3245
        %3247 = vrot.lane.b32.xlu0 %v3158, 64
        %v3248 = vpop.permute.xlu0 %3247
        %3249 = vrot.lane.b32.xlu0 %v3159, 64
        %v3250 = vpop.permute.xlu0 %3249
        %3251 = vrot.lane.b32.xlu0 %v3160, 64
        %v3252 = vpop.permute.xlu0 %3251
        %3253 = vrot.lane.b32.xlu0 %v3161, 64
        %v3254 = vpop.permute.xlu0 %3253
        %3255 = vrot.lane.b32.xlu0 %v3162, 64
        %v3256 = vpop.permute.xlu0 %3255
        %3257 = vrot.lane.b32.xlu0 %v3163, 64
        %v3258 = vpop.permute.xlu0 %3257
        %3259 = vrot.lane.b32.xlu0 %v3164, 64
        %v3260 = vpop.permute.xlu0 %3259
        %3293 = vst.msk [vmem:[#allocation3] sm:$0xf] %vm603, %v3198
        %3294 = vst.msk [vmem:[#allocation3 + $0x14] sm:$0xf] %vm603, %v3200
        %3295 = vst.msk [vmem:[#allocation3 + $0x28] sm:$0xf] %vm603, %v3202
        %3296 = vst.msk [vmem:[#allocation3 + $0x3c] sm:$0xf] %vm603, %v3204
        %3297 = vst.msk [vmem:[#allocation3 + $0x50] sm:$0xf] %vm603, %v3206
        %3298 = vst.msk [vmem:[#allocation3 + $0x64] sm:$0xf] %vm603, %v3208
        %3299 = vst.msk [vmem:[#allocation3 + $0x78] sm:$0xf] %vm603, %v3210
        %3300 = vst.msk [vmem:[#allocation3 + $0x8c] sm:$0xf] %vm603, %v3212
        %3301 = vst.msk [vmem:[#allocation3 + $0xa0] sm:$0xf] %vm603, %v3214
        %3302 = vst.msk [vmem:[#allocation3 + $0xb4] sm:$0xf] %vm603, %v3216
        %3303 = vst.msk [vmem:[#allocation3 + $0xc8] sm:$0xf] %vm603, %v3218
        %3304 = vst.msk [vmem:[#allocation3 + $0xdc] sm:$0xf] %vm603, %v3220
        %3305 = vst.msk [vmem:[#allocation3 + $0xf0] sm:$0xf] %vm603, %v3222
        %3306 = vst.msk [vmem:[#allocation3 + $0x104] sm:$0xf] %vm603, %v3224
        %3307 = vst.msk [vmem:[#allocation3 + $0x118] sm:$0xf] %vm603, %v3226
        %3308 = vst.msk [vmem:[#allocation3 + $0x12c] sm:$0xf] %vm603, %v3228
        %3309 = vst.msk [vmem:[#allocation3 + $0x140] sm:$0xf] %vm603, %v3230
        %3310 = vst.msk [vmem:[#allocation3 + $0x154] sm:$0xf] %vm603, %v3232
        %3311 = vst.msk [vmem:[#allocation3 + $0x168] sm:$0xf] %vm603, %v3234
        %3312 = vst.msk [vmem:[#allocation3 + $0x17c] sm:$0xf] %vm603, %v3236
        %3313 = vst.msk [vmem:[#allocation3 + $0x190] sm:$0xf] %vm603, %v3238
        %3314 = vst.msk [vmem:[#allocation3 + $0x1a4] sm:$0xf] %vm603, %v3240
        %3315 = vst.msk [vmem:[#allocation3 + $0x1b8] sm:$0xf] %vm603, %v3242
        %3316 = vst.msk [vmem:[#allocation3 + $0x1cc] sm:$0xf] %vm603, %v3244
        %3317 = vst.msk [vmem:[#allocation3 + $0x1e0] sm:$0xf] %vm603, %v3246
        %3318 = vst.msk [vmem:[#allocation3 + $0x1f4] sm:$0xf] %vm603, %v3248
        %3319 = vst.msk [vmem:[#allocation3 + $0x208] sm:$0xf] %vm603, %v3250
        %3320 = vst.msk [vmem:[#allocation3 + $0x21c] sm:$0xf] %vm603, %v3252
        %3321 = vst.msk [vmem:[#allocation3 + $0x230] sm:$0xf] %vm603, %v3254
        %3322 = vst.msk [vmem:[#allocation3 + $0x244] sm:$0xf] %vm603, %v3256
        %3323 = vst.msk [vmem:[#allocation3 + $0x258] sm:$0xf] %vm603, %v3258
        %3324 = vst.msk [vmem:[#allocation3 + $0x26c] sm:$0xf] %vm603, %v3260
        %v3325 = vld [vmem:[#allocation2 + $0x2] sm:$0xff]
        %v3326 = vld [vmem:[#allocation2 + $0xa] sm:$0xff]
        %v3327 = vld [vmem:[#allocation2 + $0x1a] sm:$0xff]
        %v3328 = vld [vmem:[#allocation2 + $0x22] sm:$0xff]
        %v3329 = vld [vmem:[#allocation2 + $0x32] sm:$0xff]
        %v3330 = vld [vmem:[#allocation2 + $0x3a] sm:$0xff]
        %v3331 = vld [vmem:[#allocation2 + $0x4a] sm:$0xff]
        %v3332 = vld [vmem:[#allocation2 + $0x52] sm:$0xff]
        %v3333 = vld [vmem:[#allocation2 + $0x62] sm:$0xff]
        %v3334 = vld [vmem:[#allocation2 + $0x6a] sm:$0xff]
        %v3335 = vld [vmem:[#allocation2 + $0x7a] sm:$0xff]
        %v3336 = vld [vmem:[#allocation2 + $0x82] sm:$0xff]
        %v3337 = vld [vmem:[#allocation2 + $0x92] sm:$0xff]
        %v3338 = vld [vmem:[#allocation2 + $0x9a] sm:$0xff]
        %v3339 = vld [vmem:[#allocation2 + $0xaa] sm:$0xff]
        %v3340 = vld [vmem:[#allocation2 + $0xb2] sm:$0xff]
        %v3341 = vld [vmem:[#allocation2 + $0xc2] sm:$0xff]
        %v3342 = vld [vmem:[#allocation2 + $0xca] sm:$0xff]
        %v3343 = vld [vmem:[#allocation2 + $0xda] sm:$0xff]
        %v3344 = vld [vmem:[#allocation2 + $0xe2] sm:$0xff]
        %v3345 = vld [vmem:[#allocation2 + $0xf2] sm:$0xff]
        %v3346 = vld [vmem:[#allocation2 + $0xfa] sm:$0xff]
        %v3347 = vld [vmem:[#allocation2 + $0x10a] sm:$0xff]
        %v3348 = vld [vmem:[#allocation2 + $0x112] sm:$0xff]
        %v3349 = vld [vmem:[#allocation2 + $0x122] sm:$0xff]
        %v3350 = vld [vmem:[#allocation2 + $0x12a] sm:$0xff]
        %v3351 = vld [vmem:[#allocation2 + $0x13a] sm:$0xff]
        %v3352 = vld [vmem:[#allocation2 + $0x142] sm:$0xff]
        %v3353 = vld [vmem:[#allocation2 + $0x152] sm:$0xff]
        %v3354 = vld [vmem:[#allocation2 + $0x15a] sm:$0xff]
        %v3355 = vld [vmem:[#allocation2 + $0x16a] sm:$0xff]
        %v3356 = vld [vmem:[#allocation2 + $0x172] sm:$0xff]
        %v3357 = vpack.c.bf16 %v3325, %v3325
        %v3358 = vpack.c.bf16 %v3326, %v3326
        %v3359 = vpack.c.bf16 %v3327, %v3327
        %v3360 = vpack.c.bf16 %v3328, %v3328
        %v3361 = vpack.c.bf16 %v3329, %v3329
        %v3362 = vpack.c.bf16 %v3330, %v3330
        %v3363 = vpack.c.bf16 %v3331, %v3331
        %v3364 = vpack.c.bf16 %v3332, %v3332
        %v3365 = vpack.c.bf16 %v3333, %v3333
        %v3366 = vpack.c.bf16 %v3334, %v3334
        %v3367 = vpack.c.bf16 %v3335, %v3335
        %v3368 = vpack.c.bf16 %v3336, %v3336
        %v3369 = vpack.c.bf16 %v3337, %v3337
        %v3370 = vpack.c.bf16 %v3338, %v3338
        %v3371 = vpack.c.bf16 %v3339, %v3339
        %v3372 = vpack.c.bf16 %v3340, %v3340
        %v3373 = vpack.c.bf16 %v3341, %v3341
        %v3374 = vpack.c.bf16 %v3342, %v3342
        %v3375 = vpack.c.bf16 %v3343, %v3343
        %v3376 = vpack.c.bf16 %v3344, %v3344
        %v3377 = vpack.c.bf16 %v3345, %v3345
        %v3378 = vpack.c.bf16 %v3346, %v3346
        %v3379 = vpack.c.bf16 %v3347, %v3347
        %v3380 = vpack.c.bf16 %v3348, %v3348
        %v3381 = vpack.c.bf16 %v3349, %v3349
        %v3382 = vpack.c.bf16 %v3350, %v3350
        %v3383 = vpack.c.bf16 %v3351, %v3351
        %v3384 = vpack.c.bf16 %v3352, %v3352
        %v3385 = vpack.c.bf16 %v3353, %v3353
        %v3386 = vpack.c.bf16 %v3354, %v3354
        %v3387 = vpack.c.bf16 %v3355, %v3355
        %v3388 = vpack.c.bf16 %v3356, %v3356
        %3389 = vst.msk [vmem:[#allocation3 + $0x4] sm:$0xf] %vm378, %v3357
        %3390 = vst.msk [vmem:[#allocation3 + $0x18] sm:$0xf] %vm378, %v3358
        %3391 = vst.msk [vmem:[#allocation3 + $0x2c] sm:$0xf] %vm378, %v3359
        %3392 = vst.msk [vmem:[#allocation3 + $0x40] sm:$0xf] %vm378, %v3360
        %3393 = vst.msk [vmem:[#allocation3 + $0x54] sm:$0xf] %vm378, %v3361
        %3394 = vst.msk [vmem:[#allocation3 + $0x68] sm:$0xf] %vm378, %v3362
        %3395 = vst.msk [vmem:[#allocation3 + $0x7c] sm:$0xf] %vm378, %v3363
        %3396 = vst.msk [vmem:[#allocation3 + $0x90] sm:$0xf] %vm378, %v3364
        %3397 = vst.msk [vmem:[#allocation3 + $0xa4] sm:$0xf] %vm378, %v3365
        %3398 = vst.msk [vmem:[#allocation3 + $0xb8] sm:$0xf] %vm378, %v3366
        %3399 = vst.msk [vmem:[#allocation3 + $0xcc] sm:$0xf] %vm378, %v3367
        %3400 = vst.msk [vmem:[#allocation3 + $0xe0] sm:$0xf] %vm378, %v3368
        %3401 = vst.msk [vmem:[#allocation3 + $0xf4] sm:$0xf] %vm378, %v3369
        %3402 = vst.msk [vmem:[#allocation3 + $0x108] sm:$0xf] %vm378, %v3370
        %3403 = vst.msk [vmem:[#allocation3 + $0x11c] sm:$0xf] %vm378, %v3371
        %3404 = vst.msk [vmem:[#allocation3 + $0x130] sm:$0xf] %vm378, %v3372
        %3405 = vst.msk [vmem:[#allocation3 + $0x144] sm:$0xf] %vm378, %v3373
        %3406 = vst.msk [vmem:[#allocation3 + $0x158] sm:$0xf] %vm378, %v3374
        %3407 = vst.msk [vmem:[#allocation3 + $0x16c] sm:$0xf] %vm378, %v3375
        %3408 = vst.msk [vmem:[#allocation3 + $0x180] sm:$0xf] %vm378, %v3376
        %3409 = vst.msk [vmem:[#allocation3 + $0x194] sm:$0xf] %vm378, %v3377
        %3410 = vst.msk [vmem:[#allocation3 + $0x1a8] sm:$0xf] %vm378, %v3378
        %3411 = vst.msk [vmem:[#allocation3 + $0x1bc] sm:$0xf] %vm378, %v3379
        %3412 = vst.msk [vmem:[#allocation3 + $0x1d0] sm:$0xf] %vm378, %v3380
        %3413 = vst.msk [vmem:[#allocation3 + $0x1e4] sm:$0xf] %vm378, %v3381
        %3414 = vst.msk [vmem:[#allocation3 + $0x1f8] sm:$0xf] %vm378, %v3382
        %3415 = vst.msk [vmem:[#allocation3 + $0x20c] sm:$0xf] %vm378, %v3383
        %3416 = vst.msk [vmem:[#allocation3 + $0x220] sm:$0xf] %vm378, %v3384
        %3417 = vst.msk [vmem:[#allocation3 + $0x234] sm:$0xf] %vm378, %v3385
        %3418 = vst.msk [vmem:[#allocation3 + $0x248] sm:$0xf] %vm378, %v3386
        %3419 = vst.msk [vmem:[#allocation3 + $0x25c] sm:$0xf] %vm378, %v3387
        %3420 = vst.msk [vmem:[#allocation3 + $0x270] sm:$0xf] %vm378, %v3388
        %v3421 = vld [vmem:[%s281] sm:$0xff]
        %v3422 = vld [vmem:[%s281 + $0x8] sm:$0xff]
        %v3423 = vld [vmem:[%s281 + $0x18] sm:$0xff]
        %v3424 = vld [vmem:[%s281 + $0x20] sm:$0xff]
        %v3425 = vld [vmem:[%s281 + $0x30] sm:$0xff]
        %v3426 = vld [vmem:[%s281 + $0x38] sm:$0xff]
        %v3427 = vld [vmem:[%s281 + $0x48] sm:$0xff]
        %v3428 = vld [vmem:[%s281 + $0x50] sm:$0xff]
        %v3429 = vld [vmem:[%s281 + $0x60] sm:$0xff]
        %v3430 = vld [vmem:[%s281 + $0x68] sm:$0xff]
        %v3431 = vld [vmem:[%s281 + $0x78] sm:$0xff]
        %v3432 = vld [vmem:[%s281 + $0x80] sm:$0xff]
        %v3433 = vld [vmem:[%s281 + $0x90] sm:$0xff]
        %v3434 = vld [vmem:[%s281 + $0x98] sm:$0xff]
        %v3435 = vld [vmem:[%s281 + $0xa8] sm:$0xff]
        %v3436 = vld [vmem:[%s281 + $0xb0] sm:$0xff]
        %v3437 = vld [vmem:[%s281 + $0xc0] sm:$0xff]
        %v3438 = vld [vmem:[%s281 + $0xc8] sm:$0xff]
        %v3439 = vld [vmem:[%s281 + $0xd8] sm:$0xff]
        %v3440 = vld [vmem:[%s281 + $0xe0] sm:$0xff]
        %v3441 = vld [vmem:[%s281 + $0xf0] sm:$0xff]
        %v3442 = vld [vmem:[%s281 + $0xf8] sm:$0xff]
        %v3443 = vld [vmem:[%s281 + $0x108] sm:$0xff]
        %v3444 = vld [vmem:[%s281 + $0x110] sm:$0xff]
        %v3445 = vld [vmem:[%s281 + $0x120] sm:$0xff]
        %v3446 = vld [vmem:[%s281 + $0x128] sm:$0xff]
        %v3447 = vld [vmem:[%s281 + $0x138] sm:$0xff]
        %v3448 = vld [vmem:[%s281 + $0x140] sm:$0xff]
        %v3449 = vld [vmem:[%s281 + $0x150] sm:$0xff]
        %v3450 = vld [vmem:[%s281 + $0x158] sm:$0xff]
        %v3451 = vld [vmem:[%s281 + $0x168] sm:$0xff]
        %v3452 = vld [vmem:[%s281 + $0x170] sm:$0xff]
        %v3453 = vpack.c.bf16 %v3421, %v3421
        %v3454 = vpack.c.bf16 %v3422, %v3422
        %v3455 = vpack.c.bf16 %v3423, %v3423
        %v3456 = vpack.c.bf16 %v3424, %v3424
        %v3457 = vpack.c.bf16 %v3425, %v3425
        %v3458 = vpack.c.bf16 %v3426, %v3426
        %v3459 = vpack.c.bf16 %v3427, %v3427
        %v3460 = vpack.c.bf16 %v3428, %v3428
        %v3461 = vpack.c.bf16 %v3429, %v3429
        %v3462 = vpack.c.bf16 %v3430, %v3430
        %v3463 = vpack.c.bf16 %v3431, %v3431
        %v3464 = vpack.c.bf16 %v3432, %v3432
        %v3465 = vpack.c.bf16 %v3433, %v3433
        %v3466 = vpack.c.bf16 %v3434, %v3434
        %v3467 = vpack.c.bf16 %v3435, %v3435
        %v3468 = vpack.c.bf16 %v3436, %v3436
        %v3469 = vpack.c.bf16 %v3437, %v3437
        %v3470 = vpack.c.bf16 %v3438, %v3438
        %v3471 = vpack.c.bf16 %v3439, %v3439
        %v3472 = vpack.c.bf16 %v3440, %v3440
        %v3473 = vpack.c.bf16 %v3441, %v3441
        %v3474 = vpack.c.bf16 %v3442, %v3442
        %v3475 = vpack.c.bf16 %v3443, %v3443
        %v3476 = vpack.c.bf16 %v3444, %v3444
        %v3477 = vpack.c.bf16 %v3445, %v3445
        %v3478 = vpack.c.bf16 %v3446, %v3446
        %v3479 = vpack.c.bf16 %v3447, %v3447
        %v3480 = vpack.c.bf16 %v3448, %v3448
        %v3481 = vpack.c.bf16 %v3449, %v3449
        %v3482 = vpack.c.bf16 %v3450, %v3450
        %v3483 = vpack.c.bf16 %v3451, %v3451
        %v3484 = vpack.c.bf16 %v3452, %v3452
        %3517 = vrot.lane.b32.xlu0 %v3453, 64
        %v3518 = vpop.permute.xlu0 %3517
        %3519 = vrot.lane.b32.xlu0 %v3454, 64
        %v3520 = vpop.permute.xlu0 %3519
        %3521 = vrot.lane.b32.xlu0 %v3455, 64
        %v3522 = vpop.permute.xlu0 %3521
        %3523 = vrot.lane.b32.xlu0 %v3456, 64
        %v3524 = vpop.permute.xlu0 %3523
        %3525 = vrot.lane.b32.xlu0 %v3457, 64
        %v3526 = vpop.permute.xlu0 %3525
        %3527 = vrot.lane.b32.xlu0 %v3458, 64
        %v3528 = vpop.permute.xlu0 %3527
        %3529 = vrot.lane.b32.xlu0 %v3459, 64
        %v3530 = vpop.permute.xlu0 %3529
        %3531 = vrot.lane.b32.xlu0 %v3460, 64
        %v3532 = vpop.permute.xlu0 %3531
        %3533 = vrot.lane.b32.xlu0 %v3461, 64
        %v3534 = vpop.permute.xlu0 %3533
        %3535 = vrot.lane.b32.xlu0 %v3462, 64
        %v3536 = vpop.permute.xlu0 %3535
        %3537 = vrot.lane.b32.xlu0 %v3463, 64
        %v3538 = vpop.permute.xlu0 %3537
        %3539 = vrot.lane.b32.xlu0 %v3464, 64
        %v3540 = vpop.permute.xlu0 %3539
        %3541 = vrot.lane.b32.xlu0 %v3465, 64
        %v3542 = vpop.permute.xlu0 %3541
        %3543 = vrot.lane.b32.xlu0 %v3466, 64
        %v3544 = vpop.permute.xlu0 %3543
        %3545 = vrot.lane.b32.xlu0 %v3467, 64
        %v3546 = vpop.permute.xlu0 %3545
        %3547 = vrot.lane.b32.xlu0 %v3468, 64
        %v3548 = vpop.permute.xlu0 %3547
        %3549 = vrot.lane.b32.xlu0 %v3469, 64
        %v3550 = vpop.permute.xlu0 %3549
        %3551 = vrot.lane.b32.xlu0 %v3470, 64
        %v3552 = vpop.permute.xlu0 %3551
        %3553 = vrot.lane.b32.xlu0 %v3471, 64
        %v3554 = vpop.permute.xlu0 %3553
        %3555 = vrot.lane.b32.xlu0 %v3472, 64
        %v3556 = vpop.permute.xlu0 %3555
        %3557 = vrot.lane.b32.xlu0 %v3473, 64
        %v3558 = vpop.permute.xlu0 %3557
        %3559 = vrot.lane.b32.xlu0 %v3474, 64
        %v3560 = vpop.permute.xlu0 %3559
        %3561 = vrot.lane.b32.xlu0 %v3475, 64
        %v3562 = vpop.permute.xlu0 %3561
        %3563 = vrot.lane.b32.xlu0 %v3476, 64
        %v3564 = vpop.permute.xlu0 %3563
        %3565 = vrot.lane.b32.xlu0 %v3477, 64
        %v3566 = vpop.permute.xlu0 %3565
        %3567 = vrot.lane.b32.xlu0 %v3478, 64
        %v3568 = vpop.permute.xlu0 %3567
        %3569 = vrot.lane.b32.xlu0 %v3479, 64
        %v3570 = vpop.permute.xlu0 %3569
        %3571 = vrot.lane.b32.xlu0 %v3480, 64
        %v3572 = vpop.permute.xlu0 %3571
        %3573 = vrot.lane.b32.xlu0 %v3481, 64
        %v3574 = vpop.permute.xlu0 %3573
        %3575 = vrot.lane.b32.xlu0 %v3482, 64
        %v3576 = vpop.permute.xlu0 %3575
        %3577 = vrot.lane.b32.xlu0 %v3483, 64
        %v3578 = vpop.permute.xlu0 %3577
        %3579 = vrot.lane.b32.xlu0 %v3484, 64
        %v3580 = vpop.permute.xlu0 %3579
        %3613 = vst.msk [vmem:[#allocation3 + $0x4] sm:$0xf] %vm603, %v3518
        %3614 = vst.msk [vmem:[#allocation3 + $0x18] sm:$0xf] %vm603, %v3520
        %3615 = vst.msk [vmem:[#allocation3 + $0x2c] sm:$0xf] %vm603, %v3522
        %3616 = vst.msk [vmem:[#allocation3 + $0x40] sm:$0xf] %vm603, %v3524
        %3617 = vst.msk [vmem:[#allocation3 + $0x54] sm:$0xf] %vm603, %v3526
        %3618 = vst.msk [vmem:[#allocation3 + $0x68] sm:$0xf] %vm603, %v3528
        %3619 = vst.msk [vmem:[#allocation3 + $0x7c] sm:$0xf] %vm603, %v3530
        %3620 = vst.msk [vmem:[#allocation3 + $0x90] sm:$0xf] %vm603, %v3532
        %3621 = vst.msk [vmem:[#allocation3 + $0xa4] sm:$0xf] %vm603, %v3534
        %3622 = vst.msk [vmem:[#allocation3 + $0xb8] sm:$0xf] %vm603, %v3536
        %3623 = vst.msk [vmem:[#allocation3 + $0xcc] sm:$0xf] %vm603, %v3538
        %3624 = vst.msk [vmem:[#allocation3 + $0xe0] sm:$0xf] %vm603, %v3540
        %3625 = vst.msk [vmem:[#allocation3 + $0xf4] sm:$0xf] %vm603, %v3542
        %3626 = vst.msk [vmem:[#allocation3 + $0x108] sm:$0xf] %vm603, %v3544
        %3627 = vst.msk [vmem:[#allocation3 + $0x11c] sm:$0xf] %vm603, %v3546
        %3628 = vst.msk [vmem:[#allocation3 + $0x130] sm:$0xf] %vm603, %v3548
        %3629 = vst.msk [vmem:[#allocation3 + $0x144] sm:$0xf] %vm603, %v3550
        %3630 = vst.msk [vmem:[#allocation3 + $0x158] sm:$0xf] %vm603, %v3552
        %3631 = vst.msk [vmem:[#allocation3 + $0x16c] sm:$0xf] %vm603, %v3554
        %3632 = vst.msk [vmem:[#allocation3 + $0x180] sm:$0xf] %vm603, %v3556
        %3633 = vst.msk [vmem:[#allocation3 + $0x194] sm:$0xf] %vm603, %v3558
        %3634 = vst.msk [vmem:[#allocation3 + $0x1a8] sm:$0xf] %vm603, %v3560
        %3635 = vst.msk [vmem:[#allocation3 + $0x1bc] sm:$0xf] %vm603, %v3562
        %3636 = vst.msk [vmem:[#allocation3 + $0x1d0] sm:$0xf] %vm603, %v3564
        %3637 = vst.msk [vmem:[#allocation3 + $0x1e4] sm:$0xf] %vm603, %v3566
        %3638 = vst.msk [vmem:[#allocation3 + $0x1f8] sm:$0xf] %vm603, %v3568
        %3639 = vst.msk [vmem:[#allocation3 + $0x20c] sm:$0xf] %vm603, %v3570
        %3640 = vst.msk [vmem:[#allocation3 + $0x220] sm:$0xf] %vm603, %v3572
        %3641 = vst.msk [vmem:[#allocation3 + $0x234] sm:$0xf] %vm603, %v3574
        %3642 = vst.msk [vmem:[#allocation3 + $0x248] sm:$0xf] %vm603, %v3576
        %3643 = vst.msk [vmem:[#allocation3 + $0x25c] sm:$0xf] %vm603, %v3578
        %3644 = vst.msk [vmem:[#allocation3 + $0x270] sm:$0xf] %vm603, %v3580
        %v3645 = vld [vmem:[%s281 + $0x1] sm:$0xff]
        %v3646 = vld [vmem:[%s281 + $0x9] sm:$0xff]
        %v3647 = vld [vmem:[%s281 + $0x19] sm:$0xff]
        %v3648 = vld [vmem:[%s281 + $0x21] sm:$0xff]
        %v3649 = vld [vmem:[%s281 + $0x31] sm:$0xff]
        %v3650 = vld [vmem:[%s281 + $0x39] sm:$0xff]
        %v3651 = vld [vmem:[%s281 + $0x49] sm:$0xff]
        %v3652 = vld [vmem:[%s281 + $0x51] sm:$0xff]
        %v3653 = vld [vmem:[%s281 + $0x61] sm:$0xff]
        %v3654 = vld [vmem:[%s281 + $0x69] sm:$0xff]
        %v3655 = vld [vmem:[%s281 + $0x79] sm:$0xff]
        %v3656 = vld [vmem:[%s281 + $0x81] sm:$0xff]
        %v3657 = vld [vmem:[%s281 + $0x91] sm:$0xff]
        %v3658 = vld [vmem:[%s281 + $0x99] sm:$0xff]
        %v3659 = vld [vmem:[%s281 + $0xa9] sm:$0xff]
        %v3660 = vld [vmem:[%s281 + $0xb1] sm:$0xff]
        %v3661 = vld [vmem:[%s281 + $0xc1] sm:$0xff]
        %v3662 = vld [vmem:[%s281 + $0xc9] sm:$0xff]
        %v3663 = vld [vmem:[%s281 + $0xd9] sm:$0xff]
        %v3664 = vld [vmem:[%s281 + $0xe1] sm:$0xff]
        %v3665 = vld [vmem:[%s281 + $0xf1] sm:$0xff]
        %v3666 = vld [vmem:[%s281 + $0xf9] sm:$0xff]
        %v3667 = vld [vmem:[%s281 + $0x109] sm:$0xff]
        %v3668 = vld [vmem:[%s281 + $0x111] sm:$0xff]
        %v3669 = vld [vmem:[%s281 + $0x121] sm:$0xff]
        %v3670 = vld [vmem:[%s281 + $0x129] sm:$0xff]
        %v3671 = vld [vmem:[%s281 + $0x139] sm:$0xff]
        %v3672 = vld [vmem:[%s281 + $0x141] sm:$0xff]
        %v3673 = vld [vmem:[%s281 + $0x151] sm:$0xff]
        %v3674 = vld [vmem:[%s281 + $0x159] sm:$0xff]
        %v3675 = vld [vmem:[%s281 + $0x169] sm:$0xff]
        %v3676 = vld [vmem:[%s281 + $0x171] sm:$0xff]
        %v3677 = vpack.c.bf16 %v3645, %v3645
        %v3678 = vpack.c.bf16 %v3646, %v3646
        %v3679 = vpack.c.bf16 %v3647, %v3647
        %v3680 = vpack.c.bf16 %v3648, %v3648
        %v3681 = vpack.c.bf16 %v3649, %v3649
        %v3682 = vpack.c.bf16 %v3650, %v3650
        %v3683 = vpack.c.bf16 %v3651, %v3651
        %v3684 = vpack.c.bf16 %v3652, %v3652
        %v3685 = vpack.c.bf16 %v3653, %v3653
        %v3686 = vpack.c.bf16 %v3654, %v3654
        %v3687 = vpack.c.bf16 %v3655, %v3655
        %v3688 = vpack.c.bf16 %v3656, %v3656
        %v3689 = vpack.c.bf16 %v3657, %v3657
        %v3690 = vpack.c.bf16 %v3658, %v3658
        %v3691 = vpack.c.bf16 %v3659, %v3659
        %v3692 = vpack.c.bf16 %v3660, %v3660
        %v3693 = vpack.c.bf16 %v3661, %v3661
        %v3694 = vpack.c.bf16 %v3662, %v3662
        %v3695 = vpack.c.bf16 %v3663, %v3663
        %v3696 = vpack.c.bf16 %v3664, %v3664
        %v3697 = vpack.c.bf16 %v3665, %v3665
        %v3698 = vpack.c.bf16 %v3666, %v3666
        %v3699 = vpack.c.bf16 %v3667, %v3667
        %v3700 = vpack.c.bf16 %v3668, %v3668
        %v3701 = vpack.c.bf16 %v3669, %v3669
        %v3702 = vpack.c.bf16 %v3670, %v3670
        %v3703 = vpack.c.bf16 %v3671, %v3671
        %v3704 = vpack.c.bf16 %v3672, %v3672
        %v3705 = vpack.c.bf16 %v3673, %v3673
        %v3706 = vpack.c.bf16 %v3674, %v3674
        %v3707 = vpack.c.bf16 %v3675, %v3675
        %v3708 = vpack.c.bf16 %v3676, %v3676
        %3709 = vst.msk [vmem:[#allocation3 + $0x8] sm:$0xf] %vm378, %v3677
        %3710 = vst.msk [vmem:[#allocation3 + $0x1c] sm:$0xf] %vm378, %v3678
        %3711 = vst.msk [vmem:[#allocation3 + $0x30] sm:$0xf] %vm378, %v3679
        %3712 = vst.msk [vmem:[#allocation3 + $0x44] sm:$0xf] %vm378, %v3680
        %3713 = vst.msk [vmem:[#allocation3 + $0x58] sm:$0xf] %vm378, %v3681
        %3714 = vst.msk [vmem:[#allocation3 + $0x6c] sm:$0xf] %vm378, %v3682
        %3715 = vst.msk [vmem:[#allocation3 + $0x80] sm:$0xf] %vm378, %v3683
        %3716 = vst.msk [vmem:[#allocation3 + $0x94] sm:$0xf] %vm378, %v3684
        %3717 = vst.msk [vmem:[#allocation3 + $0xa8] sm:$0xf] %vm378, %v3685
        %3718 = vst.msk [vmem:[#allocation3 + $0xbc] sm:$0xf] %vm378, %v3686
        %3719 = vst.msk [vmem:[#allocation3 + $0xd0] sm:$0xf] %vm378, %v3687
        %3720 = vst.msk [vmem:[#allocation3 + $0xe4] sm:$0xf] %vm378, %v3688
        %3721 = vst.msk [vmem:[#allocation3 + $0xf8] sm:$0xf] %vm378, %v3689
        %3722 = vst.msk [vmem:[#allocation3 + $0x10c] sm:$0xf] %vm378, %v3690
        %3723 = vst.msk [vmem:[#allocation3 + $0x120] sm:$0xf] %vm378, %v3691
        %3724 = vst.msk [vmem:[#allocation3 + $0x134] sm:$0xf] %vm378, %v3692
        %3725 = vst.msk [vmem:[#allocation3 + $0x148] sm:$0xf] %vm378, %v3693
        %3726 = vst.msk [vmem:[#allocation3 + $0x15c] sm:$0xf] %vm378, %v3694
        %3727 = vst.msk [vmem:[#allocation3 + $0x170] sm:$0xf] %vm378, %v3695
        %3728 = vst.msk [vmem:[#allocation3 + $0x184] sm:$0xf] %vm378, %v3696
        %3729 = vst.msk [vmem:[#allocation3 + $0x198] sm:$0xf] %vm378, %v3697
        %3730 = vst.msk [vmem:[#allocation3 + $0x1ac] sm:$0xf] %vm378, %v3698
        %3731 = vst.msk [vmem:[#allocation3 + $0x1c0] sm:$0xf] %vm378, %v3699
        %3732 = vst.msk [vmem:[#allocation3 + $0x1d4] sm:$0xf] %vm378, %v3700
        %3733 = vst.msk [vmem:[#allocation3 + $0x1e8] sm:$0xf] %vm378, %v3701
        %3734 = vst.msk [vmem:[#allocation3 + $0x1fc] sm:$0xf] %vm378, %v3702
        %3735 = vst.msk [vmem:[#allocation3 + $0x210] sm:$0xf] %vm378, %v3703
        %3736 = vst.msk [vmem:[#allocation3 + $0x224] sm:$0xf] %vm378, %v3704
        %3737 = vst.msk [vmem:[#allocation3 + $0x238] sm:$0xf] %vm378, %v3705
        %3738 = vst.msk [vmem:[#allocation3 + $0x24c] sm:$0xf] %vm378, %v3706
        %3739 = vst.msk [vmem:[#allocation3 + $0x260] sm:$0xf] %vm378, %v3707
        %3740 = vst.msk [vmem:[#allocation3 + $0x274] sm:$0xf] %vm378, %v3708
        %v3741 = vld [vmem:[%s281 + $0x2] sm:$0xff]
        %v3742 = vld [vmem:[%s281 + $0xa] sm:$0xff]
        %v3743 = vld [vmem:[%s281 + $0x1a] sm:$0xff]
        %v3744 = vld [vmem:[%s281 + $0x22] sm:$0xff]
        %v3745 = vld [vmem:[%s281 + $0x32] sm:$0xff]
        %v3746 = vld [vmem:[%s281 + $0x3a] sm:$0xff]
        %v3747 = vld [vmem:[%s281 + $0x4a] sm:$0xff]
        %v3748 = vld [vmem:[%s281 + $0x52] sm:$0xff]
        %v3749 = vld [vmem:[%s281 + $0x62] sm:$0xff]
        %v3750 = vld [vmem:[%s281 + $0x6a] sm:$0xff]
        %v3751 = vld [vmem:[%s281 + $0x7a] sm:$0xff]
        %v3752 = vld [vmem:[%s281 + $0x82] sm:$0xff]
        %v3753 = vld [vmem:[%s281 + $0x92] sm:$0xff]
        %v3754 = vld [vmem:[%s281 + $0x9a] sm:$0xff]
        %v3755 = vld [vmem:[%s281 + $0xaa] sm:$0xff]
        %v3756 = vld [vmem:[%s281 + $0xb2] sm:$0xff]
        %v3757 = vld [vmem:[%s281 + $0xc2] sm:$0xff]
        %v3758 = vld [vmem:[%s281 + $0xca] sm:$0xff]
        %v3759 = vld [vmem:[%s281 + $0xda] sm:$0xff]
        %v3760 = vld [vmem:[%s281 + $0xe2] sm:$0xff]
        %v3761 = vld [vmem:[%s281 + $0xf2] sm:$0xff]
        %v3762 = vld [vmem:[%s281 + $0xfa] sm:$0xff]
        %v3763 = vld [vmem:[%s281 + $0x10a] sm:$0xff]
        %v3764 = vld [vmem:[%s281 + $0x112] sm:$0xff]
        %v3765 = vld [vmem:[%s281 + $0x122] sm:$0xff]
        %v3766 = vld [vmem:[%s281 + $0x12a] sm:$0xff]
        %v3767 = vld [vmem:[%s281 + $0x13a] sm:$0xff]
        %v3768 = vld [vmem:[%s281 + $0x142] sm:$0xff]
        %v3769 = vld [vmem:[%s281 + $0x152] sm:$0xff]
        %v3770 = vld [vmem:[%s281 + $0x15a] sm:$0xff]
        %v3771 = vld [vmem:[%s281 + $0x16a] sm:$0xff]
        %v3772 = vld [vmem:[%s281 + $0x172] sm:$0xff]
        %v3773 = vpack.c.bf16 %v3741, %v3741
        %v3774 = vpack.c.bf16 %v3742, %v3742
        %v3775 = vpack.c.bf16 %v3743, %v3743
        %v3776 = vpack.c.bf16 %v3744, %v3744
        %v3777 = vpack.c.bf16 %v3745, %v3745
        %v3778 = vpack.c.bf16 %v3746, %v3746
        %v3779 = vpack.c.bf16 %v3747, %v3747
        %v3780 = vpack.c.bf16 %v3748, %v3748
        %v3781 = vpack.c.bf16 %v3749, %v3749
        %v3782 = vpack.c.bf16 %v3750, %v3750
        %v3783 = vpack.c.bf16 %v3751, %v3751
        %v3784 = vpack.c.bf16 %v3752, %v3752
        %v3785 = vpack.c.bf16 %v3753, %v3753
        %v3786 = vpack.c.bf16 %v3754, %v3754
        %v3787 = vpack.c.bf16 %v3755, %v3755
        %v3788 = vpack.c.bf16 %v3756, %v3756
        %v3789 = vpack.c.bf16 %v3757, %v3757
        %v3790 = vpack.c.bf16 %v3758, %v3758
        %v3791 = vpack.c.bf16 %v3759, %v3759
        %v3792 = vpack.c.bf16 %v3760, %v3760
        %v3793 = vpack.c.bf16 %v3761, %v3761
        %v3794 = vpack.c.bf16 %v3762, %v3762
        %v3795 = vpack.c.bf16 %v3763, %v3763
        %v3796 = vpack.c.bf16 %v3764, %v3764
        %v3797 = vpack.c.bf16 %v3765, %v3765
        %v3798 = vpack.c.bf16 %v3766, %v3766
        %v3799 = vpack.c.bf16 %v3767, %v3767
        %v3800 = vpack.c.bf16 %v3768, %v3768
        %v3801 = vpack.c.bf16 %v3769, %v3769
        %v3802 = vpack.c.bf16 %v3770, %v3770
        %v3803 = vpack.c.bf16 %v3771, %v3771
        %v3804 = vpack.c.bf16 %v3772, %v3772
        %3837 = vrot.lane.b32.xlu0 %v3773, 64
        %v3838 = vpop.permute.xlu0 %3837
        %3839 = vrot.lane.b32.xlu0 %v3774, 64
        %v3840 = vpop.permute.xlu0 %3839
        %3841 = vrot.lane.b32.xlu0 %v3775, 64
        %v3842 = vpop.permute.xlu0 %3841
        %3843 = vrot.lane.b32.xlu0 %v3776, 64
        %v3844 = vpop.permute.xlu0 %3843
        %3845 = vrot.lane.b32.xlu0 %v3777, 64
        %v3846 = vpop.permute.xlu0 %3845
        %3847 = vrot.lane.b32.xlu0 %v3778, 64
        %v3848 = vpop.permute.xlu0 %3847
        %3849 = vrot.lane.b32.xlu0 %v3779, 64
        %v3850 = vpop.permute.xlu0 %3849
        %3851 = vrot.lane.b32.xlu0 %v3780, 64
        %v3852 = vpop.permute.xlu0 %3851
        %3853 = vrot.lane.b32.xlu0 %v3781, 64
        %v3854 = vpop.permute.xlu0 %3853
        %3855 = vrot.lane.b32.xlu0 %v3782, 64
        %v3856 = vpop.permute.xlu0 %3855
        %3857 = vrot.lane.b32.xlu0 %v3783, 64
        %v3858 = vpop.permute.xlu0 %3857
        %3859 = vrot.lane.b32.xlu0 %v3784, 64
        %v3860 = vpop.permute.xlu0 %3859
        %3861 = vrot.lane.b32.xlu0 %v3785, 64
        %v3862 = vpop.permute.xlu0 %3861
        %3863 = vrot.lane.b32.xlu0 %v3786, 64
        %v3864 = vpop.permute.xlu0 %3863
        %3865 = vrot.lane.b32.xlu0 %v3787, 64
        %v3866 = vpop.permute.xlu0 %3865
        %3867 = vrot.lane.b32.xlu0 %v3788, 64
        %v3868 = vpop.permute.xlu0 %3867
        %3869 = vrot.lane.b32.xlu0 %v3789, 64
        %v3870 = vpop.permute.xlu0 %3869
        %3871 = vrot.lane.b32.xlu0 %v3790, 64
        %v3872 = vpop.permute.xlu0 %3871
        %3873 = vrot.lane.b32.xlu0 %v3791, 64
        %v3874 = vpop.permute.xlu0 %3873
        %3875 = vrot.lane.b32.xlu0 %v3792, 64
        %v3876 = vpop.permute.xlu0 %3875
        %3877 = vrot.lane.b32.xlu0 %v3793, 64
        %v3878 = vpop.permute.xlu0 %3877
        %3879 = vrot.lane.b32.xlu0 %v3794, 64
        %v3880 = vpop.permute.xlu0 %3879
        %3881 = vrot.lane.b32.xlu0 %v3795, 64
        %v3882 = vpop.permute.xlu0 %3881
        %3883 = vrot.lane.b32.xlu0 %v3796, 64
        %v3884 = vpop.permute.xlu0 %3883
        %3885 = vrot.lane.b32.xlu0 %v3797, 64
        %v3886 = vpop.permute.xlu0 %3885
        %3887 = vrot.lane.b32.xlu0 %v3798, 64
        %v3888 = vpop.permute.xlu0 %3887
        %3889 = vrot.lane.b32.xlu0 %v3799, 64
        %v3890 = vpop.permute.xlu0 %3889
        %3891 = vrot.lane.b32.xlu0 %v3800, 64
        %v3892 = vpop.permute.xlu0 %3891
        %3893 = vrot.lane.b32.xlu0 %v3801, 64
        %v3894 = vpop.permute.xlu0 %3893
        %3895 = vrot.lane.b32.xlu0 %v3802, 64
        %v3896 = vpop.permute.xlu0 %3895
        %3897 = vrot.lane.b32.xlu0 %v3803, 64
        %v3898 = vpop.permute.xlu0 %3897
        %3899 = vrot.lane.b32.xlu0 %v3804, 64
        %v3900 = vpop.permute.xlu0 %3899
        %3933 = vst.msk [vmem:[#allocation3 + $0x8] sm:$0xf] %vm603, %v3838
        %3934 = vst.msk [vmem:[#allocation3 + $0x1c] sm:$0xf] %vm603, %v3840
        %3935 = vst.msk [vmem:[#allocation3 + $0x30] sm:$0xf] %vm603, %v3842
        %3936 = vst.msk [vmem:[#allocation3 + $0x44] sm:$0xf] %vm603, %v3844
        %3937 = vst.msk [vmem:[#allocation3 + $0x58] sm:$0xf] %vm603, %v3846
        %3938 = vst.msk [vmem:[#allocation3 + $0x6c] sm:$0xf] %vm603, %v3848
        %3939 = vst.msk [vmem:[#allocation3 + $0x80] sm:$0xf] %vm603, %v3850
        %3940 = vst.msk [vmem:[#allocation3 + $0x94] sm:$0xf] %vm603, %v3852
        %3941 = vst.msk [vmem:[#allocation3 + $0xa8] sm:$0xf] %vm603, %v3854
        %3942 = vst.msk [vmem:[#allocation3 + $0xbc] sm:$0xf] %vm603, %v3856
        %3943 = vst.msk [vmem:[#allocation3 + $0xd0] sm:$0xf] %vm603, %v3858
        %3944 = vst.msk [vmem:[#allocation3 + $0xe4] sm:$0xf] %vm603, %v3860
        %3945 = vst.msk [vmem:[#allocation3 + $0xf8] sm:$0xf] %vm603, %v3862
        %3946 = vst.msk [vmem:[#allocation3 + $0x10c] sm:$0xf] %vm603, %v3864
        %3947 = vst.msk [vmem:[#allocation3 + $0x120] sm:$0xf] %vm603, %v3866
        %3948 = vst.msk [vmem:[#allocation3 + $0x134] sm:$0xf] %vm603, %v3868
        %3949 = vst.msk [vmem:[#allocation3 + $0x148] sm:$0xf] %vm603, %v3870
        %3950 = vst.msk [vmem:[#allocation3 + $0x15c] sm:$0xf] %vm603, %v3872
        %3951 = vst.msk [vmem:[#allocation3 + $0x170] sm:$0xf] %vm603, %v3874
        %3952 = vst.msk [vmem:[#allocation3 + $0x184] sm:$0xf] %vm603, %v3876
        %3953 = vst.msk [vmem:[#allocation3 + $0x198] sm:$0xf] %vm603, %v3878
        %3954 = vst.msk [vmem:[#allocation3 + $0x1ac] sm:$0xf] %vm603, %v3880
        %3955 = vst.msk [vmem:[#allocation3 + $0x1c0] sm:$0xf] %vm603, %v3882
        %3956 = vst.msk [vmem:[#allocation3 + $0x1d4] sm:$0xf] %vm603, %v3884
        %3957 = vst.msk [vmem:[#allocation3 + $0x1e8] sm:$0xf] %vm603, %v3886
        %3958 = vst.msk [vmem:[#allocation3 + $0x1fc] sm:$0xf] %vm603, %v3888
        %3959 = vst.msk [vmem:[#allocation3 + $0x210] sm:$0xf] %vm603, %v3890
        %3960 = vst.msk [vmem:[#allocation3 + $0x224] sm:$0xf] %vm603, %v3892
        %3961 = vst.msk [vmem:[#allocation3 + $0x238] sm:$0xf] %vm603, %v3894
        %3962 = vst.msk [vmem:[#allocation3 + $0x24c] sm:$0xf] %vm603, %v3896
        %3963 = vst.msk [vmem:[#allocation3 + $0x260] sm:$0xf] %vm603, %v3898
        %3964 = vst.msk [vmem:[#allocation3 + $0x274] sm:$0xf] %vm603, %v3900
        %v3965 = vld [vmem:[%s1276] sm:$0xff]
        %v3966 = vld [vmem:[%s1276 + $0x8] sm:$0xff]
        %v3967 = vld [vmem:[%s1276 + $0x18] sm:$0xff]
        %v3968 = vld [vmem:[%s1276 + $0x20] sm:$0xff]
        %v3969 = vld [vmem:[%s1276 + $0x30] sm:$0xff]
        %v3970 = vld [vmem:[%s1276 + $0x38] sm:$0xff]
        %v3971 = vld [vmem:[%s1276 + $0x48] sm:$0xff]
        %v3972 = vld [vmem:[%s1276 + $0x50] sm:$0xff]
        %v3973 = vld [vmem:[%s1276 + $0x60] sm:$0xff]
        %v3974 = vld [vmem:[%s1276 + $0x68] sm:$0xff]
        %v3975 = vld [vmem:[%s1276 + $0x78] sm:$0xff]
        %v3976 = vld [vmem:[%s1276 + $0x80] sm:$0xff]
        %v3977 = vld [vmem:[%s1276 + $0x90] sm:$0xff]
        %v3978 = vld [vmem:[%s1276 + $0x98] sm:$0xff]
        %v3979 = vld [vmem:[%s1276 + $0xa8] sm:$0xff]
        %v3980 = vld [vmem:[%s1276 + $0xb0] sm:$0xff]
        %v3981 = vld [vmem:[%s1276 + $0xc0] sm:$0xff]
        %v3982 = vld [vmem:[%s1276 + $0xc8] sm:$0xff]
        %v3983 = vld [vmem:[%s1276 + $0xd8] sm:$0xff]
        %v3984 = vld [vmem:[%s1276 + $0xe0] sm:$0xff]
        %v3985 = vld [vmem:[%s1276 + $0xf0] sm:$0xff]
        %v3986 = vld [vmem:[%s1276 + $0xf8] sm:$0xff]
        %v3987 = vld [vmem:[%s1276 + $0x108] sm:$0xff]
        %v3988 = vld [vmem:[%s1276 + $0x110] sm:$0xff]
        %v3989 = vld [vmem:[%s1276 + $0x120] sm:$0xff]
        %v3990 = vld [vmem:[%s1276 + $0x128] sm:$0xff]
        %v3991 = vld [vmem:[%s1276 + $0x138] sm:$0xff]
        %v3992 = vld [vmem:[%s1276 + $0x140] sm:$0xff]
        %v3993 = vld [vmem:[%s1276 + $0x150] sm:$0xff]
        %v3994 = vld [vmem:[%s1276 + $0x158] sm:$0xff]
        %v3995 = vld [vmem:[%s1276 + $0x168] sm:$0xff]
        %v3996 = vld [vmem:[%s1276 + $0x170] sm:$0xff]
        %v3997 = vpack.c.bf16 %v3965, %v3965
        %v3998 = vpack.c.bf16 %v3966, %v3966
        %v3999 = vpack.c.bf16 %v3967, %v3967
        %v4000 = vpack.c.bf16 %v3968, %v3968
        %v4001 = vpack.c.bf16 %v3969, %v3969
        %v4002 = vpack.c.bf16 %v3970, %v3970
        %v4003 = vpack.c.bf16 %v3971, %v3971
        %v4004 = vpack.c.bf16 %v3972, %v3972
        %v4005 = vpack.c.bf16 %v3973, %v3973
        %v4006 = vpack.c.bf16 %v3974, %v3974
        %v4007 = vpack.c.bf16 %v3975, %v3975
        %v4008 = vpack.c.bf16 %v3976, %v3976
        %v4009 = vpack.c.bf16 %v3977, %v3977
        %v4010 = vpack.c.bf16 %v3978, %v3978
        %v4011 = vpack.c.bf16 %v3979, %v3979
        %v4012 = vpack.c.bf16 %v3980, %v3980
        %v4013 = vpack.c.bf16 %v3981, %v3981
        %v4014 = vpack.c.bf16 %v3982, %v3982
        %v4015 = vpack.c.bf16 %v3983, %v3983
        %v4016 = vpack.c.bf16 %v3984, %v3984
        %v4017 = vpack.c.bf16 %v3985, %v3985
        %v4018 = vpack.c.bf16 %v3986, %v3986
        %v4019 = vpack.c.bf16 %v3987, %v3987
        %v4020 = vpack.c.bf16 %v3988, %v3988
        %v4021 = vpack.c.bf16 %v3989, %v3989
        %v4022 = vpack.c.bf16 %v3990, %v3990
        %v4023 = vpack.c.bf16 %v3991, %v3991
        %v4024 = vpack.c.bf16 %v3992, %v3992
        %v4025 = vpack.c.bf16 %v3993, %v3993
        %v4026 = vpack.c.bf16 %v3994, %v3994
        %v4027 = vpack.c.bf16 %v3995, %v3995
        %v4028 = vpack.c.bf16 %v3996, %v3996
        %4029 = vst.msk [vmem:[#allocation3 + $0xc] sm:$0xf] %vm378, %v3997
        %4030 = vst.msk [vmem:[#allocation3 + $0x20] sm:$0xf] %vm378, %v3998
        %4031 = vst.msk [vmem:[#allocation3 + $0x34] sm:$0xf] %vm378, %v3999
        %4032 = vst.msk [vmem:[#allocation3 + $0x48] sm:$0xf] %vm378, %v4000
        %4033 = vst.msk [vmem:[#allocation3 + $0x5c] sm:$0xf] %vm378, %v4001
        %4034 = vst.msk [vmem:[#allocation3 + $0x70] sm:$0xf] %vm378, %v4002
        %4035 = vst.msk [vmem:[#allocation3 + $0x84] sm:$0xf] %vm378, %v4003
        %4036 = vst.msk [vmem:[#allocation3 + $0x98] sm:$0xf] %vm378, %v4004
        %4037 = vst.msk [vmem:[#allocation3 + $0xac] sm:$0xf] %vm378, %v4005
        %4038 = vst.msk [vmem:[#allocation3 + $0xc0] sm:$0xf] %vm378, %v4006
        %4039 = vst.msk [vmem:[#allocation3 + $0xd4] sm:$0xf] %vm378, %v4007
        %4040 = vst.msk [vmem:[#allocation3 + $0xe8] sm:$0xf] %vm378, %v4008
        %4041 = vst.msk [vmem:[#allocation3 + $0xfc] sm:$0xf] %vm378, %v4009
        %4042 = vst.msk [vmem:[#allocation3 + $0x110] sm:$0xf] %vm378, %v4010
        %4043 = vst.msk [vmem:[#allocation3 + $0x124] sm:$0xf] %vm378, %v4011
        %4044 = vst.msk [vmem:[#allocation3 + $0x138] sm:$0xf] %vm378, %v4012
        %4045 = vst.msk [vmem:[#allocation3 + $0x14c] sm:$0xf] %vm378, %v4013
        %4046 = vst.msk [vmem:[#allocation3 + $0x160] sm:$0xf] %vm378, %v4014
        %4047 = vst.msk [vmem:[#allocation3 + $0x174] sm:$0xf] %vm378, %v4015
        %4048 = vst.msk [vmem:[#allocation3 + $0x188] sm:$0xf] %vm378, %v4016
        %4049 = vst.msk [vmem:[#allocation3 + $0x19c] sm:$0xf] %vm378, %v4017
        %4050 = vst.msk [vmem:[#allocation3 + $0x1b0] sm:$0xf] %vm378, %v4018
        %4051 = vst.msk [vmem:[#allocation3 + $0x1c4] sm:$0xf] %vm378, %v4019
        %4052 = vst.msk [vmem:[#allocation3 + $0x1d8] sm:$0xf] %vm378, %v4020
        %4053 = vst.msk [vmem:[#allocation3 + $0x1ec] sm:$0xf] %vm378, %v4021
        %4054 = vst.msk [vmem:[#allocation3 + $0x200] sm:$0xf] %vm378, %v4022
        %4055 = vst.msk [vmem:[#allocation3 + $0x214] sm:$0xf] %vm378, %v4023
        %4056 = vst.msk [vmem:[#allocation3 + $0x228] sm:$0xf] %vm378, %v4024
        %4057 = vst.msk [vmem:[#allocation3 + $0x23c] sm:$0xf] %vm378, %v4025
        %4058 = vst.msk [vmem:[#allocation3 + $0x250] sm:$0xf] %vm378, %v4026
        %4059 = vst.msk [vmem:[#allocation3 + $0x264] sm:$0xf] %vm378, %v4027
        %4060 = vst.msk [vmem:[#allocation3 + $0x278] sm:$0xf] %vm378, %v4028
        %v4061 = vld [vmem:[%s1276 + $0x1] sm:$0xff]
        %v4062 = vld [vmem:[%s1276 + $0x9] sm:$0xff]
        %v4063 = vld [vmem:[%s1276 + $0x19] sm:$0xff]
        %v4064 = vld [vmem:[%s1276 + $0x21] sm:$0xff]
        %v4065 = vld [vmem:[%s1276 + $0x31] sm:$0xff]
        %v4066 = vld [vmem:[%s1276 + $0x39] sm:$0xff]
        %v4067 = vld [vmem:[%s1276 + $0x49] sm:$0xff]
        %v4068 = vld [vmem:[%s1276 + $0x51] sm:$0xff]
        %v4069 = vld [vmem:[%s1276 + $0x61] sm:$0xff]
        %v4070 = vld [vmem:[%s1276 + $0x69] sm:$0xff]
        %v4071 = vld [vmem:[%s1276 + $0x79] sm:$0xff]
        %v4072 = vld [vmem:[%s1276 + $0x81] sm:$0xff]
        %v4073 = vld [vmem:[%s1276 + $0x91] sm:$0xff]
        %v4074 = vld [vmem:[%s1276 + $0x99] sm:$0xff]
        %v4075 = vld [vmem:[%s1276 + $0xa9] sm:$0xff]
        %v4076 = vld [vmem:[%s1276 + $0xb1] sm:$0xff]
        %v4077 = vld [vmem:[%s1276 + $0xc1] sm:$0xff]
        %v4078 = vld [vmem:[%s1276 + $0xc9] sm:$0xff]
        %v4079 = vld [vmem:[%s1276 + $0xd9] sm:$0xff]
        %v4080 = vld [vmem:[%s1276 + $0xe1] sm:$0xff]
        %v4081 = vld [vmem:[%s1276 + $0xf1] sm:$0xff]
        %v4082 = vld [vmem:[%s1276 + $0xf9] sm:$0xff]
        %v4083 = vld [vmem:[%s1276 + $0x109] sm:$0xff]
        %v4084 = vld [vmem:[%s1276 + $0x111] sm:$0xff]
        %v4085 = vld [vmem:[%s1276 + $0x121] sm:$0xff]
        %v4086 = vld [vmem:[%s1276 + $0x129] sm:$0xff]
        %v4087 = vld [vmem:[%s1276 + $0x139] sm:$0xff]
        %v4088 = vld [vmem:[%s1276 + $0x141] sm:$0xff]
        %v4089 = vld [vmem:[%s1276 + $0x151] sm:$0xff]
        %v4090 = vld [vmem:[%s1276 + $0x159] sm:$0xff]
        %v4091 = vld [vmem:[%s1276 + $0x169] sm:$0xff]
        %v4092 = vld [vmem:[%s1276 + $0x171] sm:$0xff]
        %v4093 = vpack.c.bf16 %v4061, %v4061
        %v4094 = vpack.c.bf16 %v4062, %v4062
        %v4095 = vpack.c.bf16 %v4063, %v4063
        %v4096 = vpack.c.bf16 %v4064, %v4064
        %v4097 = vpack.c.bf16 %v4065, %v4065
        %v4098 = vpack.c.bf16 %v4066, %v4066
        %v4099 = vpack.c.bf16 %v4067, %v4067
        %v4100 = vpack.c.bf16 %v4068, %v4068
        %v4101 = vpack.c.bf16 %v4069, %v4069
        %v4102 = vpack.c.bf16 %v4070, %v4070
        %v4103 = vpack.c.bf16 %v4071, %v4071
        %v4104 = vpack.c.bf16 %v4072, %v4072
        %v4105 = vpack.c.bf16 %v4073, %v4073
        %v4106 = vpack.c.bf16 %v4074, %v4074
        %v4107 = vpack.c.bf16 %v4075, %v4075
        %v4108 = vpack.c.bf16 %v4076, %v4076
        %v4109 = vpack.c.bf16 %v4077, %v4077
        %v4110 = vpack.c.bf16 %v4078, %v4078
        %v4111 = vpack.c.bf16 %v4079, %v4079
        %v4112 = vpack.c.bf16 %v4080, %v4080
        %v4113 = vpack.c.bf16 %v4081, %v4081
        %v4114 = vpack.c.bf16 %v4082, %v4082
        %v4115 = vpack.c.bf16 %v4083, %v4083
        %v4116 = vpack.c.bf16 %v4084, %v4084
        %v4117 = vpack.c.bf16 %v4085, %v4085
        %v4118 = vpack.c.bf16 %v4086, %v4086
        %v4119 = vpack.c.bf16 %v4087, %v4087
        %v4120 = vpack.c.bf16 %v4088, %v4088
        %v4121 = vpack.c.bf16 %v4089, %v4089
        %v4122 = vpack.c.bf16 %v4090, %v4090
        %v4123 = vpack.c.bf16 %v4091, %v4091
        %v4124 = vpack.c.bf16 %v4092, %v4092
        %4157 = vrot.lane.b32.xlu0 %v4093, 64
        %v4158 = vpop.permute.xlu0 %4157
        %4159 = vrot.lane.b32.xlu0 %v4094, 64
        %v4160 = vpop.permute.xlu0 %4159
        %4161 = vrot.lane.b32.xlu0 %v4095, 64
        %v4162 = vpop.permute.xlu0 %4161
        %4163 = vrot.lane.b32.xlu0 %v4096, 64
        %v4164 = vpop.permute.xlu0 %4163
        %4165 = vrot.lane.b32.xlu0 %v4097, 64
        %v4166 = vpop.permute.xlu0 %4165
        %4167 = vrot.lane.b32.xlu0 %v4098, 64
        %v4168 = vpop.permute.xlu0 %4167
        %4169 = vrot.lane.b32.xlu0 %v4099, 64
        %v4170 = vpop.permute.xlu0 %4169
        %4171 = vrot.lane.b32.xlu0 %v4100, 64
        %v4172 = vpop.permute.xlu0 %4171
        %4173 = vrot.lane.b32.xlu0 %v4101, 64
        %v4174 = vpop.permute.xlu0 %4173
        %4175 = vrot.lane.b32.xlu0 %v4102, 64
        %v4176 = vpop.permute.xlu0 %4175
        %4177 = vrot.lane.b32.xlu0 %v4103, 64
        %v4178 = vpop.permute.xlu0 %4177
        %4179 = vrot.lane.b32.xlu0 %v4104, 64
        %v4180 = vpop.permute.xlu0 %4179
        %4181 = vrot.lane.b32.xlu0 %v4105, 64
        %v4182 = vpop.permute.xlu0 %4181
        %4183 = vrot.lane.b32.xlu0 %v4106, 64
        %v4184 = vpop.permute.xlu0 %4183
        %4185 = vrot.lane.b32.xlu0 %v4107, 64
        %v4186 = vpop.permute.xlu0 %4185
        %4187 = vrot.lane.b32.xlu0 %v4108, 64
        %v4188 = vpop.permute.xlu0 %4187
        %4189 = vrot.lane.b32.xlu0 %v4109, 64
        %v4190 = vpop.permute.xlu0 %4189
        %4191 = vrot.lane.b32.xlu0 %v4110, 64
        %v4192 = vpop.permute.xlu0 %4191
        %4193 = vrot.lane.b32.xlu0 %v4111, 64
        %v4194 = vpop.permute.xlu0 %4193
        %4195 = vrot.lane.b32.xlu0 %v4112, 64
        %v4196 = vpop.permute.xlu0 %4195
        %4197 = vrot.lane.b32.xlu0 %v4113, 64
        %v4198 = vpop.permute.xlu0 %4197
        %4199 = vrot.lane.b32.xlu0 %v4114, 64
        %v4200 = vpop.permute.xlu0 %4199
        %4201 = vrot.lane.b32.xlu0 %v4115, 64
        %v4202 = vpop.permute.xlu0 %4201
        %4203 = vrot.lane.b32.xlu0 %v4116, 64
        %v4204 = vpop.permute.xlu0 %4203
        %4205 = vrot.lane.b32.xlu0 %v4117, 64
        %v4206 = vpop.permute.xlu0 %4205
        %4207 = vrot.lane.b32.xlu0 %v4118, 64
        %v4208 = vpop.permute.xlu0 %4207
        %4209 = vrot.lane.b32.xlu0 %v4119, 64
        %v4210 = vpop.permute.xlu0 %4209
        %4211 = vrot.lane.b32.xlu0 %v4120, 64
        %v4212 = vpop.permute.xlu0 %4211
        %4213 = vrot.lane.b32.xlu0 %v4121, 64
        %v4214 = vpop.permute.xlu0 %4213
        %4215 = vrot.lane.b32.xlu0 %v4122, 64
        %v4216 = vpop.permute.xlu0 %4215
        %4217 = vrot.lane.b32.xlu0 %v4123, 64
        %v4218 = vpop.permute.xlu0 %4217
        %4219 = vrot.lane.b32.xlu0 %v4124, 64
        %v4220 = vpop.permute.xlu0 %4219
        %4253 = vst.msk [vmem:[#allocation3 + $0xc] sm:$0xf] %vm603, %v4158
        %4254 = vst.msk [vmem:[#allocation3 + $0x20] sm:$0xf] %vm603, %v4160
        %4255 = vst.msk [vmem:[#allocation3 + $0x34] sm:$0xf] %vm603, %v4162
        %4256 = vst.msk [vmem:[#allocation3 + $0x48] sm:$0xf] %vm603, %v4164
        %4257 = vst.msk [vmem:[#allocation3 + $0x5c] sm:$0xf] %vm603, %v4166
        %4258 = vst.msk [vmem:[#allocation3 + $0x70] sm:$0xf] %vm603, %v4168
        %4259 = vst.msk [vmem:[#allocation3 + $0x84] sm:$0xf] %vm603, %v4170
        %4260 = vst.msk [vmem:[#allocation3 + $0x98] sm:$0xf] %vm603, %v4172
        %4261 = vst.msk [vmem:[#allocation3 + $0xac] sm:$0xf] %vm603, %v4174
        %4262 = vst.msk [vmem:[#allocation3 + $0xc0] sm:$0xf] %vm603, %v4176
        %4263 = vst.msk [vmem:[#allocation3 + $0xd4] sm:$0xf] %vm603, %v4178
        %4264 = vst.msk [vmem:[#allocation3 + $0xe8] sm:$0xf] %vm603, %v4180
        %4265 = vst.msk [vmem:[#allocation3 + $0xfc] sm:$0xf] %vm603, %v4182
        %4266 = vst.msk [vmem:[#allocation3 + $0x110] sm:$0xf] %vm603, %v4184
        %4267 = vst.msk [vmem:[#allocation3 + $0x124] sm:$0xf] %vm603, %v4186
        %4268 = vst.msk [vmem:[#allocation3 + $0x138] sm:$0xf] %vm603, %v4188
        %4269 = vst.msk [vmem:[#allocation3 + $0x14c] sm:$0xf] %vm603, %v4190
        %4270 = vst.msk [vmem:[#allocation3 + $0x160] sm:$0xf] %vm603, %v4192
        %4271 = vst.msk [vmem:[#allocation3 + $0x174] sm:$0xf] %vm603, %v4194
        %4272 = vst.msk [vmem:[#allocation3 + $0x188] sm:$0xf] %vm603, %v4196
        %4273 = vst.msk [vmem:[#allocation3 + $0x19c] sm:$0xf] %vm603, %v4198
        %4274 = vst.msk [vmem:[#allocation3 + $0x1b0] sm:$0xf] %vm603, %v4200
        %4275 = vst.msk [vmem:[#allocation3 + $0x1c4] sm:$0xf] %vm603, %v4202
        %4276 = vst.msk [vmem:[#allocation3 + $0x1d8] sm:$0xf] %vm603, %v4204
        %4277 = vst.msk [vmem:[#allocation3 + $0x1ec] sm:$0xf] %vm603, %v4206
        %4278 = vst.msk [vmem:[#allocation3 + $0x200] sm:$0xf] %vm603, %v4208
        %4279 = vst.msk [vmem:[#allocation3 + $0x214] sm:$0xf] %vm603, %v4210
        %4280 = vst.msk [vmem:[#allocation3 + $0x228] sm:$0xf] %vm603, %v4212
        %4281 = vst.msk [vmem:[#allocation3 + $0x23c] sm:$0xf] %vm603, %v4214
        %4282 = vst.msk [vmem:[#allocation3 + $0x250] sm:$0xf] %vm603, %v4216
        %4283 = vst.msk [vmem:[#allocation3 + $0x264] sm:$0xf] %vm603, %v4218
        %4284 = vst.msk [vmem:[#allocation3 + $0x278] sm:$0xf] %vm603, %v4220
        %v4285 = vld [vmem:[%s1276 + $0x2] sm:$0xff]
        %v4286 = vld [vmem:[%s1276 + $0xa] sm:$0xff]
        %v4287 = vld [vmem:[%s1276 + $0x1a] sm:$0xff]
        %v4288 = vld [vmem:[%s1276 + $0x22] sm:$0xff]
        %v4289 = vld [vmem:[%s1276 + $0x32] sm:$0xff]
        %v4290 = vld [vmem:[%s1276 + $0x3a] sm:$0xff]
        %v4291 = vld [vmem:[%s1276 + $0x4a] sm:$0xff]
        %v4292 = vld [vmem:[%s1276 + $0x52] sm:$0xff]
        %v4293 = vld [vmem:[%s1276 + $0x62] sm:$0xff]
        %v4294 = vld [vmem:[%s1276 + $0x6a] sm:$0xff]
        %v4295 = vld [vmem:[%s1276 + $0x7a] sm:$0xff]
        %v4296 = vld [vmem:[%s1276 + $0x82] sm:$0xff]
        %v4297 = vld [vmem:[%s1276 + $0x92] sm:$0xff]
        %v4298 = vld [vmem:[%s1276 + $0x9a] sm:$0xff]
        %v4299 = vld [vmem:[%s1276 + $0xaa] sm:$0xff]
        %v4300 = vld [vmem:[%s1276 + $0xb2] sm:$0xff]
        %v4301 = vld [vmem:[%s1276 + $0xc2] sm:$0xff]
        %v4302 = vld [vmem:[%s1276 + $0xca] sm:$0xff]
        %v4303 = vld [vmem:[%s1276 + $0xda] sm:$0xff]
        %v4304 = vld [vmem:[%s1276 + $0xe2] sm:$0xff]
        %v4305 = vld [vmem:[%s1276 + $0xf2] sm:$0xff]
        %v4306 = vld [vmem:[%s1276 + $0xfa] sm:$0xff]
        %v4307 = vld [vmem:[%s1276 + $0x10a] sm:$0xff]
        %v4308 = vld [vmem:[%s1276 + $0x112] sm:$0xff]
        %v4309 = vld [vmem:[%s1276 + $0x122] sm:$0xff]
        %v4310 = vld [vmem:[%s1276 + $0x12a] sm:$0xff]
        %v4311 = vld [vmem:[%s1276 + $0x13a] sm:$0xff]
        %v4312 = vld [vmem:[%s1276 + $0x142] sm:$0xff]
        %v4313 = vld [vmem:[%s1276 + $0x152] sm:$0xff]
        %v4314 = vld [vmem:[%s1276 + $0x15a] sm:$0xff]
        %v4315 = vld [vmem:[%s1276 + $0x16a] sm:$0xff]
        %v4316 = vld [vmem:[%s1276 + $0x172] sm:$0xff]
        %v4317 = vpack.c.bf16 %v4285, %v4285
        %v4318 = vpack.c.bf16 %v4286, %v4286
        %v4319 = vpack.c.bf16 %v4287, %v4287
        %v4320 = vpack.c.bf16 %v4288, %v4288
        %v4321 = vpack.c.bf16 %v4289, %v4289
        %v4322 = vpack.c.bf16 %v4290, %v4290
        %v4323 = vpack.c.bf16 %v4291, %v4291
        %v4324 = vpack.c.bf16 %v4292, %v4292
        %v4325 = vpack.c.bf16 %v4293, %v4293
        %v4326 = vpack.c.bf16 %v4294, %v4294
        %v4327 = vpack.c.bf16 %v4295, %v4295
        %v4328 = vpack.c.bf16 %v4296, %v4296
        %v4329 = vpack.c.bf16 %v4297, %v4297
        %v4330 = vpack.c.bf16 %v4298, %v4298
        %v4331 = vpack.c.bf16 %v4299, %v4299
        %v4332 = vpack.c.bf16 %v4300, %v4300
        %v4333 = vpack.c.bf16 %v4301, %v4301
        %v4334 = vpack.c.bf16 %v4302, %v4302
        %v4335 = vpack.c.bf16 %v4303, %v4303
        %v4336 = vpack.c.bf16 %v4304, %v4304
        %v4337 = vpack.c.bf16 %v4305, %v4305
        %v4338 = vpack.c.bf16 %v4306, %v4306
        %v4339 = vpack.c.bf16 %v4307, %v4307
        %v4340 = vpack.c.bf16 %v4308, %v4308
        %v4341 = vpack.c.bf16 %v4309, %v4309
        %v4342 = vpack.c.bf16 %v4310, %v4310
        %v4343 = vpack.c.bf16 %v4311, %v4311
        %v4344 = vpack.c.bf16 %v4312, %v4312
        %v4345 = vpack.c.bf16 %v4313, %v4313
        %v4346 = vpack.c.bf16 %v4314, %v4314
        %v4347 = vpack.c.bf16 %v4315, %v4315
        %v4348 = vpack.c.bf16 %v4316, %v4316
        %4349 = vst.msk [vmem:[#allocation3 + $0x10] sm:$0xf] %vm378, %v4317
        %4350 = vst.msk [vmem:[#allocation3 + $0x24] sm:$0xf] %vm378, %v4318
        %4351 = vst.msk [vmem:[#allocation3 + $0x38] sm:$0xf] %vm378, %v4319
        %4352 = vst.msk [vmem:[#allocation3 + $0x4c] sm:$0xf] %vm378, %v4320
        %4353 = vst.msk [vmem:[#allocation3 + $0x60] sm:$0xf] %vm378, %v4321
        %4354 = vst.msk [vmem:[#allocation3 + $0x74] sm:$0xf] %vm378, %v4322
        %4355 = vst.msk [vmem:[#allocation3 + $0x88] sm:$0xf] %vm378, %v4323
        %4356 = vst.msk [vmem:[#allocation3 + $0x9c] sm:$0xf] %vm378, %v4324
        %4357 = vst.msk [vmem:[#allocation3 + $0xb0] sm:$0xf] %vm378, %v4325
        %4358 = vst.msk [vmem:[#allocation3 + $0xc4] sm:$0xf] %vm378, %v4326
        %4359 = vst.msk [vmem:[#allocation3 + $0xd8] sm:$0xf] %vm378, %v4327
        %4360 = vst.msk [vmem:[#allocation3 + $0xec] sm:$0xf] %vm378, %v4328
        %4361 = vst.msk [vmem:[#allocation3 + $0x100] sm:$0xf] %vm378, %v4329
        %4362 = vst.msk [vmem:[#allocation3 + $0x114] sm:$0xf] %vm378, %v4330
        %4363 = vst.msk [vmem:[#allocation3 + $0x128] sm:$0xf] %vm378, %v4331
        %4364 = vst.msk [vmem:[#allocation3 + $0x13c] sm:$0xf] %vm378, %v4332
        %4365 = vst.msk [vmem:[#allocation3 + $0x150] sm:$0xf] %vm378, %v4333
        %4366 = vst.msk [vmem:[#allocation3 + $0x164] sm:$0xf] %vm378, %v4334
        %4367 = vst.msk [vmem:[#allocation3 + $0x178] sm:$0xf] %vm378, %v4335
        %4368 = vst.msk [vmem:[#allocation3 + $0x18c] sm:$0xf] %vm378, %v4336
        %4369 = vst.msk [vmem:[#allocation3 + $0x1a0] sm:$0xf] %vm378, %v4337
        %4370 = vst.msk [vmem:[#allocation3 + $0x1b4] sm:$0xf] %vm378, %v4338
        %4371 = vst.msk [vmem:[#allocation3 + $0x1c8] sm:$0xf] %vm378, %v4339
        %4372 = vst.msk [vmem:[#allocation3 + $0x1dc] sm:$0xf] %vm378, %v4340
        %4373 = vst.msk [vmem:[#allocation3 + $0x1f0] sm:$0xf] %vm378, %v4341
        %4374 = vst.msk [vmem:[#allocation3 + $0x204] sm:$0xf] %vm378, %v4342
        %4375 = vst.msk [vmem:[#allocation3 + $0x218] sm:$0xf] %vm378, %v4343
        %4376 = vst.msk [vmem:[#allocation3 + $0x22c] sm:$0xf] %vm378, %v4344
        %4377 = vst.msk [vmem:[#allocation3 + $0x240] sm:$0xf] %vm378, %v4345
        %4378 = vst.msk [vmem:[#allocation3 + $0x254] sm:$0xf] %vm378, %v4346
        %4379 = vst.msk [vmem:[#allocation3 + $0x268] sm:$0xf] %vm378, %v4347
        %4380 = vst.msk [vmem:[#allocation3 + $0x27c] sm:$0xf] %vm378, %v4348
        %v4381 = vld [vmem:[#allocation3] sm:$0xff]
        %v4382 = vld [vmem:[#allocation3 + $0x8] sm:$0xff]
        %v4383 = vld [vmem:[#allocation3 + $0x10] sm:$0xf]
        %v4384 = vld [vmem:[#allocation3 + $0x14] sm:$0xff]
        %v4385 = vld [vmem:[#allocation3 + $0x1c] sm:$0xff]
        %v4386 = vld [vmem:[#allocation3 + $0x24] sm:$0xf]
        %v4387 = vld [vmem:[#allocation3 + $0x28] sm:$0xff]
        %v4388 = vld [vmem:[#allocation3 + $0x30] sm:$0xff]
        %v4389 = vld [vmem:[#allocation3 + $0x38] sm:$0xf]
        %v4390 = vld [vmem:[#allocation3 + $0x3c] sm:$0xff]
        %v4391 = vld [vmem:[#allocation3 + $0x44] sm:$0xff]
        %v4392 = vld [vmem:[#allocation3 + $0x4c] sm:$0xf]
        %v4393 = vld [vmem:[#allocation3 + $0x50] sm:$0xff]
        %v4394 = vld [vmem:[#allocation3 + $0x58] sm:$0xff]
        %v4395 = vld [vmem:[#allocation3 + $0x60] sm:$0xf]
        %v4396 = vld [vmem:[#allocation3 + $0x64] sm:$0xff]
        %v4397 = vld [vmem:[#allocation3 + $0x6c] sm:$0xff]
        %v4398 = vld [vmem:[#allocation3 + $0x74] sm:$0xf]
        %v4399 = vld [vmem:[#allocation3 + $0x78] sm:$0xff]
        %v4400 = vld [vmem:[#allocation3 + $0x80] sm:$0xff]
        %v4401 = vld [vmem:[#allocation3 + $0x88] sm:$0xf]
        %v4402 = vld [vmem:[#allocation3 + $0x8c] sm:$0xff]
        %v4403 = vld [vmem:[#allocation3 + $0x94] sm:$0xff]
        %v4404 = vld [vmem:[#allocation3 + $0x9c] sm:$0xf]
        %v4405 = vld [vmem:[#allocation3 + $0xa0] sm:$0xff]
        %v4406 = vld [vmem:[#allocation3 + $0xa8] sm:$0xff]
        %v4407 = vld [vmem:[#allocation3 + $0xb0] sm:$0xf]
        %v4408 = vld [vmem:[#allocation3 + $0xb4] sm:$0xff]
        %v4409 = vld [vmem:[#allocation3 + $0xbc] sm:$0xff]
        %v4410 = vld [vmem:[#allocation3 + $0xc4] sm:$0xf]
        %v4411 = vld [vmem:[#allocation3 + $0xc8] sm:$0xff]
        %v4412 = vld [vmem:[#allocation3 + $0xd0] sm:$0xff]
        %v4413 = vld [vmem:[#allocation3 + $0xd8] sm:$0xf]
        %v4414 = vld [vmem:[#allocation3 + $0xdc] sm:$0xff]
        %v4415 = vld [vmem:[#allocation3 + $0xe4] sm:$0xff]
        %v4416 = vld [vmem:[#allocation3 + $0xec] sm:$0xf]
        %v4417 = vld [vmem:[#allocation3 + $0xf0] sm:$0xff]
        %v4418 = vld [vmem:[#allocation3 + $0xf8] sm:$0xff]
        %v4419 = vld [vmem:[#allocation3 + $0x100] sm:$0xf]
        %v4420 = vld [vmem:[#allocation3 + $0x104] sm:$0xff]
        %v4421 = vld [vmem:[#allocation3 + $0x10c] sm:$0xff]
        %v4422 = vld [vmem:[#allocation3 + $0x114] sm:$0xf]
        %v4423 = vld [vmem:[#allocation3 + $0x118] sm:$0xff]
        %v4424 = vld [vmem:[#allocation3 + $0x120] sm:$0xff]
        %v4425 = vld [vmem:[#allocation3 + $0x128] sm:$0xf]
        %v4426 = vld [vmem:[#allocation3 + $0x12c] sm:$0xff]
        %v4427 = vld [vmem:[#allocation3 + $0x134] sm:$0xff]
        %v4428 = vld [vmem:[#allocation3 + $0x13c] sm:$0xf]
        %v4429 = vld [vmem:[#allocation3 + $0x140] sm:$0xff]
        %v4430 = vld [vmem:[#allocation3 + $0x148] sm:$0xff]
        %v4431 = vld [vmem:[#allocation3 + $0x150] sm:$0xf]
        %v4432 = vld [vmem:[#allocation3 + $0x154] sm:$0xff]
        %v4433 = vld [vmem:[#allocation3 + $0x15c] sm:$0xff]
        %v4434 = vld [vmem:[#allocation3 + $0x164] sm:$0xf]
        %v4435 = vld [vmem:[#allocation3 + $0x168] sm:$0xff]
        %v4436 = vld [vmem:[#allocation3 + $0x170] sm:$0xff]
        %v4437 = vld [vmem:[#allocation3 + $0x178] sm:$0xf]
        %v4438 = vld [vmem:[#allocation3 + $0x17c] sm:$0xff]
        %v4439 = vld [vmem:[#allocation3 + $0x184] sm:$0xff]
        %v4440 = vld [vmem:[#allocation3 + $0x18c] sm:$0xf]
        %v4441 = vld [vmem:[#allocation3 + $0x190] sm:$0xff]
        %v4442 = vld [vmem:[#allocation3 + $0x198] sm:$0xff]
        %v4443 = vld [vmem:[#allocation3 + $0x1a0] sm:$0xf]
        %v4444 = vld [vmem:[#allocation3 + $0x1a4] sm:$0xff]
        %v4445 = vld [vmem:[#allocation3 + $0x1ac] sm:$0xff]
        %v4446 = vld [vmem:[#allocation3 + $0x1b4] sm:$0xf]
        %v4447 = vld [vmem:[#allocation3 + $0x1b8] sm:$0xff]
        %v4448 = vld [vmem:[#allocation3 + $0x1c0] sm:$0xff]
        %v4449 = vld [vmem:[#allocation3 + $0x1c8] sm:$0xf]
        %v4450 = vld [vmem:[#allocation3 + $0x1cc] sm:$0xff]
        %v4451 = vld [vmem:[#allocation3 + $0x1d4] sm:$0xff]
        %v4452 = vld [vmem:[#allocation3 + $0x1dc] sm:$0xf]
        %v4453 = vld [vmem:[#allocation3 + $0x1e0] sm:$0xff]
        %v4454 = vld [vmem:[#allocation3 + $0x1e8] sm:$0xff]
        %v4455 = vld [vmem:[#allocation3 + $0x1f0] sm:$0xf]
        %v4456 = vld [vmem:[#allocation3 + $0x1f4] sm:$0xff]
        %v4457 = vld [vmem:[#allocation3 + $0x1fc] sm:$0xff]
        %v4458 = vld [vmem:[#allocation3 + $0x204] sm:$0xf]
        %v4459 = vld [vmem:[#allocation3 + $0x208] sm:$0xff]
        %v4460 = vld [vmem:[#allocation3 + $0x210] sm:$0xff]
        %v4461 = vld [vmem:[#allocation3 + $0x218] sm:$0xf]
        %v4462 = vld [vmem:[#allocation3 + $0x21c] sm:$0xff]
        %v4463 = vld [vmem:[#allocation3 + $0x224] sm:$0xff]
        %v4464 = vld [vmem:[#allocation3 + $0x22c] sm:$0xf]
        %v4465 = vld [vmem:[#allocation3 + $0x230] sm:$0xff]
        %v4466 = vld [vmem:[#allocation3 + $0x238] sm:$0xff]
        %v4467 = vld [vmem:[#allocation3 + $0x240] sm:$0xf]
        %v4468 = vld [vmem:[#allocation3 + $0x244] sm:$0xff]
        %v4469 = vld [vmem:[#allocation3 + $0x24c] sm:$0xff]
        %v4470 = vld [vmem:[#allocation3 + $0x254] sm:$0xf]
        %v4471 = vld [vmem:[#allocation3 + $0x258] sm:$0xff]
        %v4472 = vld [vmem:[#allocation3 + $0x260] sm:$0xff]
        %v4473 = vld [vmem:[#allocation3 + $0x268] sm:$0xf]
        %v4474 = vld [vmem:[#allocation3 + $0x26c] sm:$0xff]
        %v4475 = vld [vmem:[#allocation3 + $0x274] sm:$0xff]
        %v4476 = vld [vmem:[#allocation3 + $0x27c] sm:$0xf]
        %v4477 = vld [vmem:[%s1] sm:$0xf]
        %v4478 = vld [vmem:[%s1 + $0x4] sm:$0xf]
        %v4479 = vld [vmem:[%s1 + $0x8] sm:$0xf]
        %v4480 = vld [vmem:[%s1 + $0xc] sm:$0xf]
        %v4481 = vld [vmem:[%s1 + $0x10] sm:$0xf]
        %v4482 = vld [vmem:[%s1 + $0x14] sm:$0xf]
        %v4483 = vld [vmem:[%s1 + $0x18] sm:$0xf]
        %v4484 = vld [vmem:[%s1 + $0x1c] sm:$0xf]
        %v4485 = vld [vmem:[%s1 + $0x20] sm:$0xf]
        %v4486 = vld [vmem:[%s1 + $0x24] sm:$0xf]
        %v4487 = vld [vmem:[%s1 + $0x28] sm:$0xf]
        %v4488 = vld [vmem:[%s1 + $0x2c] sm:$0xf]
        %v4489 = vld [vmem:[%s1 + $0x30] sm:$0xf]
        %v4490 = vld [vmem:[%s1 + $0x34] sm:$0xf]
        %v4491 = vld [vmem:[%s1 + $0x38] sm:$0xf]
        %v4492 = vld [vmem:[%s1 + $0x3c] sm:$0xf]
        %v4493 = vld [vmem:[%s1 + $0x40] sm:$0xf]
        %v4494 = vld [vmem:[%s1 + $0x44] sm:$0xf]
        %v4495 = vld [vmem:[%s1 + $0x48] sm:$0xf]
        %v4496 = vld [vmem:[%s1 + $0x4c] sm:$0xf]
        %v4497 = vld [vmem:[%s1 + $0x50] sm:$0xf]
        %v4498 = vld [vmem:[%s1 + $0x54] sm:$0xf]
        %v4499 = vld [vmem:[%s1 + $0x58] sm:$0xf]
        %v4500 = vld [vmem:[%s1 + $0x5c] sm:$0xf]
        %v4501 = vld [vmem:[%s1 + $0x60] sm:$0xf]
        %v4502 = vld [vmem:[%s1 + $0x64] sm:$0xf]
        %v4503 = vld [vmem:[%s1 + $0x68] sm:$0xf]
        %v4504 = vld [vmem:[%s1 + $0x6c] sm:$0xf]
        %v4505 = vld [vmem:[%s1 + $0x70] sm:$0xf]
        %v4506 = vld [vmem:[%s1 + $0x74] sm:$0xf]
        %v4507 = vld [vmem:[%s1 + $0x78] sm:$0xf]
        %v4508 = vld [vmem:[%s1 + $0x7c] sm:$0xf]
        %v4509 = vld [vmem:[%s1 + $0x80] sm:$0xf]
        %v4510 = vld [vmem:[%s1 + $0x84] sm:$0xf]
        %v4511 = vld [vmem:[%s1 + $0x88] sm:$0xf]
        %v4512 = vld [vmem:[%s1 + $0x8c] sm:$0xf]
        %v4513 = vld [vmem:[%s1 + $0x90] sm:$0xf]
        %v4514 = vld [vmem:[%s1 + $0x94] sm:$0xf]
        %v4515 = vld [vmem:[%s1 + $0x98] sm:$0xf]
        %v4516 = vld [vmem:[%s1 + $0x9c] sm:$0xf]
        %v4517 = vld [vmem:[%s1 + $0xa0] sm:$0xf]
        %v4518 = vld [vmem:[%s1 + $0xa4] sm:$0xf]
        %v4519 = vld [vmem:[%s1 + $0xa8] sm:$0xf]
        %v4520 = vld [vmem:[%s1 + $0xac] sm:$0xf]
        %v4521 = vld [vmem:[%s1 + $0xb0] sm:$0xf]
        %v4522 = vld [vmem:[%s1 + $0xb4] sm:$0xf]
        %v4523 = vld [vmem:[%s1 + $0xb8] sm:$0xf]
        %v4524 = vld [vmem:[%s1 + $0xbc] sm:$0xf]
        %v4525 = vld [vmem:[%s1 + $0xc0] sm:$0xf]
        %v4526 = vld [vmem:[%s1 + $0xc4] sm:$0xf]
        %v4527 = vld [vmem:[%s1 + $0xc8] sm:$0xf]
        %v4528 = vld [vmem:[%s1 + $0xcc] sm:$0xf]
        %v4529 = vld [vmem:[%s1 + $0xd0] sm:$0xf]
        %v4530 = vld [vmem:[%s1 + $0xd4] sm:$0xf]
        %v4531 = vld [vmem:[%s1 + $0xd8] sm:$0xf]
        %v4532 = vld [vmem:[%s1 + $0xdc] sm:$0xf]
        %v4533 = vld [vmem:[%s1 + $0xe0] sm:$0xf]
        %v4534 = vld [vmem:[%s1 + $0xe4] sm:$0xf]
        %v4535 = vld [vmem:[%s1 + $0xe8] sm:$0xf]
        %v4536 = vld [vmem:[%s1 + $0xec] sm:$0xf]
        %v4537 = vld [vmem:[%s1 + $0xf0] sm:$0xf]
        %v4538 = vld [vmem:[%s1 + $0xf4] sm:$0xf]
        %v4539 = vld [vmem:[%s1 + $0xf8] sm:$0xf]
        %v4540 = vld [vmem:[%s1 + $0xfc] sm:$0xf]
        %v4541 = vld [vmem:[%s1 + $0x100] sm:$0xf]
        %v4542 = vld [vmem:[%s1 + $0x104] sm:$0xf]
        %v4543 = vld [vmem:[%s1 + $0x108] sm:$0xf]
        %v4544 = vld [vmem:[%s1 + $0x10c] sm:$0xf]
        %v4545 = vld [vmem:[%s1 + $0x110] sm:$0xf]
        %v4546 = vld [vmem:[%s1 + $0x114] sm:$0xf]
        %v4547 = vld [vmem:[%s1 + $0x118] sm:$0xf]
        %v4548 = vld [vmem:[%s1 + $0x11c] sm:$0xf]
        %v4645 = vunpack.c.l.b16 %v4381
        %v4646 = vunpack.c.h.b16 %v4381
        %v4647 = vunpack.c.l.b16 %v4382
        %v4648 = vunpack.c.h.b16 %v4382
        %v4649 = vunpack.c.l.b16 %v4383
        %v4650 = vunpack.c.l.b16 %v4384
        %v4651 = vunpack.c.h.b16 %v4384
        %v4652 = vunpack.c.l.b16 %v4385
        %v4653 = vunpack.c.h.b16 %v4385
        %v4654 = vunpack.c.l.b16 %v4386
        %v4655 = vunpack.c.l.b16 %v4387
        %v4656 = vunpack.c.h.b16 %v4387
        %v4657 = vunpack.c.l.b16 %v4388
        %v4658 = vunpack.c.h.b16 %v4388
        %v4659 = vunpack.c.l.b16 %v4389
        %v4660 = vunpack.c.l.b16 %v4390
        %v4661 = vunpack.c.h.b16 %v4390
        %v4662 = vunpack.c.l.b16 %v4391
        %v4663 = vunpack.c.h.b16 %v4391
        %v4664 = vunpack.c.l.b16 %v4392
        %v4665 = vunpack.c.l.b16 %v4393
        %v4666 = vunpack.c.h.b16 %v4393
        %v4667 = vunpack.c.l.b16 %v4394
        %v4668 = vunpack.c.h.b16 %v4394
        %v4669 = vunpack.c.l.b16 %v4395
        %v4670 = vunpack.c.l.b16 %v4396
        %v4671 = vunpack.c.h.b16 %v4396
        %v4672 = vunpack.c.l.b16 %v4397
        %v4673 = vunpack.c.h.b16 %v4397
        %v4674 = vunpack.c.l.b16 %v4398
        %v4675 = vunpack.c.l.b16 %v4399
        %v4676 = vunpack.c.h.b16 %v4399
        %v4677 = vunpack.c.l.b16 %v4400
        %v4678 = vunpack.c.h.b16 %v4400
        %v4679 = vunpack.c.l.b16 %v4401
        %v4680 = vunpack.c.l.b16 %v4402
        %v4681 = vunpack.c.h.b16 %v4402
        %v4682 = vunpack.c.l.b16 %v4403
        %v4683 = vunpack.c.h.b16 %v4403
        %v4684 = vunpack.c.l.b16 %v4404
        %v4685 = vunpack.c.l.b16 %v4405
        %v4686 = vunpack.c.h.b16 %v4405
        %v4687 = vunpack.c.l.b16 %v4406
        %v4688 = vunpack.c.h.b16 %v4406
        %v4689 = vunpack.c.l.b16 %v4407
        %v4690 = vunpack.c.l.b16 %v4408
        %v4691 = vunpack.c.h.b16 %v4408
        %v4692 = vunpack.c.l.b16 %v4409
        %v4693 = vunpack.c.h.b16 %v4409
        %v4694 = vunpack.c.l.b16 %v4410
        %v4695 = vunpack.c.l.b16 %v4411
        %v4696 = vunpack.c.h.b16 %v4411
        %v4697 = vunpack.c.l.b16 %v4412
        %v4698 = vunpack.c.h.b16 %v4412
        %v4699 = vunpack.c.l.b16 %v4413
        %v4700 = vunpack.c.l.b16 %v4414
        %v4701 = vunpack.c.h.b16 %v4414
        %v4702 = vunpack.c.l.b16 %v4415
        %v4703 = vunpack.c.h.b16 %v4415
        %v4704 = vunpack.c.l.b16 %v4416
        %v4705 = vunpack.c.l.b16 %v4417
        %v4706 = vunpack.c.h.b16 %v4417
        %v4707 = vunpack.c.l.b16 %v4418
        %v4708 = vunpack.c.h.b16 %v4418
        %v4709 = vunpack.c.l.b16 %v4419
        %v4710 = vunpack.c.l.b16 %v4420
        %v4711 = vunpack.c.h.b16 %v4420
        %v4712 = vunpack.c.l.b16 %v4421
        %v4713 = vunpack.c.h.b16 %v4421
        %v4714 = vunpack.c.l.b16 %v4422
        %v4715 = vunpack.c.l.b16 %v4423
        %v4716 = vunpack.c.h.b16 %v4423
        %v4717 = vunpack.c.l.b16 %v4424
        %v4718 = vunpack.c.h.b16 %v4424
        %v4719 = vunpack.c.l.b16 %v4425
        %v4720 = vunpack.c.l.b16 %v4426
        %v4721 = vunpack.c.h.b16 %v4426
        %v4722 = vunpack.c.l.b16 %v4427
        %v4723 = vunpack.c.h.b16 %v4427
        %v4724 = vunpack.c.l.b16 %v4428
        %v4725 = vunpack.c.l.b16 %v4429
        %v4726 = vunpack.c.h.b16 %v4429
        %v4727 = vunpack.c.l.b16 %v4430
        %v4728 = vunpack.c.h.b16 %v4430
        %v4729 = vunpack.c.l.b16 %v4431
        %v4730 = vunpack.c.l.b16 %v4432
        %v4731 = vunpack.c.h.b16 %v4432
        %v4732 = vunpack.c.l.b16 %v4433
        %v4733 = vunpack.c.h.b16 %v4433
        %v4734 = vunpack.c.l.b16 %v4434
        %v4735 = vunpack.c.l.b16 %v4435
        %v4736 = vunpack.c.h.b16 %v4435
        %v4737 = vunpack.c.l.b16 %v4436
        %v4738 = vunpack.c.h.b16 %v4436
        %v4739 = vunpack.c.l.b16 %v4437
        %v4740 = vunpack.c.l.b16 %v4438
        %v4741 = vunpack.c.h.b16 %v4438
        %v4742 = vunpack.c.l.b16 %v4439
        %v4743 = vunpack.c.h.b16 %v4439
        %v4744 = vunpack.c.l.b16 %v4440
        %v4745 = vunpack.c.l.b16 %v4441
        %v4746 = vunpack.c.h.b16 %v4441
        %v4747 = vunpack.c.l.b16 %v4442
        %v4748 = vunpack.c.h.b16 %v4442
        %v4749 = vunpack.c.l.b16 %v4443
        %v4750 = vunpack.c.l.b16 %v4444
        %v4751 = vunpack.c.h.b16 %v4444
        %v4752 = vunpack.c.l.b16 %v4445
        %v4753 = vunpack.c.h.b16 %v4445
        %v4754 = vunpack.c.l.b16 %v4446
        %v4755 = vunpack.c.l.b16 %v4447
        %v4756 = vunpack.c.h.b16 %v4447
        %v4757 = vunpack.c.l.b16 %v4448
        %v4758 = vunpack.c.h.b16 %v4448
        %v4759 = vunpack.c.l.b16 %v4449
        %v4760 = vunpack.c.l.b16 %v4450
        %v4761 = vunpack.c.h.b16 %v4450
        %v4762 = vunpack.c.l.b16 %v4451
        %v4763 = vunpack.c.h.b16 %v4451
        %v4764 = vunpack.c.l.b16 %v4452
        %v4765 = vunpack.c.l.b16 %v4453
        %v4766 = vunpack.c.h.b16 %v4453
        %v4767 = vunpack.c.l.b16 %v4454
        %v4768 = vunpack.c.h.b16 %v4454
        %v4769 = vunpack.c.l.b16 %v4455
        %v4770 = vunpack.c.l.b16 %v4456
        %v4771 = vunpack.c.h.b16 %v4456
        %v4772 = vunpack.c.l.b16 %v4457
        %v4773 = vunpack.c.h.b16 %v4457
        %v4774 = vunpack.c.l.b16 %v4458
        %v4775 = vunpack.c.l.b16 %v4459
        %v4776 = vunpack.c.h.b16 %v4459
        %v4777 = vunpack.c.l.b16 %v4460
        %v4778 = vunpack.c.h.b16 %v4460
        %v4779 = vunpack.c.l.b16 %v4461
        %v4780 = vunpack.c.l.b16 %v4462
        %v4781 = vunpack.c.h.b16 %v4462
        %v4782 = vunpack.c.l.b16 %v4463
        %v4783 = vunpack.c.h.b16 %v4463
        %v4784 = vunpack.c.l.b16 %v4464
        %v4785 = vunpack.c.l.b16 %v4465
        %v4786 = vunpack.c.h.b16 %v4465
        %v4787 = vunpack.c.l.b16 %v4466
        %v4788 = vunpack.c.h.b16 %v4466
        %v4789 = vunpack.c.l.b16 %v4467
        %v4790 = vunpack.c.l.b16 %v4468
        %v4791 = vunpack.c.h.b16 %v4468
        %v4792 = vunpack.c.l.b16 %v4469
        %v4793 = vunpack.c.h.b16 %v4469
        %v4794 = vunpack.c.l.b16 %v4470
        %v4795 = vunpack.c.l.b16 %v4471
        %v4796 = vunpack.c.h.b16 %v4471
        %v4797 = vunpack.c.l.b16 %v4472
        %v4798 = vunpack.c.h.b16 %v4472
        %v4799 = vunpack.c.l.b16 %v4473
        %v4800 = vunpack.c.l.b16 %v4474
        %v4801 = vunpack.c.h.b16 %v4474
        %v4802 = vunpack.c.l.b16 %v4475
        %v4803 = vunpack.c.h.b16 %v4475
        %v4804 = vunpack.c.l.b16 %v4476
        %v4805 = vpack.c.b16 %v4650, %v4645
        %v4806 = vpack.c.b16 %v4651, %v4646
        %v4807 = vpack.c.b16 %v4652, %v4647
        %v4808 = vpack.c.b16 %v4653, %v4648
        %v4809 = vpack.c.b16 %v4654, %v4649
        %v4810 = vpack.c.b16 %v4660, %v4655
        %v4811 = vpack.c.b16 %v4661, %v4656
        %v4812 = vpack.c.b16 %v4662, %v4657
        %v4813 = vpack.c.b16 %v4663, %v4658
        %v4814 = vpack.c.b16 %v4664, %v4659
        %v4815 = vpack.c.b16 %v4670, %v4665
        %v4816 = vpack.c.b16 %v4671, %v4666
        %v4817 = vpack.c.b16 %v4672, %v4667
        %v4818 = vpack.c.b16 %v4673, %v4668
        %v4819 = vpack.c.b16 %v4674, %v4669
        %v4820 = vpack.c.b16 %v4680, %v4675
        %v4821 = vpack.c.b16 %v4681, %v4676
        %v4822 = vpack.c.b16 %v4682, %v4677
        %v4823 = vpack.c.b16 %v4683, %v4678
        %v4824 = vpack.c.b16 %v4684, %v4679
        %v4825 = vpack.c.b16 %v4690, %v4685
        %v4826 = vpack.c.b16 %v4691, %v4686
        %v4827 = vpack.c.b16 %v4692, %v4687
        %v4828 = vpack.c.b16 %v4693, %v4688
        %v4829 = vpack.c.b16 %v4694, %v4689
        %v4830 = vpack.c.b16 %v4700, %v4695
        %v4831 = vpack.c.b16 %v4701, %v4696
        %v4832 = vpack.c.b16 %v4702, %v4697
        %v4833 = vpack.c.b16 %v4703, %v4698
        %v4834 = vpack.c.b16 %v4704, %v4699
        %v4835 = vpack.c.b16 %v4710, %v4705
        %v4836 = vpack.c.b16 %v4711, %v4706
        %v4837 = vpack.c.b16 %v4712, %v4707
        %v4838 = vpack.c.b16 %v4713, %v4708
        %v4839 = vpack.c.b16 %v4714, %v4709
        %v4840 = vpack.c.b16 %v4720, %v4715
        %v4841 = vpack.c.b16 %v4721, %v4716
        %v4842 = vpack.c.b16 %v4722, %v4717
        %v4843 = vpack.c.b16 %v4723, %v4718
        %v4844 = vpack.c.b16 %v4724, %v4719
        %v4845 = vpack.c.b16 %v4730, %v4725
        %v4846 = vpack.c.b16 %v4731, %v4726
        %v4847 = vpack.c.b16 %v4732, %v4727
        %v4848 = vpack.c.b16 %v4733, %v4728
        %v4849 = vpack.c.b16 %v4734, %v4729
        %v4850 = vpack.c.b16 %v4740, %v4735
        %v4851 = vpack.c.b16 %v4741, %v4736
        %v4852 = vpack.c.b16 %v4742, %v4737
        %v4853 = vpack.c.b16 %v4743, %v4738
        %v4854 = vpack.c.b16 %v4744, %v4739
        %v4855 = vpack.c.b16 %v4750, %v4745
        %v4856 = vpack.c.b16 %v4751, %v4746
        %v4857 = vpack.c.b16 %v4752, %v4747
        %v4858 = vpack.c.b16 %v4753, %v4748
        %v4859 = vpack.c.b16 %v4754, %v4749
        %v4860 = vpack.c.b16 %v4760, %v4755
        %v4861 = vpack.c.b16 %v4761, %v4756
        %v4862 = vpack.c.b16 %v4762, %v4757
        %v4863 = vpack.c.b16 %v4763, %v4758
        %v4864 = vpack.c.b16 %v4764, %v4759
        %v4865 = vpack.c.b16 %v4770, %v4765
        %v4866 = vpack.c.b16 %v4771, %v4766
        %v4867 = vpack.c.b16 %v4772, %v4767
        %v4868 = vpack.c.b16 %v4773, %v4768
        %v4869 = vpack.c.b16 %v4774, %v4769
        %v4870 = vpack.c.b16 %v4780, %v4775
        %v4871 = vpack.c.b16 %v4781, %v4776
        %v4872 = vpack.c.b16 %v4782, %v4777
        %v4873 = vpack.c.b16 %v4783, %v4778
        %v4874 = vpack.c.b16 %v4784, %v4779
        %v4875 = vpack.c.b16 %v4790, %v4785
        %v4876 = vpack.c.b16 %v4791, %v4786
        %v4877 = vpack.c.b16 %v4792, %v4787
        %v4878 = vpack.c.b16 %v4793, %v4788
        %v4879 = vpack.c.b16 %v4794, %v4789
        %v4880 = vpack.c.b16 %v4800, %v4795
        %v4881 = vpack.c.b16 %v4801, %v4796
        %v4882 = vpack.c.b16 %v4802, %v4797
        %v4883 = vpack.c.b16 %v4803, %v4798
        %v4884 = vpack.c.b16 %v4804, %v4799
        %v5021 = vunpack.c.l.b16 %v4477
        %v5022 = vunpack.c.l.b16 %v4478
        %v5023 = vunpack.c.l.b16 %v4479
        %v5024 = vunpack.c.l.b16 %v4480
        %v5025 = vunpack.c.l.b16 %v4481
        %v5026 = vunpack.c.l.b16 %v4482
        %v5027 = vunpack.c.l.b16 %v4483
        %v5028 = vunpack.c.l.b16 %v4484
        %v5029 = vunpack.c.l.b16 %v4485
        %v5030 = vunpack.c.l.b16 %v4486
        %v5031 = vunpack.c.l.b16 %v4487
        %v5032 = vunpack.c.l.b16 %v4488
        %v5033 = vunpack.c.l.b16 %v4489
        %v5034 = vunpack.c.l.b16 %v4490
        %v5035 = vunpack.c.l.b16 %v4491
        %v5036 = vunpack.c.l.b16 %v4492
        %v5037 = vunpack.c.l.b16 %v4493
        %v5038 = vunpack.c.l.b16 %v4494
        %v5039 = vunpack.c.l.b16 %v4495
        %v5040 = vunpack.c.l.b16 %v4496
        %v5041 = vunpack.c.l.b16 %v4497
        %v5042 = vunpack.c.l.b16 %v4498
        %v5043 = vunpack.c.l.b16 %v4499
        %v5044 = vunpack.c.l.b16 %v4500
        %v5045 = vunpack.c.l.b16 %v4501
        %v5046 = vunpack.c.l.b16 %v4502
        %v5047 = vunpack.c.l.b16 %v4503
        %v5048 = vunpack.c.l.b16 %v4504
        %v5049 = vunpack.c.l.b16 %v4505
        %v5050 = vunpack.c.l.b16 %v4506
        %v5051 = vunpack.c.l.b16 %v4507
        %v5052 = vunpack.c.l.b16 %v4508
        %v5053 = vunpack.c.l.b16 %v4509
        %v5054 = vunpack.c.l.b16 %v4510
        %v5055 = vunpack.c.l.b16 %v4511
        %v5056 = vunpack.c.l.b16 %v4512
        %v5057 = vunpack.c.l.b16 %v4513
        %v5058 = vunpack.c.l.b16 %v4514
        %v5059 = vunpack.c.l.b16 %v4515
        %v5060 = vunpack.c.l.b16 %v4516
        %v5061 = vunpack.c.l.b16 %v4517
        %v5062 = vunpack.c.l.b16 %v4518
        %v5063 = vunpack.c.l.b16 %v4519
        %v5064 = vunpack.c.l.b16 %v4520
        %v5065 = vunpack.c.l.b16 %v4521
        %v5066 = vunpack.c.l.b16 %v4522
        %v5067 = vunpack.c.l.b16 %v4523
        %v5068 = vunpack.c.l.b16 %v4524
        %v5069 = vunpack.c.l.b16 %v4525
        %v5070 = vunpack.c.l.b16 %v4526
        %v5071 = vunpack.c.l.b16 %v4527
        %v5072 = vunpack.c.l.b16 %v4528
        %v5073 = vunpack.c.l.b16 %v4529
        %v5074 = vunpack.c.l.b16 %v4530
        %v5075 = vunpack.c.l.b16 %v4531
        %v5076 = vunpack.c.l.b16 %v4532
        %v5077 = vunpack.c.l.b16 %v4533
        %v5078 = vunpack.c.l.b16 %v4534
        %v5079 = vunpack.c.l.b16 %v4535
        %v5080 = vunpack.c.l.b16 %v4536
        %v5081 = vunpack.c.l.b16 %v4537
        %v5082 = vunpack.c.l.b16 %v4538
        %v5083 = vunpack.c.l.b16 %v4539
        %v5084 = vunpack.c.l.b16 %v4540
        %v5085 = vunpack.c.l.b16 %v4541
        %v5086 = vunpack.c.l.b16 %v4542
        %v5087 = vunpack.c.l.b16 %v4543
        %v5088 = vunpack.c.l.b16 %v4544
        %v5089 = vunpack.c.l.b16 %v4545
        %v5090 = vunpack.c.l.b16 %v4546
        %v5091 = vunpack.c.l.b16 %v4547
        %v5092 = vunpack.c.l.b16 %v4548
        %v5093 = vpack.c.b16 %v5022, %v5021
        %v5094 = vpack.c.b16 %v5024, %v5023
        %v5095 = vpack.c.b16 %v5026, %v5025
        %v5096 = vpack.c.b16 %v5028, %v5027
        %v5097 = vpack.c.b16 %v5030, %v5029
        %v5098 = vpack.c.b16 %v5032, %v5031
        %v5099 = vpack.c.b16 %v5034, %v5033
        %v5100 = vpack.c.b16 %v5036, %v5035
        %v5101 = vpack.c.b16 %v5038, %v5037
        %v5102 = vpack.c.b16 %v5040, %v5039
        %v5103 = vpack.c.b16 %v5042, %v5041
        %v5104 = vpack.c.b16 %v5044, %v5043
        %v5105 = vpack.c.b16 %v5046, %v5045
        %v5106 = vpack.c.b16 %v5048, %v5047
        %v5107 = vpack.c.b16 %v5050, %v5049
        %v5108 = vpack.c.b16 %v5052, %v5051
        %v5109 = vpack.c.b16 %v5054, %v5053
        %v5110 = vpack.c.b16 %v5056, %v5055
        %v5111 = vpack.c.b16 %v5058, %v5057
        %v5112 = vpack.c.b16 %v5060, %v5059
        %v5113 = vpack.c.b16 %v5062, %v5061
        %v5114 = vpack.c.b16 %v5064, %v5063
        %v5115 = vpack.c.b16 %v5066, %v5065
        %v5116 = vpack.c.b16 %v5068, %v5067
        %v5117 = vpack.c.b16 %v5070, %v5069
        %v5118 = vpack.c.b16 %v5072, %v5071
        %v5119 = vpack.c.b16 %v5074, %v5073
        %v5120 = vpack.c.b16 %v5076, %v5075
        %v5121 = vpack.c.b16 %v5078, %v5077
        %v5122 = vpack.c.b16 %v5080, %v5079
        %v5123 = vpack.c.b16 %v5082, %v5081
        %v5124 = vpack.c.b16 %v5084, %v5083
        %v5125 = vpack.c.b16 %v5086, %v5085
        %v5126 = vpack.c.b16 %v5088, %v5087
        %v5127 = vpack.c.b16 %v5090, %v5089
        %v5128 = vpack.c.b16 %v5092, %v5091
        %v5166 = vsel %vm193, %v4809, 0
        %v5169 = vsel %vm193, %v4814, 0
        %v5172 = vsel %vm193, %v4819, 0
        %v5175 = vsel %vm193, %v4824, 0
        %v5178 = vsel %vm193, %v4829, 0
        %v5181 = vsel %vm193, %v4834, 0
        %v5184 = vsel %vm193, %v4839, 0
        %v5187 = vsel %vm193, %v4844, 0
        %v5190 = vsel %vm193, %v4849, 0
        %v5193 = vsel %vm193, %v4854, 0
        %v5196 = vsel %vm193, %v4859, 0
        %v5199 = vsel %vm193, %v4864, 0
        %v5202 = vsel %vm193, %v4869, 0
        %v5205 = vsel %vm193, %v4874, 0
        %v5208 = vsel %vm193, %v4879, 0
        %v5211 = vsel %vm193, %v4884, 0
        %5213 = vmatpush.bf16.msra.mxu0 %v5100
        %5214 = vmatpush.bf16.msra.mxu0 %v5099
        %5215 = vmatpush.bf16.msra.mxu0 %v5098
        %5216 = vmatpush.bf16.msra.mxu0 %v5097
        %5217 = vmatpush.bf16.msra.mxu0 %v5096
        %5218 = vmatpush.bf16.msra.mxu0 %v5095
        %5219 = vmatpush.bf16.msra.mxu0 %v5094
        %5220 = vmatpush.bf16.msra.mxu0 %v5093
        %5221 = vmatmul.bf16.gmra.mxu0 %v4805
        %v5222 = vpop.f32.mrf.mxu0
        %v5223 = vadd.f32 %v1862, %v5222
        %v5224 = vpop.f32.mrf.mxu0
        %v5225 = vadd.f32 %v1862, %v5224
        %5226 = vmatmul.bf16.gmra.mxu0 %v4810
        %v5227 = vpop.f32.mrf.mxu0
        %v5228 = vadd.f32 %v1862, %v5227
        %v5229 = vpop.f32.mrf.mxu0
        %v5230 = vadd.f32 %v1862, %v5229
        %5231 = vmatmul.bf16.gmra.mxu0 %v4815
        %v5232 = vpop.f32.mrf.mxu0
        %v5233 = vadd.f32 %v1862, %v5232
        %v5234 = vpop.f32.mrf.mxu0
        %v5235 = vadd.f32 %v1862, %v5234
        %5236 = vmatmul.bf16.gmra.mxu0 %v4820
        %v5237 = vpop.f32.mrf.mxu0
        %v5238 = vadd.f32 %v1862, %v5237
        %v5239 = vpop.f32.mrf.mxu0
        %v5240 = vadd.f32 %v1862, %v5239
        %5241 = vmatmul.bf16.gmra.mxu0 %v4825
        %v5242 = vpop.f32.mrf.mxu0
        %v5243 = vadd.f32 %v1862, %v5242
        %v5244 = vpop.f32.mrf.mxu0
        %v5245 = vadd.f32 %v1862, %v5244
        %5246 = vmatmul.bf16.gmra.mxu0 %v4830
        %v5247 = vpop.f32.mrf.mxu0
        %v5248 = vadd.f32 %v1862, %v5247
        %v5249 = vpop.f32.mrf.mxu0
        %v5250 = vadd.f32 %v1862, %v5249
        %5251 = vmatmul.bf16.gmra.mxu0 %v4835
        %v5252 = vpop.f32.mrf.mxu0
        %v5253 = vadd.f32 %v1862, %v5252
        %v5254 = vpop.f32.mrf.mxu0
        %v5255 = vadd.f32 %v1862, %v5254
        %5256 = vmatmul.bf16.gmra.mxu0 %v4840
        %v5257 = vpop.f32.mrf.mxu0
        %v5258 = vadd.f32 %v1862, %v5257
        %v5259 = vpop.f32.mrf.mxu0
        %v5260 = vadd.f32 %v1862, %v5259
        %5261 = vmatmul.bf16.gmra.mxu0 %v4845
        %v5262 = vpop.f32.mrf.mxu0
        %v5263 = vadd.f32 %v1862, %v5262
        %v5264 = vpop.f32.mrf.mxu0
        %v5265 = vadd.f32 %v1862, %v5264
        %5266 = vmatmul.bf16.gmra.mxu0 %v4850
        %v5267 = vpop.f32.mrf.mxu0
        %v5268 = vadd.f32 %v1862, %v5267
        %v5269 = vpop.f32.mrf.mxu0
        %v5270 = vadd.f32 %v1862, %v5269
        %5271 = vmatmul.bf16.gmra.mxu0 %v4855
        %v5272 = vpop.f32.mrf.mxu0
        %v5273 = vadd.f32 %v1862, %v5272
        %v5274 = vpop.f32.mrf.mxu0
        %v5275 = vadd.f32 %v1862, %v5274
        %5276 = vmatmul.bf16.gmra.mxu0 %v4860
        %v5277 = vpop.f32.mrf.mxu0
        %v5278 = vadd.f32 %v1862, %v5277
        %v5279 = vpop.f32.mrf.mxu0
        %v5280 = vadd.f32 %v1862, %v5279
        %5281 = vmatmul.bf16.gmra.mxu0 %v4865
        %v5282 = vpop.f32.mrf.mxu0
        %v5283 = vadd.f32 %v1862, %v5282
        %v5284 = vpop.f32.mrf.mxu0
        %v5285 = vadd.f32 %v1862, %v5284
        %5286 = vmatmul.bf16.gmra.mxu0 %v4870
        %v5287 = vpop.f32.mrf.mxu0
        %v5288 = vadd.f32 %v1862, %v5287
        %v5289 = vpop.f32.mrf.mxu0
        %v5290 = vadd.f32 %v1862, %v5289
        %5291 = vmatmul.bf16.gmra.mxu0 %v4875
        %v5292 = vpop.f32.mrf.mxu0
        %v5293 = vadd.f32 %v1862, %v5292
        %v5294 = vpop.f32.mrf.mxu0
        %v5295 = vadd.f32 %v1862, %v5294
        %5296 = vmatmul.bf16.gmra.mxu0 %v4880
        %v5297 = vpop.f32.mrf.mxu0
        %v5298 = vadd.f32 %v1862, %v5297
        %v5299 = vpop.f32.mrf.mxu0
        %v5300 = vadd.f32 %v1862, %v5299
        %5301 = vdwg.mxu0
        %5302 = vmatpush.bf16.msra.mxu0 %v5108
        %5303 = vmatpush.bf16.msra.mxu0 %v5107
        %5304 = vmatpush.bf16.msra.mxu0 %v5106
        %5305 = vmatpush.bf16.msra.mxu0 %v5105
        %5306 = vmatpush.bf16.msra.mxu0 %v5104
        %5307 = vmatpush.bf16.msra.mxu0 %v5103
        %5308 = vmatpush.bf16.msra.mxu0 %v5102
        %5309 = vmatpush.bf16.msra.mxu0 %v5101
        %5310 = vmatmul.bf16.gmra.mxu0 %v4806
        %v5311 = vpop.f32.mrf.mxu0
        %v5312 = vadd.f32 %v5223, %v5311
        %v5313 = vpop.f32.mrf.mxu0
        %v5314 = vadd.f32 %v5225, %v5313
        %5315 = vmatmul.bf16.gmra.mxu0 %v4811
        %v5316 = vpop.f32.mrf.mxu0
        %v5317 = vadd.f32 %v5228, %v5316
        %v5318 = vpop.f32.mrf.mxu0
        %v5319 = vadd.f32 %v5230, %v5318
        %5320 = vmatmul.bf16.gmra.mxu0 %v4816
        %v5321 = vpop.f32.mrf.mxu0
        %v5322 = vadd.f32 %v5233, %v5321
        %v5323 = vpop.f32.mrf.mxu0
        %v5324 = vadd.f32 %v5235, %v5323
        %5325 = vmatmul.bf16.gmra.mxu0 %v4821
        %v5326 = vpop.f32.mrf.mxu0
        %v5327 = vadd.f32 %v5238, %v5326
        %v5328 = vpop.f32.mrf.mxu0
        %v5329 = vadd.f32 %v5240, %v5328
        %5330 = vmatmul.bf16.gmra.mxu0 %v4826
        %v5331 = vpop.f32.mrf.mxu0
        %v5332 = vadd.f32 %v5243, %v5331
        %v5333 = vpop.f32.mrf.mxu0
        %v5334 = vadd.f32 %v5245, %v5333
        %5335 = vmatmul.bf16.gmra.mxu0 %v4831
        %v5336 = vpop.f32.mrf.mxu0
        %v5337 = vadd.f32 %v5248, %v5336
        %v5338 = vpop.f32.mrf.mxu0
        %v5339 = vadd.f32 %v5250, %v5338
        %5340 = vmatmul.bf16.gmra.mxu0 %v4836
        %v5341 = vpop.f32.mrf.mxu0
        %v5342 = vadd.f32 %v5253, %v5341
        %v5343 = vpop.f32.mrf.mxu0
        %v5344 = vadd.f32 %v5255, %v5343
        %5345 = vmatmul.bf16.gmra.mxu0 %v4841
        %v5346 = vpop.f32.mrf.mxu0
        %v5347 = vadd.f32 %v5258, %v5346
        %v5348 = vpop.f32.mrf.mxu0
        %v5349 = vadd.f32 %v5260, %v5348
        %5350 = vmatmul.bf16.gmra.mxu0 %v4846
        %v5351 = vpop.f32.mrf.mxu0
        %v5352 = vadd.f32 %v5263, %v5351
        %v5353 = vpop.f32.mrf.mxu0
        %v5354 = vadd.f32 %v5265, %v5353
        %5355 = vmatmul.bf16.gmra.mxu0 %v4851
        %v5356 = vpop.f32.mrf.mxu0
        %v5357 = vadd.f32 %v5268, %v5356
        %v5358 = vpop.f32.mrf.mxu0
        %v5359 = vadd.f32 %v5270, %v5358
        %5360 = vmatmul.bf16.gmra.mxu0 %v4856
        %v5361 = vpop.f32.mrf.mxu0
        %v5362 = vadd.f32 %v5273, %v5361
        %v5363 = vpop.f32.mrf.mxu0
        %v5364 = vadd.f32 %v5275, %v5363
        %5365 = vmatmul.bf16.gmra.mxu0 %v4861
        %v5366 = vpop.f32.mrf.mxu0
        %v5367 = vadd.f32 %v5278, %v5366
        %v5368 = vpop.f32.mrf.mxu0
        %v5369 = vadd.f32 %v5280, %v5368
        %5370 = vmatmul.bf16.gmra.mxu0 %v4866
        %v5371 = vpop.f32.mrf.mxu0
        %v5372 = vadd.f32 %v5283, %v5371
        %v5373 = vpop.f32.mrf.mxu0
        %v5374 = vadd.f32 %v5285, %v5373
        %5375 = vmatmul.bf16.gmra.mxu0 %v4871
        %v5376 = vpop.f32.mrf.mxu0
        %v5377 = vadd.f32 %v5288, %v5376
        %v5378 = vpop.f32.mrf.mxu0
        %v5379 = vadd.f32 %v5290, %v5378
        %5380 = vmatmul.bf16.gmra.mxu0 %v4876
        %v5381 = vpop.f32.mrf.mxu0
        %v5382 = vadd.f32 %v5293, %v5381
        %v5383 = vpop.f32.mrf.mxu0
        %v5384 = vadd.f32 %v5295, %v5383
        %5385 = vmatmul.bf16.gmra.mxu0 %v4881
        %v5386 = vpop.f32.mrf.mxu0
        %v5387 = vadd.f32 %v5298, %v5386
        %v5388 = vpop.f32.mrf.mxu0
        %v5389 = vadd.f32 %v5300, %v5388
        %5390 = vdwg.mxu0
        %5391 = vmatpush.bf16.msra.mxu0 %v5116
        %5392 = vmatpush.bf16.msra.mxu0 %v5115
        %5393 = vmatpush.bf16.msra.mxu0 %v5114
        %5394 = vmatpush.bf16.msra.mxu0 %v5113
        %5395 = vmatpush.bf16.msra.mxu0 %v5112
        %5396 = vmatpush.bf16.msra.mxu0 %v5111
        %5397 = vmatpush.bf16.msra.mxu0 %v5110
        %5398 = vmatpush.bf16.msra.mxu0 %v5109
        %5399 = vmatmul.bf16.gmra.mxu0 %v4807
        %v5400 = vpop.f32.mrf.mxu0
        %v5401 = vadd.f32 %v5312, %v5400
        %v5402 = vpop.f32.mrf.mxu0
        %v5403 = vadd.f32 %v5314, %v5402
        %5404 = vmatmul.bf16.gmra.mxu0 %v4812
        %v5405 = vpop.f32.mrf.mxu0
        %v5406 = vadd.f32 %v5317, %v5405
        %v5407 = vpop.f32.mrf.mxu0
        %v5408 = vadd.f32 %v5319, %v5407
        %5409 = vmatmul.bf16.gmra.mxu0 %v4817
        %v5410 = vpop.f32.mrf.mxu0
        %v5411 = vadd.f32 %v5322, %v5410
        %v5412 = vpop.f32.mrf.mxu0
        %v5413 = vadd.f32 %v5324, %v5412
        %5414 = vmatmul.bf16.gmra.mxu0 %v4822
        %v5415 = vpop.f32.mrf.mxu0
        %v5416 = vadd.f32 %v5327, %v5415
        %v5417 = vpop.f32.mrf.mxu0
        %v5418 = vadd.f32 %v5329, %v5417
        %5419 = vmatmul.bf16.gmra.mxu0 %v4827
        %v5420 = vpop.f32.mrf.mxu0
        %v5421 = vadd.f32 %v5332, %v5420
        %v5422 = vpop.f32.mrf.mxu0
        %v5423 = vadd.f32 %v5334, %v5422
        %5424 = vmatmul.bf16.gmra.mxu0 %v4832
        %v5425 = vpop.f32.mrf.mxu0
        %v5426 = vadd.f32 %v5337, %v5425
        %v5427 = vpop.f32.mrf.mxu0
        %v5428 = vadd.f32 %v5339, %v5427
        %5429 = vmatmul.bf16.gmra.mxu0 %v4837
        %v5430 = vpop.f32.mrf.mxu0
        %v5431 = vadd.f32 %v5342, %v5430
        %v5432 = vpop.f32.mrf.mxu0
        %v5433 = vadd.f32 %v5344, %v5432
        %5434 = vmatmul.bf16.gmra.mxu0 %v4842
        %v5435 = vpop.f32.mrf.mxu0
        %v5436 = vadd.f32 %v5347, %v5435
        %v5437 = vpop.f32.mrf.mxu0
        %v5438 = vadd.f32 %v5349, %v5437
        %5439 = vmatmul.bf16.gmra.mxu0 %v4847
        %v5440 = vpop.f32.mrf.mxu0
        %v5441 = vadd.f32 %v5352, %v5440
        %v5442 = vpop.f32.mrf.mxu0
        %v5443 = vadd.f32 %v5354, %v5442
        %5444 = vmatmul.bf16.gmra.mxu0 %v4852
        %v5445 = vpop.f32.mrf.mxu0
        %v5446 = vadd.f32 %v5357, %v5445
        %v5447 = vpop.f32.mrf.mxu0
        %v5448 = vadd.f32 %v5359, %v5447
        %5449 = vmatmul.bf16.gmra.mxu0 %v4857
        %v5450 = vpop.f32.mrf.mxu0
        %v5451 = vadd.f32 %v5362, %v5450
        %v5452 = vpop.f32.mrf.mxu0
        %v5453 = vadd.f32 %v5364, %v5452
        %5454 = vmatmul.bf16.gmra.mxu0 %v4862
        %v5455 = vpop.f32.mrf.mxu0
        %v5456 = vadd.f32 %v5367, %v5455
        %v5457 = vpop.f32.mrf.mxu0
        %v5458 = vadd.f32 %v5369, %v5457
        %5459 = vmatmul.bf16.gmra.mxu0 %v4867
        %v5460 = vpop.f32.mrf.mxu0
        %v5461 = vadd.f32 %v5372, %v5460
        %v5462 = vpop.f32.mrf.mxu0
        %v5463 = vadd.f32 %v5374, %v5462
        %5464 = vmatmul.bf16.gmra.mxu0 %v4872
        %v5465 = vpop.f32.mrf.mxu0
        %v5466 = vadd.f32 %v5377, %v5465
        %v5467 = vpop.f32.mrf.mxu0
        %v5468 = vadd.f32 %v5379, %v5467
        %5469 = vmatmul.bf16.gmra.mxu0 %v4877
        %v5470 = vpop.f32.mrf.mxu0
        %v5471 = vadd.f32 %v5382, %v5470
        %v5472 = vpop.f32.mrf.mxu0
        %v5473 = vadd.f32 %v5384, %v5472
        %5474 = vmatmul.bf16.gmra.mxu0 %v4882
        %v5475 = vpop.f32.mrf.mxu0
        %v5476 = vadd.f32 %v5387, %v5475
        %v5477 = vpop.f32.mrf.mxu0
        %v5478 = vadd.f32 %v5389, %v5477
        %5479 = vdwg.mxu0
        %5480 = vmatpush.bf16.msra.mxu0 %v5124
        %5481 = vmatpush.bf16.msra.mxu0 %v5123
        %5482 = vmatpush.bf16.msra.mxu0 %v5122
        %5483 = vmatpush.bf16.msra.mxu0 %v5121
        %5484 = vmatpush.bf16.msra.mxu0 %v5120
        %5485 = vmatpush.bf16.msra.mxu0 %v5119
        %5486 = vmatpush.bf16.msra.mxu0 %v5118
        %5487 = vmatpush.bf16.msra.mxu0 %v5117
        %5488 = vmatmul.bf16.gmra.mxu0 %v4808
        %v5489 = vpop.f32.mrf.mxu0
        %v5490 = vadd.f32 %v5401, %v5489
        %v5491 = vpop.f32.mrf.mxu0
        %v5492 = vadd.f32 %v5403, %v5491
        %5493 = vmatmul.bf16.gmra.mxu0 %v4813
        %v5494 = vpop.f32.mrf.mxu0
        %v5495 = vadd.f32 %v5406, %v5494
        %v5496 = vpop.f32.mrf.mxu0
        %v5497 = vadd.f32 %v5408, %v5496
        %5498 = vmatmul.bf16.gmra.mxu0 %v4818
        %v5499 = vpop.f32.mrf.mxu0
        %v5500 = vadd.f32 %v5411, %v5499
        %v5501 = vpop.f32.mrf.mxu0
        %v5502 = vadd.f32 %v5413, %v5501
        %5503 = vmatmul.bf16.gmra.mxu0 %v4823
        %v5504 = vpop.f32.mrf.mxu0
        %v5505 = vadd.f32 %v5416, %v5504
        %v5506 = vpop.f32.mrf.mxu0
        %v5507 = vadd.f32 %v5418, %v5506
        %5508 = vmatmul.bf16.gmra.mxu0 %v4828
        %v5509 = vpop.f32.mrf.mxu0
        %v5510 = vadd.f32 %v5421, %v5509
        %v5511 = vpop.f32.mrf.mxu0
        %v5512 = vadd.f32 %v5423, %v5511
        %5513 = vmatmul.bf16.gmra.mxu0 %v4833
        %v5514 = vpop.f32.mrf.mxu0
        %v5515 = vadd.f32 %v5426, %v5514
        %v5516 = vpop.f32.mrf.mxu0
        %v5517 = vadd.f32 %v5428, %v5516
        %5518 = vmatmul.bf16.gmra.mxu0 %v4838
        %v5519 = vpop.f32.mrf.mxu0
        %v5520 = vadd.f32 %v5431, %v5519
        %v5521 = vpop.f32.mrf.mxu0
        %v5522 = vadd.f32 %v5433, %v5521
        %5523 = vmatmul.bf16.gmra.mxu0 %v4843
        %v5524 = vpop.f32.mrf.mxu0
        %v5525 = vadd.f32 %v5436, %v5524
        %v5526 = vpop.f32.mrf.mxu0
        %v5527 = vadd.f32 %v5438, %v5526
        %5528 = vmatmul.bf16.gmra.mxu0 %v4848
        %v5529 = vpop.f32.mrf.mxu0
        %v5530 = vadd.f32 %v5441, %v5529
        %v5531 = vpop.f32.mrf.mxu0
        %v5532 = vadd.f32 %v5443, %v5531
        %5533 = vmatmul.bf16.gmra.mxu0 %v4853
        %v5534 = vpop.f32.mrf.mxu0
        %v5535 = vadd.f32 %v5446, %v5534
        %v5536 = vpop.f32.mrf.mxu0
        %v5537 = vadd.f32 %v5448, %v5536
        %5538 = vmatmul.bf16.gmra.mxu0 %v4858
        %v5539 = vpop.f32.mrf.mxu0
        %v5540 = vadd.f32 %v5451, %v5539
        %v5541 = vpop.f32.mrf.mxu0
        %v5542 = vadd.f32 %v5453, %v5541
        %5543 = vmatmul.bf16.gmra.mxu0 %v4863
        %v5544 = vpop.f32.mrf.mxu0
        %v5545 = vadd.f32 %v5456, %v5544
        %v5546 = vpop.f32.mrf.mxu0
        %v5547 = vadd.f32 %v5458, %v5546
        %5548 = vmatmul.bf16.gmra.mxu0 %v4868
        %v5549 = vpop.f32.mrf.mxu0
        %v5550 = vadd.f32 %v5461, %v5549
        %v5551 = vpop.f32.mrf.mxu0
        %v5552 = vadd.f32 %v5463, %v5551
        %5553 = vmatmul.bf16.gmra.mxu0 %v4873
        %v5554 = vpop.f32.mrf.mxu0
        %v5555 = vadd.f32 %v5466, %v5554
        %v5556 = vpop.f32.mrf.mxu0
        %v5557 = vadd.f32 %v5468, %v5556
        %5558 = vmatmul.bf16.gmra.mxu0 %v4878
        %v5559 = vpop.f32.mrf.mxu0
        %v5560 = vadd.f32 %v5471, %v5559
        %v5561 = vpop.f32.mrf.mxu0
        %v5562 = vadd.f32 %v5473, %v5561
        %5563 = vmatmul.bf16.gmra.mxu0 %v4883
        %v5564 = vpop.f32.mrf.mxu0
        %v5565 = vadd.f32 %v5476, %v5564
        %v5566 = vpop.f32.mrf.mxu0
        %v5567 = vadd.f32 %v5478, %v5566
        %5568 = vdwg.mxu0
        %5569 = vmatpush.bf16.msra.mxu0 0
        %5570 = vmatpush.bf16.msra.mxu0 0
        %5571 = vmatpush.bf16.msra.mxu0 0
        %5572 = vmatpush.bf16.msra.mxu0 0
        %5573 = vmatpush.bf16.msra.mxu0 %v5128
        %5574 = vmatpush.bf16.msra.mxu0 %v5127
        %5575 = vmatpush.bf16.msra.mxu0 %v5126
        %5576 = vmatpush.bf16.msra.mxu0 %v5125
        %5577 = vmatmul.bf16.gmra.mxu0 %v5166
        %v5578 = vpop.f32.mrf.mxu0
        %v5579 = vadd.f32 %v5490, %v5578
        %v5580 = vpop.f32.mrf.mxu0
        %v5581 = vadd.f32 %v5492, %v5580
        %5582 = vmatmul.bf16.gmra.mxu0 %v5169
        %v5583 = vpop.f32.mrf.mxu0
        %v5584 = vadd.f32 %v5495, %v5583
        %v5585 = vpop.f32.mrf.mxu0
        %v5586 = vadd.f32 %v5497, %v5585
        %5587 = vmatmul.bf16.gmra.mxu0 %v5172
        %v5588 = vpop.f32.mrf.mxu0
        %v5589 = vadd.f32 %v5500, %v5588
        %v5590 = vpop.f32.mrf.mxu0
        %v5591 = vadd.f32 %v5502, %v5590
        %5592 = vmatmul.bf16.gmra.mxu0 %v5175
        %v5593 = vpop.f32.mrf.mxu0
        %v5594 = vadd.f32 %v5505, %v5593
        %v5595 = vpop.f32.mrf.mxu0
        %v5596 = vadd.f32 %v5507, %v5595
        %5597 = vmatmul.bf16.gmra.mxu0 %v5178
        %v5598 = vpop.f32.mrf.mxu0
        %v5599 = vadd.f32 %v5510, %v5598
        %v5600 = vpop.f32.mrf.mxu0
        %v5601 = vadd.f32 %v5512, %v5600
        %5602 = vmatmul.bf16.gmra.mxu0 %v5181
        %v5603 = vpop.f32.mrf.mxu0
        %v5604 = vadd.f32 %v5515, %v5603
        %v5605 = vpop.f32.mrf.mxu0
        %v5606 = vadd.f32 %v5517, %v5605
        %5607 = vmatmul.bf16.gmra.mxu0 %v5184
        %v5608 = vpop.f32.mrf.mxu0
        %v5609 = vadd.f32 %v5520, %v5608
        %v5610 = vpop.f32.mrf.mxu0
        %v5611 = vadd.f32 %v5522, %v5610
        %5612 = vmatmul.bf16.gmra.mxu0 %v5187
        %v5613 = vpop.f32.mrf.mxu0
        %v5614 = vadd.f32 %v5525, %v5613
        %v5615 = vpop.f32.mrf.mxu0
        %v5616 = vadd.f32 %v5527, %v5615
        %5617 = vmatmul.bf16.gmra.mxu0 %v5190
        %v5618 = vpop.f32.mrf.mxu0
        %v5619 = vadd.f32 %v5530, %v5618
        %v5620 = vpop.f32.mrf.mxu0
        %v5621 = vadd.f32 %v5532, %v5620
        %5622 = vmatmul.bf16.gmra.mxu0 %v5193
        %v5623 = vpop.f32.mrf.mxu0
        %v5624 = vadd.f32 %v5535, %v5623
        %v5625 = vpop.f32.mrf.mxu0
        %v5626 = vadd.f32 %v5537, %v5625
        %5627 = vmatmul.bf16.gmra.mxu0 %v5196
        %v5628 = vpop.f32.mrf.mxu0
        %v5629 = vadd.f32 %v5540, %v5628
        %v5630 = vpop.f32.mrf.mxu0
        %v5631 = vadd.f32 %v5542, %v5630
        %5632 = vmatmul.bf16.gmra.mxu0 %v5199
        %v5633 = vpop.f32.mrf.mxu0
        %v5634 = vadd.f32 %v5545, %v5633
        %v5635 = vpop.f32.mrf.mxu0
        %v5636 = vadd.f32 %v5547, %v5635
        %5637 = vmatmul.bf16.gmra.mxu0 %v5202
        %v5638 = vpop.f32.mrf.mxu0
        %v5639 = vadd.f32 %v5550, %v5638
        %v5640 = vpop.f32.mrf.mxu0
        %v5641 = vadd.f32 %v5552, %v5640
        %5642 = vmatmul.bf16.gmra.mxu0 %v5205
        %v5643 = vpop.f32.mrf.mxu0
        %v5644 = vadd.f32 %v5555, %v5643
        %v5645 = vpop.f32.mrf.mxu0
        %v5646 = vadd.f32 %v5557, %v5645
        %5647 = vmatmul.bf16.gmra.mxu0 %v5208
        %v5648 = vpop.f32.mrf.mxu0
        %v5649 = vadd.f32 %v5560, %v5648
        %v5650 = vpop.f32.mrf.mxu0
        %v5651 = vadd.f32 %v5562, %v5650
        %5652 = vmatmul.bf16.gmra.mxu0 %v5211
        %v5653 = vpop.f32.mrf.mxu0
        %v5654 = vadd.f32 %v5565, %v5653
        %v5655 = vpop.f32.mrf.mxu0
        %v5656 = vadd.f32 %v5567, %v5655
        %5657 = vdwg.mxu0
        %v5658 = vadd.f32 %v2894, %v5579
        %v5659 = vadd.f32 %v2896, %v5581
        %v5660 = vadd.f32 %v2899, %v5584
        %v5661 = vadd.f32 %v2901, %v5586
        %v5662 = vadd.f32 %v2904, %v5589
        %v5663 = vadd.f32 %v2906, %v5591
        %v5664 = vadd.f32 %v2909, %v5594
        %v5665 = vadd.f32 %v2911, %v5596
        %v5666 = vadd.f32 %v2914, %v5599
        %v5667 = vadd.f32 %v2916, %v5601
        %v5668 = vadd.f32 %v2919, %v5604
        %v5669 = vadd.f32 %v2921, %v5606
        %v5670 = vadd.f32 %v2924, %v5609
        %v5671 = vadd.f32 %v2926, %v5611
        %v5672 = vadd.f32 %v2929, %v5614
        %v5673 = vadd.f32 %v2931, %v5616
        %v5674 = vadd.f32 %v2934, %v5619
        %v5675 = vadd.f32 %v2936, %v5621
        %v5676 = vadd.f32 %v2939, %v5624
        %v5677 = vadd.f32 %v2941, %v5626
        %v5678 = vadd.f32 %v2944, %v5629
        %v5679 = vadd.f32 %v2946, %v5631
        %v5680 = vadd.f32 %v2949, %v5634
        %v5681 = vadd.f32 %v2951, %v5636
        %v5682 = vadd.f32 %v2954, %v5639
        %v5683 = vadd.f32 %v2956, %v5641
        %v5684 = vadd.f32 %v2959, %v5644
        %v5685 = vadd.f32 %v2961, %v5646
        %v5686 = vadd.f32 %v2964, %v5649
        %v5687 = vadd.f32 %v2966, %v5651
        %v5688 = vadd.f32 %v2969, %v5654
        %v5689 = vadd.f32 %v2971, %v5656
        %5690 = vst.msk [vmem:[%s281 + $0x1] sm:$0xff] %vm193, %v5579
        %5691 = vst.msk [vmem:[%s281 + $0x9] sm:$0xff] %vm193, %v5581
        %5692 = vst.msk [vmem:[%s281 + $0x19] sm:$0xff] %vm193, %v5584
        %5693 = vst.msk [vmem:[%s281 + $0x21] sm:$0xff] %vm193, %v5586
        %5694 = vst.msk [vmem:[%s281 + $0x31] sm:$0xff] %vm193, %v5589
        %5695 = vst.msk [vmem:[%s281 + $0x39] sm:$0xff] %vm193, %v5591
        %5696 = vst.msk [vmem:[%s281 + $0x49] sm:$0xff] %vm193, %v5594
        %5697 = vst.msk [vmem:[%s281 + $0x51] sm:$0xff] %vm193, %v5596
        %5698 = vst.msk [vmem:[%s281 + $0x61] sm:$0xff] %vm193, %v5599
        %5699 = vst.msk [vmem:[%s281 + $0x69] sm:$0xff] %vm193, %v5601
        %5700 = vst.msk [vmem:[%s281 + $0x79] sm:$0xff] %vm193, %v5604
        %5701 = vst.msk [vmem:[%s281 + $0x81] sm:$0xff] %vm193, %v5606
        %5702 = vst.msk [vmem:[%s281 + $0x91] sm:$0xff] %vm193, %v5609
        %5703 = vst.msk [vmem:[%s281 + $0x99] sm:$0xff] %vm193, %v5611
        %5704 = vst.msk [vmem:[%s281 + $0xa9] sm:$0xff] %vm193, %v5614
        %5705 = vst.msk [vmem:[%s281 + $0xb1] sm:$0xff] %vm193, %v5616
        %5706 = vst.msk [vmem:[%s281 + $0xc1] sm:$0xff] %vm193, %v5619
        %5707 = vst.msk [vmem:[%s281 + $0xc9] sm:$0xff] %vm193, %v5621
        %5708 = vst.msk [vmem:[%s281 + $0xd9] sm:$0xff] %vm193, %v5624
        %5709 = vst.msk [vmem:[%s281 + $0xe1] sm:$0xff] %vm193, %v5626
        %5710 = vst.msk [vmem:[%s281 + $0xf1] sm:$0xff] %vm193, %v5629
        %5711 = vst.msk [vmem:[%s281 + $0xf9] sm:$0xff] %vm193, %v5631
        %5712 = vst.msk [vmem:[%s281 + $0x109] sm:$0xff] %vm193, %v5634
        %5713 = vst.msk [vmem:[%s281 + $0x111] sm:$0xff] %vm193, %v5636
        %5714 = vst.msk [vmem:[%s281 + $0x121] sm:$0xff] %vm193, %v5639
        %5715 = vst.msk [vmem:[%s281 + $0x129] sm:$0xff] %vm193, %v5641
        %5716 = vst.msk [vmem:[%s281 + $0x139] sm:$0xff] %vm193, %v5644
        %5717 = vst.msk [vmem:[%s281 + $0x141] sm:$0xff] %vm193, %v5646
        %5718 = vst.msk [vmem:[%s281 + $0x151] sm:$0xff] %vm193, %v5649
        %5719 = vst.msk [vmem:[%s281 + $0x159] sm:$0xff] %vm193, %v5651
        %5720 = vst.msk [vmem:[%s281 + $0x169] sm:$0xff] %vm193, %v5654
        %5721 = vst.msk [vmem:[%s281 + $0x171] sm:$0xff] %vm193, %v5656
        %v5722 = vld [vmem:[#allocation2] sm:$0xff]
        %v5723 = vld [vmem:[#allocation2 + $0x8] sm:$0xff]
        %v5724 = vld [vmem:[#allocation2 + $0x18] sm:$0xff]
        %v5725 = vld [vmem:[#allocation2 + $0x20] sm:$0xff]
        %v5726 = vld [vmem:[#allocation2 + $0x30] sm:$0xff]
        %v5727 = vld [vmem:[#allocation2 + $0x38] sm:$0xff]
        %v5728 = vld [vmem:[#allocation2 + $0x48] sm:$0xff]
        %v5729 = vld [vmem:[#allocation2 + $0x50] sm:$0xff]
        %v5730 = vld [vmem:[#allocation2 + $0x60] sm:$0xff]
        %v5731 = vld [vmem:[#allocation2 + $0x68] sm:$0xff]
        %v5732 = vld [vmem:[#allocation2 + $0x78] sm:$0xff]
        %v5733 = vld [vmem:[#allocation2 + $0x80] sm:$0xff]
        %v5734 = vld [vmem:[#allocation2 + $0x90] sm:$0xff]
        %v5735 = vld [vmem:[#allocation2 + $0x98] sm:$0xff]
        %v5736 = vld [vmem:[#allocation2 + $0xa8] sm:$0xff]
        %v5737 = vld [vmem:[#allocation2 + $0xb0] sm:$0xff]
        %v5738 = vld [vmem:[#allocation2 + $0xc0] sm:$0xff]
        %v5739 = vld [vmem:[#allocation2 + $0xc8] sm:$0xff]
        %v5740 = vld [vmem:[#allocation2 + $0xd8] sm:$0xff]
        %v5741 = vld [vmem:[#allocation2 + $0xe0] sm:$0xff]
        %v5742 = vld [vmem:[#allocation2 + $0xf0] sm:$0xff]
        %v5743 = vld [vmem:[#allocation2 + $0xf8] sm:$0xff]
        %v5744 = vld [vmem:[#allocation2 + $0x108] sm:$0xff]
        %v5745 = vld [vmem:[#allocation2 + $0x110] sm:$0xff]
        %v5746 = vld [vmem:[#allocation2 + $0x120] sm:$0xff]
        %v5747 = vld [vmem:[#allocation2 + $0x128] sm:$0xff]
        %v5748 = vld [vmem:[#allocation2 + $0x138] sm:$0xff]
        %v5749 = vld [vmem:[#allocation2 + $0x140] sm:$0xff]
        %v5750 = vld [vmem:[#allocation2 + $0x150] sm:$0xff]
        %v5751 = vld [vmem:[#allocation2 + $0x158] sm:$0xff]
        %v5752 = vld [vmem:[#allocation2 + $0x168] sm:$0xff]
        %v5753 = vld [vmem:[#allocation2 + $0x170] sm:$0xff]
        %v5754 = vpack.c.bf16 %v5722, %v5722
        %v5755 = vpack.c.bf16 %v5723, %v5723
        %v5756 = vpack.c.bf16 %v5724, %v5724
        %v5757 = vpack.c.bf16 %v5725, %v5725
        %v5758 = vpack.c.bf16 %v5726, %v5726
        %v5759 = vpack.c.bf16 %v5727, %v5727
        %v5760 = vpack.c.bf16 %v5728, %v5728
        %v5761 = vpack.c.bf16 %v5729, %v5729
        %v5762 = vpack.c.bf16 %v5730, %v5730
        %v5763 = vpack.c.bf16 %v5731, %v5731
        %v5764 = vpack.c.bf16 %v5732, %v5732
        %v5765 = vpack.c.bf16 %v5733, %v5733
        %v5766 = vpack.c.bf16 %v5734, %v5734
        %v5767 = vpack.c.bf16 %v5735, %v5735
        %v5768 = vpack.c.bf16 %v5736, %v5736
        %v5769 = vpack.c.bf16 %v5737, %v5737
        %v5770 = vpack.c.bf16 %v5738, %v5738
        %v5771 = vpack.c.bf16 %v5739, %v5739
        %v5772 = vpack.c.bf16 %v5740, %v5740
        %v5773 = vpack.c.bf16 %v5741, %v5741
        %v5774 = vpack.c.bf16 %v5742, %v5742
        %v5775 = vpack.c.bf16 %v5743, %v5743
        %v5776 = vpack.c.bf16 %v5744, %v5744
        %v5777 = vpack.c.bf16 %v5745, %v5745
        %v5778 = vpack.c.bf16 %v5746, %v5746
        %v5779 = vpack.c.bf16 %v5747, %v5747
        %v5780 = vpack.c.bf16 %v5748, %v5748
        %v5781 = vpack.c.bf16 %v5749, %v5749
        %v5782 = vpack.c.bf16 %v5750, %v5750
        %v5783 = vpack.c.bf16 %v5751, %v5751
        %v5784 = vpack.c.bf16 %v5752, %v5752
        %v5785 = vpack.c.bf16 %v5753, %v5753
        %5786 = vst.msk [vmem:[#allocation3] sm:$0xf] %vm378, %v5754
        %5787 = vst.msk [vmem:[#allocation3 + $0x14] sm:$0xf] %vm378, %v5755
        %5788 = vst.msk [vmem:[#allocation3 + $0x28] sm:$0xf] %vm378, %v5756
        %5789 = vst.msk [vmem:[#allocation3 + $0x3c] sm:$0xf] %vm378, %v5757
        %5790 = vst.msk [vmem:[#allocation3 + $0x50] sm:$0xf] %vm378, %v5758
        %5791 = vst.msk [vmem:[#allocation3 + $0x64] sm:$0xf] %vm378, %v5759
        %5792 = vst.msk [vmem:[#allocation3 + $0x78] sm:$0xf] %vm378, %v5760
        %5793 = vst.msk [vmem:[#allocation3 + $0x8c] sm:$0xf] %vm378, %v5761
        %5794 = vst.msk [vmem:[#allocation3 + $0xa0] sm:$0xf] %vm378, %v5762
        %5795 = vst.msk [vmem:[#allocation3 + $0xb4] sm:$0xf] %vm378, %v5763
        %5796 = vst.msk [vmem:[#allocation3 + $0xc8] sm:$0xf] %vm378, %v5764
        %5797 = vst.msk [vmem:[#allocation3 + $0xdc] sm:$0xf] %vm378, %v5765
        %5798 = vst.msk [vmem:[#allocation3 + $0xf0] sm:$0xf] %vm378, %v5766
        %5799 = vst.msk [vmem:[#allocation3 + $0x104] sm:$0xf] %vm378, %v5767
        %5800 = vst.msk [vmem:[#allocation3 + $0x118] sm:$0xf] %vm378, %v5768
        %5801 = vst.msk [vmem:[#allocation3 + $0x12c] sm:$0xf] %vm378, %v5769
        %5802 = vst.msk [vmem:[#allocation3 + $0x140] sm:$0xf] %vm378, %v5770
        %5803 = vst.msk [vmem:[#allocation3 + $0x154] sm:$0xf] %vm378, %v5771
        %5804 = vst.msk [vmem:[#allocation3 + $0x168] sm:$0xf] %vm378, %v5772
        %5805 = vst.msk [vmem:[#allocation3 + $0x17c] sm:$0xf] %vm378, %v5773
        %5806 = vst.msk [vmem:[#allocation3 + $0x190] sm:$0xf] %vm378, %v5774
        %5807 = vst.msk [vmem:[#allocation3 + $0x1a4] sm:$0xf] %vm378, %v5775
        %5808 = vst.msk [vmem:[#allocation3 + $0x1b8] sm:$0xf] %vm378, %v5776
        %5809 = vst.msk [vmem:[#allocation3 + $0x1cc] sm:$0xf] %vm378, %v5777
        %5810 = vst.msk [vmem:[#allocation3 + $0x1e0] sm:$0xf] %vm378, %v5778
        %5811 = vst.msk [vmem:[#allocation3 + $0x1f4] sm:$0xf] %vm378, %v5779
        %5812 = vst.msk [vmem:[#allocation3 + $0x208] sm:$0xf] %vm378, %v5780
        %5813 = vst.msk [vmem:[#allocation3 + $0x21c] sm:$0xf] %vm378, %v5781
        %5814 = vst.msk [vmem:[#allocation3 + $0x230] sm:$0xf] %vm378, %v5782
        %5815 = vst.msk [vmem:[#allocation3 + $0x244] sm:$0xf] %vm378, %v5783
        %5816 = vst.msk [vmem:[#allocation3 + $0x258] sm:$0xf] %vm378, %v5784
        %5817 = vst.msk [vmem:[#allocation3 + $0x26c] sm:$0xf] %vm378, %v5785
        %v5818 = vld [vmem:[#allocation2 + $0x1] sm:$0xff]
        %v5819 = vld [vmem:[#allocation2 + $0x9] sm:$0xff]
        %v5820 = vld [vmem:[#allocation2 + $0x19] sm:$0xff]
        %v5821 = vld [vmem:[#allocation2 + $0x21] sm:$0xff]
        %v5822 = vld [vmem:[#allocation2 + $0x31] sm:$0xff]
        %v5823 = vld [vmem:[#allocation2 + $0x39] sm:$0xff]
        %v5824 = vld [vmem:[#allocation2 + $0x49] sm:$0xff]
        %v5825 = vld [vmem:[#allocation2 + $0x51] sm:$0xff]
        %v5826 = vld [vmem:[#allocation2 + $0x61] sm:$0xff]
        %v5827 = vld [vmem:[#allocation2 + $0x69] sm:$0xff]
        %v5828 = vld [vmem:[#allocation2 + $0x79] sm:$0xff]
        %v5829 = vld [vmem:[#allocation2 + $0x81] sm:$0xff]
        %v5830 = vld [vmem:[#allocation2 + $0x91] sm:$0xff]
        %v5831 = vld [vmem:[#allocation2 + $0x99] sm:$0xff]
        %v5832 = vld [vmem:[#allocation2 + $0xa9] sm:$0xff]
        %v5833 = vld [vmem:[#allocation2 + $0xb1] sm:$0xff]
        %v5834 = vld [vmem:[#allocation2 + $0xc1] sm:$0xff]
        %v5835 = vld [vmem:[#allocation2 + $0xc9] sm:$0xff]
        %v5836 = vld [vmem:[#allocation2 + $0xd9] sm:$0xff]
        %v5837 = vld [vmem:[#allocation2 + $0xe1] sm:$0xff]
        %v5838 = vld [vmem:[#allocation2 + $0xf1] sm:$0xff]
        %v5839 = vld [vmem:[#allocation2 + $0xf9] sm:$0xff]
        %v5840 = vld [vmem:[#allocation2 + $0x109] sm:$0xff]
        %v5841 = vld [vmem:[#allocation2 + $0x111] sm:$0xff]
        %v5842 = vld [vmem:[#allocation2 + $0x121] sm:$0xff]
        %v5843 = vld [vmem:[#allocation2 + $0x129] sm:$0xff]
        %v5844 = vld [vmem:[#allocation2 + $0x139] sm:$0xff]
        %v5845 = vld [vmem:[#allocation2 + $0x141] sm:$0xff]
        %v5846 = vld [vmem:[#allocation2 + $0x151] sm:$0xff]
        %v5847 = vld [vmem:[#allocation2 + $0x159] sm:$0xff]
        %v5848 = vld [vmem:[#allocation2 + $0x169] sm:$0xff]
        %v5849 = vld [vmem:[#allocation2 + $0x171] sm:$0xff]
        %v5850 = vpack.c.bf16 %v5818, %v5818
        %v5851 = vpack.c.bf16 %v5819, %v5819
        %v5852 = vpack.c.bf16 %v5820, %v5820
        %v5853 = vpack.c.bf16 %v5821, %v5821
        %v5854 = vpack.c.bf16 %v5822, %v5822
        %v5855 = vpack.c.bf16 %v5823, %v5823
        %v5856 = vpack.c.bf16 %v5824, %v5824
        %v5857 = vpack.c.bf16 %v5825, %v5825
        %v5858 = vpack.c.bf16 %v5826, %v5826
        %v5859 = vpack.c.bf16 %v5827, %v5827
        %v5860 = vpack.c.bf16 %v5828, %v5828
        %v5861 = vpack.c.bf16 %v5829, %v5829
        %v5862 = vpack.c.bf16 %v5830, %v5830
        %v5863 = vpack.c.bf16 %v5831, %v5831
        %v5864 = vpack.c.bf16 %v5832, %v5832
        %v5865 = vpack.c.bf16 %v5833, %v5833
        %v5866 = vpack.c.bf16 %v5834, %v5834
        %v5867 = vpack.c.bf16 %v5835, %v5835
        %v5868 = vpack.c.bf16 %v5836, %v5836
        %v5869 = vpack.c.bf16 %v5837, %v5837
        %v5870 = vpack.c.bf16 %v5838, %v5838
        %v5871 = vpack.c.bf16 %v5839, %v5839
        %v5872 = vpack.c.bf16 %v5840, %v5840
        %v5873 = vpack.c.bf16 %v5841, %v5841
        %v5874 = vpack.c.bf16 %v5842, %v5842
        %v5875 = vpack.c.bf16 %v5843, %v5843
        %v5876 = vpack.c.bf16 %v5844, %v5844
        %v5877 = vpack.c.bf16 %v5845, %v5845
        %v5878 = vpack.c.bf16 %v5846, %v5846
        %v5879 = vpack.c.bf16 %v5847, %v5847
        %v5880 = vpack.c.bf16 %v5848, %v5848
        %v5881 = vpack.c.bf16 %v5849, %v5849
        %5914 = vrot.lane.b32.xlu0 %v5850, 64
        %v5915 = vpop.permute.xlu0 %5914
        %5916 = vrot.lane.b32.xlu0 %v5851, 64
        %v5917 = vpop.permute.xlu0 %5916
        %5918 = vrot.lane.b32.xlu0 %v5852, 64
        %v5919 = vpop.permute.xlu0 %5918
        %5920 = vrot.lane.b32.xlu0 %v5853, 64
        %v5921 = vpop.permute.xlu0 %5920
        %5922 = vrot.lane.b32.xlu0 %v5854, 64
        %v5923 = vpop.permute.xlu0 %5922
        %5924 = vrot.lane.b32.xlu0 %v5855, 64
        %v5925 = vpop.permute.xlu0 %5924
        %5926 = vrot.lane.b32.xlu0 %v5856, 64
        %v5927 = vpop.permute.xlu0 %5926
        %5928 = vrot.lane.b32.xlu0 %v5857, 64
        %v5929 = vpop.permute.xlu0 %5928
        %5930 = vrot.lane.b32.xlu0 %v5858, 64
        %v5931 = vpop.permute.xlu0 %5930
        %5932 = vrot.lane.b32.xlu0 %v5859, 64
        %v5933 = vpop.permute.xlu0 %5932
        %5934 = vrot.lane.b32.xlu0 %v5860, 64
        %v5935 = vpop.permute.xlu0 %5934
        %5936 = vrot.lane.b32.xlu0 %v5861, 64
        %v5937 = vpop.permute.xlu0 %5936
        %5938 = vrot.lane.b32.xlu0 %v5862, 64
        %v5939 = vpop.permute.xlu0 %5938
        %5940 = vrot.lane.b32.xlu0 %v5863, 64
        %v5941 = vpop.permute.xlu0 %5940
        %5942 = vrot.lane.b32.xlu0 %v5864, 64
        %v5943 = vpop.permute.xlu0 %5942
        %5944 = vrot.lane.b32.xlu0 %v5865, 64
        %v5945 = vpop.permute.xlu0 %5944
        %5946 = vrot.lane.b32.xlu0 %v5866, 64
        %v5947 = vpop.permute.xlu0 %5946
        %5948 = vrot.lane.b32.xlu0 %v5867, 64
        %v5949 = vpop.permute.xlu0 %5948
        %5950 = vrot.lane.b32.xlu0 %v5868, 64
        %v5951 = vpop.permute.xlu0 %5950
        %5952 = vrot.lane.b32.xlu0 %v5869, 64
        %v5953 = vpop.permute.xlu0 %5952
        %5954 = vrot.lane.b32.xlu0 %v5870, 64
        %v5955 = vpop.permute.xlu0 %5954
        %5956 = vrot.lane.b32.xlu0 %v5871, 64
        %v5957 = vpop.permute.xlu0 %5956
        %5958 = vrot.lane.b32.xlu0 %v5872, 64
        %v5959 = vpop.permute.xlu0 %5958
        %5960 = vrot.lane.b32.xlu0 %v5873, 64
        %v5961 = vpop.permute.xlu0 %5960
        %5962 = vrot.lane.b32.xlu0 %v5874, 64
        %v5963 = vpop.permute.xlu0 %5962
        %5964 = vrot.lane.b32.xlu0 %v5875, 64
        %v5965 = vpop.permute.xlu0 %5964
        %5966 = vrot.lane.b32.xlu0 %v5876, 64
        %v5967 = vpop.permute.xlu0 %5966
        %5968 = vrot.lane.b32.xlu0 %v5877, 64
        %v5969 = vpop.permute.xlu0 %5968
        %5970 = vrot.lane.b32.xlu0 %v5878, 64
        %v5971 = vpop.permute.xlu0 %5970
        %5972 = vrot.lane.b32.xlu0 %v5879, 64
        %v5973 = vpop.permute.xlu0 %5972
        %5974 = vrot.lane.b32.xlu0 %v5880, 64
        %v5975 = vpop.permute.xlu0 %5974
        %5976 = vrot.lane.b32.xlu0 %v5881, 64
        %v5977 = vpop.permute.xlu0 %5976
        %6010 = vst.msk [vmem:[#allocation3] sm:$0xf] %vm603, %v5915
        %6011 = vst.msk [vmem:[#allocation3 + $0x14] sm:$0xf] %vm603, %v5917
        %6012 = vst.msk [vmem:[#allocation3 + $0x28] sm:$0xf] %vm603, %v5919
        %6013 = vst.msk [vmem:[#allocation3 + $0x3c] sm:$0xf] %vm603, %v5921
        %6014 = vst.msk [vmem:[#allocation3 + $0x50] sm:$0xf] %vm603, %v5923
        %6015 = vst.msk [vmem:[#allocation3 + $0x64] sm:$0xf] %vm603, %v5925
        %6016 = vst.msk [vmem:[#allocation3 + $0x78] sm:$0xf] %vm603, %v5927
        %6017 = vst.msk [vmem:[#allocation3 + $0x8c] sm:$0xf] %vm603, %v5929
        %6018 = vst.msk [vmem:[#allocation3 + $0xa0] sm:$0xf] %vm603, %v5931
        %6019 = vst.msk [vmem:[#allocation3 + $0xb4] sm:$0xf] %vm603, %v5933
        %6020 = vst.msk [vmem:[#allocation3 + $0xc8] sm:$0xf] %vm603, %v5935
        %6021 = vst.msk [vmem:[#allocation3 + $0xdc] sm:$0xf] %vm603, %v5937
        %6022 = vst.msk [vmem:[#allocation3 + $0xf0] sm:$0xf] %vm603, %v5939
        %6023 = vst.msk [vmem:[#allocation3 + $0x104] sm:$0xf] %vm603, %v5941
        %6024 = vst.msk [vmem:[#allocation3 + $0x118] sm:$0xf] %vm603, %v5943
        %6025 = vst.msk [vmem:[#allocation3 + $0x12c] sm:$0xf] %vm603, %v5945
        %6026 = vst.msk [vmem:[#allocation3 + $0x140] sm:$0xf] %vm603, %v5947
        %6027 = vst.msk [vmem:[#allocation3 + $0x154] sm:$0xf] %vm603, %v5949
        %6028 = vst.msk [vmem:[#allocation3 + $0x168] sm:$0xf] %vm603, %v5951
        %6029 = vst.msk [vmem:[#allocation3 + $0x17c] sm:$0xf] %vm603, %v5953
        %6030 = vst.msk [vmem:[#allocation3 + $0x190] sm:$0xf] %vm603, %v5955
        %6031 = vst.msk [vmem:[#allocation3 + $0x1a4] sm:$0xf] %vm603, %v5957
        %6032 = vst.msk [vmem:[#allocation3 + $0x1b8] sm:$0xf] %vm603, %v5959
        %6033 = vst.msk [vmem:[#allocation3 + $0x1cc] sm:$0xf] %vm603, %v5961
        %6034 = vst.msk [vmem:[#allocation3 + $0x1e0] sm:$0xf] %vm603, %v5963
        %6035 = vst.msk [vmem:[#allocation3 + $0x1f4] sm:$0xf] %vm603, %v5965
        %6036 = vst.msk [vmem:[#allocation3 + $0x208] sm:$0xf] %vm603, %v5967
        %6037 = vst.msk [vmem:[#allocation3 + $0x21c] sm:$0xf] %vm603, %v5969
        %6038 = vst.msk [vmem:[#allocation3 + $0x230] sm:$0xf] %vm603, %v5971
        %6039 = vst.msk [vmem:[#allocation3 + $0x244] sm:$0xf] %vm603, %v5973
        %6040 = vst.msk [vmem:[#allocation3 + $0x258] sm:$0xf] %vm603, %v5975
        %6041 = vst.msk [vmem:[#allocation3 + $0x26c] sm:$0xf] %vm603, %v5977
        %v6042 = vld [vmem:[#allocation2 + $0x2] sm:$0xff]
        %v6043 = vld [vmem:[#allocation2 + $0xa] sm:$0xff]
        %v6044 = vld [vmem:[#allocation2 + $0x1a] sm:$0xff]
        %v6045 = vld [vmem:[#allocation2 + $0x22] sm:$0xff]
        %v6046 = vld [vmem:[#allocation2 + $0x32] sm:$0xff]
        %v6047 = vld [vmem:[#allocation2 + $0x3a] sm:$0xff]
        %v6048 = vld [vmem:[#allocation2 + $0x4a] sm:$0xff]
        %v6049 = vld [vmem:[#allocation2 + $0x52] sm:$0xff]
        %v6050 = vld [vmem:[#allocation2 + $0x62] sm:$0xff]
        %v6051 = vld [vmem:[#allocation2 + $0x6a] sm:$0xff]
        %v6052 = vld [vmem:[#allocation2 + $0x7a] sm:$0xff]
        %v6053 = vld [vmem:[#allocation2 + $0x82] sm:$0xff]
        %v6054 = vld [vmem:[#allocation2 + $0x92] sm:$0xff]
        %v6055 = vld [vmem:[#allocation2 + $0x9a] sm:$0xff]
        %v6056 = vld [vmem:[#allocation2 + $0xaa] sm:$0xff]
        %v6057 = vld [vmem:[#allocation2 + $0xb2] sm:$0xff]
        %v6058 = vld [vmem:[#allocation2 + $0xc2] sm:$0xff]
        %v6059 = vld [vmem:[#allocation2 + $0xca] sm:$0xff]
        %v6060 = vld [vmem:[#allocation2 + $0xda] sm:$0xff]
        %v6061 = vld [vmem:[#allocation2 + $0xe2] sm:$0xff]
        %v6062 = vld [vmem:[#allocation2 + $0xf2] sm:$0xff]
        %v6063 = vld [vmem:[#allocation2 + $0xfa] sm:$0xff]
        %v6064 = vld [vmem:[#allocation2 + $0x10a] sm:$0xff]
        %v6065 = vld [vmem:[#allocation2 + $0x112] sm:$0xff]
        %v6066 = vld [vmem:[#allocation2 + $0x122] sm:$0xff]
        %v6067 = vld [vmem:[#allocation2 + $0x12a] sm:$0xff]
        %v6068 = vld [vmem:[#allocation2 + $0x13a] sm:$0xff]
        %v6069 = vld [vmem:[#allocation2 + $0x142] sm:$0xff]
        %v6070 = vld [vmem:[#allocation2 + $0x152] sm:$0xff]
        %v6071 = vld [vmem:[#allocation2 + $0x15a] sm:$0xff]
        %v6072 = vld [vmem:[#allocation2 + $0x16a] sm:$0xff]
        %v6073 = vld [vmem:[#allocation2 + $0x172] sm:$0xff]
        %v6074 = vpack.c.bf16 %v6042, %v6042
        %v6075 = vpack.c.bf16 %v6043, %v6043
        %v6076 = vpack.c.bf16 %v6044, %v6044
        %v6077 = vpack.c.bf16 %v6045, %v6045
        %v6078 = vpack.c.bf16 %v6046, %v6046
        %v6079 = vpack.c.bf16 %v6047, %v6047
        %v6080 = vpack.c.bf16 %v6048, %v6048
        %v6081 = vpack.c.bf16 %v6049, %v6049
        %v6082 = vpack.c.bf16 %v6050, %v6050
        %v6083 = vpack.c.bf16 %v6051, %v6051
        %v6084 = vpack.c.bf16 %v6052, %v6052
        %v6085 = vpack.c.bf16 %v6053, %v6053
        %v6086 = vpack.c.bf16 %v6054, %v6054
        %v6087 = vpack.c.bf16 %v6055, %v6055
        %v6088 = vpack.c.bf16 %v6056, %v6056
        %v6089 = vpack.c.bf16 %v6057, %v6057
        %v6090 = vpack.c.bf16 %v6058, %v6058
        %v6091 = vpack.c.bf16 %v6059, %v6059
        %v6092 = vpack.c.bf16 %v6060, %v6060
        %v6093 = vpack.c.bf16 %v6061, %v6061
        %v6094 = vpack.c.bf16 %v6062, %v6062
        %v6095 = vpack.c.bf16 %v6063, %v6063
        %v6096 = vpack.c.bf16 %v6064, %v6064
        %v6097 = vpack.c.bf16 %v6065, %v6065
        %v6098 = vpack.c.bf16 %v6066, %v6066
        %v6099 = vpack.c.bf16 %v6067, %v6067
        %v6100 = vpack.c.bf16 %v6068, %v6068
        %v6101 = vpack.c.bf16 %v6069, %v6069
        %v6102 = vpack.c.bf16 %v6070, %v6070
        %v6103 = vpack.c.bf16 %v6071, %v6071
        %v6104 = vpack.c.bf16 %v6072, %v6072
        %v6105 = vpack.c.bf16 %v6073, %v6073
        %6106 = vst.msk [vmem:[#allocation3 + $0x4] sm:$0xf] %vm378, %v6074
        %6107 = vst.msk [vmem:[#allocation3 + $0x18] sm:$0xf] %vm378, %v6075
        %6108 = vst.msk [vmem:[#allocation3 + $0x2c] sm:$0xf] %vm378, %v6076
        %6109 = vst.msk [vmem:[#allocation3 + $0x40] sm:$0xf] %vm378, %v6077
        %6110 = vst.msk [vmem:[#allocation3 + $0x54] sm:$0xf] %vm378, %v6078
        %6111 = vst.msk [vmem:[#allocation3 + $0x68] sm:$0xf] %vm378, %v6079
        %6112 = vst.msk [vmem:[#allocation3 + $0x7c] sm:$0xf] %vm378, %v6080
        %6113 = vst.msk [vmem:[#allocation3 + $0x90] sm:$0xf] %vm378, %v6081
        %6114 = vst.msk [vmem:[#allocation3 + $0xa4] sm:$0xf] %vm378, %v6082
        %6115 = vst.msk [vmem:[#allocation3 + $0xb8] sm:$0xf] %vm378, %v6083
        %6116 = vst.msk [vmem:[#allocation3 + $0xcc] sm:$0xf] %vm378, %v6084
        %6117 = vst.msk [vmem:[#allocation3 + $0xe0] sm:$0xf] %vm378, %v6085
        %6118 = vst.msk [vmem:[#allocation3 + $0xf4] sm:$0xf] %vm378, %v6086
        %6119 = vst.msk [vmem:[#allocation3 + $0x108] sm:$0xf] %vm378, %v6087
        %6120 = vst.msk [vmem:[#allocation3 + $0x11c] sm:$0xf] %vm378, %v6088
        %6121 = vst.msk [vmem:[#allocation3 + $0x130] sm:$0xf] %vm378, %v6089
        %6122 = vst.msk [vmem:[#allocation3 + $0x144] sm:$0xf] %vm378, %v6090
        %6123 = vst.msk [vmem:[#allocation3 + $0x158] sm:$0xf] %vm378, %v6091
        %6124 = vst.msk [vmem:[#allocation3 + $0x16c] sm:$0xf] %vm378, %v6092
        %6125 = vst.msk [vmem:[#allocation3 + $0x180] sm:$0xf] %vm378, %v6093
        %6126 = vst.msk [vmem:[#allocation3 + $0x194] sm:$0xf] %vm378, %v6094
        %6127 = vst.msk [vmem:[#allocation3 + $0x1a8] sm:$0xf] %vm378, %v6095
        %6128 = vst.msk [vmem:[#allocation3 + $0x1bc] sm:$0xf] %vm378, %v6096
        %6129 = vst.msk [vmem:[#allocation3 + $0x1d0] sm:$0xf] %vm378, %v6097
        %6130 = vst.msk [vmem:[#allocation3 + $0x1e4] sm:$0xf] %vm378, %v6098
        %6131 = vst.msk [vmem:[#allocation3 + $0x1f8] sm:$0xf] %vm378, %v6099
        %6132 = vst.msk [vmem:[#allocation3 + $0x20c] sm:$0xf] %vm378, %v6100
        %6133 = vst.msk [vmem:[#allocation3 + $0x220] sm:$0xf] %vm378, %v6101
        %6134 = vst.msk [vmem:[#allocation3 + $0x234] sm:$0xf] %vm378, %v6102
        %6135 = vst.msk [vmem:[#allocation3 + $0x248] sm:$0xf] %vm378, %v6103
        %6136 = vst.msk [vmem:[#allocation3 + $0x25c] sm:$0xf] %vm378, %v6104
        %6137 = vst.msk [vmem:[#allocation3 + $0x270] sm:$0xf] %vm378, %v6105
        %v6138 = vld [vmem:[%s281] sm:$0xff]
        %v6139 = vld [vmem:[%s281 + $0x8] sm:$0xff]
        %v6140 = vld [vmem:[%s281 + $0x18] sm:$0xff]
        %v6141 = vld [vmem:[%s281 + $0x20] sm:$0xff]
        %v6142 = vld [vmem:[%s281 + $0x30] sm:$0xff]
        %v6143 = vld [vmem:[%s281 + $0x38] sm:$0xff]
        %v6144 = vld [vmem:[%s281 + $0x48] sm:$0xff]
        %v6145 = vld [vmem:[%s281 + $0x50] sm:$0xff]
        %v6146 = vld [vmem:[%s281 + $0x60] sm:$0xff]
        %v6147 = vld [vmem:[%s281 + $0x68] sm:$0xff]
        %v6148 = vld [vmem:[%s281 + $0x78] sm:$0xff]
        %v6149 = vld [vmem:[%s281 + $0x80] sm:$0xff]
        %v6150 = vld [vmem:[%s281 + $0x90] sm:$0xff]
        %v6151 = vld [vmem:[%s281 + $0x98] sm:$0xff]
        %v6152 = vld [vmem:[%s281 + $0xa8] sm:$0xff]
        %v6153 = vld [vmem:[%s281 + $0xb0] sm:$0xff]
        %v6154 = vld [vmem:[%s281 + $0xc0] sm:$0xff]
        %v6155 = vld [vmem:[%s281 + $0xc8] sm:$0xff]
        %v6156 = vld [vmem:[%s281 + $0xd8] sm:$0xff]
        %v6157 = vld [vmem:[%s281 + $0xe0] sm:$0xff]
        %v6158 = vld [vmem:[%s281 + $0xf0] sm:$0xff]
        %v6159 = vld [vmem:[%s281 + $0xf8] sm:$0xff]
        %v6160 = vld [vmem:[%s281 + $0x108] sm:$0xff]
        %v6161 = vld [vmem:[%s281 + $0x110] sm:$0xff]
        %v6162 = vld [vmem:[%s281 + $0x120] sm:$0xff]
        %v6163 = vld [vmem:[%s281 + $0x128] sm:$0xff]
        %v6164 = vld [vmem:[%s281 + $0x138] sm:$0xff]
        %v6165 = vld [vmem:[%s281 + $0x140] sm:$0xff]
        %v6166 = vld [vmem:[%s281 + $0x150] sm:$0xff]
        %v6167 = vld [vmem:[%s281 + $0x158] sm:$0xff]
        %v6168 = vld [vmem:[%s281 + $0x168] sm:$0xff]
        %v6169 = vld [vmem:[%s281 + $0x170] sm:$0xff]
        %v6170 = vpack.c.bf16 %v6138, %v6138
        %v6171 = vpack.c.bf16 %v6139, %v6139
        %v6172 = vpack.c.bf16 %v6140, %v6140
        %v6173 = vpack.c.bf16 %v6141, %v6141
        %v6174 = vpack.c.bf16 %v6142, %v6142
        %v6175 = vpack.c.bf16 %v6143, %v6143
        %v6176 = vpack.c.bf16 %v6144, %v6144
        %v6177 = vpack.c.bf16 %v6145, %v6145
        %v6178 = vpack.c.bf16 %v6146, %v6146
        %v6179 = vpack.c.bf16 %v6147, %v6147
        %v6180 = vpack.c.bf16 %v6148, %v6148
        %v6181 = vpack.c.bf16 %v6149, %v6149
        %v6182 = vpack.c.bf16 %v6150, %v6150
        %v6183 = vpack.c.bf16 %v6151, %v6151
        %v6184 = vpack.c.bf16 %v6152, %v6152
        %v6185 = vpack.c.bf16 %v6153, %v6153
        %v6186 = vpack.c.bf16 %v6154, %v6154
        %v6187 = vpack.c.bf16 %v6155, %v6155
        %v6188 = vpack.c.bf16 %v6156, %v6156
        %v6189 = vpack.c.bf16 %v6157, %v6157
        %v6190 = vpack.c.bf16 %v6158, %v6158
        %v6191 = vpack.c.bf16 %v6159, %v6159
        %v6192 = vpack.c.bf16 %v6160, %v6160
        %v6193 = vpack.c.bf16 %v6161, %v6161
        %v6194 = vpack.c.bf16 %v6162, %v6162
        %v6195 = vpack.c.bf16 %v6163, %v6163
        %v6196 = vpack.c.bf16 %v6164, %v6164
        %v6197 = vpack.c.bf16 %v6165, %v6165
        %v6198 = vpack.c.bf16 %v6166, %v6166
        %v6199 = vpack.c.bf16 %v6167, %v6167
        %v6200 = vpack.c.bf16 %v6168, %v6168
        %v6201 = vpack.c.bf16 %v6169, %v6169
        %6234 = vrot.lane.b32.xlu0 %v6170, 64
        %v6235 = vpop.permute.xlu0 %6234
        %6236 = vrot.lane.b32.xlu0 %v6171, 64
        %v6237 = vpop.permute.xlu0 %6236
        %6238 = vrot.lane.b32.xlu0 %v6172, 64
        %v6239 = vpop.permute.xlu0 %6238
        %6240 = vrot.lane.b32.xlu0 %v6173, 64
        %v6241 = vpop.permute.xlu0 %6240
        %6242 = vrot.lane.b32.xlu0 %v6174, 64
        %v6243 = vpop.permute.xlu0 %6242
        %6244 = vrot.lane.b32.xlu0 %v6175, 64
        %v6245 = vpop.permute.xlu0 %6244
        %6246 = vrot.lane.b32.xlu0 %v6176, 64
        %v6247 = vpop.permute.xlu0 %6246
        %6248 = vrot.lane.b32.xlu0 %v6177, 64
        %v6249 = vpop.permute.xlu0 %6248
        %6250 = vrot.lane.b32.xlu0 %v6178, 64
        %v6251 = vpop.permute.xlu0 %6250
        %6252 = vrot.lane.b32.xlu0 %v6179, 64
        %v6253 = vpop.permute.xlu0 %6252
        %6254 = vrot.lane.b32.xlu0 %v6180, 64
        %v6255 = vpop.permute.xlu0 %6254
        %6256 = vrot.lane.b32.xlu0 %v6181, 64
        %v6257 = vpop.permute.xlu0 %6256
        %6258 = vrot.lane.b32.xlu0 %v6182, 64
        %v6259 = vpop.permute.xlu0 %6258
        %6260 = vrot.lane.b32.xlu0 %v6183, 64
        %v6261 = vpop.permute.xlu0 %6260
        %6262 = vrot.lane.b32.xlu0 %v6184, 64
        %v6263 = vpop.permute.xlu0 %6262
        %6264 = vrot.lane.b32.xlu0 %v6185, 64
        %v6265 = vpop.permute.xlu0 %6264
        %6266 = vrot.lane.b32.xlu0 %v6186, 64
        %v6267 = vpop.permute.xlu0 %6266
        %6268 = vrot.lane.b32.xlu0 %v6187, 64
        %v6269 = vpop.permute.xlu0 %6268
        %6270 = vrot.lane.b32.xlu0 %v6188, 64
        %v6271 = vpop.permute.xlu0 %6270
        %6272 = vrot.lane.b32.xlu0 %v6189, 64
        %v6273 = vpop.permute.xlu0 %6272
        %6274 = vrot.lane.b32.xlu0 %v6190, 64
        %v6275 = vpop.permute.xlu0 %6274
        %6276 = vrot.lane.b32.xlu0 %v6191, 64
        %v6277 = vpop.permute.xlu0 %6276
        %6278 = vrot.lane.b32.xlu0 %v6192, 64
        %v6279 = vpop.permute.xlu0 %6278
        %6280 = vrot.lane.b32.xlu0 %v6193, 64
        %v6281 = vpop.permute.xlu0 %6280
        %6282 = vrot.lane.b32.xlu0 %v6194, 64
        %v6283 = vpop.permute.xlu0 %6282
        %6284 = vrot.lane.b32.xlu0 %v6195, 64
        %v6285 = vpop.permute.xlu0 %6284
        %6286 = vrot.lane.b32.xlu0 %v6196, 64
        %v6287 = vpop.permute.xlu0 %6286
        %6288 = vrot.lane.b32.xlu0 %v6197, 64
        %v6289 = vpop.permute.xlu0 %6288
        %6290 = vrot.lane.b32.xlu0 %v6198, 64
        %v6291 = vpop.permute.xlu0 %6290
        %6292 = vrot.lane.b32.xlu0 %v6199, 64
        %v6293 = vpop.permute.xlu0 %6292
        %6294 = vrot.lane.b32.xlu0 %v6200, 64
        %v6295 = vpop.permute.xlu0 %6294
        %6296 = vrot.lane.b32.xlu0 %v6201, 64
        %v6297 = vpop.permute.xlu0 %6296
        %6330 = vst.msk [vmem:[#allocation3 + $0x4] sm:$0xf] %vm603, %v6235
        %6331 = vst.msk [vmem:[#allocation3 + $0x18] sm:$0xf] %vm603, %v6237
        %6332 = vst.msk [vmem:[#allocation3 + $0x2c] sm:$0xf] %vm603, %v6239
        %6333 = vst.msk [vmem:[#allocation3 + $0x40] sm:$0xf] %vm603, %v6241
        %6334 = vst.msk [vmem:[#allocation3 + $0x54] sm:$0xf] %vm603, %v6243
        %6335 = vst.msk [vmem:[#allocation3 + $0x68] sm:$0xf] %vm603, %v6245
        %6336 = vst.msk [vmem:[#allocation3 + $0x7c] sm:$0xf] %vm603, %v6247
        %6337 = vst.msk [vmem:[#allocation3 + $0x90] sm:$0xf] %vm603, %v6249
        %6338 = vst.msk [vmem:[#allocation3 + $0xa4] sm:$0xf] %vm603, %v6251
        %6339 = vst.msk [vmem:[#allocation3 + $0xb8] sm:$0xf] %vm603, %v6253
        %6340 = vst.msk [vmem:[#allocation3 + $0xcc] sm:$0xf] %vm603, %v6255
        %6341 = vst.msk [vmem:[#allocation3 + $0xe0] sm:$0xf] %vm603, %v6257
        %6342 = vst.msk [vmem:[#allocation3 + $0xf4] sm:$0xf] %vm603, %v6259
        %6343 = vst.msk [vmem:[#allocation3 + $0x108] sm:$0xf] %vm603, %v6261
        %6344 = vst.msk [vmem:[#allocation3 + $0x11c] sm:$0xf] %vm603, %v6263
        %6345 = vst.msk [vmem:[#allocation3 + $0x130] sm:$0xf] %vm603, %v6265
        %6346 = vst.msk [vmem:[#allocation3 + $0x144] sm:$0xf] %vm603, %v6267
        %6347 = vst.msk [vmem:[#allocation3 + $0x158] sm:$0xf] %vm603, %v6269
        %6348 = vst.msk [vmem:[#allocation3 + $0x16c] sm:$0xf] %vm603, %v6271
        %6349 = vst.msk [vmem:[#allocation3 + $0x180] sm:$0xf] %vm603, %v6273
        %6350 = vst.msk [vmem:[#allocation3 + $0x194] sm:$0xf] %vm603, %v6275
        %6351 = vst.msk [vmem:[#allocation3 + $0x1a8] sm:$0xf] %vm603, %v6277
        %6352 = vst.msk [vmem:[#allocation3 + $0x1bc] sm:$0xf] %vm603, %v6279
        %6353 = vst.msk [vmem:[#allocation3 + $0x1d0] sm:$0xf] %vm603, %v6281
        %6354 = vst.msk [vmem:[#allocation3 + $0x1e4] sm:$0xf] %vm603, %v6283
        %6355 = vst.msk [vmem:[#allocation3 + $0x1f8] sm:$0xf] %vm603, %v6285
        %6356 = vst.msk [vmem:[#allocation3 + $0x20c] sm:$0xf] %vm603, %v6287
        %6357 = vst.msk [vmem:[#allocation3 + $0x220] sm:$0xf] %vm603, %v6289
        %6358 = vst.msk [vmem:[#allocation3 + $0x234] sm:$0xf] %vm603, %v6291
        %6359 = vst.msk [vmem:[#allocation3 + $0x248] sm:$0xf] %vm603, %v6293
        %6360 = vst.msk [vmem:[#allocation3 + $0x25c] sm:$0xf] %vm603, %v6295
        %6361 = vst.msk [vmem:[#allocation3 + $0x270] sm:$0xf] %vm603, %v6297
        %v6362 = vld [vmem:[%s281 + $0x1] sm:$0xff]
        %v6363 = vld [vmem:[%s281 + $0x9] sm:$0xff]
        %v6364 = vld [vmem:[%s281 + $0x19] sm:$0xff]
        %v6365 = vld [vmem:[%s281 + $0x21] sm:$0xff]
        %v6366 = vld [vmem:[%s281 + $0x31] sm:$0xff]
        %v6367 = vld [vmem:[%s281 + $0x39] sm:$0xff]
        %v6368 = vld [vmem:[%s281 + $0x49] sm:$0xff]
        %v6369 = vld [vmem:[%s281 + $0x51] sm:$0xff]
        %v6370 = vld [vmem:[%s281 + $0x61] sm:$0xff]
        %v6371 = vld [vmem:[%s281 + $0x69] sm:$0xff]
        %v6372 = vld [vmem:[%s281 + $0x79] sm:$0xff]
        %v6373 = vld [vmem:[%s281 + $0x81] sm:$0xff]
        %v6374 = vld [vmem:[%s281 + $0x91] sm:$0xff]
        %v6375 = vld [vmem:[%s281 + $0x99] sm:$0xff]
        %v6376 = vld [vmem:[%s281 + $0xa9] sm:$0xff]
        %v6377 = vld [vmem:[%s281 + $0xb1] sm:$0xff]
        %v6378 = vld [vmem:[%s281 + $0xc1] sm:$0xff]
        %v6379 = vld [vmem:[%s281 + $0xc9] sm:$0xff]
        %v6380 = vld [vmem:[%s281 + $0xd9] sm:$0xff]
        %v6381 = vld [vmem:[%s281 + $0xe1] sm:$0xff]
        %v6382 = vld [vmem:[%s281 + $0xf1] sm:$0xff]
        %v6383 = vld [vmem:[%s281 + $0xf9] sm:$0xff]
        %v6384 = vld [vmem:[%s281 + $0x109] sm:$0xff]
        %v6385 = vld [vmem:[%s281 + $0x111] sm:$0xff]
        %v6386 = vld [vmem:[%s281 + $0x121] sm:$0xff]
        %v6387 = vld [vmem:[%s281 + $0x129] sm:$0xff]
        %v6388 = vld [vmem:[%s281 + $0x139] sm:$0xff]
        %v6389 = vld [vmem:[%s281 + $0x141] sm:$0xff]
        %v6390 = vld [vmem:[%s281 + $0x151] sm:$0xff]
        %v6391 = vld [vmem:[%s281 + $0x159] sm:$0xff]
        %v6392 = vld [vmem:[%s281 + $0x169] sm:$0xff]
        %v6393 = vld [vmem:[%s281 + $0x171] sm:$0xff]
        %v6394 = vpack.c.bf16 %v6362, %v6362
        %v6395 = vpack.c.bf16 %v6363, %v6363
        %v6396 = vpack.c.bf16 %v6364, %v6364
        %v6397 = vpack.c.bf16 %v6365, %v6365
        %v6398 = vpack.c.bf16 %v6366, %v6366
        %v6399 = vpack.c.bf16 %v6367, %v6367
        %v6400 = vpack.c.bf16 %v6368, %v6368
        %v6401 = vpack.c.bf16 %v6369, %v6369
        %v6402 = vpack.c.bf16 %v6370, %v6370
        %v6403 = vpack.c.bf16 %v6371, %v6371
        %v6404 = vpack.c.bf16 %v6372, %v6372
        %v6405 = vpack.c.bf16 %v6373, %v6373
        %v6406 = vpack.c.bf16 %v6374, %v6374
        %v6407 = vpack.c.bf16 %v6375, %v6375
        %v6408 = vpack.c.bf16 %v6376, %v6376
        %v6409 = vpack.c.bf16 %v6377, %v6377
        %v6410 = vpack.c.bf16 %v6378, %v6378
        %v6411 = vpack.c.bf16 %v6379, %v6379
        %v6412 = vpack.c.bf16 %v6380, %v6380
        %v6413 = vpack.c.bf16 %v6381, %v6381
        %v6414 = vpack.c.bf16 %v6382, %v6382
        %v6415 = vpack.c.bf16 %v6383, %v6383
        %v6416 = vpack.c.bf16 %v6384, %v6384
        %v6417 = vpack.c.bf16 %v6385, %v6385
        %v6418 = vpack.c.bf16 %v6386, %v6386
        %v6419 = vpack.c.bf16 %v6387, %v6387
        %v6420 = vpack.c.bf16 %v6388, %v6388
        %v6421 = vpack.c.bf16 %v6389, %v6389
        %v6422 = vpack.c.bf16 %v6390, %v6390
        %v6423 = vpack.c.bf16 %v6391, %v6391
        %v6424 = vpack.c.bf16 %v6392, %v6392
        %v6425 = vpack.c.bf16 %v6393, %v6393
        %6426 = vst.msk [vmem:[#allocation3 + $0x8] sm:$0xf] %vm378, %v6394
        %6427 = vst.msk [vmem:[#allocation3 + $0x1c] sm:$0xf] %vm378, %v6395
        %6428 = vst.msk [vmem:[#allocation3 + $0x30] sm:$0xf] %vm378, %v6396
        %6429 = vst.msk [vmem:[#allocation3 + $0x44] sm:$0xf] %vm378, %v6397
        %6430 = vst.msk [vmem:[#allocation3 + $0x58] sm:$0xf] %vm378, %v6398
        %6431 = vst.msk [vmem:[#allocation3 + $0x6c] sm:$0xf] %vm378, %v6399
        %6432 = vst.msk [vmem:[#allocation3 + $0x80] sm:$0xf] %vm378, %v6400
        %6433 = vst.msk [vmem:[#allocation3 + $0x94] sm:$0xf] %vm378, %v6401
        %6434 = vst.msk [vmem:[#allocation3 + $0xa8] sm:$0xf] %vm378, %v6402
        %6435 = vst.msk [vmem:[#allocation3 + $0xbc] sm:$0xf] %vm378, %v6403
        %6436 = vst.msk [vmem:[#allocation3 + $0xd0] sm:$0xf] %vm378, %v6404
        %6437 = vst.msk [vmem:[#allocation3 + $0xe4] sm:$0xf] %vm378, %v6405
        %6438 = vst.msk [vmem:[#allocation3 + $0xf8] sm:$0xf] %vm378, %v6406
        %6439 = vst.msk [vmem:[#allocation3 + $0x10c] sm:$0xf] %vm378, %v6407
        %6440 = vst.msk [vmem:[#allocation3 + $0x120] sm:$0xf] %vm378, %v6408
        %6441 = vst.msk [vmem:[#allocation3 + $0x134] sm:$0xf] %vm378, %v6409
        %6442 = vst.msk [vmem:[#allocation3 + $0x148] sm:$0xf] %vm378, %v6410
        %6443 = vst.msk [vmem:[#allocation3 + $0x15c] sm:$0xf] %vm378, %v6411
        %6444 = vst.msk [vmem:[#allocation3 + $0x170] sm:$0xf] %vm378, %v6412
        %6445 = vst.msk [vmem:[#allocation3 + $0x184] sm:$0xf] %vm378, %v6413
        %6446 = vst.msk [vmem:[#allocation3 + $0x198] sm:$0xf] %vm378, %v6414
        %6447 = vst.msk [vmem:[#allocation3 + $0x1ac] sm:$0xf] %vm378, %v6415
        %6448 = vst.msk [vmem:[#allocation3 + $0x1c0] sm:$0xf] %vm378, %v6416
        %6449 = vst.msk [vmem:[#allocation3 + $0x1d4] sm:$0xf] %vm378, %v6417
        %6450 = vst.msk [vmem:[#allocation3 + $0x1e8] sm:$0xf] %vm378, %v6418
        %6451 = vst.msk [vmem:[#allocation3 + $0x1fc] sm:$0xf] %vm378, %v6419
        %6452 = vst.msk [vmem:[#allocation3 + $0x210] sm:$0xf] %vm378, %v6420
        %6453 = vst.msk [vmem:[#allocation3 + $0x224] sm:$0xf] %vm378, %v6421
        %6454 = vst.msk [vmem:[#allocation3 + $0x238] sm:$0xf] %vm378, %v6422
        %6455 = vst.msk [vmem:[#allocation3 + $0x24c] sm:$0xf] %vm378, %v6423
        %6456 = vst.msk [vmem:[#allocation3 + $0x260] sm:$0xf] %vm378, %v6424
        %6457 = vst.msk [vmem:[#allocation3 + $0x274] sm:$0xf] %vm378, %v6425
        %v6458 = vld [vmem:[%s281 + $0x2] sm:$0xff]
        %v6459 = vld [vmem:[%s281 + $0xa] sm:$0xff]
        %v6460 = vld [vmem:[%s281 + $0x1a] sm:$0xff]
        %v6461 = vld [vmem:[%s281 + $0x22] sm:$0xff]
        %v6462 = vld [vmem:[%s281 + $0x32] sm:$0xff]
        %v6463 = vld [vmem:[%s281 + $0x3a] sm:$0xff]
        %v6464 = vld [vmem:[%s281 + $0x4a] sm:$0xff]
        %v6465 = vld [vmem:[%s281 + $0x52] sm:$0xff]
        %v6466 = vld [vmem:[%s281 + $0x62] sm:$0xff]
        %v6467 = vld [vmem:[%s281 + $0x6a] sm:$0xff]
        %v6468 = vld [vmem:[%s281 + $0x7a] sm:$0xff]
        %v6469 = vld [vmem:[%s281 + $0x82] sm:$0xff]
        %v6470 = vld [vmem:[%s281 + $0x92] sm:$0xff]
        %v6471 = vld [vmem:[%s281 + $0x9a] sm:$0xff]
        %v6472 = vld [vmem:[%s281 + $0xaa] sm:$0xff]
        %v6473 = vld [vmem:[%s281 + $0xb2] sm:$0xff]
        %v6474 = vld [vmem:[%s281 + $0xc2] sm:$0xff]
        %v6475 = vld [vmem:[%s281 + $0xca] sm:$0xff]
        %v6476 = vld [vmem:[%s281 + $0xda] sm:$0xff]
        %v6477 = vld [vmem:[%s281 + $0xe2] sm:$0xff]
        %v6478 = vld [vmem:[%s281 + $0xf2] sm:$0xff]
        %v6479 = vld [vmem:[%s281 + $0xfa] sm:$0xff]
        %v6480 = vld [vmem:[%s281 + $0x10a] sm:$0xff]
        %v6481 = vld [vmem:[%s281 + $0x112] sm:$0xff]
        %v6482 = vld [vmem:[%s281 + $0x122] sm:$0xff]
        %v6483 = vld [vmem:[%s281 + $0x12a] sm:$0xff]
        %v6484 = vld [vmem:[%s281 + $0x13a] sm:$0xff]
        %v6485 = vld [vmem:[%s281 + $0x142] sm:$0xff]
        %v6486 = vld [vmem:[%s281 + $0x152] sm:$0xff]
        %v6487 = vld [vmem:[%s281 + $0x15a] sm:$0xff]
        %v6488 = vld [vmem:[%s281 + $0x16a] sm:$0xff]
        %v6489 = vld [vmem:[%s281 + $0x172] sm:$0xff]
        %v6490 = vpack.c.bf16 %v6458, %v6458
        %v6491 = vpack.c.bf16 %v6459, %v6459
        %v6492 = vpack.c.bf16 %v6460, %v6460
        %v6493 = vpack.c.bf16 %v6461, %v6461
        %v6494 = vpack.c.bf16 %v6462, %v6462
        %v6495 = vpack.c.bf16 %v6463, %v6463
        %v6496 = vpack.c.bf16 %v6464, %v6464
        %v6497 = vpack.c.bf16 %v6465, %v6465
        %v6498 = vpack.c.bf16 %v6466, %v6466
        %v6499 = vpack.c.bf16 %v6467, %v6467
        %v6500 = vpack.c.bf16 %v6468, %v6468
        %v6501 = vpack.c.bf16 %v6469, %v6469
        %v6502 = vpack.c.bf16 %v6470, %v6470
        %v6503 = vpack.c.bf16 %v6471, %v6471
        %v6504 = vpack.c.bf16 %v6472, %v6472
        %v6505 = vpack.c.bf16 %v6473, %v6473
        %v6506 = vpack.c.bf16 %v6474, %v6474
        %v6507 = vpack.c.bf16 %v6475, %v6475
        %v6508 = vpack.c.bf16 %v6476, %v6476
        %v6509 = vpack.c.bf16 %v6477, %v6477
        %v6510 = vpack.c.bf16 %v6478, %v6478
        %v6511 = vpack.c.bf16 %v6479, %v6479
        %v6512 = vpack.c.bf16 %v6480, %v6480
        %v6513 = vpack.c.bf16 %v6481, %v6481
        %v6514 = vpack.c.bf16 %v6482, %v6482
        %v6515 = vpack.c.bf16 %v6483, %v6483
        %v6516 = vpack.c.bf16 %v6484, %v6484
        %v6517 = vpack.c.bf16 %v6485, %v6485
        %v6518 = vpack.c.bf16 %v6486, %v6486
        %v6519 = vpack.c.bf16 %v6487, %v6487
        %v6520 = vpack.c.bf16 %v6488, %v6488
        %v6521 = vpack.c.bf16 %v6489, %v6489
        %6554 = vrot.lane.b32.xlu0 %v6490, 64
        %v6555 = vpop.permute.xlu0 %6554
        %6556 = vrot.lane.b32.xlu0 %v6491, 64
        %v6557 = vpop.permute.xlu0 %6556
        %6558 = vrot.lane.b32.xlu0 %v6492, 64
        %v6559 = vpop.permute.xlu0 %6558
        %6560 = vrot.lane.b32.xlu0 %v6493, 64
        %v6561 = vpop.permute.xlu0 %6560
        %6562 = vrot.lane.b32.xlu0 %v6494, 64
        %v6563 = vpop.permute.xlu0 %6562
        %6564 = vrot.lane.b32.xlu0 %v6495, 64
        %v6565 = vpop.permute.xlu0 %6564
        %6566 = vrot.lane.b32.xlu0 %v6496, 64
        %v6567 = vpop.permute.xlu0 %6566
        %6568 = vrot.lane.b32.xlu0 %v6497, 64
        %v6569 = vpop.permute.xlu0 %6568
        %6570 = vrot.lane.b32.xlu0 %v6498, 64
        %v6571 = vpop.permute.xlu0 %6570
        %6572 = vrot.lane.b32.xlu0 %v6499, 64
        %v6573 = vpop.permute.xlu0 %6572
        %6574 = vrot.lane.b32.xlu0 %v6500, 64
        %v6575 = vpop.permute.xlu0 %6574
        %6576 = vrot.lane.b32.xlu0 %v6501, 64
        %v6577 = vpop.permute.xlu0 %6576
        %6578 = vrot.lane.b32.xlu0 %v6502, 64
        %v6579 = vpop.permute.xlu0 %6578
        %6580 = vrot.lane.b32.xlu0 %v6503, 64
        %v6581 = vpop.permute.xlu0 %6580
        %6582 = vrot.lane.b32.xlu0 %v6504, 64
        %v6583 = vpop.permute.xlu0 %6582
        %6584 = vrot.lane.b32.xlu0 %v6505, 64
        %v6585 = vpop.permute.xlu0 %6584
        %6586 = vrot.lane.b32.xlu0 %v6506, 64
        %v6587 = vpop.permute.xlu0 %6586
        %6588 = vrot.lane.b32.xlu0 %v6507, 64
        %v6589 = vpop.permute.xlu0 %6588
        %6590 = vrot.lane.b32.xlu0 %v6508, 64
        %v6591 = vpop.permute.xlu0 %6590
        %6592 = vrot.lane.b32.xlu0 %v6509, 64
        %v6593 = vpop.permute.xlu0 %6592
        %6594 = vrot.lane.b32.xlu0 %v6510, 64
        %v6595 = vpop.permute.xlu0 %6594
        %6596 = vrot.lane.b32.xlu0 %v6511, 64
        %v6597 = vpop.permute.xlu0 %6596
        %6598 = vrot.lane.b32.xlu0 %v6512, 64
        %v6599 = vpop.permute.xlu0 %6598
        %6600 = vrot.lane.b32.xlu0 %v6513, 64
        %v6601 = vpop.permute.xlu0 %6600
        %6602 = vrot.lane.b32.xlu0 %v6514, 64
        %v6603 = vpop.permute.xlu0 %6602
        %6604 = vrot.lane.b32.xlu0 %v6515, 64
        %v6605 = vpop.permute.xlu0 %6604
        %6606 = vrot.lane.b32.xlu0 %v6516, 64
        %v6607 = vpop.permute.xlu0 %6606
        %6608 = vrot.lane.b32.xlu0 %v6517, 64
        %v6609 = vpop.permute.xlu0 %6608
        %6610 = vrot.lane.b32.xlu0 %v6518, 64
        %v6611 = vpop.permute.xlu0 %6610
        %6612 = vrot.lane.b32.xlu0 %v6519, 64
        %v6613 = vpop.permute.xlu0 %6612
        %6614 = vrot.lane.b32.xlu0 %v6520, 64
        %v6615 = vpop.permute.xlu0 %6614
        %6616 = vrot.lane.b32.xlu0 %v6521, 64
        %v6617 = vpop.permute.xlu0 %6616
        %6650 = vst.msk [vmem:[#allocation3 + $0x8] sm:$0xf] %vm603, %v6555
        %6651 = vst.msk [vmem:[#allocation3 + $0x1c] sm:$0xf] %vm603, %v6557
        %6652 = vst.msk [vmem:[#allocation3 + $0x30] sm:$0xf] %vm603, %v6559
        %6653 = vst.msk [vmem:[#allocation3 + $0x44] sm:$0xf] %vm603, %v6561
        %6654 = vst.msk [vmem:[#allocation3 + $0x58] sm:$0xf] %vm603, %v6563
        %6655 = vst.msk [vmem:[#allocation3 + $0x6c] sm:$0xf] %vm603, %v6565
        %6656 = vst.msk [vmem:[#allocation3 + $0x80] sm:$0xf] %vm603, %v6567
        %6657 = vst.msk [vmem:[#allocation3 + $0x94] sm:$0xf] %vm603, %v6569
        %6658 = vst.msk [vmem:[#allocation3 + $0xa8] sm:$0xf] %vm603, %v6571
        %6659 = vst.msk [vmem:[#allocation3 + $0xbc] sm:$0xf] %vm603, %v6573
        %6660 = vst.msk [vmem:[#allocation3 + $0xd0] sm:$0xf] %vm603, %v6575
        %6661 = vst.msk [vmem:[#allocation3 + $0xe4] sm:$0xf] %vm603, %v6577
        %6662 = vst.msk [vmem:[#allocation3 + $0xf8] sm:$0xf] %vm603, %v6579
        %6663 = vst.msk [vmem:[#allocation3 + $0x10c] sm:$0xf] %vm603, %v6581
        %6664 = vst.msk [vmem:[#allocation3 + $0x120] sm:$0xf] %vm603, %v6583
        %6665 = vst.msk [vmem:[#allocation3 + $0x134] sm:$0xf] %vm603, %v6585
        %6666 = vst.msk [vmem:[#allocation3 + $0x148] sm:$0xf] %vm603, %v6587
        %6667 = vst.msk [vmem:[#allocation3 + $0x15c] sm:$0xf] %vm603, %v6589
        %6668 = vst.msk [vmem:[#allocation3 + $0x170] sm:$0xf] %vm603, %v6591
        %6669 = vst.msk [vmem:[#allocation3 + $0x184] sm:$0xf] %vm603, %v6593
        %6670 = vst.msk [vmem:[#allocation3 + $0x198] sm:$0xf] %vm603, %v6595
        %6671 = vst.msk [vmem:[#allocation3 + $0x1ac] sm:$0xf] %vm603, %v6597
        %6672 = vst.msk [vmem:[#allocation3 + $0x1c0] sm:$0xf] %vm603, %v6599
        %6673 = vst.msk [vmem:[#allocation3 + $0x1d4] sm:$0xf] %vm603, %v6601
        %6674 = vst.msk [vmem:[#allocation3 + $0x1e8] sm:$0xf] %vm603, %v6603
        %6675 = vst.msk [vmem:[#allocation3 + $0x1fc] sm:$0xf] %vm603, %v6605
        %6676 = vst.msk [vmem:[#allocation3 + $0x210] sm:$0xf] %vm603, %v6607
        %6677 = vst.msk [vmem:[#allocation3 + $0x224] sm:$0xf] %vm603, %v6609
        %6678 = vst.msk [vmem:[#allocation3 + $0x238] sm:$0xf] %vm603, %v6611
        %6679 = vst.msk [vmem:[#allocation3 + $0x24c] sm:$0xf] %vm603, %v6613
        %6680 = vst.msk [vmem:[#allocation3 + $0x260] sm:$0xf] %vm603, %v6615
        %6681 = vst.msk [vmem:[#allocation3 + $0x274] sm:$0xf] %vm603, %v6617
        %v6682 = vld [vmem:[%s1276] sm:$0xff]
        %v6683 = vld [vmem:[%s1276 + $0x8] sm:$0xff]
        %v6684 = vld [vmem:[%s1276 + $0x18] sm:$0xff]
        %v6685 = vld [vmem:[%s1276 + $0x20] sm:$0xff]
        %v6686 = vld [vmem:[%s1276 + $0x30] sm:$0xff]
        %v6687 = vld [vmem:[%s1276 + $0x38] sm:$0xff]
        %v6688 = vld [vmem:[%s1276 + $0x48] sm:$0xff]
        %v6689 = vld [vmem:[%s1276 + $0x50] sm:$0xff]
        %v6690 = vld [vmem:[%s1276 + $0x60] sm:$0xff]
        %v6691 = vld [vmem:[%s1276 + $0x68] sm:$0xff]
        %v6692 = vld [vmem:[%s1276 + $0x78] sm:$0xff]
        %v6693 = vld [vmem:[%s1276 + $0x80] sm:$0xff]
        %v6694 = vld [vmem:[%s1276 + $0x90] sm:$0xff]
        %v6695 = vld [vmem:[%s1276 + $0x98] sm:$0xff]
        %v6696 = vld [vmem:[%s1276 + $0xa8] sm:$0xff]
        %v6697 = vld [vmem:[%s1276 + $0xb0] sm:$0xff]
        %v6698 = vld [vmem:[%s1276 + $0xc0] sm:$0xff]
        %v6699 = vld [vmem:[%s1276 + $0xc8] sm:$0xff]
        %v6700 = vld [vmem:[%s1276 + $0xd8] sm:$0xff]
        %v6701 = vld [vmem:[%s1276 + $0xe0] sm:$0xff]
        %v6702 = vld [vmem:[%s1276 + $0xf0] sm:$0xff]
        %v6703 = vld [vmem:[%s1276 + $0xf8] sm:$0xff]
        %v6704 = vld [vmem:[%s1276 + $0x108] sm:$0xff]
        %v6705 = vld [vmem:[%s1276 + $0x110] sm:$0xff]
        %v6706 = vld [vmem:[%s1276 + $0x120] sm:$0xff]
        %v6707 = vld [vmem:[%s1276 + $0x128] sm:$0xff]
        %v6708 = vld [vmem:[%s1276 + $0x138] sm:$0xff]
        %v6709 = vld [vmem:[%s1276 + $0x140] sm:$0xff]
        %v6710 = vld [vmem:[%s1276 + $0x150] sm:$0xff]
        %v6711 = vld [vmem:[%s1276 + $0x158] sm:$0xff]
        %v6712 = vld [vmem:[%s1276 + $0x168] sm:$0xff]
        %v6713 = vld [vmem:[%s1276 + $0x170] sm:$0xff]
        %v6714 = vpack.c.bf16 %v6682, %v6682
        %v6715 = vpack.c.bf16 %v6683, %v6683
        %v6716 = vpack.c.bf16 %v6684, %v6684
        %v6717 = vpack.c.bf16 %v6685, %v6685
        %v6718 = vpack.c.bf16 %v6686, %v6686
        %v6719 = vpack.c.bf16 %v6687, %v6687
        %v6720 = vpack.c.bf16 %v6688, %v6688
        %v6721 = vpack.c.bf16 %v6689, %v6689
        %v6722 = vpack.c.bf16 %v6690, %v6690
        %v6723 = vpack.c.bf16 %v6691, %v6691
        %v6724 = vpack.c.bf16 %v6692, %v6692
        %v6725 = vpack.c.bf16 %v6693, %v6693
        %v6726 = vpack.c.bf16 %v6694, %v6694
        %v6727 = vpack.c.bf16 %v6695, %v6695
        %v6728 = vpack.c.bf16 %v6696, %v6696
        %v6729 = vpack.c.bf16 %v6697, %v6697
        %v6730 = vpack.c.bf16 %v6698, %v6698
        %v6731 = vpack.c.bf16 %v6699, %v6699
        %v6732 = vpack.c.bf16 %v6700, %v6700
        %v6733 = vpack.c.bf16 %v6701, %v6701
        %v6734 = vpack.c.bf16 %v6702, %v6702
        %v6735 = vpack.c.bf16 %v6703, %v6703
        %v6736 = vpack.c.bf16 %v6704, %v6704
        %v6737 = vpack.c.bf16 %v6705, %v6705
        %v6738 = vpack.c.bf16 %v6706, %v6706
        %v6739 = vpack.c.bf16 %v6707, %v6707
        %v6740 = vpack.c.bf16 %v6708, %v6708
        %v6741 = vpack.c.bf16 %v6709, %v6709
        %v6742 = vpack.c.bf16 %v6710, %v6710
        %v6743 = vpack.c.bf16 %v6711, %v6711
        %v6744 = vpack.c.bf16 %v6712, %v6712
        %v6745 = vpack.c.bf16 %v6713, %v6713
        %6746 = vst.msk [vmem:[#allocation3 + $0xc] sm:$0xf] %vm378, %v6714
        %6747 = vst.msk [vmem:[#allocation3 + $0x20] sm:$0xf] %vm378, %v6715
        %6748 = vst.msk [vmem:[#allocation3 + $0x34] sm:$0xf] %vm378, %v6716
        %6749 = vst.msk [vmem:[#allocation3 + $0x48] sm:$0xf] %vm378, %v6717
        %6750 = vst.msk [vmem:[#allocation3 + $0x5c] sm:$0xf] %vm378, %v6718
        %6751 = vst.msk [vmem:[#allocation3 + $0x70] sm:$0xf] %vm378, %v6719
        %6752 = vst.msk [vmem:[#allocation3 + $0x84] sm:$0xf] %vm378, %v6720
        %6753 = vst.msk [vmem:[#allocation3 + $0x98] sm:$0xf] %vm378, %v6721
        %6754 = vst.msk [vmem:[#allocation3 + $0xac] sm:$0xf] %vm378, %v6722
        %6755 = vst.msk [vmem:[#allocation3 + $0xc0] sm:$0xf] %vm378, %v6723
        %6756 = vst.msk [vmem:[#allocation3 + $0xd4] sm:$0xf] %vm378, %v6724
        %6757 = vst.msk [vmem:[#allocation3 + $0xe8] sm:$0xf] %vm378, %v6725
        %6758 = vst.msk [vmem:[#allocation3 + $0xfc] sm:$0xf] %vm378, %v6726
        %6759 = vst.msk [vmem:[#allocation3 + $0x110] sm:$0xf] %vm378, %v6727
        %6760 = vst.msk [vmem:[#allocation3 + $0x124] sm:$0xf] %vm378, %v6728
        %6761 = vst.msk [vmem:[#allocation3 + $0x138] sm:$0xf] %vm378, %v6729
        %6762 = vst.msk [vmem:[#allocation3 + $0x14c] sm:$0xf] %vm378, %v6730
        %6763 = vst.msk [vmem:[#allocation3 + $0x160] sm:$0xf] %vm378, %v6731
        %6764 = vst.msk [vmem:[#allocation3 + $0x174] sm:$0xf] %vm378, %v6732
        %6765 = vst.msk [vmem:[#allocation3 + $0x188] sm:$0xf] %vm378, %v6733
        %6766 = vst.msk [vmem:[#allocation3 + $0x19c] sm:$0xf] %vm378, %v6734
        %6767 = vst.msk [vmem:[#allocation3 + $0x1b0] sm:$0xf] %vm378, %v6735
        %6768 = vst.msk [vmem:[#allocation3 + $0x1c4] sm:$0xf] %vm378, %v6736
        %6769 = vst.msk [vmem:[#allocation3 + $0x1d8] sm:$0xf] %vm378, %v6737
        %6770 = vst.msk [vmem:[#allocation3 + $0x1ec] sm:$0xf] %vm378, %v6738
        %6771 = vst.msk [vmem:[#allocation3 + $0x200] sm:$0xf] %vm378, %v6739
        %6772 = vst.msk [vmem:[#allocation3 + $0x214] sm:$0xf] %vm378, %v6740
        %6773 = vst.msk [vmem:[#allocation3 + $0x228] sm:$0xf] %vm378, %v6741
        %6774 = vst.msk [vmem:[#allocation3 + $0x23c] sm:$0xf] %vm378, %v6742
        %6775 = vst.msk [vmem:[#allocation3 + $0x250] sm:$0xf] %vm378, %v6743
        %6776 = vst.msk [vmem:[#allocation3 + $0x264] sm:$0xf] %vm378, %v6744
        %6777 = vst.msk [vmem:[#allocation3 + $0x278] sm:$0xf] %vm378, %v6745
        %v6778 = vld [vmem:[%s1276 + $0x1] sm:$0xff]
        %v6779 = vld [vmem:[%s1276 + $0x9] sm:$0xff]
        %v6780 = vld [vmem:[%s1276 + $0x19] sm:$0xff]
        %v6781 = vld [vmem:[%s1276 + $0x21] sm:$0xff]
        %v6782 = vld [vmem:[%s1276 + $0x31] sm:$0xff]
        %v6783 = vld [vmem:[%s1276 + $0x39] sm:$0xff]
        %v6784 = vld [vmem:[%s1276 + $0x49] sm:$0xff]
        %v6785 = vld [vmem:[%s1276 + $0x51] sm:$0xff]
        %v6786 = vld [vmem:[%s1276 + $0x61] sm:$0xff]
        %v6787 = vld [vmem:[%s1276 + $0x69] sm:$0xff]
        %v6788 = vld [vmem:[%s1276 + $0x79] sm:$0xff]
        %v6789 = vld [vmem:[%s1276 + $0x81] sm:$0xff]
        %v6790 = vld [vmem:[%s1276 + $0x91] sm:$0xff]
        %v6791 = vld [vmem:[%s1276 + $0x99] sm:$0xff]
        %v6792 = vld [vmem:[%s1276 + $0xa9] sm:$0xff]
        %v6793 = vld [vmem:[%s1276 + $0xb1] sm:$0xff]
        %v6794 = vld [vmem:[%s1276 + $0xc1] sm:$0xff]
        %v6795 = vld [vmem:[%s1276 + $0xc9] sm:$0xff]
        %v6796 = vld [vmem:[%s1276 + $0xd9] sm:$0xff]
        %v6797 = vld [vmem:[%s1276 + $0xe1] sm:$0xff]
        %v6798 = vld [vmem:[%s1276 + $0xf1] sm:$0xff]
        %v6799 = vld [vmem:[%s1276 + $0xf9] sm:$0xff]
        %v6800 = vld [vmem:[%s1276 + $0x109] sm:$0xff]
        %v6801 = vld [vmem:[%s1276 + $0x111] sm:$0xff]
        %v6802 = vld [vmem:[%s1276 + $0x121] sm:$0xff]
        %v6803 = vld [vmem:[%s1276 + $0x129] sm:$0xff]
        %v6804 = vld [vmem:[%s1276 + $0x139] sm:$0xff]
        %v6805 = vld [vmem:[%s1276 + $0x141] sm:$0xff]
        %v6806 = vld [vmem:[%s1276 + $0x151] sm:$0xff]
        %v6807 = vld [vmem:[%s1276 + $0x159] sm:$0xff]
        %v6808 = vld [vmem:[%s1276 + $0x169] sm:$0xff]
        %v6809 = vld [vmem:[%s1276 + $0x171] sm:$0xff]
        %v6810 = vpack.c.bf16 %v6778, %v6778
        %v6811 = vpack.c.bf16 %v6779, %v6779
        %v6812 = vpack.c.bf16 %v6780, %v6780
        %v6813 = vpack.c.bf16 %v6781, %v6781
        %v6814 = vpack.c.bf16 %v6782, %v6782
        %v6815 = vpack.c.bf16 %v6783, %v6783
        %v6816 = vpack.c.bf16 %v6784, %v6784
        %v6817 = vpack.c.bf16 %v6785, %v6785
        %v6818 = vpack.c.bf16 %v6786, %v6786
        %v6819 = vpack.c.bf16 %v6787, %v6787
        %v6820 = vpack.c.bf16 %v6788, %v6788
        %v6821 = vpack.c.bf16 %v6789, %v6789
        %v6822 = vpack.c.bf16 %v6790, %v6790
        %v6823 = vpack.c.bf16 %v6791, %v6791
        %v6824 = vpack.c.bf16 %v6792, %v6792
        %v6825 = vpack.c.bf16 %v6793, %v6793
        %v6826 = vpack.c.bf16 %v6794, %v6794
        %v6827 = vpack.c.bf16 %v6795, %v6795
        %v6828 = vpack.c.bf16 %v6796, %v6796
        %v6829 = vpack.c.bf16 %v6797, %v6797
        %v6830 = vpack.c.bf16 %v6798, %v6798
        %v6831 = vpack.c.bf16 %v6799, %v6799
        %v6832 = vpack.c.bf16 %v6800, %v6800
        %v6833 = vpack.c.bf16 %v6801, %v6801
        %v6834 = vpack.c.bf16 %v6802, %v6802
        %v6835 = vpack.c.bf16 %v6803, %v6803
        %v6836 = vpack.c.bf16 %v6804, %v6804
        %v6837 = vpack.c.bf16 %v6805, %v6805
        %v6838 = vpack.c.bf16 %v6806, %v6806
        %v6839 = vpack.c.bf16 %v6807, %v6807
        %v6840 = vpack.c.bf16 %v6808, %v6808
        %v6841 = vpack.c.bf16 %v6809, %v6809
        %6874 = vrot.lane.b32.xlu0 %v6810, 64
        %v6875 = vpop.permute.xlu0 %6874
        %6876 = vrot.lane.b32.xlu0 %v6811, 64
        %v6877 = vpop.permute.xlu0 %6876
        %6878 = vrot.lane.b32.xlu0 %v6812, 64
        %v6879 = vpop.permute.xlu0 %6878
        %6880 = vrot.lane.b32.xlu0 %v6813, 64
        %v6881 = vpop.permute.xlu0 %6880
        %6882 = vrot.lane.b32.xlu0 %v6814, 64
        %v6883 = vpop.permute.xlu0 %6882
        %6884 = vrot.lane.b32.xlu0 %v6815, 64
        %v6885 = vpop.permute.xlu0 %6884
        %6886 = vrot.lane.b32.xlu0 %v6816, 64
        %v6887 = vpop.permute.xlu0 %6886
        %6888 = vrot.lane.b32.xlu0 %v6817, 64
        %v6889 = vpop.permute.xlu0 %6888
        %6890 = vrot.lane.b32.xlu0 %v6818, 64
        %v6891 = vpop.permute.xlu0 %6890
        %6892 = vrot.lane.b32.xlu0 %v6819, 64
        %v6893 = vpop.permute.xlu0 %6892
        %6894 = vrot.lane.b32.xlu0 %v6820, 64
        %v6895 = vpop.permute.xlu0 %6894
        %6896 = vrot.lane.b32.xlu0 %v6821, 64
        %v6897 = vpop.permute.xlu0 %6896
        %6898 = vrot.lane.b32.xlu0 %v6822, 64
        %v6899 = vpop.permute.xlu0 %6898
        %6900 = vrot.lane.b32.xlu0 %v6823, 64
        %v6901 = vpop.permute.xlu0 %6900
        %6902 = vrot.lane.b32.xlu0 %v6824, 64
        %v6903 = vpop.permute.xlu0 %6902
        %6904 = vrot.lane.b32.xlu0 %v6825, 64
        %v6905 = vpop.permute.xlu0 %6904
        %6906 = vrot.lane.b32.xlu0 %v6826, 64
        %v6907 = vpop.permute.xlu0 %6906
        %6908 = vrot.lane.b32.xlu0 %v6827, 64
        %v6909 = vpop.permute.xlu0 %6908
        %6910 = vrot.lane.b32.xlu0 %v6828, 64
        %v6911 = vpop.permute.xlu0 %6910
        %6912 = vrot.lane.b32.xlu0 %v6829, 64
        %v6913 = vpop.permute.xlu0 %6912
        %6914 = vrot.lane.b32.xlu0 %v6830, 64
        %v6915 = vpop.permute.xlu0 %6914
        %6916 = vrot.lane.b32.xlu0 %v6831, 64
        %v6917 = vpop.permute.xlu0 %6916
        %6918 = vrot.lane.b32.xlu0 %v6832, 64
        %v6919 = vpop.permute.xlu0 %6918
        %6920 = vrot.lane.b32.xlu0 %v6833, 64
        %v6921 = vpop.permute.xlu0 %6920
        %6922 = vrot.lane.b32.xlu0 %v6834, 64
        %v6923 = vpop.permute.xlu0 %6922
        %6924 = vrot.lane.b32.xlu0 %v6835, 64
        %v6925 = vpop.permute.xlu0 %6924
        %6926 = vrot.lane.b32.xlu0 %v6836, 64
        %v6927 = vpop.permute.xlu0 %6926
        %6928 = vrot.lane.b32.xlu0 %v6837, 64
        %v6929 = vpop.permute.xlu0 %6928
        %6930 = vrot.lane.b32.xlu0 %v6838, 64
        %v6931 = vpop.permute.xlu0 %6930
        %6932 = vrot.lane.b32.xlu0 %v6839, 64
        %v6933 = vpop.permute.xlu0 %6932
        %6934 = vrot.lane.b32.xlu0 %v6840, 64
        %v6935 = vpop.permute.xlu0 %6934
        %6936 = vrot.lane.b32.xlu0 %v6841, 64
        %v6937 = vpop.permute.xlu0 %6936
        %6970 = vst.msk [vmem:[#allocation3 + $0xc] sm:$0xf] %vm603, %v6875
        %6971 = vst.msk [vmem:[#allocation3 + $0x20] sm:$0xf] %vm603, %v6877
        %6972 = vst.msk [vmem:[#allocation3 + $0x34] sm:$0xf] %vm603, %v6879
        %6973 = vst.msk [vmem:[#allocation3 + $0x48] sm:$0xf] %vm603, %v6881
        %6974 = vst.msk [vmem:[#allocation3 + $0x5c] sm:$0xf] %vm603, %v6883
        %6975 = vst.msk [vmem:[#allocation3 + $0x70] sm:$0xf] %vm603, %v6885
        %6976 = vst.msk [vmem:[#allocation3 + $0x84] sm:$0xf] %vm603, %v6887
        %6977 = vst.msk [vmem:[#allocation3 + $0x98] sm:$0xf] %vm603, %v6889
        %6978 = vst.msk [vmem:[#allocation3 + $0xac] sm:$0xf] %vm603, %v6891
        %6979 = vst.msk [vmem:[#allocation3 + $0xc0] sm:$0xf] %vm603, %v6893
        %6980 = vst.msk [vmem:[#allocation3 + $0xd4] sm:$0xf] %vm603, %v6895
        %6981 = vst.msk [vmem:[#allocation3 + $0xe8] sm:$0xf] %vm603, %v6897
        %6982 = vst.msk [vmem:[#allocation3 + $0xfc] sm:$0xf] %vm603, %v6899
        %6983 = vst.msk [vmem:[#allocation3 + $0x110] sm:$0xf] %vm603, %v6901
        %6984 = vst.msk [vmem:[#allocation3 + $0x124] sm:$0xf] %vm603, %v6903
        %6985 = vst.msk [vmem:[#allocation3 + $0x138] sm:$0xf] %vm603, %v6905
        %6986 = vst.msk [vmem:[#allocation3 + $0x14c] sm:$0xf] %vm603, %v6907
        %6987 = vst.msk [vmem:[#allocation3 + $0x160] sm:$0xf] %vm603, %v6909
        %6988 = vst.msk [vmem:[#allocation3 + $0x174] sm:$0xf] %vm603, %v6911
        %6989 = vst.msk [vmem:[#allocation3 + $0x188] sm:$0xf] %vm603, %v6913
        %6990 = vst.msk [vmem:[#allocation3 + $0x19c] sm:$0xf] %vm603, %v6915
        %6991 = vst.msk [vmem:[#allocation3 + $0x1b0] sm:$0xf] %vm603, %v6917
        %6992 = vst.msk [vmem:[#allocation3 + $0x1c4] sm:$0xf] %vm603, %v6919
        %6993 = vst.msk [vmem:[#allocation3 + $0x1d8] sm:$0xf] %vm603, %v6921
        %6994 = vst.msk [vmem:[#allocation3 + $0x1ec] sm:$0xf] %vm603, %v6923
        %6995 = vst.msk [vmem:[#allocation3 + $0x200] sm:$0xf] %vm603, %v6925
        %6996 = vst.msk [vmem:[#allocation3 + $0x214] sm:$0xf] %vm603, %v6927
        %6997 = vst.msk [vmem:[#allocation3 + $0x228] sm:$0xf] %vm603, %v6929
        %6998 = vst.msk [vmem:[#allocation3 + $0x23c] sm:$0xf] %vm603, %v6931
        %6999 = vst.msk [vmem:[#allocation3 + $0x250] sm:$0xf] %vm603, %v6933
        %7000 = vst.msk [vmem:[#allocation3 + $0x264] sm:$0xf] %vm603, %v6935
        %7001 = vst.msk [vmem:[#allocation3 + $0x278] sm:$0xf] %vm603, %v6937
        %v7002 = vld [vmem:[%s1276 + $0x2] sm:$0xff]
        %v7003 = vld [vmem:[%s1276 + $0xa] sm:$0xff]
        %v7004 = vld [vmem:[%s1276 + $0x1a] sm:$0xff]
        %v7005 = vld [vmem:[%s1276 + $0x22] sm:$0xff]
        %v7006 = vld [vmem:[%s1276 + $0x32] sm:$0xff]
        %v7007 = vld [vmem:[%s1276 + $0x3a] sm:$0xff]
        %v7008 = vld [vmem:[%s1276 + $0x4a] sm:$0xff]
        %v7009 = vld [vmem:[%s1276 + $0x52] sm:$0xff]
        %v7010 = vld [vmem:[%s1276 + $0x62] sm:$0xff]
        %v7011 = vld [vmem:[%s1276 + $0x6a] sm:$0xff]
        %v7012 = vld [vmem:[%s1276 + $0x7a] sm:$0xff]
        %v7013 = vld [vmem:[%s1276 + $0x82] sm:$0xff]
        %v7014 = vld [vmem:[%s1276 + $0x92] sm:$0xff]
        %v7015 = vld [vmem:[%s1276 + $0x9a] sm:$0xff]
        %v7016 = vld [vmem:[%s1276 + $0xaa] sm:$0xff]
        %v7017 = vld [vmem:[%s1276 + $0xb2] sm:$0xff]
        %v7018 = vld [vmem:[%s1276 + $0xc2] sm:$0xff]
        %v7019 = vld [vmem:[%s1276 + $0xca] sm:$0xff]
        %v7020 = vld [vmem:[%s1276 + $0xda] sm:$0xff]
        %v7021 = vld [vmem:[%s1276 + $0xe2] sm:$0xff]
        %v7022 = vld [vmem:[%s1276 + $0xf2] sm:$0xff]
        %v7023 = vld [vmem:[%s1276 + $0xfa] sm:$0xff]
        %v7024 = vld [vmem:[%s1276 + $0x10a] sm:$0xff]
        %v7025 = vld [vmem:[%s1276 + $0x112] sm:$0xff]
        %v7026 = vld [vmem:[%s1276 + $0x122] sm:$0xff]
        %v7027 = vld [vmem:[%s1276 + $0x12a] sm:$0xff]
        %v7028 = vld [vmem:[%s1276 + $0x13a] sm:$0xff]
        %v7029 = vld [vmem:[%s1276 + $0x142] sm:$0xff]
        %v7030 = vld [vmem:[%s1276 + $0x152] sm:$0xff]
        %v7031 = vld [vmem:[%s1276 + $0x15a] sm:$0xff]
        %v7032 = vld [vmem:[%s1276 + $0x16a] sm:$0xff]
        %v7033 = vld [vmem:[%s1276 + $0x172] sm:$0xff]
        %v7034 = vpack.c.bf16 %v7002, %v7002
        %v7035 = vpack.c.bf16 %v7003, %v7003
        %v7036 = vpack.c.bf16 %v7004, %v7004
        %v7037 = vpack.c.bf16 %v7005, %v7005
        %v7038 = vpack.c.bf16 %v7006, %v7006
        %v7039 = vpack.c.bf16 %v7007, %v7007
        %v7040 = vpack.c.bf16 %v7008, %v7008
        %v7041 = vpack.c.bf16 %v7009, %v7009
        %v7042 = vpack.c.bf16 %v7010, %v7010
        %v7043 = vpack.c.bf16 %v7011, %v7011
        %v7044 = vpack.c.bf16 %v7012, %v7012
        %v7045 = vpack.c.bf16 %v7013, %v7013
        %v7046 = vpack.c.bf16 %v7014, %v7014
        %v7047 = vpack.c.bf16 %v7015, %v7015
        %v7048 = vpack.c.bf16 %v7016, %v7016
        %v7049 = vpack.c.bf16 %v7017, %v7017
        %v7050 = vpack.c.bf16 %v7018, %v7018
        %v7051 = vpack.c.bf16 %v7019, %v7019
        %v7052 = vpack.c.bf16 %v7020, %v7020
        %v7053 = vpack.c.bf16 %v7021, %v7021
        %v7054 = vpack.c.bf16 %v7022, %v7022
        %v7055 = vpack.c.bf16 %v7023, %v7023
        %v7056 = vpack.c.bf16 %v7024, %v7024
        %v7057 = vpack.c.bf16 %v7025, %v7025
        %v7058 = vpack.c.bf16 %v7026, %v7026
        %v7059 = vpack.c.bf16 %v7027, %v7027
        %v7060 = vpack.c.bf16 %v7028, %v7028
        %v7061 = vpack.c.bf16 %v7029, %v7029
        %v7062 = vpack.c.bf16 %v7030, %v7030
        %v7063 = vpack.c.bf16 %v7031, %v7031
        %v7064 = vpack.c.bf16 %v7032, %v7032
        %v7065 = vpack.c.bf16 %v7033, %v7033
        %7066 = vst.msk [vmem:[#allocation3 + $0x10] sm:$0xf] %vm378, %v7034
        %7067 = vst.msk [vmem:[#allocation3 + $0x24] sm:$0xf] %vm378, %v7035
        %7068 = vst.msk [vmem:[#allocation3 + $0x38] sm:$0xf] %vm378, %v7036
        %7069 = vst.msk [vmem:[#allocation3 + $0x4c] sm:$0xf] %vm378, %v7037
        %7070 = vst.msk [vmem:[#allocation3 + $0x60] sm:$0xf] %vm378, %v7038
        %7071 = vst.msk [vmem:[#allocation3 + $0x74] sm:$0xf] %vm378, %v7039
        %7072 = vst.msk [vmem:[#allocation3 + $0x88] sm:$0xf] %vm378, %v7040
        %7073 = vst.msk [vmem:[#allocation3 + $0x9c] sm:$0xf] %vm378, %v7041
        %7074 = vst.msk [vmem:[#allocation3 + $0xb0] sm:$0xf] %vm378, %v7042
        %7075 = vst.msk [vmem:[#allocation3 + $0xc4] sm:$0xf] %vm378, %v7043
        %7076 = vst.msk [vmem:[#allocation3 + $0xd8] sm:$0xf] %vm378, %v7044
        %7077 = vst.msk [vmem:[#allocation3 + $0xec] sm:$0xf] %vm378, %v7045
        %7078 = vst.msk [vmem:[#allocation3 + $0x100] sm:$0xf] %vm378, %v7046
        %7079 = vst.msk [vmem:[#allocation3 + $0x114] sm:$0xf] %vm378, %v7047
        %7080 = vst.msk [vmem:[#allocation3 + $0x128] sm:$0xf] %vm378, %v7048
        %7081 = vst.msk [vmem:[#allocation3 + $0x13c] sm:$0xf] %vm378, %v7049
        %7082 = vst.msk [vmem:[#allocation3 + $0x150] sm:$0xf] %vm378, %v7050
        %7083 = vst.msk [vmem:[#allocation3 + $0x164] sm:$0xf] %vm378, %v7051
        %7084 = vst.msk [vmem:[#allocation3 + $0x178] sm:$0xf] %vm378, %v7052
        %7085 = vst.msk [vmem:[#allocation3 + $0x18c] sm:$0xf] %vm378, %v7053
        %7086 = vst.msk [vmem:[#allocation3 + $0x1a0] sm:$0xf] %vm378, %v7054
        %7087 = vst.msk [vmem:[#allocation3 + $0x1b4] sm:$0xf] %vm378, %v7055
        %7088 = vst.msk [vmem:[#allocation3 + $0x1c8] sm:$0xf] %vm378, %v7056
        %7089 = vst.msk [vmem:[#allocation3 + $0x1dc] sm:$0xf] %vm378, %v7057
        %7090 = vst.msk [vmem:[#allocation3 + $0x1f0] sm:$0xf] %vm378, %v7058
        %7091 = vst.msk [vmem:[#allocation3 + $0x204] sm:$0xf] %vm378, %v7059
        %7092 = vst.msk [vmem:[#allocation3 + $0x218] sm:$0xf] %vm378, %v7060
        %7093 = vst.msk [vmem:[#allocation3 + $0x22c] sm:$0xf] %vm378, %v7061
        %7094 = vst.msk [vmem:[#allocation3 + $0x240] sm:$0xf] %vm378, %v7062
        %7095 = vst.msk [vmem:[#allocation3 + $0x254] sm:$0xf] %vm378, %v7063
        %7096 = vst.msk [vmem:[#allocation3 + $0x268] sm:$0xf] %vm378, %v7064
        %7097 = vst.msk [vmem:[#allocation3 + $0x27c] sm:$0xf] %vm378, %v7065
        %v7098 = vld [vmem:[#allocation3] sm:$0xff]
        %v7099 = vld [vmem:[#allocation3 + $0x8] sm:$0xff]
        %v7100 = vld [vmem:[#allocation3 + $0x10] sm:$0xf]
        %v7101 = vld [vmem:[#allocation3 + $0x14] sm:$0xff]
        %v7102 = vld [vmem:[#allocation3 + $0x1c] sm:$0xff]
        %v7103 = vld [vmem:[#allocation3 + $0x24] sm:$0xf]
        %v7104 = vld [vmem:[#allocation3 + $0x28] sm:$0xff]
        %v7105 = vld [vmem:[#allocation3 + $0x30] sm:$0xff]
        %v7106 = vld [vmem:[#allocation3 + $0x38] sm:$0xf]
        %v7107 = vld [vmem:[#allocation3 + $0x3c] sm:$0xff]
        %v7108 = vld [vmem:[#allocation3 + $0x44] sm:$0xff]
        %v7109 = vld [vmem:[#allocation3 + $0x4c] sm:$0xf]
        %v7110 = vld [vmem:[#allocation3 + $0x50] sm:$0xff]
        %v7111 = vld [vmem:[#allocation3 + $0x58] sm:$0xff]
        %v7112 = vld [vmem:[#allocation3 + $0x60] sm:$0xf]
        %v7113 = vld [vmem:[#allocation3 + $0x64] sm:$0xff]
        %v7114 = vld [vmem:[#allocation3 + $0x6c] sm:$0xff]
        %v7115 = vld [vmem:[#allocation3 + $0x74] sm:$0xf]
        %v7116 = vld [vmem:[#allocation3 + $0x78] sm:$0xff]
        %v7117 = vld [vmem:[#allocation3 + $0x80] sm:$0xff]
        %v7118 = vld [vmem:[#allocation3 + $0x88] sm:$0xf]
        %v7119 = vld [vmem:[#allocation3 + $0x8c] sm:$0xff]
        %v7120 = vld [vmem:[#allocation3 + $0x94] sm:$0xff]
        %v7121 = vld [vmem:[#allocation3 + $0x9c] sm:$0xf]
        %v7122 = vld [vmem:[#allocation3 + $0xa0] sm:$0xff]
        %v7123 = vld [vmem:[#allocation3 + $0xa8] sm:$0xff]
        %v7124 = vld [vmem:[#allocation3 + $0xb0] sm:$0xf]
        %v7125 = vld [vmem:[#allocation3 + $0xb4] sm:$0xff]
        %v7126 = vld [vmem:[#allocation3 + $0xbc] sm:$0xff]
        %v7127 = vld [vmem:[#allocation3 + $0xc4] sm:$0xf]
        %v7128 = vld [vmem:[#allocation3 + $0xc8] sm:$0xff]
        %v7129 = vld [vmem:[#allocation3 + $0xd0] sm:$0xff]
        %v7130 = vld [vmem:[#allocation3 + $0xd8] sm:$0xf]
        %v7131 = vld [vmem:[#allocation3 + $0xdc] sm:$0xff]
        %v7132 = vld [vmem:[#allocation3 + $0xe4] sm:$0xff]
        %v7133 = vld [vmem:[#allocation3 + $0xec] sm:$0xf]
        %v7134 = vld [vmem:[#allocation3 + $0xf0] sm:$0xff]
        %v7135 = vld [vmem:[#allocation3 + $0xf8] sm:$0xff]
        %v7136 = vld [vmem:[#allocation3 + $0x100] sm:$0xf]
        %v7137 = vld [vmem:[#allocation3 + $0x104] sm:$0xff]
        %v7138 = vld [vmem:[#allocation3 + $0x10c] sm:$0xff]
        %v7139 = vld [vmem:[#allocation3 + $0x114] sm:$0xf]
        %v7140 = vld [vmem:[#allocation3 + $0x118] sm:$0xff]
        %v7141 = vld [vmem:[#allocation3 + $0x120] sm:$0xff]
        %v7142 = vld [vmem:[#allocation3 + $0x128] sm:$0xf]
        %v7143 = vld [vmem:[#allocation3 + $0x12c] sm:$0xff]
        %v7144 = vld [vmem:[#allocation3 + $0x134] sm:$0xff]
        %v7145 = vld [vmem:[#allocation3 + $0x13c] sm:$0xf]
        %v7146 = vld [vmem:[#allocation3 + $0x140] sm:$0xff]
        %v7147 = vld [vmem:[#allocation3 + $0x148] sm:$0xff]
        %v7148 = vld [vmem:[#allocation3 + $0x150] sm:$0xf]
        %v7149 = vld [vmem:[#allocation3 + $0x154] sm:$0xff]
        %v7150 = vld [vmem:[#allocation3 + $0x15c] sm:$0xff]
        %v7151 = vld [vmem:[#allocation3 + $0x164] sm:$0xf]
        %v7152 = vld [vmem:[#allocation3 + $0x168] sm:$0xff]
        %v7153 = vld [vmem:[#allocation3 + $0x170] sm:$0xff]
        %v7154 = vld [vmem:[#allocation3 + $0x178] sm:$0xf]
        %v7155 = vld [vmem:[#allocation3 + $0x17c] sm:$0xff]
        %v7156 = vld [vmem:[#allocation3 + $0x184] sm:$0xff]
        %v7157 = vld [vmem:[#allocation3 + $0x18c] sm:$0xf]
        %v7158 = vld [vmem:[#allocation3 + $0x190] sm:$0xff]
        %v7159 = vld [vmem:[#allocation3 + $0x198] sm:$0xff]
        %v7160 = vld [vmem:[#allocation3 + $0x1a0] sm:$0xf]
        %v7161 = vld [vmem:[#allocation3 + $0x1a4] sm:$0xff]
        %v7162 = vld [vmem:[#allocation3 + $0x1ac] sm:$0xff]
        %v7163 = vld [vmem:[#allocation3 + $0x1b4] sm:$0xf]
        %v7164 = vld [vmem:[#allocation3 + $0x1b8] sm:$0xff]
        %v7165 = vld [vmem:[#allocation3 + $0x1c0] sm:$0xff]
        %v7166 = vld [vmem:[#allocation3 + $0x1c8] sm:$0xf]
        %v7167 = vld [vmem:[#allocation3 + $0x1cc] sm:$0xff]
        %v7168 = vld [vmem:[#allocation3 + $0x1d4] sm:$0xff]
        %v7169 = vld [vmem:[#allocation3 + $0x1dc] sm:$0xf]
        %v7170 = vld [vmem:[#allocation3 + $0x1e0] sm:$0xff]
        %v7171 = vld [vmem:[#allocation3 + $0x1e8] sm:$0xff]
        %v7172 = vld [vmem:[#allocation3 + $0x1f0] sm:$0xf]
        %v7173 = vld [vmem:[#allocation3 + $0x1f4] sm:$0xff]
        %v7174 = vld [vmem:[#allocation3 + $0x1fc] sm:$0xff]
        %v7175 = vld [vmem:[#allocation3 + $0x204] sm:$0xf]
        %v7176 = vld [vmem:[#allocation3 + $0x208] sm:$0xff]
        %v7177 = vld [vmem:[#allocation3 + $0x210] sm:$0xff]
        %v7178 = vld [vmem:[#allocation3 + $0x218] sm:$0xf]
        %v7179 = vld [vmem:[#allocation3 + $0x21c] sm:$0xff]
        %v7180 = vld [vmem:[#allocation3 + $0x224] sm:$0xff]
        %v7181 = vld [vmem:[#allocation3 + $0x22c] sm:$0xf]
        %v7182 = vld [vmem:[#allocation3 + $0x230] sm:$0xff]
        %v7183 = vld [vmem:[#allocation3 + $0x238] sm:$0xff]
        %v7184 = vld [vmem:[#allocation3 + $0x240] sm:$0xf]
        %v7185 = vld [vmem:[#allocation3 + $0x244] sm:$0xff]
        %v7186 = vld [vmem:[#allocation3 + $0x24c] sm:$0xff]
        %v7187 = vld [vmem:[#allocation3 + $0x254] sm:$0xf]
        %v7188 = vld [vmem:[#allocation3 + $0x258] sm:$0xff]
        %v7189 = vld [vmem:[#allocation3 + $0x260] sm:$0xff]
        %v7190 = vld [vmem:[#allocation3 + $0x268] sm:$0xf]
        %v7191 = vld [vmem:[#allocation3 + $0x26c] sm:$0xff]
        %v7192 = vld [vmem:[#allocation3 + $0x274] sm:$0xff]
        %v7193 = vld [vmem:[#allocation3 + $0x27c] sm:$0xf]
        %v7194 = vld [vmem:[%s1] sm:$0xf]
        %v7195 = vld [vmem:[%s1 + $0x4] sm:$0xf]
        %v7196 = vld [vmem:[%s1 + $0x8] sm:$0xf]
        %v7197 = vld [vmem:[%s1 + $0xc] sm:$0xf]
        %v7198 = vld [vmem:[%s1 + $0x10] sm:$0xf]
        %v7199 = vld [vmem:[%s1 + $0x14] sm:$0xf]
        %v7200 = vld [vmem:[%s1 + $0x18] sm:$0xf]
        %v7201 = vld [vmem:[%s1 + $0x1c] sm:$0xf]
        %v7202 = vld [vmem:[%s1 + $0x20] sm:$0xf]
        %v7203 = vld [vmem:[%s1 + $0x24] sm:$0xf]
        %v7204 = vld [vmem:[%s1 + $0x28] sm:$0xf]
        %v7205 = vld [vmem:[%s1 + $0x2c] sm:$0xf]
        %v7206 = vld [vmem:[%s1 + $0x30] sm:$0xf]
        %v7207 = vld [vmem:[%s1 + $0x34] sm:$0xf]
        %v7208 = vld [vmem:[%s1 + $0x38] sm:$0xf]
        %v7209 = vld [vmem:[%s1 + $0x3c] sm:$0xf]
        %v7210 = vld [vmem:[%s1 + $0x40] sm:$0xf]
        %v7211 = vld [vmem:[%s1 + $0x44] sm:$0xf]
        %v7212 = vld [vmem:[%s1 + $0x48] sm:$0xf]
        %v7213 = vld [vmem:[%s1 + $0x4c] sm:$0xf]
        %v7214 = vld [vmem:[%s1 + $0x50] sm:$0xf]
        %v7215 = vld [vmem:[%s1 + $0x54] sm:$0xf]
        %v7216 = vld [vmem:[%s1 + $0x58] sm:$0xf]
        %v7217 = vld [vmem:[%s1 + $0x5c] sm:$0xf]
        %v7218 = vld [vmem:[%s1 + $0x60] sm:$0xf]
        %v7219 = vld [vmem:[%s1 + $0x64] sm:$0xf]
        %v7220 = vld [vmem:[%s1 + $0x68] sm:$0xf]
        %v7221 = vld [vmem:[%s1 + $0x6c] sm:$0xf]
        %v7222 = vld [vmem:[%s1 + $0x70] sm:$0xf]
        %v7223 = vld [vmem:[%s1 + $0x74] sm:$0xf]
        %v7224 = vld [vmem:[%s1 + $0x78] sm:$0xf]
        %v7225 = vld [vmem:[%s1 + $0x7c] sm:$0xf]
        %v7226 = vld [vmem:[%s1 + $0x80] sm:$0xf]
        %v7227 = vld [vmem:[%s1 + $0x84] sm:$0xf]
        %v7228 = vld [vmem:[%s1 + $0x88] sm:$0xf]
        %v7229 = vld [vmem:[%s1 + $0x8c] sm:$0xf]
        %v7230 = vld [vmem:[%s1 + $0x90] sm:$0xf]
        %v7231 = vld [vmem:[%s1 + $0x94] sm:$0xf]
        %v7232 = vld [vmem:[%s1 + $0x98] sm:$0xf]
        %v7233 = vld [vmem:[%s1 + $0x9c] sm:$0xf]
        %v7234 = vld [vmem:[%s1 + $0xa0] sm:$0xf]
        %v7235 = vld [vmem:[%s1 + $0xa4] sm:$0xf]
        %v7236 = vld [vmem:[%s1 + $0xa8] sm:$0xf]
        %v7237 = vld [vmem:[%s1 + $0xac] sm:$0xf]
        %v7238 = vld [vmem:[%s1 + $0xb0] sm:$0xf]
        %v7239 = vld [vmem:[%s1 + $0xb4] sm:$0xf]
        %v7240 = vld [vmem:[%s1 + $0xb8] sm:$0xf]
        %v7241 = vld [vmem:[%s1 + $0xbc] sm:$0xf]
        %v7242 = vld [vmem:[%s1 + $0xc0] sm:$0xf]
        %v7243 = vld [vmem:[%s1 + $0xc4] sm:$0xf]
        %v7244 = vld [vmem:[%s1 + $0xc8] sm:$0xf]
        %v7245 = vld [vmem:[%s1 + $0xcc] sm:$0xf]
        %v7246 = vld [vmem:[%s1 + $0xd0] sm:$0xf]
        %v7247 = vld [vmem:[%s1 + $0xd4] sm:$0xf]
        %v7248 = vld [vmem:[%s1 + $0xd8] sm:$0xf]
        %v7249 = vld [vmem:[%s1 + $0xdc] sm:$0xf]
        %v7250 = vld [vmem:[%s1 + $0xe0] sm:$0xf]
        %v7251 = vld [vmem:[%s1 + $0xe4] sm:$0xf]
        %v7252 = vld [vmem:[%s1 + $0xe8] sm:$0xf]
        %v7253 = vld [vmem:[%s1 + $0xec] sm:$0xf]
        %v7254 = vld [vmem:[%s1 + $0xf0] sm:$0xf]
        %v7255 = vld [vmem:[%s1 + $0xf4] sm:$0xf]
        %v7256 = vld [vmem:[%s1 + $0xf8] sm:$0xf]
        %v7257 = vld [vmem:[%s1 + $0xfc] sm:$0xf]
        %v7258 = vld [vmem:[%s1 + $0x100] sm:$0xf]
        %v7259 = vld [vmem:[%s1 + $0x104] sm:$0xf]
        %v7260 = vld [vmem:[%s1 + $0x108] sm:$0xf]
        %v7261 = vld [vmem:[%s1 + $0x10c] sm:$0xf]
        %v7262 = vld [vmem:[%s1 + $0x110] sm:$0xf]
        %v7263 = vld [vmem:[%s1 + $0x114] sm:$0xf]
        %v7264 = vld [vmem:[%s1 + $0x118] sm:$0xf]
        %v7265 = vld [vmem:[%s1 + $0x11c] sm:$0xf]
        %v7362 = vunpack.c.l.b16 %v7098
        %v7363 = vunpack.c.h.b16 %v7098
        %v7364 = vunpack.c.l.b16 %v7099
        %v7365 = vunpack.c.h.b16 %v7099
        %v7366 = vunpack.c.l.b16 %v7100
        %v7367 = vunpack.c.l.b16 %v7101
        %v7368 = vunpack.c.h.b16 %v7101
        %v7369 = vunpack.c.l.b16 %v7102
        %v7370 = vunpack.c.h.b16 %v7102
        %v7371 = vunpack.c.l.b16 %v7103
        %v7372 = vunpack.c.l.b16 %v7104
        %v7373 = vunpack.c.h.b16 %v7104
        %v7374 = vunpack.c.l.b16 %v7105
        %v7375 = vunpack.c.h.b16 %v7105
        %v7376 = vunpack.c.l.b16 %v7106
        %v7377 = vunpack.c.l.b16 %v7107
        %v7378 = vunpack.c.h.b16 %v7107
        %v7379 = vunpack.c.l.b16 %v7108
        %v7380 = vunpack.c.h.b16 %v7108
        %v7381 = vunpack.c.l.b16 %v7109
        %v7382 = vunpack.c.l.b16 %v7110
        %v7383 = vunpack.c.h.b16 %v7110
        %v7384 = vunpack.c.l.b16 %v7111
        %v7385 = vunpack.c.h.b16 %v7111
        %v7386 = vunpack.c.l.b16 %v7112
        %v7387 = vunpack.c.l.b16 %v7113
        %v7388 = vunpack.c.h.b16 %v7113
        %v7389 = vunpack.c.l.b16 %v7114
        %v7390 = vunpack.c.h.b16 %v7114
        %v7391 = vunpack.c.l.b16 %v7115
        %v7392 = vunpack.c.l.b16 %v7116
        %v7393 = vunpack.c.h.b16 %v7116
        %v7394 = vunpack.c.l.b16 %v7117
        %v7395 = vunpack.c.h.b16 %v7117
        %v7396 = vunpack.c.l.b16 %v7118
        %v7397 = vunpack.c.l.b16 %v7119
        %v7398 = vunpack.c.h.b16 %v7119
        %v7399 = vunpack.c.l.b16 %v7120
        %v7400 = vunpack.c.h.b16 %v7120
        %v7401 = vunpack.c.l.b16 %v7121
        %v7402 = vunpack.c.l.b16 %v7122
        %v7403 = vunpack.c.h.b16 %v7122
        %v7404 = vunpack.c.l.b16 %v7123
        %v7405 = vunpack.c.h.b16 %v7123
        %v7406 = vunpack.c.l.b16 %v7124
        %v7407 = vunpack.c.l.b16 %v7125
        %v7408 = vunpack.c.h.b16 %v7125
        %v7409 = vunpack.c.l.b16 %v7126
        %v7410 = vunpack.c.h.b16 %v7126
        %v7411 = vunpack.c.l.b16 %v7127
        %v7412 = vunpack.c.l.b16 %v7128
        %v7413 = vunpack.c.h.b16 %v7128
        %v7414 = vunpack.c.l.b16 %v7129
        %v7415 = vunpack.c.h.b16 %v7129
        %v7416 = vunpack.c.l.b16 %v7130
        %v7417 = vunpack.c.l.b16 %v7131
        %v7418 = vunpack.c.h.b16 %v7131
        %v7419 = vunpack.c.l.b16 %v7132
        %v7420 = vunpack.c.h.b16 %v7132
        %v7421 = vunpack.c.l.b16 %v7133
        %v7422 = vunpack.c.l.b16 %v7134
        %v7423 = vunpack.c.h.b16 %v7134
        %v7424 = vunpack.c.l.b16 %v7135
        %v7425 = vunpack.c.h.b16 %v7135
        %v7426 = vunpack.c.l.b16 %v7136
        %v7427 = vunpack.c.l.b16 %v7137
        %v7428 = vunpack.c.h.b16 %v7137
        %v7429 = vunpack.c.l.b16 %v7138
        %v7430 = vunpack.c.h.b16 %v7138
        %v7431 = vunpack.c.l.b16 %v7139
        %v7432 = vunpack.c.l.b16 %v7140
        %v7433 = vunpack.c.h.b16 %v7140
        %v7434 = vunpack.c.l.b16 %v7141
        %v7435 = vunpack.c.h.b16 %v7141
        %v7436 = vunpack.c.l.b16 %v7142
        %v7437 = vunpack.c.l.b16 %v7143
        %v7438 = vunpack.c.h.b16 %v7143
        %v7439 = vunpack.c.l.b16 %v7144
        %v7440 = vunpack.c.h.b16 %v7144
        %v7441 = vunpack.c.l.b16 %v7145
        %v7442 = vunpack.c.l.b16 %v7146
        %v7443 = vunpack.c.h.b16 %v7146
        %v7444 = vunpack.c.l.b16 %v7147
        %v7445 = vunpack.c.h.b16 %v7147
        %v7446 = vunpack.c.l.b16 %v7148
        %v7447 = vunpack.c.l.b16 %v7149
        %v7448 = vunpack.c.h.b16 %v7149
        %v7449 = vunpack.c.l.b16 %v7150
        %v7450 = vunpack.c.h.b16 %v7150
        %v7451 = vunpack.c.l.b16 %v7151
        %v7452 = vunpack.c.l.b16 %v7152
        %v7453 = vunpack.c.h.b16 %v7152
        %v7454 = vunpack.c.l.b16 %v7153
        %v7455 = vunpack.c.h.b16 %v7153
        %v7456 = vunpack.c.l.b16 %v7154
        %v7457 = vunpack.c.l.b16 %v7155
        %v7458 = vunpack.c.h.b16 %v7155
        %v7459 = vunpack.c.l.b16 %v7156
        %v7460 = vunpack.c.h.b16 %v7156
        %v7461 = vunpack.c.l.b16 %v7157
        %v7462 = vunpack.c.l.b16 %v7158
        %v7463 = vunpack.c.h.b16 %v7158
        %v7464 = vunpack.c.l.b16 %v7159
        %v7465 = vunpack.c.h.b16 %v7159
        %v7466 = vunpack.c.l.b16 %v7160
        %v7467 = vunpack.c.l.b16 %v7161
        %v7468 = vunpack.c.h.b16 %v7161
        %v7469 = vunpack.c.l.b16 %v7162
        %v7470 = vunpack.c.h.b16 %v7162
        %v7471 = vunpack.c.l.b16 %v7163
        %v7472 = vunpack.c.l.b16 %v7164
        %v7473 = vunpack.c.h.b16 %v7164
        %v7474 = vunpack.c.l.b16 %v7165
        %v7475 = vunpack.c.h.b16 %v7165
        %v7476 = vunpack.c.l.b16 %v7166
        %v7477 = vunpack.c.l.b16 %v7167
        %v7478 = vunpack.c.h.b16 %v7167
        %v7479 = vunpack.c.l.b16 %v7168
        %v7480 = vunpack.c.h.b16 %v7168
        %v7481 = vunpack.c.l.b16 %v7169
        %v7482 = vunpack.c.l.b16 %v7170
        %v7483 = vunpack.c.h.b16 %v7170
        %v7484 = vunpack.c.l.b16 %v7171
        %v7485 = vunpack.c.h.b16 %v7171
        %v7486 = vunpack.c.l.b16 %v7172
        %v7487 = vunpack.c.l.b16 %v7173
        %v7488 = vunpack.c.h.b16 %v7173
        %v7489 = vunpack.c.l.b16 %v7174
        %v7490 = vunpack.c.h.b16 %v7174
        %v7491 = vunpack.c.l.b16 %v7175
        %v7492 = vunpack.c.l.b16 %v7176
        %v7493 = vunpack.c.h.b16 %v7176
        %v7494 = vunpack.c.l.b16 %v7177
        %v7495 = vunpack.c.h.b16 %v7177
        %v7496 = vunpack.c.l.b16 %v7178
        %v7497 = vunpack.c.l.b16 %v7179
        %v7498 = vunpack.c.h.b16 %v7179
        %v7499 = vunpack.c.l.b16 %v7180
        %v7500 = vunpack.c.h.b16 %v7180
        %v7501 = vunpack.c.l.b16 %v7181
        %v7502 = vunpack.c.l.b16 %v7182
        %v7503 = vunpack.c.h.b16 %v7182
        %v7504 = vunpack.c.l.b16 %v7183
        %v7505 = vunpack.c.h.b16 %v7183
        %v7506 = vunpack.c.l.b16 %v7184
        %v7507 = vunpack.c.l.b16 %v7185
        %v7508 = vunpack.c.h.b16 %v7185
        %v7509 = vunpack.c.l.b16 %v7186
        %v7510 = vunpack.c.h.b16 %v7186
        %v7511 = vunpack.c.l.b16 %v7187
        %v7512 = vunpack.c.l.b16 %v7188
        %v7513 = vunpack.c.h.b16 %v7188
        %v7514 = vunpack.c.l.b16 %v7189
        %v7515 = vunpack.c.h.b16 %v7189
        %v7516 = vunpack.c.l.b16 %v7190
        %v7517 = vunpack.c.l.b16 %v7191
        %v7518 = vunpack.c.h.b16 %v7191
        %v7519 = vunpack.c.l.b16 %v7192
        %v7520 = vunpack.c.h.b16 %v7192
        %v7521 = vunpack.c.l.b16 %v7193
        %v7522 = vpack.c.b16 %v7367, %v7362
        %v7523 = vpack.c.b16 %v7368, %v7363
        %v7524 = vpack.c.b16 %v7369, %v7364
        %v7525 = vpack.c.b16 %v7370, %v7365
        %v7526 = vpack.c.b16 %v7371, %v7366
        %v7527 = vpack.c.b16 %v7377, %v7372
        %v7528 = vpack.c.b16 %v7378, %v7373
        %v7529 = vpack.c.b16 %v7379, %v7374
        %v7530 = vpack.c.b16 %v7380, %v7375
        %v7531 = vpack.c.b16 %v7381, %v7376
        %v7532 = vpack.c.b16 %v7387, %v7382
        %v7533 = vpack.c.b16 %v7388, %v7383
        %v7534 = vpack.c.b16 %v7389, %v7384
        %v7535 = vpack.c.b16 %v7390, %v7385
        %v7536 = vpack.c.b16 %v7391, %v7386
        %v7537 = vpack.c.b16 %v7397, %v7392
        %v7538 = vpack.c.b16 %v7398, %v7393
        %v7539 = vpack.c.b16 %v7399, %v7394
        %v7540 = vpack.c.b16 %v7400, %v7395
        %v7541 = vpack.c.b16 %v7401, %v7396
        %v7542 = vpack.c.b16 %v7407, %v7402
        %v7543 = vpack.c.b16 %v7408, %v7403
        %v7544 = vpack.c.b16 %v7409, %v7404
        %v7545 = vpack.c.b16 %v7410, %v7405
        %v7546 = vpack.c.b16 %v7411, %v7406
        %v7547 = vpack.c.b16 %v7417, %v7412
        %v7548 = vpack.c.b16 %v7418, %v7413
        %v7549 = vpack.c.b16 %v7419, %v7414
        %v7550 = vpack.c.b16 %v7420, %v7415
        %v7551 = vpack.c.b16 %v7421, %v7416
        %v7552 = vpack.c.b16 %v7427, %v7422
        %v7553 = vpack.c.b16 %v7428, %v7423
        %v7554 = vpack.c.b16 %v7429, %v7424
        %v7555 = vpack.c.b16 %v7430, %v7425
        %v7556 = vpack.c.b16 %v7431, %v7426
        %v7557 = vpack.c.b16 %v7437, %v7432
        %v7558 = vpack.c.b16 %v7438, %v7433
        %v7559 = vpack.c.b16 %v7439, %v7434
        %v7560 = vpack.c.b16 %v7440, %v7435
        %v7561 = vpack.c.b16 %v7441, %v7436
        %v7562 = vpack.c.b16 %v7447, %v7442
        %v7563 = vpack.c.b16 %v7448, %v7443
        %v7564 = vpack.c.b16 %v7449, %v7444
        %v7565 = vpack.c.b16 %v7450, %v7445
        %v7566 = vpack.c.b16 %v7451, %v7446
        %v7567 = vpack.c.b16 %v7457, %v7452
        %v7568 = vpack.c.b16 %v7458, %v7453
        %v7569 = vpack.c.b16 %v7459, %v7454
        %v7570 = vpack.c.b16 %v7460, %v7455
        %v7571 = vpack.c.b16 %v7461, %v7456
        %v7572 = vpack.c.b16 %v7467, %v7462
        %v7573 = vpack.c.b16 %v7468, %v7463
        %v7574 = vpack.c.b16 %v7469, %v7464
        %v7575 = vpack.c.b16 %v7470, %v7465
        %v7576 = vpack.c.b16 %v7471, %v7466
        %v7577 = vpack.c.b16 %v7477, %v7472
        %v7578 = vpack.c.b16 %v7478, %v7473
        %v7579 = vpack.c.b16 %v7479, %v7474
        %v7580 = vpack.c.b16 %v7480, %v7475
        %v7581 = vpack.c.b16 %v7481, %v7476
        %v7582 = vpack.c.b16 %v7487, %v7482
        %v7583 = vpack.c.b16 %v7488, %v7483
        %v7584 = vpack.c.b16 %v7489, %v7484
        %v7585 = vpack.c.b16 %v7490, %v7485
        %v7586 = vpack.c.b16 %v7491, %v7486
        %v7587 = vpack.c.b16 %v7497, %v7492
        %v7588 = vpack.c.b16 %v7498, %v7493
        %v7589 = vpack.c.b16 %v7499, %v7494
        %v7590 = vpack.c.b16 %v7500, %v7495
        %v7591 = vpack.c.b16 %v7501, %v7496
        %v7592 = vpack.c.b16 %v7507, %v7502
        %v7593 = vpack.c.b16 %v7508, %v7503
        %v7594 = vpack.c.b16 %v7509, %v7504
        %v7595 = vpack.c.b16 %v7510, %v7505
        %v7596 = vpack.c.b16 %v7511, %v7506
        %v7597 = vpack.c.b16 %v7517, %v7512
        %v7598 = vpack.c.b16 %v7518, %v7513
        %v7599 = vpack.c.b16 %v7519, %v7514
        %v7600 = vpack.c.b16 %v7520, %v7515
        %v7601 = vpack.c.b16 %v7521, %v7516
        %v7738 = vunpack.c.l.b16 %v7194
        %v7739 = vunpack.c.l.b16 %v7195
        %v7740 = vunpack.c.l.b16 %v7196
        %v7741 = vunpack.c.l.b16 %v7197
        %v7742 = vunpack.c.l.b16 %v7198
        %v7743 = vunpack.c.l.b16 %v7199
        %v7744 = vunpack.c.l.b16 %v7200
        %v7745 = vunpack.c.l.b16 %v7201
        %v7746 = vunpack.c.l.b16 %v7202
        %v7747 = vunpack.c.l.b16 %v7203
        %v7748 = vunpack.c.l.b16 %v7204
        %v7749 = vunpack.c.l.b16 %v7205
        %v7750 = vunpack.c.l.b16 %v7206
        %v7751 = vunpack.c.l.b16 %v7207
        %v7752 = vunpack.c.l.b16 %v7208
        %v7753 = vunpack.c.l.b16 %v7209
        %v7754 = vunpack.c.l.b16 %v7210
        %v7755 = vunpack.c.l.b16 %v7211
        %v7756 = vunpack.c.l.b16 %v7212
        %v7757 = vunpack.c.l.b16 %v7213
        %v7758 = vunpack.c.l.b16 %v7214
        %v7759 = vunpack.c.l.b16 %v7215
        %v7760 = vunpack.c.l.b16 %v7216
        %v7761 = vunpack.c.l.b16 %v7217
        %v7762 = vunpack.c.l.b16 %v7218
        %v7763 = vunpack.c.l.b16 %v7219
        %v7764 = vunpack.c.l.b16 %v7220
        %v7765 = vunpack.c.l.b16 %v7221
        %v7766 = vunpack.c.l.b16 %v7222
        %v7767 = vunpack.c.l.b16 %v7223
        %v7768 = vunpack.c.l.b16 %v7224
        %v7769 = vunpack.c.l.b16 %v7225
        %v7770 = vunpack.c.l.b16 %v7226
        %v7771 = vunpack.c.l.b16 %v7227
        %v7772 = vunpack.c.l.b16 %v7228
        %v7773 = vunpack.c.l.b16 %v7229
        %v7774 = vunpack.c.l.b16 %v7230
        %v7775 = vunpack.c.l.b16 %v7231
        %v7776 = vunpack.c.l.b16 %v7232
        %v7777 = vunpack.c.l.b16 %v7233
        %v7778 = vunpack.c.l.b16 %v7234
        %v7779 = vunpack.c.l.b16 %v7235
        %v7780 = vunpack.c.l.b16 %v7236
        %v7781 = vunpack.c.l.b16 %v7237
        %v7782 = vunpack.c.l.b16 %v7238
        %v7783 = vunpack.c.l.b16 %v7239
        %v7784 = vunpack.c.l.b16 %v7240
        %v7785 = vunpack.c.l.b16 %v7241
        %v7786 = vunpack.c.l.b16 %v7242
        %v7787 = vunpack.c.l.b16 %v7243
        %v7788 = vunpack.c.l.b16 %v7244
        %v7789 = vunpack.c.l.b16 %v7245
        %v7790 = vunpack.c.l.b16 %v7246
        %v7791 = vunpack.c.l.b16 %v7247
        %v7792 = vunpack.c.l.b16 %v7248
        %v7793 = vunpack.c.l.b16 %v7249
        %v7794 = vunpack.c.l.b16 %v7250
        %v7795 = vunpack.c.l.b16 %v7251
        %v7796 = vunpack.c.l.b16 %v7252
        %v7797 = vunpack.c.l.b16 %v7253
        %v7798 = vunpack.c.l.b16 %v7254
        %v7799 = vunpack.c.l.b16 %v7255
        %v7800 = vunpack.c.l.b16 %v7256
        %v7801 = vunpack.c.l.b16 %v7257
        %v7802 = vunpack.c.l.b16 %v7258
        %v7803 = vunpack.c.l.b16 %v7259
        %v7804 = vunpack.c.l.b16 %v7260
        %v7805 = vunpack.c.l.b16 %v7261
        %v7806 = vunpack.c.l.b16 %v7262
        %v7807 = vunpack.c.l.b16 %v7263
        %v7808 = vunpack.c.l.b16 %v7264
        %v7809 = vunpack.c.l.b16 %v7265
        %v7810 = vpack.c.b16 %v7739, %v7738
        %v7811 = vpack.c.b16 %v7741, %v7740
        %v7812 = vpack.c.b16 %v7743, %v7742
        %v7813 = vpack.c.b16 %v7745, %v7744
        %v7814 = vpack.c.b16 %v7747, %v7746
        %v7815 = vpack.c.b16 %v7749, %v7748
        %v7816 = vpack.c.b16 %v7751, %v7750
        %v7817 = vpack.c.b16 %v7753, %v7752
        %v7818 = vpack.c.b16 %v7755, %v7754
        %v7819 = vpack.c.b16 %v7757, %v7756
        %v7820 = vpack.c.b16 %v7759, %v7758
        %v7821 = vpack.c.b16 %v7761, %v7760
        %v7822 = vpack.c.b16 %v7763, %v7762
        %v7823 = vpack.c.b16 %v7765, %v7764
        %v7824 = vpack.c.b16 %v7767, %v7766
        %v7825 = vpack.c.b16 %v7769, %v7768
        %v7826 = vpack.c.b16 %v7771, %v7770
        %v7827 = vpack.c.b16 %v7773, %v7772
        %v7828 = vpack.c.b16 %v7775, %v7774
        %v7829 = vpack.c.b16 %v7777, %v7776
        %v7830 = vpack.c.b16 %v7779, %v7778
        %v7831 = vpack.c.b16 %v7781, %v7780
        %v7832 = vpack.c.b16 %v7783, %v7782
        %v7833 = vpack.c.b16 %v7785, %v7784
        %v7834 = vpack.c.b16 %v7787, %v7786
        %v7835 = vpack.c.b16 %v7789, %v7788
        %v7836 = vpack.c.b16 %v7791, %v7790
        %v7837 = vpack.c.b16 %v7793, %v7792
        %v7838 = vpack.c.b16 %v7795, %v7794
        %v7839 = vpack.c.b16 %v7797, %v7796
        %v7840 = vpack.c.b16 %v7799, %v7798
        %v7841 = vpack.c.b16 %v7801, %v7800
        %v7842 = vpack.c.b16 %v7803, %v7802
        %v7843 = vpack.c.b16 %v7805, %v7804
        %v7844 = vpack.c.b16 %v7807, %v7806
        %v7845 = vpack.c.b16 %v7809, %v7808
        %v7883 = vsel %vm193, %v7526, 0
        %v7886 = vsel %vm193, %v7531, 0
        %v7889 = vsel %vm193, %v7536, 0
        %v7892 = vsel %vm193, %v7541, 0
        %v7895 = vsel %vm193, %v7546, 0
        %v7898 = vsel %vm193, %v7551, 0
        %v7901 = vsel %vm193, %v7556, 0
        %v7904 = vsel %vm193, %v7561, 0
        %v7907 = vsel %vm193, %v7566, 0
        %v7910 = vsel %vm193, %v7571, 0
        %v7913 = vsel %vm193, %v7576, 0
        %v7916 = vsel %vm193, %v7581, 0
        %v7919 = vsel %vm193, %v7586, 0
        %v7922 = vsel %vm193, %v7591, 0
        %v7925 = vsel %vm193, %v7596, 0
        %v7928 = vsel %vm193, %v7601, 0
        %7930 = vmatpush.bf16.msra.mxu0 %v7817
        %7931 = vmatpush.bf16.msra.mxu0 %v7816
        %7932 = vmatpush.bf16.msra.mxu0 %v7815
        %7933 = vmatpush.bf16.msra.mxu0 %v7814
        %7934 = vmatpush.bf16.msra.mxu0 %v7813
        %7935 = vmatpush.bf16.msra.mxu0 %v7812
        %7936 = vmatpush.bf16.msra.mxu0 %v7811
        %7937 = vmatpush.bf16.msra.mxu0 %v7810
        %7938 = vmatmul.bf16.gmra.mxu0 %v7522
        %v7939 = vpop.f32.mrf.mxu0
        %v7940 = vadd.f32 %v1862, %v7939
        %v7941 = vpop.f32.mrf.mxu0
        %v7942 = vadd.f32 %v1862, %v7941
        %7943 = vmatmul.bf16.gmra.mxu0 %v7527
        %v7944 = vpop.f32.mrf.mxu0
        %v7945 = vadd.f32 %v1862, %v7944
        %v7946 = vpop.f32.mrf.mxu0
        %v7947 = vadd.f32 %v1862, %v7946
        %7948 = vmatmul.bf16.gmra.mxu0 %v7532
        %v7949 = vpop.f32.mrf.mxu0
        %v7950 = vadd.f32 %v1862, %v7949
        %v7951 = vpop.f32.mrf.mxu0
        %v7952 = vadd.f32 %v1862, %v7951
        %7953 = vmatmul.bf16.gmra.mxu0 %v7537
        %v7954 = vpop.f32.mrf.mxu0
        %v7955 = vadd.f32 %v1862, %v7954
        %v7956 = vpop.f32.mrf.mxu0
        %v7957 = vadd.f32 %v1862, %v7956
        %7958 = vmatmul.bf16.gmra.mxu0 %v7542
        %v7959 = vpop.f32.mrf.mxu0
        %v7960 = vadd.f32 %v1862, %v7959
        %v7961 = vpop.f32.mrf.mxu0
        %v7962 = vadd.f32 %v1862, %v7961
        %7963 = vmatmul.bf16.gmra.mxu0 %v7547
        %v7964 = vpop.f32.mrf.mxu0
        %v7965 = vadd.f32 %v1862, %v7964
        %v7966 = vpop.f32.mrf.mxu0
        %v7967 = vadd.f32 %v1862, %v7966
        %7968 = vmatmul.bf16.gmra.mxu0 %v7552
        %v7969 = vpop.f32.mrf.mxu0
        %v7970 = vadd.f32 %v1862, %v7969
        %v7971 = vpop.f32.mrf.mxu0
        %v7972 = vadd.f32 %v1862, %v7971
        %7973 = vmatmul.bf16.gmra.mxu0 %v7557
        %v7974 = vpop.f32.mrf.mxu0
        %v7975 = vadd.f32 %v1862, %v7974
        %v7976 = vpop.f32.mrf.mxu0
        %v7977 = vadd.f32 %v1862, %v7976
        %7978 = vmatmul.bf16.gmra.mxu0 %v7562
        %v7979 = vpop.f32.mrf.mxu0
        %v7980 = vadd.f32 %v1862, %v7979
        %v7981 = vpop.f32.mrf.mxu0
        %v7982 = vadd.f32 %v1862, %v7981
        %7983 = vmatmul.bf16.gmra.mxu0 %v7567
        %v7984 = vpop.f32.mrf.mxu0
        %v7985 = vadd.f32 %v1862, %v7984
        %v7986 = vpop.f32.mrf.mxu0
        %v7987 = vadd.f32 %v1862, %v7986
        %7988 = vmatmul.bf16.gmra.mxu0 %v7572
        %v7989 = vpop.f32.mrf.mxu0
        %v7990 = vadd.f32 %v1862, %v7989
        %v7991 = vpop.f32.mrf.mxu0
        %v7992 = vadd.f32 %v1862, %v7991
        %7993 = vmatmul.bf16.gmra.mxu0 %v7577
        %v7994 = vpop.f32.mrf.mxu0
        %v7995 = vadd.f32 %v1862, %v7994
        %v7996 = vpop.f32.mrf.mxu0
        %v7997 = vadd.f32 %v1862, %v7996
        %7998 = vmatmul.bf16.gmra.mxu0 %v7582
        %v7999 = vpop.f32.mrf.mxu0
        %v8000 = vadd.f32 %v1862, %v7999
        %v8001 = vpop.f32.mrf.mxu0
        %v8002 = vadd.f32 %v1862, %v8001
        %8003 = vmatmul.bf16.gmra.mxu0 %v7587
        %v8004 = vpop.f32.mrf.mxu0
        %v8005 = vadd.f32 %v1862, %v8004
        %v8006 = vpop.f32.mrf.mxu0
        %v8007 = vadd.f32 %v1862, %v8006
        %8008 = vmatmul.bf16.gmra.mxu0 %v7592
        %v8009 = vpop.f32.mrf.mxu0
        %v8010 = vadd.f32 %v1862, %v8009
        %v8011 = vpop.f32.mrf.mxu0
        %v8012 = vadd.f32 %v1862, %v8011
        %8013 = vmatmul.bf16.gmra.mxu0 %v7597
        %v8014 = vpop.f32.mrf.mxu0
        %v8015 = vadd.f32 %v1862, %v8014
        %v8016 = vpop.f32.mrf.mxu0
        %v8017 = vadd.f32 %v1862, %v8016
        %8018 = vdwg.mxu0
        %8019 = vmatpush.bf16.msra.mxu0 %v7825
        %8020 = vmatpush.bf16.msra.mxu0 %v7824
        %8021 = vmatpush.bf16.msra.mxu0 %v7823
        %8022 = vmatpush.bf16.msra.mxu0 %v7822
        %8023 = vmatpush.bf16.msra.mxu0 %v7821
        %8024 = vmatpush.bf16.msra.mxu0 %v7820
        %8025 = vmatpush.bf16.msra.mxu0 %v7819
        %8026 = vmatpush.bf16.msra.mxu0 %v7818
        %8027 = vmatmul.bf16.gmra.mxu0 %v7523
        %v8028 = vpop.f32.mrf.mxu0
        %v8029 = vadd.f32 %v7940, %v8028
        %v8030 = vpop.f32.mrf.mxu0
        %v8031 = vadd.f32 %v7942, %v8030
        %8032 = vmatmul.bf16.gmra.mxu0 %v7528
        %v8033 = vpop.f32.mrf.mxu0
        %v8034 = vadd.f32 %v7945, %v8033
        %v8035 = vpop.f32.mrf.mxu0
        %v8036 = vadd.f32 %v7947, %v8035
        %8037 = vmatmul.bf16.gmra.mxu0 %v7533
        %v8038 = vpop.f32.mrf.mxu0
        %v8039 = vadd.f32 %v7950, %v8038
        %v8040 = vpop.f32.mrf.mxu0
        %v8041 = vadd.f32 %v7952, %v8040
        %8042 = vmatmul.bf16.gmra.mxu0 %v7538
        %v8043 = vpop.f32.mrf.mxu0
        %v8044 = vadd.f32 %v7955, %v8043
        %v8045 = vpop.f32.mrf.mxu0
        %v8046 = vadd.f32 %v7957, %v8045
        %8047 = vmatmul.bf16.gmra.mxu0 %v7543
        %v8048 = vpop.f32.mrf.mxu0
        %v8049 = vadd.f32 %v7960, %v8048
        %v8050 = vpop.f32.mrf.mxu0
        %v8051 = vadd.f32 %v7962, %v8050
        %8052 = vmatmul.bf16.gmra.mxu0 %v7548
        %v8053 = vpop.f32.mrf.mxu0
        %v8054 = vadd.f32 %v7965, %v8053
        %v8055 = vpop.f32.mrf.mxu0
        %v8056 = vadd.f32 %v7967, %v8055
        %8057 = vmatmul.bf16.gmra.mxu0 %v7553
        %v8058 = vpop.f32.mrf.mxu0
        %v8059 = vadd.f32 %v7970, %v8058
        %v8060 = vpop.f32.mrf.mxu0
        %v8061 = vadd.f32 %v7972, %v8060
        %8062 = vmatmul.bf16.gmra.mxu0 %v7558
        %v8063 = vpop.f32.mrf.mxu0
        %v8064 = vadd.f32 %v7975, %v8063
        %v8065 = vpop.f32.mrf.mxu0
        %v8066 = vadd.f32 %v7977, %v8065
        %8067 = vmatmul.bf16.gmra.mxu0 %v7563
        %v8068 = vpop.f32.mrf.mxu0
        %v8069 = vadd.f32 %v7980, %v8068
        %v8070 = vpop.f32.mrf.mxu0
        %v8071 = vadd.f32 %v7982, %v8070
        %8072 = vmatmul.bf16.gmra.mxu0 %v7568
        %v8073 = vpop.f32.mrf.mxu0
        %v8074 = vadd.f32 %v7985, %v8073
        %v8075 = vpop.f32.mrf.mxu0
        %v8076 = vadd.f32 %v7987, %v8075
        %8077 = vmatmul.bf16.gmra.mxu0 %v7573
        %v8078 = vpop.f32.mrf.mxu0
        %v8079 = vadd.f32 %v7990, %v8078
        %v8080 = vpop.f32.mrf.mxu0
        %v8081 = vadd.f32 %v7992, %v8080
        %8082 = vmatmul.bf16.gmra.mxu0 %v7578
        %v8083 = vpop.f32.mrf.mxu0
        %v8084 = vadd.f32 %v7995, %v8083
        %v8085 = vpop.f32.mrf.mxu0
        %v8086 = vadd.f32 %v7997, %v8085
        %8087 = vmatmul.bf16.gmra.mxu0 %v7583
        %v8088 = vpop.f32.mrf.mxu0
        %v8089 = vadd.f32 %v8000, %v8088
        %v8090 = vpop.f32.mrf.mxu0
        %v8091 = vadd.f32 %v8002, %v8090
        %8092 = vmatmul.bf16.gmra.mxu0 %v7588
        %v8093 = vpop.f32.mrf.mxu0
        %v8094 = vadd.f32 %v8005, %v8093
        %v8095 = vpop.f32.mrf.mxu0
        %v8096 = vadd.f32 %v8007, %v8095
        %8097 = vmatmul.bf16.gmra.mxu0 %v7593
        %v8098 = vpop.f32.mrf.mxu0
        %v8099 = vadd.f32 %v8010, %v8098
        %v8100 = vpop.f32.mrf.mxu0
        %v8101 = vadd.f32 %v8012, %v8100
        %8102 = vmatmul.bf16.gmra.mxu0 %v7598
        %v8103 = vpop.f32.mrf.mxu0
        %v8104 = vadd.f32 %v8015, %v8103
        %v8105 = vpop.f32.mrf.mxu0
        %v8106 = vadd.f32 %v8017, %v8105
        %8107 = vdwg.mxu0
        %8108 = vmatpush.bf16.msra.mxu0 %v7833
        %8109 = vmatpush.bf16.msra.mxu0 %v7832
        %8110 = vmatpush.bf16.msra.mxu0 %v7831
        %8111 = vmatpush.bf16.msra.mxu0 %v7830
        %8112 = vmatpush.bf16.msra.mxu0 %v7829
        %8113 = vmatpush.bf16.msra.mxu0 %v7828
        %8114 = vmatpush.bf16.msra.mxu0 %v7827
        %8115 = vmatpush.bf16.msra.mxu0 %v7826
        %8116 = vmatmul.bf16.gmra.mxu0 %v7524
        %v8117 = vpop.f32.mrf.mxu0
        %v8118 = vadd.f32 %v8029, %v8117
        %v8119 = vpop.f32.mrf.mxu0
        %v8120 = vadd.f32 %v8031, %v8119
        %8121 = vmatmul.bf16.gmra.mxu0 %v7529
        %v8122 = vpop.f32.mrf.mxu0
        %v8123 = vadd.f32 %v8034, %v8122
        %v8124 = vpop.f32.mrf.mxu0
        %v8125 = vadd.f32 %v8036, %v8124
        %8126 = vmatmul.bf16.gmra.mxu0 %v7534
        %v8127 = vpop.f32.mrf.mxu0
        %v8128 = vadd.f32 %v8039, %v8127
        %v8129 = vpop.f32.mrf.mxu0
        %v8130 = vadd.f32 %v8041, %v8129
        %8131 = vmatmul.bf16.gmra.mxu0 %v7539
        %v8132 = vpop.f32.mrf.mxu0
        %v8133 = vadd.f32 %v8044, %v8132
        %v8134 = vpop.f32.mrf.mxu0
        %v8135 = vadd.f32 %v8046, %v8134
        %8136 = vmatmul.bf16.gmra.mxu0 %v7544
        %v8137 = vpop.f32.mrf.mxu0
        %v8138 = vadd.f32 %v8049, %v8137
        %v8139 = vpop.f32.mrf.mxu0
        %v8140 = vadd.f32 %v8051, %v8139
        %8141 = vmatmul.bf16.gmra.mxu0 %v7549
        %v8142 = vpop.f32.mrf.mxu0
        %v8143 = vadd.f32 %v8054, %v8142
        %v8144 = vpop.f32.mrf.mxu0
        %v8145 = vadd.f32 %v8056, %v8144
        %8146 = vmatmul.bf16.gmra.mxu0 %v7554
        %v8147 = vpop.f32.mrf.mxu0
        %v8148 = vadd.f32 %v8059, %v8147
        %v8149 = vpop.f32.mrf.mxu0
        %v8150 = vadd.f32 %v8061, %v8149
        %8151 = vmatmul.bf16.gmra.mxu0 %v7559
        %v8152 = vpop.f32.mrf.mxu0
        %v8153 = vadd.f32 %v8064, %v8152
        %v8154 = vpop.f32.mrf.mxu0
        %v8155 = vadd.f32 %v8066, %v8154
        %8156 = vmatmul.bf16.gmra.mxu0 %v7564
        %v8157 = vpop.f32.mrf.mxu0
        %v8158 = vadd.f32 %v8069, %v8157
        %v8159 = vpop.f32.mrf.mxu0
        %v8160 = vadd.f32 %v8071, %v8159
        %8161 = vmatmul.bf16.gmra.mxu0 %v7569
        %v8162 = vpop.f32.mrf.mxu0
        %v8163 = vadd.f32 %v8074, %v8162
        %v8164 = vpop.f32.mrf.mxu0
        %v8165 = vadd.f32 %v8076, %v8164
        %8166 = vmatmul.bf16.gmra.mxu0 %v7574
        %v8167 = vpop.f32.mrf.mxu0
        %v8168 = vadd.f32 %v8079, %v8167
        %v8169 = vpop.f32.mrf.mxu0
        %v8170 = vadd.f32 %v8081, %v8169
        %8171 = vmatmul.bf16.gmra.mxu0 %v7579
        %v8172 = vpop.f32.mrf.mxu0
        %v8173 = vadd.f32 %v8084, %v8172
        %v8174 = vpop.f32.mrf.mxu0
        %v8175 = vadd.f32 %v8086, %v8174
        %8176 = vmatmul.bf16.gmra.mxu0 %v7584
        %v8177 = vpop.f32.mrf.mxu0
        %v8178 = vadd.f32 %v8089, %v8177
        %v8179 = vpop.f32.mrf.mxu0
        %v8180 = vadd.f32 %v8091, %v8179
        %8181 = vmatmul.bf16.gmra.mxu0 %v7589
        %v8182 = vpop.f32.mrf.mxu0
        %v8183 = vadd.f32 %v8094, %v8182
        %v8184 = vpop.f32.mrf.mxu0
        %v8185 = vadd.f32 %v8096, %v8184
        %8186 = vmatmul.bf16.gmra.mxu0 %v7594
        %v8187 = vpop.f32.mrf.mxu0
        %v8188 = vadd.f32 %v8099, %v8187
        %v8189 = vpop.f32.mrf.mxu0
        %v8190 = vadd.f32 %v8101, %v8189
        %8191 = vmatmul.bf16.gmra.mxu0 %v7599
        %v8192 = vpop.f32.mrf.mxu0
        %v8193 = vadd.f32 %v8104, %v8192
        %v8194 = vpop.f32.mrf.mxu0
        %v8195 = vadd.f32 %v8106, %v8194
        %8196 = vdwg.mxu0
        %8197 = vmatpush.bf16.msra.mxu0 %v7841
        %8198 = vmatpush.bf16.msra.mxu0 %v7840
        %8199 = vmatpush.bf16.msra.mxu0 %v7839
        %8200 = vmatpush.bf16.msra.mxu0 %v7838
        %8201 = vmatpush.bf16.msra.mxu0 %v7837
        %8202 = vmatpush.bf16.msra.mxu0 %v7836
        %8203 = vmatpush.bf16.msra.mxu0 %v7835
        %8204 = vmatpush.bf16.msra.mxu0 %v7834
        %8205 = vmatmul.bf16.gmra.mxu0 %v7525
        %v8206 = vpop.f32.mrf.mxu0
        %v8207 = vadd.f32 %v8118, %v8206
        %v8208 = vpop.f32.mrf.mxu0
        %v8209 = vadd.f32 %v8120, %v8208
        %8210 = vmatmul.bf16.gmra.mxu0 %v7530
        %v8211 = vpop.f32.mrf.mxu0
        %v8212 = vadd.f32 %v8123, %v8211
        %v8213 = vpop.f32.mrf.mxu0
        %v8214 = vadd.f32 %v8125, %v8213
        %8215 = vmatmul.bf16.gmra.mxu0 %v7535
        %v8216 = vpop.f32.mrf.mxu0
        %v8217 = vadd.f32 %v8128, %v8216
        %v8218 = vpop.f32.mrf.mxu0
        %v8219 = vadd.f32 %v8130, %v8218
        %8220 = vmatmul.bf16.gmra.mxu0 %v7540
        %v8221 = vpop.f32.mrf.mxu0
        %v8222 = vadd.f32 %v8133, %v8221
        %v8223 = vpop.f32.mrf.mxu0
        %v8224 = vadd.f32 %v8135, %v8223
        %8225 = vmatmul.bf16.gmra.mxu0 %v7545
        %v8226 = vpop.f32.mrf.mxu0
        %v8227 = vadd.f32 %v8138, %v8226
        %v8228 = vpop.f32.mrf.mxu0
        %v8229 = vadd.f32 %v8140, %v8228
        %8230 = vmatmul.bf16.gmra.mxu0 %v7550
        %v8231 = vpop.f32.mrf.mxu0
        %v8232 = vadd.f32 %v8143, %v8231
        %v8233 = vpop.f32.mrf.mxu0
        %v8234 = vadd.f32 %v8145, %v8233
        %8235 = vmatmul.bf16.gmra.mxu0 %v7555
        %v8236 = vpop.f32.mrf.mxu0
        %v8237 = vadd.f32 %v8148, %v8236
        %v8238 = vpop.f32.mrf.mxu0
        %v8239 = vadd.f32 %v8150, %v8238
        %8240 = vmatmul.bf16.gmra.mxu0 %v7560
        %v8241 = vpop.f32.mrf.mxu0
        %v8242 = vadd.f32 %v8153, %v8241
        %v8243 = vpop.f32.mrf.mxu0
        %v8244 = vadd.f32 %v8155, %v8243
        %8245 = vmatmul.bf16.gmra.mxu0 %v7565
        %v8246 = vpop.f32.mrf.mxu0
        %v8247 = vadd.f32 %v8158, %v8246
        %v8248 = vpop.f32.mrf.mxu0
        %v8249 = vadd.f32 %v8160, %v8248
        %8250 = vmatmul.bf16.gmra.mxu0 %v7570
        %v8251 = vpop.f32.mrf.mxu0
        %v8252 = vadd.f32 %v8163, %v8251
        %v8253 = vpop.f32.mrf.mxu0
        %v8254 = vadd.f32 %v8165, %v8253
        %8255 = vmatmul.bf16.gmra.mxu0 %v7575
        %v8256 = vpop.f32.mrf.mxu0
        %v8257 = vadd.f32 %v8168, %v8256
        %v8258 = vpop.f32.mrf.mxu0
        %v8259 = vadd.f32 %v8170, %v8258
        %8260 = vmatmul.bf16.gmra.mxu0 %v7580
        %v8261 = vpop.f32.mrf.mxu0
        %v8262 = vadd.f32 %v8173, %v8261
        %v8263 = vpop.f32.mrf.mxu0
        %v8264 = vadd.f32 %v8175, %v8263
        %8265 = vmatmul.bf16.gmra.mxu0 %v7585
        %v8266 = vpop.f32.mrf.mxu0
        %v8267 = vadd.f32 %v8178, %v8266
        %v8268 = vpop.f32.mrf.mxu0
        %v8269 = vadd.f32 %v8180, %v8268
        %8270 = vmatmul.bf16.gmra.mxu0 %v7590
        %v8271 = vpop.f32.mrf.mxu0
        %v8272 = vadd.f32 %v8183, %v8271
        %v8273 = vpop.f32.mrf.mxu0
        %v8274 = vadd.f32 %v8185, %v8273
        %8275 = vmatmul.bf16.gmra.mxu0 %v7595
        %v8276 = vpop.f32.mrf.mxu0
        %v8277 = vadd.f32 %v8188, %v8276
        %v8278 = vpop.f32.mrf.mxu0
        %v8279 = vadd.f32 %v8190, %v8278
        %8280 = vmatmul.bf16.gmra.mxu0 %v7600
        %v8281 = vpop.f32.mrf.mxu0
        %v8282 = vadd.f32 %v8193, %v8281
        %v8283 = vpop.f32.mrf.mxu0
        %v8284 = vadd.f32 %v8195, %v8283
        %8285 = vdwg.mxu0
        %8286 = vmatpush.bf16.msra.mxu0 0
        %8287 = vmatpush.bf16.msra.mxu0 0
        %8288 = vmatpush.bf16.msra.mxu0 0
        %8289 = vmatpush.bf16.msra.mxu0 0
        %8290 = vmatpush.bf16.msra.mxu0 %v7845
        %8291 = vmatpush.bf16.msra.mxu0 %v7844
        %8292 = vmatpush.bf16.msra.mxu0 %v7843
        %8293 = vmatpush.bf16.msra.mxu0 %v7842
        %8294 = vmatmul.bf16.gmra.mxu0 %v7883
        %v8295 = vpop.f32.mrf.mxu0
        %v8296 = vadd.f32 %v8207, %v8295
        %v8297 = vpop.f32.mrf.mxu0
        %v8298 = vadd.f32 %v8209, %v8297
        %8299 = vmatmul.bf16.gmra.mxu0 %v7886
        %v8300 = vpop.f32.mrf.mxu0
        %v8301 = vadd.f32 %v8212, %v8300
        %v8302 = vpop.f32.mrf.mxu0
        %v8303 = vadd.f32 %v8214, %v8302
        %8304 = vmatmul.bf16.gmra.mxu0 %v7889
        %v8305 = vpop.f32.mrf.mxu0
        %v8306 = vadd.f32 %v8217, %v8305
        %v8307 = vpop.f32.mrf.mxu0
        %v8308 = vadd.f32 %v8219, %v8307
        %8309 = vmatmul.bf16.gmra.mxu0 %v7892
        %v8310 = vpop.f32.mrf.mxu0
        %v8311 = vadd.f32 %v8222, %v8310
        %v8312 = vpop.f32.mrf.mxu0
        %v8313 = vadd.f32 %v8224, %v8312
        %8314 = vmatmul.bf16.gmra.mxu0 %v7895
        %v8315 = vpop.f32.mrf.mxu0
        %v8316 = vadd.f32 %v8227, %v8315
        %v8317 = vpop.f32.mrf.mxu0
        %v8318 = vadd.f32 %v8229, %v8317
        %8319 = vmatmul.bf16.gmra.mxu0 %v7898
        %v8320 = vpop.f32.mrf.mxu0
        %v8321 = vadd.f32 %v8232, %v8320
        %v8322 = vpop.f32.mrf.mxu0
        %v8323 = vadd.f32 %v8234, %v8322
        %8324 = vmatmul.bf16.gmra.mxu0 %v7901
        %v8325 = vpop.f32.mrf.mxu0
        %v8326 = vadd.f32 %v8237, %v8325
        %v8327 = vpop.f32.mrf.mxu0
        %v8328 = vadd.f32 %v8239, %v8327
        %8329 = vmatmul.bf16.gmra.mxu0 %v7904
        %v8330 = vpop.f32.mrf.mxu0
        %v8331 = vadd.f32 %v8242, %v8330
        %v8332 = vpop.f32.mrf.mxu0
        %v8333 = vadd.f32 %v8244, %v8332
        %8334 = vmatmul.bf16.gmra.mxu0 %v7907
        %v8335 = vpop.f32.mrf.mxu0
        %v8336 = vadd.f32 %v8247, %v8335
        %v8337 = vpop.f32.mrf.mxu0
        %v8338 = vadd.f32 %v8249, %v8337
        %8339 = vmatmul.bf16.gmra.mxu0 %v7910
        %v8340 = vpop.f32.mrf.mxu0
        %v8341 = vadd.f32 %v8252, %v8340
        %v8342 = vpop.f32.mrf.mxu0
        %v8343 = vadd.f32 %v8254, %v8342
        %8344 = vmatmul.bf16.gmra.mxu0 %v7913
        %v8345 = vpop.f32.mrf.mxu0
        %v8346 = vadd.f32 %v8257, %v8345
        %v8347 = vpop.f32.mrf.mxu0
        %v8348 = vadd.f32 %v8259, %v8347
        %8349 = vmatmul.bf16.gmra.mxu0 %v7916
        %v8350 = vpop.f32.mrf.mxu0
        %v8351 = vadd.f32 %v8262, %v8350
        %v8352 = vpop.f32.mrf.mxu0
        %v8353 = vadd.f32 %v8264, %v8352
        %8354 = vmatmul.bf16.gmra.mxu0 %v7919
        %v8355 = vpop.f32.mrf.mxu0
        %v8356 = vadd.f32 %v8267, %v8355
        %v8357 = vpop.f32.mrf.mxu0
        %v8358 = vadd.f32 %v8269, %v8357
        %8359 = vmatmul.bf16.gmra.mxu0 %v7922
        %v8360 = vpop.f32.mrf.mxu0
        %v8361 = vadd.f32 %v8272, %v8360
        %v8362 = vpop.f32.mrf.mxu0
        %v8363 = vadd.f32 %v8274, %v8362
        %8364 = vmatmul.bf16.gmra.mxu0 %v7925
        %v8365 = vpop.f32.mrf.mxu0
        %v8366 = vadd.f32 %v8277, %v8365
        %v8367 = vpop.f32.mrf.mxu0
        %v8368 = vadd.f32 %v8279, %v8367
        %8369 = vmatmul.bf16.gmra.mxu0 %v7928
        %v8370 = vpop.f32.mrf.mxu0
        %v8371 = vadd.f32 %v8282, %v8370
        %v8372 = vpop.f32.mrf.mxu0
        %v8373 = vadd.f32 %v8284, %v8372
        %8374 = vdwg.mxu0
        %v8375 = vadd.f32 %v5658, %v8296
        %v8376 = vadd.f32 %v5659, %v8298
        %v8377 = vadd.f32 %v5660, %v8301
        %v8378 = vadd.f32 %v5661, %v8303
        %v8379 = vadd.f32 %v5662, %v8306
        %v8380 = vadd.f32 %v5663, %v8308
        %v8381 = vadd.f32 %v5664, %v8311
        %v8382 = vadd.f32 %v5665, %v8313
        %v8383 = vadd.f32 %v5666, %v8316
        %v8384 = vadd.f32 %v5667, %v8318
        %v8385 = vadd.f32 %v5668, %v8321
        %v8386 = vadd.f32 %v5669, %v8323
        %v8387 = vadd.f32 %v5670, %v8326
        %v8388 = vadd.f32 %v5671, %v8328
        %v8389 = vadd.f32 %v5672, %v8331
        %v8390 = vadd.f32 %v5673, %v8333
        %v8391 = vadd.f32 %v5674, %v8336
        %v8392 = vadd.f32 %v5675, %v8338
        %v8393 = vadd.f32 %v5676, %v8341
        %v8394 = vadd.f32 %v5677, %v8343
        %v8395 = vadd.f32 %v5678, %v8346
        %v8396 = vadd.f32 %v5679, %v8348
        %v8397 = vadd.f32 %v5680, %v8351
        %v8398 = vadd.f32 %v5681, %v8353
        %v8399 = vadd.f32 %v5682, %v8356
        %v8400 = vadd.f32 %v5683, %v8358
        %v8401 = vadd.f32 %v5684, %v8361
        %v8402 = vadd.f32 %v5685, %v8363
        %v8403 = vadd.f32 %v5686, %v8366
        %v8404 = vadd.f32 %v5687, %v8368
        %v8405 = vadd.f32 %v5688, %v8371
        %v8406 = vadd.f32 %v5689, %v8373
        %v8407 = vld [vmem:[%s167] sm:$0xff]
        %v8408 = vld [vmem:[%s167 + $0x8] sm:$0xff]
        %v8409 = vld [vmem:[%s167 + $0x10] sm:$0xff]
        %v8410 = vld [vmem:[%s167 + $0x18] sm:$0xff]
        %v8411 = vld [vmem:[%s167 + $0x20] sm:$0xff]
        %v8412 = vld [vmem:[%s167 + $0x28] sm:$0xff]
        %v8413 = vld [vmem:[%s167 + $0x30] sm:$0xff]
        %v8414 = vld [vmem:[%s167 + $0x38] sm:$0xff]
        %v8415 = vld [vmem:[%s167 + $0x40] sm:$0xff]
        %v8416 = vld [vmem:[%s167 + $0x48] sm:$0xff]
        %v8417 = vld [vmem:[%s167 + $0x50] sm:$0xff]
        %v8418 = vld [vmem:[%s167 + $0x58] sm:$0xff]
        %v8419 = vld [vmem:[%s167 + $0x60] sm:$0xff]
        %v8420 = vld [vmem:[%s167 + $0x68] sm:$0xff]
        %v8421 = vld [vmem:[%s167 + $0x70] sm:$0xff]
        %v8422 = vld [vmem:[%s167 + $0x78] sm:$0xff]
        %v8423 = vld [vmem:[%s167 + $0x80] sm:$0xff]
        %v8424 = vld [vmem:[%s167 + $0x88] sm:$0xff]
        %v8425 = vld [vmem:[%s167 + $0x90] sm:$0xff]
        %v8426 = vld [vmem:[%s167 + $0x98] sm:$0xff]
        %v8427 = vld [vmem:[%s167 + $0xa0] sm:$0xff]
        %v8428 = vld [vmem:[%s167 + $0xa8] sm:$0xff]
        %v8429 = vld [vmem:[%s167 + $0xb0] sm:$0xff]
        %v8430 = vld [vmem:[%s167 + $0xb8] sm:$0xff]
        %v8431 = vld [vmem:[%s167 + $0xc0] sm:$0xff]
        %v8432 = vld [vmem:[%s167 + $0xc8] sm:$0xff]
        %v8433 = vld [vmem:[%s167 + $0xd0] sm:$0xff]
        %v8434 = vld [vmem:[%s167 + $0xd8] sm:$0xff]
        %v8435 = vld [vmem:[%s167 + $0xe0] sm:$0xff]
        %v8436 = vld [vmem:[%s167 + $0xe8] sm:$0xff]
        %v8437 = vld [vmem:[%s167 + $0xf0] sm:$0xff]
        %v8438 = vld [vmem:[%s167 + $0xf8] sm:$0xff]
        %8439 = vst.msk [vmem:[%s281 + $0x1] sm:$0xff] %vm193, %v8407
        %8440 = vst.msk [vmem:[%s281 + $0x9] sm:$0xff] %vm193, %v8408
        %8441 = vst.msk [vmem:[%s281 + $0x19] sm:$0xff] %vm193, %v8409
        %8442 = vst.msk [vmem:[%s281 + $0x21] sm:$0xff] %vm193, %v8410
        %8443 = vst.msk [vmem:[%s281 + $0x31] sm:$0xff] %vm193, %v8411
        %8444 = vst.msk [vmem:[%s281 + $0x39] sm:$0xff] %vm193, %v8412
        %8445 = vst.msk [vmem:[%s281 + $0x49] sm:$0xff] %vm193, %v8413
        %8446 = vst.msk [vmem:[%s281 + $0x51] sm:$0xff] %vm193, %v8414
        %8447 = vst.msk [vmem:[%s281 + $0x61] sm:$0xff] %vm193, %v8415
        %8448 = vst.msk [vmem:[%s281 + $0x69] sm:$0xff] %vm193, %v8416
        %8449 = vst.msk [vmem:[%s281 + $0x79] sm:$0xff] %vm193, %v8417
        %8450 = vst.msk [vmem:[%s281 + $0x81] sm:$0xff] %vm193, %v8418
        %8451 = vst.msk [vmem:[%s281 + $0x91] sm:$0xff] %vm193, %v8419
        %8452 = vst.msk [vmem:[%s281 + $0x99] sm:$0xff] %vm193, %v8420
        %8453 = vst.msk [vmem:[%s281 + $0xa9] sm:$0xff] %vm193, %v8421
        %8454 = vst.msk [vmem:[%s281 + $0xb1] sm:$0xff] %vm193, %v8422
        %8455 = vst.msk [vmem:[%s281 + $0xc1] sm:$0xff] %vm193, %v8423
        %8456 = vst.msk [vmem:[%s281 + $0xc9] sm:$0xff] %vm193, %v8424
        %8457 = vst.msk [vmem:[%s281 + $0xd9] sm:$0xff] %vm193, %v8425
        %8458 = vst.msk [vmem:[%s281 + $0xe1] sm:$0xff] %vm193, %v8426
        %8459 = vst.msk [vmem:[%s281 + $0xf1] sm:$0xff] %vm193, %v8427
        %8460 = vst.msk [vmem:[%s281 + $0xf9] sm:$0xff] %vm193, %v8428
        %8461 = vst.msk [vmem:[%s281 + $0x109] sm:$0xff] %vm193, %v8429
        %8462 = vst.msk [vmem:[%s281 + $0x111] sm:$0xff] %vm193, %v8430
        %8463 = vst.msk [vmem:[%s281 + $0x121] sm:$0xff] %vm193, %v8431
        %8464 = vst.msk [vmem:[%s281 + $0x129] sm:$0xff] %vm193, %v8432
        %8465 = vst.msk [vmem:[%s281 + $0x139] sm:$0xff] %vm193, %v8433
        %8466 = vst.msk [vmem:[%s281 + $0x141] sm:$0xff] %vm193, %v8434
        %8467 = vst.msk [vmem:[%s281 + $0x151] sm:$0xff] %vm193, %v8435
        %8468 = vst.msk [vmem:[%s281 + $0x159] sm:$0xff] %vm193, %v8436
        %8469 = vst.msk [vmem:[%s281 + $0x169] sm:$0xff] %vm193, %v8437
        %8470 = vst.msk [vmem:[%s281 + $0x171] sm:$0xff] %vm193, %v8438
        %v8471 = vlaneseq
        %v8472 = vshrl.u32 %v8471, 7
        %v8473 = vadd.s32 %v8472, 8
        %vm8474 = vcmp.lt.s32.totalorder %v8472, 0
        %v8475 = vsub.s32 0, %v8472
        %v8476 = vsel %vm8474, %v8475, %v8472
        %v8477 = vshrl.u32 %v8476, 1
        %v8478 = vand.u32 %v8476, 1
        %v8479 = vsub.s32 0, %v8478
        %v8480 = vsel %vm8474, %v8479, %v8478
        %vm8481 = vcmp.lt.s32.totalorder %v8473, 0
        %v8482 = vsub.s32 0, %v8473
        %v8483 = vsel %vm8481, %v8482, %v8473
        %v8484 = vshrl.u32 %v8483, 1
        %v8485 = vand.u32 %v8483, 1
        %v8486 = vsub.s32 0, %v8485
        %v8487 = vsel %vm8481, %v8486, %v8485
        %vm8488 = vcmp.ne.s32.totalorder %v8480, 0
        %vm8489 = vcmp.ne.s32.totalorder %v8487, 0
        %vm8490 = vcmp.lt.s32.totalorder %v8480, 0
        %vm8491 = vcmp.lt.s32.totalorder %v8487, 0
        %vm8492 = vmand %vm8490, %vm8488
        %vm8493 = vmand %vm8491, %vm8489
        %v8494 = vadd.s32 %v8480, 2
        %v8495 = vadd.s32 %v8487, 2
        %v8496 = vsel %vm8492, %v8494, %v8480
        %v8497 = vsel %vm8493, %v8495, %v8487
        %vm8498 = vcmp.eq.s32.totalorder %v8496, 0
        %vm8499 = vcmp.eq.s32.totalorder %v8497, 0
        %v8500 = vld [vmem:[%s281 + $0x1] sm:$0xff]
        %v8501 = vld [vmem:[%s281 + $0x9] sm:$0xff]
        %v8502 = vld [vmem:[%s281 + $0x19] sm:$0xff]
        %v8503 = vld [vmem:[%s281 + $0x21] sm:$0xff]
        %v8504 = vld [vmem:[%s281 + $0x31] sm:$0xff]
        %v8505 = vld [vmem:[%s281 + $0x39] sm:$0xff]
        %v8506 = vld [vmem:[%s281 + $0x49] sm:$0xff]
        %v8507 = vld [vmem:[%s281 + $0x51] sm:$0xff]
        %v8508 = vld [vmem:[%s281 + $0x61] sm:$0xff]
        %v8509 = vld [vmem:[%s281 + $0x69] sm:$0xff]
        %v8510 = vld [vmem:[%s281 + $0x79] sm:$0xff]
        %v8511 = vld [vmem:[%s281 + $0x81] sm:$0xff]
        %v8512 = vld [vmem:[%s281 + $0x91] sm:$0xff]
        %v8513 = vld [vmem:[%s281 + $0x99] sm:$0xff]
        %v8514 = vld [vmem:[%s281 + $0xa9] sm:$0xff]
        %v8515 = vld [vmem:[%s281 + $0xb1] sm:$0xff]
        %v8516 = vld [vmem:[%s281 + $0xc1] sm:$0xff]
        %v8517 = vld [vmem:[%s281 + $0xc9] sm:$0xff]
        %v8518 = vld [vmem:[%s281 + $0xd9] sm:$0xff]
        %v8519 = vld [vmem:[%s281 + $0xe1] sm:$0xff]
        %v8520 = vld [vmem:[%s281 + $0xf1] sm:$0xff]
        %v8521 = vld [vmem:[%s281 + $0xf9] sm:$0xff]
        %v8522 = vld [vmem:[%s281 + $0x109] sm:$0xff]
        %v8523 = vld [vmem:[%s281 + $0x111] sm:$0xff]
        %v8524 = vld [vmem:[%s281 + $0x121] sm:$0xff]
        %v8525 = vld [vmem:[%s281 + $0x129] sm:$0xff]
        %v8526 = vld [vmem:[%s281 + $0x139] sm:$0xff]
        %v8527 = vld [vmem:[%s281 + $0x141] sm:$0xff]
        %v8528 = vld [vmem:[%s281 + $0x151] sm:$0xff]
        %v8529 = vld [vmem:[%s281 + $0x159] sm:$0xff]
        %v8530 = vld [vmem:[%s281 + $0x169] sm:$0xff]
        %v8531 = vld [vmem:[%s281 + $0x171] sm:$0xff]
        %v8532 = vld [vmem:[%s1276 + $0x1] sm:$0xff]
        %v8533 = vld [vmem:[%s1276 + $0x9] sm:$0xff]
        %v8534 = vld [vmem:[%s1276 + $0x19] sm:$0xff]
        %v8535 = vld [vmem:[%s1276 + $0x21] sm:$0xff]
        %v8536 = vld [vmem:[%s1276 + $0x31] sm:$0xff]
        %v8537 = vld [vmem:[%s1276 + $0x39] sm:$0xff]
        %v8538 = vld [vmem:[%s1276 + $0x49] sm:$0xff]
        %v8539 = vld [vmem:[%s1276 + $0x51] sm:$0xff]
        %v8540 = vld [vmem:[%s1276 + $0x61] sm:$0xff]
        %v8541 = vld [vmem:[%s1276 + $0x69] sm:$0xff]
        %v8542 = vld [vmem:[%s1276 + $0x79] sm:$0xff]
        %v8543 = vld [vmem:[%s1276 + $0x81] sm:$0xff]
        %v8544 = vld [vmem:[%s1276 + $0x91] sm:$0xff]
        %v8545 = vld [vmem:[%s1276 + $0x99] sm:$0xff]
        %v8546 = vld [vmem:[%s1276 + $0xa9] sm:$0xff]
        %v8547 = vld [vmem:[%s1276 + $0xb1] sm:$0xff]
        %v8548 = vld [vmem:[%s1276 + $0xc1] sm:$0xff]
        %v8549 = vld [vmem:[%s1276 + $0xc9] sm:$0xff]
        %v8550 = vld [vmem:[%s1276 + $0xd9] sm:$0xff]
        %v8551 = vld [vmem:[%s1276 + $0xe1] sm:$0xff]
        %v8552 = vld [vmem:[%s1276 + $0xf1] sm:$0xff]
        %v8553 = vld [vmem:[%s1276 + $0xf9] sm:$0xff]
        %v8554 = vld [vmem:[%s1276 + $0x109] sm:$0xff]
        %v8555 = vld [vmem:[%s1276 + $0x111] sm:$0xff]
        %v8556 = vld [vmem:[%s1276 + $0x121] sm:$0xff]
        %v8557 = vld [vmem:[%s1276 + $0x129] sm:$0xff]
        %v8558 = vld [vmem:[%s1276 + $0x139] sm:$0xff]
        %v8559 = vld [vmem:[%s1276 + $0x141] sm:$0xff]
        %v8560 = vld [vmem:[%s1276 + $0x151] sm:$0xff]
        %v8561 = vld [vmem:[%s1276 + $0x159] sm:$0xff]
        %v8562 = vld [vmem:[%s1276 + $0x169] sm:$0xff]
        %v8563 = vld [vmem:[%s1276 + $0x171] sm:$0xff]
        %v8564 = vld [vmem:[#allocation2 + $0x1] sm:$0xff]
        %v8565 = vld [vmem:[#allocation2 + $0x9] sm:$0xff]
        %v8566 = vld [vmem:[#allocation2 + $0x19] sm:$0xff]
        %v8567 = vld [vmem:[#allocation2 + $0x21] sm:$0xff]
        %v8568 = vld [vmem:[#allocation2 + $0x31] sm:$0xff]
        %v8569 = vld [vmem:[#allocation2 + $0x39] sm:$0xff]
        %v8570 = vld [vmem:[#allocation2 + $0x49] sm:$0xff]
        %v8571 = vld [vmem:[#allocation2 + $0x51] sm:$0xff]
        %v8572 = vld [vmem:[#allocation2 + $0x61] sm:$0xff]
        %v8573 = vld [vmem:[#allocation2 + $0x69] sm:$0xff]
        %v8574 = vld [vmem:[#allocation2 + $0x79] sm:$0xff]
        %v8575 = vld [vmem:[#allocation2 + $0x81] sm:$0xff]
        %v8576 = vld [vmem:[#allocation2 + $0x91] sm:$0xff]
        %v8577 = vld [vmem:[#allocation2 + $0x99] sm:$0xff]
        %v8578 = vld [vmem:[#allocation2 + $0xa9] sm:$0xff]
        %v8579 = vld [vmem:[#allocation2 + $0xb1] sm:$0xff]
        %v8580 = vld [vmem:[#allocation2 + $0xc1] sm:$0xff]
        %v8581 = vld [vmem:[#allocation2 + $0xc9] sm:$0xff]
        %v8582 = vld [vmem:[#allocation2 + $0xd9] sm:$0xff]
        %v8583 = vld [vmem:[#allocation2 + $0xe1] sm:$0xff]
        %v8584 = vld [vmem:[#allocation2 + $0xf1] sm:$0xff]
        %v8585 = vld [vmem:[#allocation2 + $0xf9] sm:$0xff]
        %v8586 = vld [vmem:[#allocation2 + $0x109] sm:$0xff]
        %v8587 = vld [vmem:[#allocation2 + $0x111] sm:$0xff]
        %v8588 = vld [vmem:[#allocation2 + $0x121] sm:$0xff]
        %v8589 = vld [vmem:[#allocation2 + $0x129] sm:$0xff]
        %v8590 = vld [vmem:[#allocation2 + $0x139] sm:$0xff]
        %v8591 = vld [vmem:[#allocation2 + $0x141] sm:$0xff]
        %v8592 = vld [vmem:[#allocation2 + $0x151] sm:$0xff]
        %v8593 = vld [vmem:[#allocation2 + $0x159] sm:$0xff]
        %v8594 = vld [vmem:[#allocation2 + $0x169] sm:$0xff]
        %v8595 = vld [vmem:[#allocation2 + $0x171] sm:$0xff]
        %v8596 = vsel 1, %v8532, %v8564
        %v8597 = vsel 1, %v8533, %v8565
        %v8598 = vsel 0, %v8534, %v8566
        %v8599 = vsel 0, %v8535, %v8567
        %v8600 = vsel 1, %v8536, %v8568
        %v8601 = vsel 1, %v8537, %v8569
        %v8602 = vsel 0, %v8538, %v8570
        %v8603 = vsel 0, %v8539, %v8571
        %v8604 = vsel 1, %v8540, %v8572
        %v8605 = vsel 1, %v8541, %v8573
        %v8606 = vsel 0, %v8542, %v8574
        %v8607 = vsel 0, %v8543, %v8575
        %v8608 = vsel 1, %v8544, %v8576
        %v8609 = vsel 1, %v8545, %v8577
        %v8610 = vsel 0, %v8546, %v8578
        %v8611 = vsel 0, %v8547, %v8579
        %v8612 = vsel 1, %v8548, %v8580
        %v8613 = vsel 1, %v8549, %v8581
        %v8614 = vsel 0, %v8550, %v8582
        %v8615 = vsel 0, %v8551, %v8583
        %v8616 = vsel 1, %v8552, %v8584
        %v8617 = vsel 1, %v8553, %v8585
        %v8618 = vsel 0, %v8554, %v8586
        %v8619 = vsel 0, %v8555, %v8587
        %v8620 = vsel 1, %v8556, %v8588
        %v8621 = vsel 1, %v8557, %v8589
        %v8622 = vsel 0, %v8558, %v8590
        %v8623 = vsel 0, %v8559, %v8591
        %v8624 = vsel 1, %v8560, %v8592
        %v8625 = vsel 1, %v8561, %v8593
        %v8626 = vsel 0, %v8562, %v8594
        %v8627 = vsel 0, %v8563, %v8595
        %v8628 = vld [vmem:[%s281 + $0x2] sm:$0xff]
        %v8629 = vld [vmem:[%s281 + $0xa] sm:$0xff]
        %v8630 = vld [vmem:[%s281 + $0x1a] sm:$0xff]
        %v8631 = vld [vmem:[%s281 + $0x22] sm:$0xff]
        %v8632 = vld [vmem:[%s281 + $0x32] sm:$0xff]
        %v8633 = vld [vmem:[%s281 + $0x3a] sm:$0xff]
        %v8634 = vld [vmem:[%s281 + $0x4a] sm:$0xff]
        %v8635 = vld [vmem:[%s281 + $0x52] sm:$0xff]
        %v8636 = vld [vmem:[%s281 + $0x62] sm:$0xff]
        %v8637 = vld [vmem:[%s281 + $0x6a] sm:$0xff]
        %v8638 = vld [vmem:[%s281 + $0x7a] sm:$0xff]
        %v8639 = vld [vmem:[%s281 + $0x82] sm:$0xff]
        %v8640 = vld [vmem:[%s281 + $0x92] sm:$0xff]
        %v8641 = vld [vmem:[%s281 + $0x9a] sm:$0xff]
        %v8642 = vld [vmem:[%s281 + $0xaa] sm:$0xff]
        %v8643 = vld [vmem:[%s281 + $0xb2] sm:$0xff]
        %v8644 = vld [vmem:[%s281 + $0xc2] sm:$0xff]
        %v8645 = vld [vmem:[%s281 + $0xca] sm:$0xff]
        %v8646 = vld [vmem:[%s281 + $0xda] sm:$0xff]
        %v8647 = vld [vmem:[%s281 + $0xe2] sm:$0xff]
        %v8648 = vld [vmem:[%s281 + $0xf2] sm:$0xff]
        %v8649 = vld [vmem:[%s281 + $0xfa] sm:$0xff]
        %v8650 = vld [vmem:[%s281 + $0x10a] sm:$0xff]
        %v8651 = vld [vmem:[%s281 + $0x112] sm:$0xff]
        %v8652 = vld [vmem:[%s281 + $0x122] sm:$0xff]
        %v8653 = vld [vmem:[%s281 + $0x12a] sm:$0xff]
        %v8654 = vld [vmem:[%s281 + $0x13a] sm:$0xff]
        %v8655 = vld [vmem:[%s281 + $0x142] sm:$0xff]
        %v8656 = vld [vmem:[%s281 + $0x152] sm:$0xff]
        %v8657 = vld [vmem:[%s281 + $0x15a] sm:$0xff]
        %v8658 = vld [vmem:[%s281 + $0x16a] sm:$0xff]
        %v8659 = vld [vmem:[%s281 + $0x172] sm:$0xff]
        %v8660 = vld [vmem:[%s281] sm:$0xff]
        %v8661 = vld [vmem:[%s281 + $0x8] sm:$0xff]
        %v8662 = vld [vmem:[%s281 + $0x18] sm:$0xff]
        %v8663 = vld [vmem:[%s281 + $0x20] sm:$0xff]
        %v8664 = vld [vmem:[%s281 + $0x30] sm:$0xff]
        %v8665 = vld [vmem:[%s281 + $0x38] sm:$0xff]
        %v8666 = vld [vmem:[%s281 + $0x48] sm:$0xff]
        %v8667 = vld [vmem:[%s281 + $0x50] sm:$0xff]
        %v8668 = vld [vmem:[%s281 + $0x60] sm:$0xff]
        %v8669 = vld [vmem:[%s281 + $0x68] sm:$0xff]
        %v8670 = vld [vmem:[%s281 + $0x78] sm:$0xff]
        %v8671 = vld [vmem:[%s281 + $0x80] sm:$0xff]
        %v8672 = vld [vmem:[%s281 + $0x90] sm:$0xff]
        %v8673 = vld [vmem:[%s281 + $0x98] sm:$0xff]
        %v8674 = vld [vmem:[%s281 + $0xa8] sm:$0xff]
        %v8675 = vld [vmem:[%s281 + $0xb0] sm:$0xff]
        %v8676 = vld [vmem:[%s281 + $0xc0] sm:$0xff]
        %v8677 = vld [vmem:[%s281 + $0xc8] sm:$0xff]
        %v8678 = vld [vmem:[%s281 + $0xd8] sm:$0xff]
        %v8679 = vld [vmem:[%s281 + $0xe0] sm:$0xff]
        %v8680 = vld [vmem:[%s281 + $0xf0] sm:$0xff]
        %v8681 = vld [vmem:[%s281 + $0xf8] sm:$0xff]
        %v8682 = vld [vmem:[%s281 + $0x108] sm:$0xff]
        %v8683 = vld [vmem:[%s281 + $0x110] sm:$0xff]
        %v8684 = vld [vmem:[%s281 + $0x120] sm:$0xff]
        %v8685 = vld [vmem:[%s281 + $0x128] sm:$0xff]
        %v8686 = vld [vmem:[%s281 + $0x138] sm:$0xff]
        %v8687 = vld [vmem:[%s281 + $0x140] sm:$0xff]
        %v8688 = vld [vmem:[%s281 + $0x150] sm:$0xff]
        %v8689 = vld [vmem:[%s281 + $0x158] sm:$0xff]
        %v8690 = vld [vmem:[%s281 + $0x168] sm:$0xff]
        %v8691 = vld [vmem:[%s281 + $0x170] sm:$0xff]
        %v8692 = vsel %vm8498, 1, 0
        %v8693 = vsel %vm8499, 1, 0
        %vm8694 = vcmp.eq.s32.totalorder %v8692, 1
        %vm8695 = vcmp.eq.s32.totalorder %v8693, 1
        %v8696 = vsel %vm8694, %v8628, %v8660
        %v8697 = vsel %vm8695, %v8629, %v8661
        %v8698 = vsel %vm8694, %v8630, %v8662
        %v8699 = vsel %vm8695, %v8631, %v8663
        %v8700 = vsel %vm8694, %v8632, %v8664
        %v8701 = vsel %vm8695, %v8633, %v8665
        %v8702 = vsel %vm8694, %v8634, %v8666
        %v8703 = vsel %vm8695, %v8635, %v8667
        %v8704 = vsel %vm8694, %v8636, %v8668
        %v8705 = vsel %vm8695, %v8637, %v8669
        %v8706 = vsel %vm8694, %v8638, %v8670
        %v8707 = vsel %vm8695, %v8639, %v8671
        %v8708 = vsel %vm8694, %v8640, %v8672
        %v8709 = vsel %vm8695, %v8641, %v8673
        %v8710 = vsel %vm8694, %v8642, %v8674
        %v8711 = vsel %vm8695, %v8643, %v8675
        %v8712 = vsel %vm8694, %v8644, %v8676
        %v8713 = vsel %vm8695, %v8645, %v8677
        %v8714 = vsel %vm8694, %v8646, %v8678
        %v8715 = vsel %vm8695, %v8647, %v8679
        %v8716 = vsel %vm8694, %v8648, %v8680
        %v8717 = vsel %vm8695, %v8649, %v8681
        %v8718 = vsel %vm8694, %v8650, %v8682
        %v8719 = vsel %vm8695, %v8651, %v8683
        %v8720 = vsel %vm8694, %v8652, %v8684
        %v8721 = vsel %vm8695, %v8653, %v8685
        %v8722 = vsel %vm8694, %v8654, %v8686
        %v8723 = vsel %vm8695, %v8655, %v8687
        %v8724 = vsel %vm8694, %v8656, %v8688
        %v8725 = vsel %vm8695, %v8657, %v8689
        %v8726 = vsel %vm8694, %v8658, %v8690
        %v8727 = vsel %vm8695, %v8659, %v8691
        %v8728 = vld [vmem:[%s1276 + $0x2] sm:$0xff]
        %v8729 = vld [vmem:[%s1276 + $0xa] sm:$0xff]
        %v8730 = vld [vmem:[%s1276 + $0x1a] sm:$0xff]
        %v8731 = vld [vmem:[%s1276 + $0x22] sm:$0xff]
        %v8732 = vld [vmem:[%s1276 + $0x32] sm:$0xff]
        %v8733 = vld [vmem:[%s1276 + $0x3a] sm:$0xff]
        %v8734 = vld [vmem:[%s1276 + $0x4a] sm:$0xff]
        %v8735 = vld [vmem:[%s1276 + $0x52] sm:$0xff]
        %v8736 = vld [vmem:[%s1276 + $0x62] sm:$0xff]
        %v8737 = vld [vmem:[%s1276 + $0x6a] sm:$0xff]
        %v8738 = vld [vmem:[%s1276 + $0x7a] sm:$0xff]
        %v8739 = vld [vmem:[%s1276 + $0x82] sm:$0xff]
        %v8740 = vld [vmem:[%s1276 + $0x92] sm:$0xff]
        %v8741 = vld [vmem:[%s1276 + $0x9a] sm:$0xff]
        %v8742 = vld [vmem:[%s1276 + $0xaa] sm:$0xff]
        %v8743 = vld [vmem:[%s1276 + $0xb2] sm:$0xff]
        %v8744 = vld [vmem:[%s1276 + $0xc2] sm:$0xff]
        %v8745 = vld [vmem:[%s1276 + $0xca] sm:$0xff]
        %v8746 = vld [vmem:[%s1276 + $0xda] sm:$0xff]
        %v8747 = vld [vmem:[%s1276 + $0xe2] sm:$0xff]
        %v8748 = vld [vmem:[%s1276 + $0xf2] sm:$0xff]
        %v8749 = vld [vmem:[%s1276 + $0xfa] sm:$0xff]
        %v8750 = vld [vmem:[%s1276 + $0x10a] sm:$0xff]
        %v8751 = vld [vmem:[%s1276 + $0x112] sm:$0xff]
        %v8752 = vld [vmem:[%s1276 + $0x122] sm:$0xff]
        %v8753 = vld [vmem:[%s1276 + $0x12a] sm:$0xff]
        %v8754 = vld [vmem:[%s1276 + $0x13a] sm:$0xff]
        %v8755 = vld [vmem:[%s1276 + $0x142] sm:$0xff]
        %v8756 = vld [vmem:[%s1276 + $0x152] sm:$0xff]
        %v8757 = vld [vmem:[%s1276 + $0x15a] sm:$0xff]
        %v8758 = vld [vmem:[%s1276 + $0x16a] sm:$0xff]
        %v8759 = vld [vmem:[%s1276 + $0x172] sm:$0xff]
        %v8760 = vld [vmem:[%s1276] sm:$0xff]
        %v8761 = vld [vmem:[%s1276 + $0x8] sm:$0xff]
        %v8762 = vld [vmem:[%s1276 + $0x18] sm:$0xff]
        %v8763 = vld [vmem:[%s1276 + $0x20] sm:$0xff]
        %v8764 = vld [vmem:[%s1276 + $0x30] sm:$0xff]
        %v8765 = vld [vmem:[%s1276 + $0x38] sm:$0xff]
        %v8766 = vld [vmem:[%s1276 + $0x48] sm:$0xff]
        %v8767 = vld [vmem:[%s1276 + $0x50] sm:$0xff]
        %v8768 = vld [vmem:[%s1276 + $0x60] sm:$0xff]
        %v8769 = vld [vmem:[%s1276 + $0x68] sm:$0xff]
        %v8770 = vld [vmem:[%s1276 + $0x78] sm:$0xff]
        %v8771 = vld [vmem:[%s1276 + $0x80] sm:$0xff]
        %v8772 = vld [vmem:[%s1276 + $0x90] sm:$0xff]
        %v8773 = vld [vmem:[%s1276 + $0x98] sm:$0xff]
        %v8774 = vld [vmem:[%s1276 + $0xa8] sm:$0xff]
        %v8775 = vld [vmem:[%s1276 + $0xb0] sm:$0xff]
        %v8776 = vld [vmem:[%s1276 + $0xc0] sm:$0xff]
        %v8777 = vld [vmem:[%s1276 + $0xc8] sm:$0xff]
        %v8778 = vld [vmem:[%s1276 + $0xd8] sm:$0xff]
        %v8779 = vld [vmem:[%s1276 + $0xe0] sm:$0xff]
        %v8780 = vld [vmem:[%s1276 + $0xf0] sm:$0xff]
        %v8781 = vld [vmem:[%s1276 + $0xf8] sm:$0xff]
        %v8782 = vld [vmem:[%s1276 + $0x108] sm:$0xff]
        %v8783 = vld [vmem:[%s1276 + $0x110] sm:$0xff]
        %v8784 = vld [vmem:[%s1276 + $0x120] sm:$0xff]
        %v8785 = vld [vmem:[%s1276 + $0x128] sm:$0xff]
        %v8786 = vld [vmem:[%s1276 + $0x138] sm:$0xff]
        %v8787 = vld [vmem:[%s1276 + $0x140] sm:$0xff]
        %v8788 = vld [vmem:[%s1276 + $0x150] sm:$0xff]
        %v8789 = vld [vmem:[%s1276 + $0x158] sm:$0xff]
        %v8790 = vld [vmem:[%s1276 + $0x168] sm:$0xff]
        %v8791 = vld [vmem:[%s1276 + $0x170] sm:$0xff]
        %v8792 = vsel %vm8694, %v8728, %v8760
        %v8793 = vsel %vm8695, %v8729, %v8761
        %v8794 = vsel %vm8694, %v8730, %v8762
        %v8795 = vsel %vm8695, %v8731, %v8763
        %v8796 = vsel %vm8694, %v8732, %v8764
        %v8797 = vsel %vm8695, %v8733, %v8765
        %v8798 = vsel %vm8694, %v8734, %v8766
        %v8799 = vsel %vm8695, %v8735, %v8767
        %v8800 = vsel %vm8694, %v8736, %v8768
        %v8801 = vsel %vm8695, %v8737, %v8769
        %v8802 = vsel %vm8694, %v8738, %v8770
        %v8803 = vsel %vm8695, %v8739, %v8771
        %v8804 = vsel %vm8694, %v8740, %v8772
        %v8805 = vsel %vm8695, %v8741, %v8773
        %v8806 = vsel %vm8694, %v8742, %v8774
        %v8807 = vsel %vm8695, %v8743, %v8775
        %v8808 = vsel %vm8694, %v8744, %v8776
        %v8809 = vsel %vm8695, %v8745, %v8777
        %v8810 = vsel %vm8694, %v8746, %v8778
        %v8811 = vsel %vm8695, %v8747, %v8779
        %v8812 = vsel %vm8694, %v8748, %v8780
        %v8813 = vsel %vm8695, %v8749, %v8781
        %v8814 = vsel %vm8694, %v8750, %v8782
        %v8815 = vsel %vm8695, %v8751, %v8783
        %v8816 = vsel %vm8694, %v8752, %v8784
        %v8817 = vsel %vm8695, %v8753, %v8785
        %v8818 = vsel %vm8694, %v8754, %v8786
        %v8819 = vsel %vm8695, %v8755, %v8787
        %v8820 = vsel %vm8694, %v8756, %v8788
        %v8821 = vsel %vm8695, %v8757, %v8789
        %v8822 = vsel %vm8694, %v8758, %v8790
        %v8823 = vsel %vm8695, %v8759, %v8791
        %v8824 = vld [vmem:[#allocation2 + $0x2] sm:$0xff]
        %v8825 = vld [vmem:[#allocation2 + $0xa] sm:$0xff]
        %v8826 = vld [vmem:[#allocation2 + $0x1a] sm:$0xff]
        %v8827 = vld [vmem:[#allocation2 + $0x22] sm:$0xff]
        %v8828 = vld [vmem:[#allocation2 + $0x32] sm:$0xff]
        %v8829 = vld [vmem:[#allocation2 + $0x3a] sm:$0xff]
        %v8830 = vld [vmem:[#allocation2 + $0x4a] sm:$0xff]
        %v8831 = vld [vmem:[#allocation2 + $0x52] sm:$0xff]
        %v8832 = vld [vmem:[#allocation2 + $0x62] sm:$0xff]
        %v8833 = vld [vmem:[#allocation2 + $0x6a] sm:$0xff]
        %v8834 = vld [vmem:[#allocation2 + $0x7a] sm:$0xff]
        %v8835 = vld [vmem:[#allocation2 + $0x82] sm:$0xff]
        %v8836 = vld [vmem:[#allocation2 + $0x92] sm:$0xff]
        %v8837 = vld [vmem:[#allocation2 + $0x9a] sm:$0xff]
        %v8838 = vld [vmem:[#allocation2 + $0xaa] sm:$0xff]
        %v8839 = vld [vmem:[#allocation2 + $0xb2] sm:$0xff]
        %v8840 = vld [vmem:[#allocation2 + $0xc2] sm:$0xff]
        %v8841 = vld [vmem:[#allocation2 + $0xca] sm:$0xff]
        %v8842 = vld [vmem:[#allocation2 + $0xda] sm:$0xff]
        %v8843 = vld [vmem:[#allocation2 + $0xe2] sm:$0xff]
        %v8844 = vld [vmem:[#allocation2 + $0xf2] sm:$0xff]
        %v8845 = vld [vmem:[#allocation2 + $0xfa] sm:$0xff]
        %v8846 = vld [vmem:[#allocation2 + $0x10a] sm:$0xff]
        %v8847 = vld [vmem:[#allocation2 + $0x112] sm:$0xff]
        %v8848 = vld [vmem:[#allocation2 + $0x122] sm:$0xff]
        %v8849 = vld [vmem:[#allocation2 + $0x12a] sm:$0xff]
        %v8850 = vld [vmem:[#allocation2 + $0x13a] sm:$0xff]
        %v8851 = vld [vmem:[#allocation2 + $0x142] sm:$0xff]
        %v8852 = vld [vmem:[#allocation2 + $0x152] sm:$0xff]
        %v8853 = vld [vmem:[#allocation2 + $0x15a] sm:$0xff]
        %v8854 = vld [vmem:[#allocation2 + $0x16a] sm:$0xff]
        %v8855 = vld [vmem:[#allocation2 + $0x172] sm:$0xff]
        %v8856 = vld [vmem:[#allocation2] sm:$0xff]
        %v8857 = vld [vmem:[#allocation2 + $0x8] sm:$0xff]
        %v8858 = vld [vmem:[#allocation2 + $0x18] sm:$0xff]
        %v8859 = vld [vmem:[#allocation2 + $0x20] sm:$0xff]
        %v8860 = vld [vmem:[#allocation2 + $0x30] sm:$0xff]
        %v8861 = vld [vmem:[#allocation2 + $0x38] sm:$0xff]
        %v8862 = vld [vmem:[#allocation2 + $0x48] sm:$0xff]
        %v8863 = vld [vmem:[#allocation2 + $0x50] sm:$0xff]
        %v8864 = vld [vmem:[#allocation2 + $0x60] sm:$0xff]
        %v8865 = vld [vmem:[#allocation2 + $0x68] sm:$0xff]
        %v8866 = vld [vmem:[#allocation2 + $0x78] sm:$0xff]
        %v8867 = vld [vmem:[#allocation2 + $0x80] sm:$0xff]
        %v8868 = vld [vmem:[#allocation2 + $0x90] sm:$0xff]
        %v8869 = vld [vmem:[#allocation2 + $0x98] sm:$0xff]
        %v8870 = vld [vmem:[#allocation2 + $0xa8] sm:$0xff]
        %v8871 = vld [vmem:[#allocation2 + $0xb0] sm:$0xff]
        %v8872 = vld [vmem:[#allocation2 + $0xc0] sm:$0xff]
        %v8873 = vld [vmem:[#allocation2 + $0xc8] sm:$0xff]
        %v8874 = vld [vmem:[#allocation2 + $0xd8] sm:$0xff]
        %v8875 = vld [vmem:[#allocation2 + $0xe0] sm:$0xff]
        %v8876 = vld [vmem:[#allocation2 + $0xf0] sm:$0xff]
        %v8877 = vld [vmem:[#allocation2 + $0xf8] sm:$0xff]
        %v8878 = vld [vmem:[#allocation2 + $0x108] sm:$0xff]
        %v8879 = vld [vmem:[#allocation2 + $0x110] sm:$0xff]
        %v8880 = vld [vmem:[#allocation2 + $0x120] sm:$0xff]
        %v8881 = vld [vmem:[#allocation2 + $0x128] sm:$0xff]
        %v8882 = vld [vmem:[#allocation2 + $0x138] sm:$0xff]
        %v8883 = vld [vmem:[#allocation2 + $0x140] sm:$0xff]
        %v8884 = vld [vmem:[#allocation2 + $0x150] sm:$0xff]
        %v8885 = vld [vmem:[#allocation2 + $0x158] sm:$0xff]
        %v8886 = vld [vmem:[#allocation2 + $0x168] sm:$0xff]
        %v8887 = vld [vmem:[#allocation2 + $0x170] sm:$0xff]
        %v8888 = vsel %vm8694, %v8824, %v8856
        %v8889 = vsel %vm8695, %v8825, %v8857
        %v8890 = vsel %vm8694, %v8826, %v8858
        %v8891 = vsel %vm8695, %v8827, %v8859
        %v8892 = vsel %vm8694, %v8828, %v8860
        %v8893 = vsel %vm8695, %v8829, %v8861
        %v8894 = vsel %vm8694, %v8830, %v8862
        %v8895 = vsel %vm8695, %v8831, %v8863
        %v8896 = vsel %vm8694, %v8832, %v8864
        %v8897 = vsel %vm8695, %v8833, %v8865
        %v8898 = vsel %vm8694, %v8834, %v8866
        %v8899 = vsel %vm8695, %v8835, %v8867
        %v8900 = vsel %vm8694, %v8836, %v8868
        %v8901 = vsel %vm8695, %v8837, %v8869
        %v8902 = vsel %vm8694, %v8838, %v8870
        %v8903 = vsel %vm8695, %v8839, %v8871
        %v8904 = vsel %vm8694, %v8840, %v8872
        %v8905 = vsel %vm8695, %v8841, %v8873
        %v8906 = vsel %vm8694, %v8842, %v8874
        %v8907 = vsel %vm8695, %v8843, %v8875
        %v8908 = vsel %vm8694, %v8844, %v8876
        %v8909 = vsel %vm8695, %v8845, %v8877
        %v8910 = vsel %vm8694, %v8846, %v8878
        %v8911 = vsel %vm8695, %v8847, %v8879
        %v8912 = vsel %vm8694, %v8848, %v8880
        %v8913 = vsel %vm8695, %v8849, %v8881
        %v8914 = vsel %vm8694, %v8850, %v8882
        %v8915 = vsel %vm8695, %v8851, %v8883
        %v8916 = vsel %vm8694, %v8852, %v8884
        %v8917 = vsel %vm8695, %v8853, %v8885
        %v8918 = vsel %vm8694, %v8854, %v8886
        %v8919 = vsel %vm8695, %v8855, %v8887
        %v8920 = vsel 1, %v8792, %v8888
        %v8921 = vsel 1, %v8793, %v8889
        %v8922 = vsel 0, %v8794, %v8890
        %v8923 = vsel 0, %v8795, %v8891
        %v8924 = vsel 1, %v8796, %v8892
        %v8925 = vsel 1, %v8797, %v8893
        %v8926 = vsel 0, %v8798, %v8894
        %v8927 = vsel 0, %v8799, %v8895
        %v8928 = vsel 1, %v8800, %v8896
        %v8929 = vsel 1, %v8801, %v8897
        %v8930 = vsel 0, %v8802, %v8898
        %v8931 = vsel 0, %v8803, %v8899
        %v8932 = vsel 1, %v8804, %v8900
        %v8933 = vsel 1, %v8805, %v8901
        %v8934 = vsel 0, %v8806, %v8902
        %v8935 = vsel 0, %v8807, %v8903
        %v8936 = vsel 1, %v8808, %v8904
        %v8937 = vsel 1, %v8809, %v8905
        %v8938 = vsel 0, %v8810, %v8906
        %v8939 = vsel 0, %v8811, %v8907
        %v8940 = vsel 1, %v8812, %v8908
        %v8941 = vsel 1, %v8813, %v8909
        %v8942 = vsel 0, %v8814, %v8910
        %v8943 = vsel 0, %v8815, %v8911
        %v8944 = vsel 1, %v8816, %v8912
        %v8945 = vsel 1, %v8817, %v8913
        %v8946 = vsel 0, %v8818, %v8914
        %v8947 = vsel 0, %v8819, %v8915
        %v8948 = vsel 1, %v8820, %v8916
        %v8949 = vsel 1, %v8821, %v8917
        %v8950 = vsel 0, %v8822, %v8918
        %v8951 = vsel 0, %v8823, %v8919
        %v8952 = vadd.f32 %v8500, %v8596
        %v8953 = vadd.f32 %v8501, %v8597
        %v8954 = vadd.f32 %v8502, %v8598
        %v8955 = vadd.f32 %v8503, %v8599
        %v8956 = vadd.f32 %v8504, %v8600
        %v8957 = vadd.f32 %v8505, %v8601
        %v8958 = vadd.f32 %v8506, %v8602
        %v8959 = vadd.f32 %v8507, %v8603
        %v8960 = vadd.f32 %v8508, %v8604
        %v8961 = vadd.f32 %v8509, %v8605
        %v8962 = vadd.f32 %v8510, %v8606
        %v8963 = vadd.f32 %v8511, %v8607
        %v8964 = vadd.f32 %v8512, %v8608
        %v8965 = vadd.f32 %v8513, %v8609
        %v8966 = vadd.f32 %v8514, %v8610
        %v8967 = vadd.f32 %v8515, %v8611
        %v8968 = vadd.f32 %v8516, %v8612
        %v8969 = vadd.f32 %v8517, %v8613
        %v8970 = vadd.f32 %v8518, %v8614
        %v8971 = vadd.f32 %v8519, %v8615
        %v8972 = vadd.f32 %v8520, %v8616
        %v8973 = vadd.f32 %v8521, %v8617
        %v8974 = vadd.f32 %v8522, %v8618
        %v8975 = vadd.f32 %v8523, %v8619
        %v8976 = vadd.f32 %v8524, %v8620
        %v8977 = vadd.f32 %v8525, %v8621
        %v8978 = vadd.f32 %v8526, %v8622
        %v8979 = vadd.f32 %v8527, %v8623
        %v8980 = vadd.f32 %v8528, %v8624
        %v8981 = vadd.f32 %v8529, %v8625
        %v8982 = vadd.f32 %v8530, %v8626
        %v8983 = vadd.f32 %v8531, %v8627
        %v8984 = vadd.f32 %v8952, %v8696
        %v8985 = vadd.f32 %v8953, %v8697
        %v8986 = vadd.f32 %v8954, %v8698
        %v8987 = vadd.f32 %v8955, %v8699
        %v8988 = vadd.f32 %v8956, %v8700
        %v8989 = vadd.f32 %v8957, %v8701
        %v8990 = vadd.f32 %v8958, %v8702
        %v8991 = vadd.f32 %v8959, %v8703
        %v8992 = vadd.f32 %v8960, %v8704
        %v8993 = vadd.f32 %v8961, %v8705
        %v8994 = vadd.f32 %v8962, %v8706
        %v8995 = vadd.f32 %v8963, %v8707
        %v8996 = vadd.f32 %v8964, %v8708
        %v8997 = vadd.f32 %v8965, %v8709
        %v8998 = vadd.f32 %v8966, %v8710
        %v8999 = vadd.f32 %v8967, %v8711
        %v9000 = vadd.f32 %v8968, %v8712
        %v9001 = vadd.f32 %v8969, %v8713
        %v9002 = vadd.f32 %v8970, %v8714
        %v9003 = vadd.f32 %v8971, %v8715
        %v9004 = vadd.f32 %v8972, %v8716
        %v9005 = vadd.f32 %v8973, %v8717
        %v9006 = vadd.f32 %v8974, %v8718
        %v9007 = vadd.f32 %v8975, %v8719
        %v9008 = vadd.f32 %v8976, %v8720
        %v9009 = vadd.f32 %v8977, %v8721
        %v9010 = vadd.f32 %v8978, %v8722
        %v9011 = vadd.f32 %v8979, %v8723
        %v9012 = vadd.f32 %v8980, %v8724
        %v9013 = vadd.f32 %v8981, %v8725
        %v9014 = vadd.f32 %v8982, %v8726
        %v9015 = vadd.f32 %v8983, %v8727
        %v9016 = vadd.f32 %v8984, %v8920
        %v9017 = vadd.f32 %v8985, %v8921
        %v9018 = vadd.f32 %v8986, %v8922
        %v9019 = vadd.f32 %v8987, %v8923
        %v9020 = vadd.f32 %v8988, %v8924
        %v9021 = vadd.f32 %v8989, %v8925
        %v9022 = vadd.f32 %v8990, %v8926
        %v9023 = vadd.f32 %v8991, %v8927
        %v9024 = vadd.f32 %v8992, %v8928
        %v9025 = vadd.f32 %v8993, %v8929
        %v9026 = vadd.f32 %v8994, %v8930
        %v9027 = vadd.f32 %v8995, %v8931
        %v9028 = vadd.f32 %v8996, %v8932
        %v9029 = vadd.f32 %v8997, %v8933
        %v9030 = vadd.f32 %v8998, %v8934
        %v9031 = vadd.f32 %v8999, %v8935
        %v9032 = vadd.f32 %v9000, %v8936
        %v9033 = vadd.f32 %v9001, %v8937
        %v9034 = vadd.f32 %v9002, %v8938
        %v9035 = vadd.f32 %v9003, %v8939
        %v9036 = vadd.f32 %v9004, %v8940
        %v9037 = vadd.f32 %v9005, %v8941
        %v9038 = vadd.f32 %v9006, %v8942
        %v9039 = vadd.f32 %v9007, %v8943
        %v9040 = vadd.f32 %v9008, %v8944
        %v9041 = vadd.f32 %v9009, %v8945
        %v9042 = vadd.f32 %v9010, %v8946
        %v9043 = vadd.f32 %v9011, %v8947
        %v9044 = vadd.f32 %v9012, %v8948
        %v9045 = vadd.f32 %v9013, %v8949
        %v9046 = vadd.f32 %v9014, %v8950
        %v9047 = vadd.f32 %v9015, %v8951
        %v9048 = vmul.f32 %v9016, 0.25
        %v9049 = vmul.f32 %v9017, 0.25
        %v9050 = vmul.f32 %v9018, 0.25
        %v9051 = vmul.f32 %v9019, 0.25
        %v9052 = vmul.f32 %v9020, 0.25
        %v9053 = vmul.f32 %v9021, 0.25
        %v9054 = vmul.f32 %v9022, 0.25
        %v9055 = vmul.f32 %v9023, 0.25
        %v9056 = vmul.f32 %v9024, 0.25
        %v9057 = vmul.f32 %v9025, 0.25
        %v9058 = vmul.f32 %v9026, 0.25
        %v9059 = vmul.f32 %v9027, 0.25
        %v9060 = vmul.f32 %v9028, 0.25
        %v9061 = vmul.f32 %v9029, 0.25
        %v9062 = vmul.f32 %v9030, 0.25
        %v9063 = vmul.f32 %v9031, 0.25
        %v9064 = vmul.f32 %v9032, 0.25
        %v9065 = vmul.f32 %v9033, 0.25
        %v9066 = vmul.f32 %v9034, 0.25
        %v9067 = vmul.f32 %v9035, 0.25
        %v9068 = vmul.f32 %v9036, 0.25
        %v9069 = vmul.f32 %v9037, 0.25
        %v9070 = vmul.f32 %v9038, 0.25
        %v9071 = vmul.f32 %v9039, 0.25
        %v9072 = vmul.f32 %v9040, 0.25
        %v9073 = vmul.f32 %v9041, 0.25
        %v9074 = vmul.f32 %v9042, 0.25
        %v9075 = vmul.f32 %v9043, 0.25
        %v9076 = vmul.f32 %v9044, 0.25
        %v9077 = vmul.f32 %v9045, 0.25
        %v9078 = vmul.f32 %v9046, 0.25
        %v9079 = vmul.f32 %v9047, 0.25
        %v9080 = vmax.f32 %v9048, 0.0
        %v9081 = vmax.f32 %v9049, 0.0
        %v9082 = vmax.f32 %v9050, 0.0
        %v9083 = vmax.f32 %v9051, 0.0
        %v9084 = vmax.f32 %v9052, 0.0
        %v9085 = vmax.f32 %v9053, 0.0
        %v9086 = vmax.f32 %v9054, 0.0
        %v9087 = vmax.f32 %v9055, 0.0
        %v9088 = vmax.f32 %v9056, 0.0
        %v9089 = vmax.f32 %v9057, 0.0
        %v9090 = vmax.f32 %v9058, 0.0
        %v9091 = vmax.f32 %v9059, 0.0
        %v9092 = vmax.f32 %v9060, 0.0
        %v9093 = vmax.f32 %v9061, 0.0
        %v9094 = vmax.f32 %v9062, 0.0
        %v9095 = vmax.f32 %v9063, 0.0
        %v9096 = vmax.f32 %v9064, 0.0
        %v9097 = vmax.f32 %v9065, 0.0
        %v9098 = vmax.f32 %v9066, 0.0
        %v9099 = vmax.f32 %v9067, 0.0
        %v9100 = vmax.f32 %v9068, 0.0
        %v9101 = vmax.f32 %v9069, 0.0
        %v9102 = vmax.f32 %v9070, 0.0
        %v9103 = vmax.f32 %v9071, 0.0
        %v9104 = vmax.f32 %v9072, 0.0
        %v9105 = vmax.f32 %v9073, 0.0
        %v9106 = vmax.f32 %v9074, 0.0
        %v9107 = vmax.f32 %v9075, 0.0
        %v9108 = vmax.f32 %v9076, 0.0
        %v9109 = vmax.f32 %v9077, 0.0
        %v9110 = vmax.f32 %v9078, 0.0
        %v9111 = vmax.f32 %v9079, 0.0
        %v9112 = vld [vmem:[%s167] sm:$0xff]
        %v9113 = vld [vmem:[%s167 + $0x8] sm:$0xff]
        %v9114 = vld [vmem:[%s167 + $0x10] sm:$0xff]
        %v9115 = vld [vmem:[%s167 + $0x18] sm:$0xff]
        %v9116 = vld [vmem:[%s167 + $0x20] sm:$0xff]
        %v9117 = vld [vmem:[%s167 + $0x28] sm:$0xff]
        %v9118 = vld [vmem:[%s167 + $0x30] sm:$0xff]
        %v9119 = vld [vmem:[%s167 + $0x38] sm:$0xff]
        %v9120 = vld [vmem:[%s167 + $0x40] sm:$0xff]
        %v9121 = vld [vmem:[%s167 + $0x48] sm:$0xff]
        %v9122 = vld [vmem:[%s167 + $0x50] sm:$0xff]
        %v9123 = vld [vmem:[%s167 + $0x58] sm:$0xff]
        %v9124 = vld [vmem:[%s167 + $0x60] sm:$0xff]
        %v9125 = vld [vmem:[%s167 + $0x68] sm:$0xff]
        %v9126 = vld [vmem:[%s167 + $0x70] sm:$0xff]
        %v9127 = vld [vmem:[%s167 + $0x78] sm:$0xff]
        %v9128 = vld [vmem:[%s167 + $0x80] sm:$0xff]
        %v9129 = vld [vmem:[%s167 + $0x88] sm:$0xff]
        %v9130 = vld [vmem:[%s167 + $0x90] sm:$0xff]
        %v9131 = vld [vmem:[%s167 + $0x98] sm:$0xff]
        %v9132 = vld [vmem:[%s167 + $0xa0] sm:$0xff]
        %v9133 = vld [vmem:[%s167 + $0xa8] sm:$0xff]
        %v9134 = vld [vmem:[%s167 + $0xb0] sm:$0xff]
        %v9135 = vld [vmem:[%s167 + $0xb8] sm:$0xff]
        %v9136 = vld [vmem:[%s167 + $0xc0] sm:$0xff]
        %v9137 = vld [vmem:[%s167 + $0xc8] sm:$0xff]
        %v9138 = vld [vmem:[%s167 + $0xd0] sm:$0xff]
        %v9139 = vld [vmem:[%s167 + $0xd8] sm:$0xff]
        %v9140 = vld [vmem:[%s167 + $0xe0] sm:$0xff]
        %v9141 = vld [vmem:[%s167 + $0xe8] sm:$0xff]
        %v9142 = vld [vmem:[%s167 + $0xf0] sm:$0xff]
        %v9143 = vld [vmem:[%s167 + $0xf8] sm:$0xff]
        %v9144 = vmul.f32 %v9080, %v8375
        %v9145 = vmul.f32 %v9081, %v8376
        %v9146 = vmul.f32 %v9082, %v8377
        %v9147 = vmul.f32 %v9083, %v8378
        %v9148 = vmul.f32 %v9084, %v8379
        %v9149 = vmul.f32 %v9085, %v8380
        %v9150 = vmul.f32 %v9086, %v8381
        %v9151 = vmul.f32 %v9087, %v8382
        %v9152 = vmul.f32 %v9088, %v8383
        %v9153 = vmul.f32 %v9089, %v8384
        %v9154 = vmul.f32 %v9090, %v8385
        %v9155 = vmul.f32 %v9091, %v8386
        %v9156 = vmul.f32 %v9092, %v8387
        %v9157 = vmul.f32 %v9093, %v8388
        %v9158 = vmul.f32 %v9094, %v8389
        %v9159 = vmul.f32 %v9095, %v8390
        %v9160 = vmul.f32 %v9096, %v8391
        %v9161 = vmul.f32 %v9097, %v8392
        %v9162 = vmul.f32 %v9098, %v8393
        %v9163 = vmul.f32 %v9099, %v8394
        %v9164 = vmul.f32 %v9100, %v8395
        %v9165 = vmul.f32 %v9101, %v8396
        %v9166 = vmul.f32 %v9102, %v8397
        %v9167 = vmul.f32 %v9103, %v8398
        %v9168 = vmul.f32 %v9104, %v8399
        %v9169 = vmul.f32 %v9105, %v8400
        %v9170 = vmul.f32 %v9106, %v8401
        %v9171 = vmul.f32 %v9107, %v8402
        %v9172 = vmul.f32 %v9108, %v8403
        %v9173 = vmul.f32 %v9109, %v8404
        %v9174 = vmul.f32 %v9110, %v8405
        %v9175 = vmul.f32 %v9111, %v8406
        %v9176 = vadd.f32 %v9112, %v9144
        %v9177 = vadd.f32 %v9113, %v9145
        %v9178 = vadd.f32 %v9114, %v9146
        %v9179 = vadd.f32 %v9115, %v9147
        %v9180 = vadd.f32 %v9116, %v9148
        %v9181 = vadd.f32 %v9117, %v9149
        %v9182 = vadd.f32 %v9118, %v9150
        %v9183 = vadd.f32 %v9119, %v9151
        %v9184 = vadd.f32 %v9120, %v9152
        %v9185 = vadd.f32 %v9121, %v9153
        %v9186 = vadd.f32 %v9122, %v9154
        %v9187 = vadd.f32 %v9123, %v9155
        %v9188 = vadd.f32 %v9124, %v9156
        %v9189 = vadd.f32 %v9125, %v9157
        %v9190 = vadd.f32 %v9126, %v9158
        %v9191 = vadd.f32 %v9127, %v9159
        %v9192 = vadd.f32 %v9128, %v9160
        %v9193 = vadd.f32 %v9129, %v9161
        %v9194 = vadd.f32 %v9130, %v9162
        %v9195 = vadd.f32 %v9131, %v9163
        %v9196 = vadd.f32 %v9132, %v9164
        %v9197 = vadd.f32 %v9133, %v9165
        %v9198 = vadd.f32 %v9134, %v9166
        %v9199 = vadd.f32 %v9135, %v9167
        %v9200 = vadd.f32 %v9136, %v9168
        %v9201 = vadd.f32 %v9137, %v9169
        %v9202 = vadd.f32 %v9138, %v9170
        %v9203 = vadd.f32 %v9139, %v9171
        %v9204 = vadd.f32 %v9140, %v9172
        %v9205 = vadd.f32 %v9141, %v9173
        %v9206 = vadd.f32 %v9142, %v9174
        %v9207 = vadd.f32 %v9143, %v9175
        %9208 = vst.msk [vmem:[%s190] sm:$0xff] %vm193, %v9176
        %9209 = vst.msk [vmem:[%s190 + $0x8] sm:$0xff] %vm193, %v9177
        %9210 = vst.msk [vmem:[%s190 + $0x10] sm:$0xff] %vm193, %v9178
        %9211 = vst.msk [vmem:[%s190 + $0x18] sm:$0xff] %vm193, %v9179
        %9212 = vst.msk [vmem:[%s190 + $0x20] sm:$0xff] %vm193, %v9180
        %9213 = vst.msk [vmem:[%s190 + $0x28] sm:$0xff] %vm193, %v9181
        %9214 = vst.msk [vmem:[%s190 + $0x30] sm:$0xff] %vm193, %v9182
        %9215 = vst.msk [vmem:[%s190 + $0x38] sm:$0xff] %vm193, %v9183
        %9216 = vst.msk [vmem:[%s190 + $0x40] sm:$0xff] %vm193, %v9184
        %9217 = vst.msk [vmem:[%s190 + $0x48] sm:$0xff] %vm193, %v9185
        %9218 = vst.msk [vmem:[%s190 + $0x50] sm:$0xff] %vm193, %v9186
        %9219 = vst.msk [vmem:[%s190 + $0x58] sm:$0xff] %vm193, %v9187
        %9220 = vst.msk [vmem:[%s190 + $0x60] sm:$0xff] %vm193, %v9188
        %9221 = vst.msk [vmem:[%s190 + $0x68] sm:$0xff] %vm193, %v9189
        %9222 = vst.msk [vmem:[%s190 + $0x70] sm:$0xff] %vm193, %v9190
        %9223 = vst.msk [vmem:[%s190 + $0x78] sm:$0xff] %vm193, %v9191
        %9224 = vst.msk [vmem:[%s190 + $0x80] sm:$0xff] %vm193, %v9192
        %9225 = vst.msk [vmem:[%s190 + $0x88] sm:$0xff] %vm193, %v9193
        %9226 = vst.msk [vmem:[%s190 + $0x90] sm:$0xff] %vm193, %v9194
        %9227 = vst.msk [vmem:[%s190 + $0x98] sm:$0xff] %vm193, %v9195
        %9228 = vst.msk [vmem:[%s190 + $0xa0] sm:$0xff] %vm193, %v9196
        %9229 = vst.msk [vmem:[%s190 + $0xa8] sm:$0xff] %vm193, %v9197
        %9230 = vst.msk [vmem:[%s190 + $0xb0] sm:$0xff] %vm193, %v9198
        %9231 = vst.msk [vmem:[%s190 + $0xb8] sm:$0xff] %vm193, %v9199
        %9232 = vst.msk [vmem:[%s190 + $0xc0] sm:$0xff] %vm193, %v9200
        %9233 = vst.msk [vmem:[%s190 + $0xc8] sm:$0xff] %vm193, %v9201
        %9234 = vst.msk [vmem:[%s190 + $0xd0] sm:$0xff] %vm193, %v9202
        %9235 = vst.msk [vmem:[%s190 + $0xd8] sm:$0xff] %vm193, %v9203
        %9236 = vst.msk [vmem:[%s190 + $0xe0] sm:$0xff] %vm193, %v9204
        %9237 = vst.msk [vmem:[%s190 + $0xe8] sm:$0xff] %vm193, %v9205
        %9238 = vst.msk [vmem:[%s190 + $0xf0] sm:$0xff] %vm193, %v9206
        %9239 = vst.msk [vmem:[%s190 + $0xf8] sm:$0xff] %vm193, %v9207
        %s9240 = sand.u32 %s96, 1
        %s9241 = scalar_lea.sflag [#allocation6], %s9240
        %s9242 = sand.u32 %s96, 1
        %s9243 = smul.addr %s9242, 256
        %s9244 = scalar_lea.vmem [#allocation7], %s9243
        // Predicated region
        $region37: #{tpu_custom_call.1} parent=31 // pred_check
          %p9245 = pneg %p106
        $region38: #{tpu_custom_call.1} parent=31 // pred_check_branch
          %9247 = sbr.rel (%p9245) target = $region40
        $region39: #{tpu_custom_call.1} parent=31 // pred_region
          %9249 = vsyncadd %s9241, 0
          %s9250 = smul.addr %s20, 32
          %s9251 = smul.addr %s9250, 8
          %s9252 = scalar_lea.hbm %s3, %s9251
          %s9253 = sshll.u32 %s9244, 4
          %s9254 = int_to_ptr.vmem [resolvable:$true] %s9253
          %s9255 = sshll.u32 %s9252, 4
          %s9256 = int_to_ptr.hbm [resolvable:$true] %s9255
          %9261 = dma.vmem_to_hbm [thread:$0]  %s9254, 4096, %s9256, %s9241, 128, 128, 8
        $region40: #{tpu_custom_call.1} parent=31 // pred_fallthru
          _
      $region32: #{tpu_custom_call.1} parent=5 // pred_fallthru
        _
      %p9262 = scmp.le.s32.totalorder 2, %s15
      // Predicated region
      $region41: #{tpu_custom_call.1} parent=5 // pred_check
        %p9263 = pneg %p9262
      $region42: #{tpu_custom_call.1} parent=5 // pred_check_branch
        %9265 = sbr.rel (%p9263) target = $region44
      $region43: #{tpu_custom_call.1} parent=5 // pred_region
        %s9266 = ssub.s32 %s15, 2
        // Predicated region
        $region45: #{tpu_custom_call.1} parent=43 // pred_check
          %p9267 = pneg %p112
        $region46: #{tpu_custom_call.1} parent=43 // pred_check_branch
          %9269 = sbr.rel (%p9267) target = $region48
        $region47: #{tpu_custom_call.1} parent=43 // pred_region
          %s9270 = sand.u32 %s97, 1
          %s9271 = scalar_lea.sflag [#allocation6], %s9270
          %s9272 = sand.u32 %s97, 1
          %s9273 = smul.addr %s9272, 256
          %s9274 = scalar_lea.vmem [#allocation7], %s9273
          %9276 = dma.done %s9271, 4096
        $region48: #{tpu_custom_call.1} parent=43 // pred_fallthru
          _
      $region44: #{tpu_custom_call.1} parent=5 // pred_fallthru
        _
    $region6: #{tpu_custom_call.1} parent=1 // loop_footer
      %s19 = sadd.s32 1, %s15
    $region7: #{tpu_custom_call.1} parent=1 // loop_footer_branch
      %14 = sbr.rel target = $region3
    $region8: #{tpu_custom_call.1} parent=1 // loop_exit
      _
    %9277 = vsyncpa [#allocation5], 1
    %s9278 = scalar_lea.sflag [#allocation5], 1
    %9279 = vsyncpa %s9278, 1
    %9280 = vsyncpa [#allocation6], 1
    %s9281 = scalar_lea.sflag [#allocation6], 1
    %9282 = vsyncpa %s9281, 1

</llo_original>
